<compile_context>
chip_gen: v6e
topology: v6e:2x2x1
jax: 0.10.0
libtpu: 0.0.40
codegen_flags: <defaults>
</compile_context>

<pallas_src>
import functools
import math

import jax
import jax.numpy as jnp
from jax import lax
from jax.experimental import pallas as pl
from jax.experimental.pallas import tpu as pltpu

NEG_INF = -1e9
EPS = 1e-6


# ----------------------------- in-kernel helpers ----------------------------

def _layernorm(x, g, b):
    """torch-style LayerNorm: unbiased std (ddof=1), divide by (std + eps)."""
    d = x.shape[-1]
    mean = jnp.mean(x, axis=-1, keepdims=True)
    xc = x - mean
    var = jnp.sum(xc * xc, axis=-1, keepdims=True) * (1.0 / (d - 1))
    return g * xc / (jnp.sqrt(var) + EPS) + b


def _mha_lastrow(q_in, kv, mask_add, wqkv_ref, bqkv_ref, wo_ref, bo_ref, n_heads):
    """Multi-head attention for ONE query row per slab, batched over NB slabs.

    q_in:     (NB, D)      normalized queries (one row per slab), f32
    kv:       (NB, Sk, D)  key/value source rows, f32
    mask_add: (NB, 1, Sk)  additive mask (0 = visible, -1e9 = blocked)
    wqkv_ref: (3, D, D) bf16,  bqkv_ref: (3, 1, D) f32
    wo_ref:   (D, D) bf16,     bo_ref:   (1, D) f32
    Returns   (NB, D) f32.
    """
    nb, d = q_in.shape
    sk = kv.shape[1]
    dk = d // n_heads
    scale = 1.0 / math.sqrt(dk)
    bf16, f32 = jnp.bfloat16, jnp.float32

    # Full-width (rows, D) @ (D, D) projections, bf16 operands, f32 accumulate.
    kv_flat = kv.reshape(nb * sk, d).astype(bf16)
    q = jnp.dot(q_in.astype(bf16), wqkv_ref[0], preferred_element_type=f32) + bqkv_ref[0]
    k = (jnp.dot(kv_flat, wqkv_ref[1], preferred_element_type=f32) + bqkv_ref[1]
         ).reshape(nb, sk, d)
    v = (jnp.dot(kv_flat, wqkv_ref[2], preferred_element_type=f32) + bqkv_ref[2]
         ).reshape(nb, sk, d)

    # Per-head scores / context from dk-wide lane slices (tiny contractions).
    ctx_heads = []
    for h in range(n_heads):
        lo = h * dk
        qh = q[:, lo:lo + dk].reshape(nb, 1, dk)          # (NB, 1, dk)
        kh = k[:, :, lo:lo + dk]                          # (NB, Sk, dk)
        vh = v[:, :, lo:lo + dk]                          # (NB, Sk, dk)
        s = jnp.einsum('bqe,bke->bqk', qh, kh,
                       preferred_element_type=f32) * scale
        s = s + mask_add
        s = s - jnp.max(s, axis=-1, keepdims=True)        # guards fully-masked rows
        p = jnp.exp(s)
        p = p / jnp.sum(p, axis=-1, keepdims=True)        # exact softmax denominator
        ctx_heads.append(
            jnp.einsum('bqk,bkd->bqd', p, vh, preferred_element_type=f32)[:, 0, :])
    ctx = jnp.concatenate(ctx_heads, axis=-1)             # (NB, D), lane-dense

    # One full-width output projection.
    return (jnp.dot(ctx.astype(bf16), wo_ref[...], preferred_element_type=f32)
            + bo_ref[...])


# ------------------------------- fused kernel -------------------------------

def _decoder_layer_kernel(
        # per-step activation slabs and additive masks
        x_ref, mem_ref, pad_ref, lmask_ref, smask_ref,
        # sublayer 0: LayerNorm + self-attention
        ln0_g_ref, ln0_b_ref, wqkv0_ref, bqkv0_ref, wo0_ref, bo0_ref,
        # sublayer 1: LayerNorm + source attention
        ln1_g_ref, ln1_b_ref, wqkv1_ref, bqkv1_ref, wo1_ref, bo1_ref,
        # sublayer 2: LayerNorm + feed forward
        ln2_g_ref, ln2_b_ref, w1_ref, b1_ref, w2_ref, b2_ref,
        # output
        o_ref,
        # VMEM scratch: extended K/V slab [padded padding_price ; norm(x)]
        ext_ref,
        *, n_heads, pad_rows):
    nb, s_len, d = x_ref.shape
    bf16, f32 = jnp.bfloat16, jnp.float32

    # --- sublayer 0: self-attention over [padding_price ; norm(x)] ----------
    x = x_ref[...]                                        # (NB, S, D)
    xn = _layernorm(x, ln0_g_ref[...], ln0_b_ref[...])    # (NB, S, D)
    # Sublane-aligned assembly of the extended K/V source (pad_rows % 8 == 0).
    ext_ref[:, 0:pad_rows, :] = pad_ref[...]
    ext_ref[:, pad_rows:pad_rows + s_len, :] = xn
    # Only the last time step survives after this sublayer; reuse its
    # already-normalized row as the query (bit-identical to LN(x_last)).
    q0_in = xn[:, s_len - 1, :]                           # (NB, D)
    x_last = x[:, s_len - 1, :]                           # (NB, D)
    attn0 = _mha_lastrow(q0_in, ext_ref[...], lmask_ref[...],
                         wqkv0_ref, bqkv0_ref, wo0_ref, bo0_ref, n_heads)
    x1 = x_last + attn0                                   # residual (dropout = id)

    # --- sublayer 1: source attention over encoder memory -------------------
    q1_in = _layernorm(x1, ln1_g_ref[...], ln1_b_ref[...])
    attn1 = _mha_lastrow(q1_in, mem_ref[...], smask_ref[...],
                         wqkv1_ref, bqkv1_ref, wo1_ref, bo1_ref, n_heads)
    x2 = x1 + attn1                                       # (NB, D)

    # --- sublayer 2: position-wise feed forward ------------------------------
    x2n = _layernorm(x2, ln2_g_ref[...], ln2_b_ref[...])
    hidden = jnp.dot(x2n.astype(bf16), w1_ref[...],
                     preferred_element_type=f32) + b1_ref[...]
    hidden = jnp.maximum(hidden, 0.0)
    y = jnp.dot(hidden.astype(bf16), w2_ref[...],
                preferred_element_type=f32) + b2_ref[...]
    o_ref[...] = (x2 + y).reshape(nb, 1, d).astype(o_ref.dtype)


# ------------------------------ host-side wrapper ----------------------------

def _additive_lastrow_mask(mask, batch, assets):
    """0/1 mask (b, a, sq, sk) -> additive (0 / -1e9) mask for the LAST query
    row only, broadcast to every (batch, asset) slab: shape (B*A, 1, sk).

    NOTE: the module keeps only x[:, :, -1:, :] right after the self-attention
    sublayer, and LayerNorm / attention rows are query-independent, so the
    kernel computes the last query row only.  This slicing encodes that
    contract -- keep it in sync with the kernel."""
    m = mask[:, :, -1:, :]                                # (b, a, 1, sk)
    add = jnp.where(m == 0, NEG_INF, 0.0).astype(jnp.float32)
    sk = add.shape[-1]
    add = jnp.broadcast_to(add, (batch, assets, 1, sk))
    return add.reshape(batch * assets, 1, sk)


def _const_index_map(ndim):
    zero = (0,) * ndim
    def idx(i):
        return zero
    return idx


def _const_spec(arr):
    """Weights / LN params / biases never change across the grid: constant
    index_map and (when available) single-buffered pipelining."""
    idx = _const_index_map(arr.ndim)
    if hasattr(pl, "Buffered"):
        try:
            return pl.BlockSpec(arr.shape, idx, pipeline_mode=pl.Buffered(1))
        except TypeError:
            pass
    return pl.BlockSpec(arr.shape, idx)


@functools.partial(jax.jit, static_argnames=('h',))
def decoder_layer(params, x, memory, price_series_mask, local_price_mask,
                  padding_price, *, h):
    B, A, S, D = x.shape
    T = memory.shape[2]
    P = padding_price.shape[2]
    N = B * A
    dff = params['ff_w1'].shape[1]
    f32, bf16 = jnp.float32, jnp.bfloat16

    # ---- host-side packing (tiny) -------------------------------------------
    xf = x.reshape(N, S, D).astype(f32)
    memf = memory.reshape(N, T, D).astype(f32)
    padf = padding_price.reshape(N, P, D).astype(f32)

    # Pad the prepended price context up to a multiple of 8 rows (zeros) so the
    # in-kernel [pad ; norm(x)] slab assembly uses only sublane-aligned stores;
    # the ghost rows are masked below with -1e9.
    Pp = ((P + 7) // 8) * 8
    if Pp > P:
        padf = jnp.concatenate([padf, jnp.zeros((N, Pp - P, D), f32)], axis=1)
    SkP = Pp + S

    lmask = _additive_lastrow_mask(local_price_mask, B, A)       # (N, 1, P+S)
    if Pp > P:
        lmask = jnp.concatenate(
            [lmask[:, :, :P], jnp.full((N, 1, Pp - P), NEG_INF, f32),
             lmask[:, :, P:]], axis=2)                            # (N, 1, Pp+S)
    smask = _additive_lastrow_mask(price_series_mask, B, A)      # (N, 1, T)

    # Matmul operands in bf16 (MXU-native on v5e/v6e/v7x, halves weight VMEM);
    # LayerNorm params and biases stay f32 (added to f32 accumulators).
    sa, ca = params['self_attn'], params['src_attn']
    weights = (
        params['ln0_g'], params['ln0_b'],
        sa['wqkv'].astype(bf16), sa['bqkv'], sa['wo'].astype(bf16), sa['bo'],
        params['ln1_g'], params['ln1_b'],
        ca['wqkv'].astype(bf16), ca['bqkv'], ca['wo'].astype(bf16), ca['bo'],
        params['ln2_g'], params['ln2_b'],
        params['ff_w1'].astype(bf16), params['ff_b1'],
        params['ff_w2'].astype(bf16), params['ff_b2'],
    )

    # ---- grid: several slabs per step; keep >= 2 steps for v7x's two TCs ----
    num_steps = 2 if (N % 2 == 0 and N >= 2) else 1
    NB = N // num_steps

    def per_step3(i):
        return (i, 0, 0)

    in_specs = [
        pl.BlockSpec((NB, S, D), per_step3),      # x
        pl.BlockSpec((NB, T, D), per_step3),      # memory
        pl.BlockSpec((NB, Pp, D), per_step3),     # padded padding_price
        pl.BlockSpec((NB, 1, SkP), per_step3),    # local additive mask
        pl.BlockSpec((NB, 1, T), per_step3),      # src additive mask
    ] + [_const_spec(w) for w in weights]

    # vmem_limit from actual residency: double-buffered activation/output
    # blocks + single-buffered weights + scratch + generous headroom.
    def _nbytes(a):
        return int(a.size) * a.dtype.itemsize
    act_bytes = sum(_nbytes(a) for a in (xf, memf, padf, lmask, smask)) // num_steps
    out_bytes = (N * D * 4) // num_steps
    w_bytes = sum(_nbytes(w) for w in weights)
    scratch_bytes = NB * SkP * D * 4
    vmem_limit = int(2 * (act_bytes + out_bytes) + 2 * w_bytes
                     + scratch_bytes + (8 << 20))

    kernel = functools.partial(_decoder_layer_kernel, n_heads=h, pad_rows=Pp)

    out = pl.pallas_call(
        kernel,
        out_shape=jax.ShapeDtypeStruct((N, 1, D), f32),
        grid=(num_steps,),
        in_specs=in_specs,
        out_specs=pl.BlockSpec((NB, 1, D), per_step3),
        scratch_shapes=[pltpu.VMEM((NB, SkP, D), f32)],
        compiler_params=pltpu.CompilerParams(
            dimension_semantics=("parallel",),
            vmem_limit_bytes=vmem_limit),
    )(xf, memf, padf, lmask, smask, *weights)
    return out.reshape(B, A, 1, D)


# ------------------------------ parameter init -------------------------------

def init_attn_params(key, d_model):
    """Random attention weights, packed full-width for the fused kernel:
       wqkv: (3, D, D)  q/k/v projections (y = x @ W + b)
       bqkv: (3, 1, D)  lane-dense biases
       wo:   (D, D), bo: (1, D)
    """
    ks = jax.random.split(key, 8)
    s = 0.05
    w = [s * jax.random.normal(ks[i], (d_model, d_model), jnp.float32) for i in range(4)]
    b = [s * jax.random.normal(ks[4 + i], (1, d_model), jnp.float32) for i in range(4)]
    return {'wqkv': jnp.stack(w[:3]), 'bqkv': jnp.stack(b[:3]),
            'wo': w[3], 'bo': b[3]}


def init_params(key, d_model, d_ff):
    k1, k2, k3, k4, k5, k6 = jax.random.split(key, 6)
    s = 0.05
    ones = jnp.ones((1, d_model), jnp.float32)
    zeros = jnp.zeros((1, d_model), jnp.float32)
    return {
        'self_attn': init_attn_params(k1, d_model),
        'src_attn': init_attn_params(k2, d_model),
        'ff_w1': s * jax.random.normal(k3, (d_model, d_ff), jnp.float32),
        'ff_b1': s * jax.random.normal(k4, (1, d_ff), jnp.float32),
        'ff_w2': s * jax.random.normal(k5, (d_ff, d_model), jnp.float32),
        'ff_b2': s * jax.random.normal(k6, (1, d_model), jnp.float32),
        'ln0_g': ones, 'ln0_b': zeros,
        'ln1_g': ones, 'ln1_b': zeros,
        'ln2_g': ones, 'ln2_b': zeros,
    }


# ---------------------------- pure-JAX reference -----------------------------
# (kept in f32 with Precision.HIGHEST matmuls; the kernel holds matmul
#  operands in bf16, so the comparison tolerance covers bf16 rounding.)

_HP = lax.Precision.HIGHEST


def _ref_layernorm(x, g, b):
    mean = jnp.mean(x, axis=-1, keepdims=True)
    xc = x - mean
    var = jnp.sum(xc * xc, axis=-1, keepdims=True) / (x.shape[-1] - 1)
    return g * xc / (jnp.sqrt(var) + EPS) + b


def _ref_mha(ap, q_in, kv_in, mask, h):
    d = q_in.shape[-1]
    dk = d // h

    def proj(t, w, bias):
        return jnp.einsum('basd,de->base', t, w, precision=_HP) + bias

    def split(t):  # (b, a, s, d) -> (b, a, h, s, dk)
        b, a, s, _ = t.shape
        return t.reshape(b, a, s, h, dk).transpose(0, 1, 3, 2, 4)

    q = split(proj(q_in, ap['wqkv'][0], ap['bqkv'][0]))
    k = split(proj(kv_in, ap['wqkv'][1], ap['bqkv'][1]))
    v = split(proj(kv_in, ap['wqkv'][2], ap['bqkv'][2]))
    s = jnp.einsum('bahse,bahte->bahst', q, k, precision=_HP) / math.sqrt(dk)
    s = jnp.where(mask[:, :, None] == 0, NEG_INF, s)
    p = jax.nn.softmax(s, axis=-1)
    ctx = jnp.einsum('bahst,bahte->bahse', p, v, precision=_HP)
    b, a, _, sq, _ = ctx.shape
    ctx = ctx.transpose(0, 1, 3, 2, 4).reshape(b, a, sq, d)
    return jnp.einsum('basd,de->base', ctx, ap['wo'], precision=_HP) + ap['bo']


def decoder_layer_ref(params, x, memory, price_series_mask, local_price_mask,
                      padding_price, h):
    xn = _ref_layernorm(x, params['ln0_g'], params['ln0_b'])
    kv = jnp.concatenate([padding_price, xn], axis=2)
    x = x + _ref_mha(params['self_attn'], xn, kv, local_price_mask, h)
    x = x[:, :, -1:, :]
    xn = _ref_layernorm(x, params['ln1_g'], params['ln1_b'])
    x = x + _ref_mha(params['src_attn'], xn, memory, price_series_mask, h)
    xn = _ref_layernorm(x, params['ln2_g'], params['ln2_b'])
    hid = jnp.maximum(jnp.einsum('basd,df->basf', xn, params['ff_w1'],
                                 precision=_HP) + params['ff_b1'], 0.0)
    y = jnp.einsum('basf,fd->basd', hid, params['ff_w2'],
                   precision=_HP) + params['ff_b2']
    return x + y


# ---------------------------------- main -------------------------------------

if __name__ == "__main__":
    B, A, S, D = 2, 4, 8, 32     # batch, assets, local seq, d_model
    P = 4                        # padding_price length (local context)
    T = 8                        # memory (encoder) length
    H, D_FF = 4, 64

    root = jax.random.PRNGKey(0)
    kx, km, kp, kw = jax.random.split(root, 4)

    x = jax.random.normal(kx, (B, A, S, D), jnp.float32)
    memory = jax.random.normal(km, (B, A, T, D), jnp.float32)
    padding_price = jax.random.normal(kp, (B, A, P, D), jnp.float32)

    # local causal mask over [padding | local seq] keys (1 = attend, 0 = blocked)
    q_idx = jnp.arange(S)[:, None]
    k_idx = jnp.arange(P + S)[None, :]
    local_price_mask = (k_idx < (P + q_idx + 1)).astype(jnp.float32)[None, None]  # (1,1,S,P+S)
    # encoder-memory mask: all positions visible
    price_series_mask = jnp.ones((B, A, 1, T), jnp.float32)

    params = init_params(kw, D, D_FF)

    out = decoder_layer(params, x, memory, price_series_mask, local_price_mask,
                        padding_price, h=H)
    out = jax.block_until_ready(out)
    assert out.shape == (B, A, 1, D), out.shape
    assert bool(jnp.all(jnp.isfinite(out)))

    # correctness vs. a pure-JAX reference (tolerance covers bf16 weight rounding)
    ref = decoder_layer_ref(params, x, memory, price_series_mask,
                            local_price_mask, padding_price, H)
    err = float(jnp.max(jnp.abs(out - ref)))
    assert err < 2e-2, f"max |kernel - reference| = {err}"

    print("KERNEL_OK")
</pallas_src>

<mosaic_0001>
module attributes {stable_mosaic.version = 11 : i64} {
  func.func @_decoder_layer_kernel(%arg0: i32, %arg1: memref<4x8x32xf32, #tpu.memory_space<vmem>>, %arg2: memref<4x8x32xf32, #tpu.memory_space<vmem>>, %arg3: memref<4x8x32xf32, #tpu.memory_space<vmem>>, %arg4: memref<4x1x16xf32, #tpu.memory_space<vmem>>, %arg5: memref<4x1x8xf32, #tpu.memory_space<vmem>>, %arg6: memref<1x32xf32, #tpu.memory_space<vmem>>, %arg7: memref<1x32xf32, #tpu.memory_space<vmem>>, %arg8: memref<3x32x32xbf16, #tpu.memory_space<vmem>>, %arg9: memref<3x1x32xf32, #tpu.memory_space<vmem>>, %arg10: memref<32x32xbf16, #tpu.memory_space<vmem>>, %arg11: memref<1x32xf32, #tpu.memory_space<vmem>>, %arg12: memref<1x32xf32, #tpu.memory_space<vmem>>, %arg13: memref<1x32xf32, #tpu.memory_space<vmem>>, %arg14: memref<3x32x32xbf16, #tpu.memory_space<vmem>>, %arg15: memref<3x1x32xf32, #tpu.memory_space<vmem>>, %arg16: memref<32x32xbf16, #tpu.memory_space<vmem>>, %arg17: memref<1x32xf32, #tpu.memory_space<vmem>>, %arg18: memref<1x32xf32, #tpu.memory_space<vmem>>, %arg19: memref<1x32xf32, #tpu.memory_space<vmem>>, %arg20: memref<32x64xbf16, #tpu.memory_space<vmem>>, %arg21: memref<1x64xf32, #tpu.memory_space<vmem>>, %arg22: memref<64x32xbf16, #tpu.memory_space<vmem>>, %arg23: memref<1x32xf32, #tpu.memory_space<vmem>>, %arg24: memref<4x1x32xf32, #tpu.memory_space<vmem>>, %arg25: memref<4x16x32xf32, #tpu.memory_space<vmem>>) attributes {dimension_semantics = [#tpu.dimension_semantics<parallel>], iteration_bounds = array<i64: 2>, scalar_prefetch = 0 : i64, scratch_operands = 1 : i64, tpu.core_type = #tpu.core_type<tc>, window_params = [{transform_indices = @transform_0, window_bounds = array<i64: 4, 8, 32>}, {transform_indices = @transform_1, window_bounds = array<i64: 4, 8, 32>}, {transform_indices = @transform_2, window_bounds = array<i64: 4, 8, 32>}, {transform_indices = @transform_3, window_bounds = array<i64: 4, 1, 16>}, {transform_indices = @transform_4, window_bounds = array<i64: 4, 1, 8>}, {pipeline_mode = #tpu.pipeline_mode<synchronous>, transform_indices = @transform_5, window_bounds = array<i64: 1, 32>}, {pipeline_mode = #tpu.pipeline_mode<synchronous>, transform_indices = @transform_6, window_bounds = array<i64: 1, 32>}, {pipeline_mode = #tpu.pipeline_mode<synchronous>, transform_indices = @transform_7, window_bounds = array<i64: 3, 32, 32>}, {pipeline_mode = #tpu.pipeline_mode<synchronous>, transform_indices = @transform_8, window_bounds = array<i64: 3, 1, 32>}, {pipeline_mode = #tpu.pipeline_mode<synchronous>, transform_indices = @transform_9, window_bounds = array<i64: 32, 32>}, {pipeline_mode = #tpu.pipeline_mode<synchronous>, transform_indices = @transform_10, window_bounds = array<i64: 1, 32>}, {pipeline_mode = #tpu.pipeline_mode<synchronous>, transform_indices = @transform_11, window_bounds = array<i64: 1, 32>}, {pipeline_mode = #tpu.pipeline_mode<synchronous>, transform_indices = @transform_12, window_bounds = array<i64: 1, 32>}, {pipeline_mode = #tpu.pipeline_mode<synchronous>, transform_indices = @transform_13, window_bounds = array<i64: 3, 32, 32>}, {pipeline_mode = #tpu.pipeline_mode<synchronous>, transform_indices = @transform_14, window_bounds = array<i64: 3, 1, 32>}, {pipeline_mode = #tpu.pipeline_mode<synchronous>, transform_indices = @transform_15, window_bounds = array<i64: 32, 32>}, {pipeline_mode = #tpu.pipeline_mode<synchronous>, transform_indices = @transform_16, window_bounds = array<i64: 1, 32>}, {pipeline_mode = #tpu.pipeline_mode<synchronous>, transform_indices = @transform_17, window_bounds = array<i64: 1, 32>}, {pipeline_mode = #tpu.pipeline_mode<synchronous>, transform_indices = @transform_18, window_bounds = array<i64: 1, 32>}, {pipeline_mode = #tpu.pipeline_mode<synchronous>, transform_indices = @transform_19, window_bounds = array<i64: 32, 64>}, {pipeline_mode = #tpu.pipeline_mode<synchronous>, transform_indices = @transform_20, window_bounds = array<i64: 1, 64>}, {pipeline_mode = #tpu.pipeline_mode<synchronous>, transform_indices = @transform_21, window_bounds = array<i64: 64, 32>}, {pipeline_mode = #tpu.pipeline_mode<synchronous>, transform_indices = @transform_22, window_bounds = array<i64: 1, 32>}, {transform_indices = @transform_23, window_bounds = array<i64: 4, 1, 32>}]} {
    %c0 = arith.constant 0 : index
    %c0_0 = arith.constant 0 : index
    %c0_1 = arith.constant 0 : index
    %0 = vector.load %arg1[%c0, %c0_0, %c0_1] : memref<4x8x32xf32, #tpu.memory_space<vmem>>, vector<4x8x32xf32>
    %c0_2 = arith.constant 0 : index
    %c0_3 = arith.constant 0 : index
    %1 = vector.load %arg6[%c0_2, %c0_3] : memref<1x32xf32, #tpu.memory_space<vmem>>, vector<1x32xf32>
    %c0_4 = arith.constant 0 : index
    %c0_5 = arith.constant 0 : index
    %2 = vector.load %arg7[%c0_4, %c0_5] : memref<1x32xf32, #tpu.memory_space<vmem>>, vector<1x32xf32>
    %cst = arith.constant dense<0.000000e+00> : vector<4x8xf32>
    %3 = vector.multi_reduction <add>, %0, %cst [2] : vector<4x8x32xf32> to vector<4x8xf32>
    %4 = vector.shape_cast %3 : vector<4x8xf32> to vector<4x8x1xf32>
    %cst_6 = arith.constant 3.200000e+01 : f32
    %5 = vector.broadcast %cst_6 : f32 to vector<4x8x1xf32>
    %6 = arith.divf %4, %5 : vector<4x8x1xf32>
    %7 = vector.broadcast %6 : vector<4x8x1xf32> to vector<4x8x32xf32>
    %8 = arith.subf %0, %7 : vector<4x8x32xf32>
    %9 = arith.mulf %8, %8 : vector<4x8x32xf32>
    %cst_7 = arith.constant dense<0.000000e+00> : vector<4x8xf32>
    %10 = vector.multi_reduction <add>, %9, %cst_7 [2] : vector<4x8x32xf32> to vector<4x8xf32>
    %11 = vector.shape_cast %10 : vector<4x8xf32> to vector<4x8x1xf32>
    %cst_8 = arith.constant 0.0322580636 : f32
    %12 = vector.broadcast %cst_8 : f32 to vector<4x8x1xf32>
    %13 = arith.mulf %11, %12 : vector<4x8x1xf32>
    %14 = vector.shape_cast %1 : vector<1x32xf32> to vector<1x1x32xf32>
    %15 = vector.broadcast %14 : vector<1x1x32xf32> to vector<4x8x32xf32>
    %16 = arith.mulf %15, %8 : vector<4x8x32xf32>
    %17 = math.sqrt %13 : vector<4x8x1xf32>
    %cst_9 = arith.constant 9.99999997E-7 : f32
    %18 = vector.broadcast %cst_9 : f32 to vector<4x8x1xf32>
    %19 = arith.addf %17, %18 : vector<4x8x1xf32>
    %20 = vector.broadcast %19 : vector<4x8x1xf32> to vector<4x8x32xf32>
    %21 = arith.divf %16, %20 : vector<4x8x32xf32>
    %22 = vector.shape_cast %2 : vector<1x32xf32> to vector<1x1x32xf32>
    %23 = vector.broadcast %22 : vector<1x1x32xf32> to vector<4x8x32xf32>
    %24 = arith.addf %21, %23 : vector<4x8x32xf32>
    %c0_10 = arith.constant 0 : index
    %c0_11 = arith.constant 0 : index
    %c0_12 = arith.constant 0 : index
    %25 = vector.load %arg3[%c0_10, %c0_11, %c0_12] : memref<4x8x32xf32, #tpu.memory_space<vmem>>, vector<4x8x32xf32>
    %c0_13 = arith.constant 0 : index
    %c0_14 = arith.constant 0 : index
    %c0_15 = arith.constant 0 : index
    %26 = vector.load %arg25[%c0_13, %c0_14, %c0_15] : memref<4x16x32xf32, #tpu.memory_space<vmem>>, vector<4x8x32xf32>
    tpu.vector_store %arg25[%c0_13, %c0_14, %c0_15], %25 {strides = array<i32>} : memref<4x16x32xf32, #tpu.memory_space<vmem>>, vector<4x8x32xf32>,
    %c0_16 = arith.constant 0 : index
    %c8 = arith.constant 8 : index
    %c0_17 = arith.constant 0 : index
    %27 = vector.load %arg25[%c0_16, %c8, %c0_17] : memref<4x16x32xf32, #tpu.memory_space<vmem>>, vector<4x8x32xf32>
    tpu.vector_store %arg25[%c0_16, %c8, %c0_17], %24 {strides = array<i32>} : memref<4x16x32xf32, #tpu.memory_space<vmem>>, vector<4x8x32xf32>,
    %28 = vector.extract_strided_slice %24 {offsets = [0, 7, 0], sizes = [4, 1, 32], strides = [1, 1, 1]} : vector<4x8x32xf32> to vector<4x1x32xf32>
    %29 = vector.shape_cast %28 : vector<4x1x32xf32> to vector<4x32xf32>
    %30 = vector.extract_strided_slice %0 {offsets = [0, 7, 0], sizes = [4, 1, 32], strides = [1, 1, 1]} : vector<4x8x32xf32> to vector<4x1x32xf32>
    %31 = vector.shape_cast %30 : vector<4x1x32xf32> to vector<4x32xf32>
    %c0_18 = arith.constant 0 : index
    %c0_19 = arith.constant 0 : index
    %c0_20 = arith.constant 0 : index
    %32 = vector.load %arg25[%c0_18, %c0_19, %c0_20] : memref<4x16x32xf32, #tpu.memory_space<vmem>>, vector<4x16x32xf32>
    %c0_21 = arith.constant 0 : index
    %c0_22 = arith.constant 0 : index
    %c0_23 = arith.constant 0 : index
    %33 = vector.load %arg4[%c0_21, %c0_22, %c0_23] : memref<4x1x16xf32, #tpu.memory_space<vmem>>, vector<4x1x16xf32>
    %34 = vector.shape_cast %32 : vector<4x16x32xf32> to vector<64x32xf32>
    %35 = arith.truncf %34 : vector<64x32xf32> to vector<64x32xbf16>
    %36 = arith.truncf %29 : vector<4x32xf32> to vector<4x32xbf16>
    %c0_24 = arith.constant 0 : index
    %c0_25 = arith.constant 0 : index
    %c0_26 = arith.constant 0 : index
    %37 = vector.load %arg8[%c0_24, %c0_25, %c0_26] : memref<3x32x32xbf16, #tpu.memory_space<vmem>>, vector<1x32x32xbf16>
    %38 = vector.shape_cast %37 : vector<1x32x32xbf16> to vector<32x32xbf16>
    %cst_27 = arith.constant dense<0.000000e+00> : vector<4x32xf32>
    %39 = tpu.matmul %36, %38, %cst_27 {dimension_numbers = #tpu.dot_dimension_numbers<[1], [0], [0], [1], [0, 0, 1, 1], [], []>} : vector<4x32xbf16>, vector<32x32xbf16>, vector<4x32xf32> -> vector<4x32xf32>
    %c0_28 = arith.constant 0 : index
    %c0_29 = arith.constant 0 : index
    %c0_30 = arith.constant 0 : index
    %40 = vector.load %arg9[%c0_28, %c0_29, %c0_30] : memref<3x1x32xf32, #tpu.memory_space<vmem>>, vector<1x1x32xf32>
    %41 = vector.shape_cast %40 : vector<1x1x32xf32> to vector<1x32xf32>
    %42 = vector.broadcast %41 : vector<1x32xf32> to vector<4x32xf32>
    %43 = arith.addf %39, %42 : vector<4x32xf32>
    %c1 = arith.constant 1 : index
    %c0_31 = arith.constant 0 : index
    %c0_32 = arith.constant 0 : index
    %44 = vector.load %arg8[%c1, %c0_31, %c0_32] : memref<3x32x32xbf16, #tpu.memory_space<vmem>>, vector<1x32x32xbf16>
    %45 = vector.shape_cast %44 : vector<1x32x32xbf16> to vector<32x32xbf16>
    %cst_33 = arith.constant dense<0.000000e+00> : vector<64x32xf32>
    %46 = tpu.matmul %35, %45, %cst_33 {dimension_numbers = #tpu.dot_dimension_numbers<[1], [0], [0], [1], [0, 0, 1, 1], [], []>} : vector<64x32xbf16>, vector<32x32xbf16>, vector<64x32xf32> -> vector<64x32xf32>
    %c1_34 = arith.constant 1 : index
    %c0_35 = arith.constant 0 : index
    %c0_36 = arith.constant 0 : index
    %47 = vector.load %arg9[%c1_34, %c0_35, %c0_36] : memref<3x1x32xf32, #tpu.memory_space<vmem>>, vector<1x1x32xf32>
    %48 = vector.shape_cast %47 : vector<1x1x32xf32> to vector<1x32xf32>
    %49 = vector.broadcast %48 : vector<1x32xf32> to vector<64x32xf32>
    %50 = arith.addf %46, %49 : vector<64x32xf32>
    %51 = vector.shape_cast %50 : vector<64x32xf32> to vector<4x16x32xf32>
    %c2 = arith.constant 2 : index
    %c0_37 = arith.constant 0 : index
    %c0_38 = arith.constant 0 : index
    %52 = vector.load %arg8[%c2, %c0_37, %c0_38] : memref<3x32x32xbf16, #tpu.memory_space<vmem>>, vector<1x32x32xbf16>
    %53 = vector.shape_cast %52 : vector<1x32x32xbf16> to vector<32x32xbf16>
    %cst_39 = arith.constant dense<0.000000e+00> : vector<64x32xf32>
    %54 = tpu.matmul %35, %53, %cst_39 {dimension_numbers = #tpu.dot_dimension_numbers<[1], [0], [0], [1], [0, 0, 1, 1], [], []>} : vector<64x32xbf16>, vector<32x32xbf16>, vector<64x32xf32> -> vector<64x32xf32>
    %c2_40 = arith.constant 2 : index
    %c0_41 = arith.constant 0 : index
    %c0_42 = arith.constant 0 : index
    %55 = vector.load %arg9[%c2_40, %c0_41, %c0_42] : memref<3x1x32xf32, #tpu.memory_space<vmem>>, vector<1x1x32xf32>
    %56 = vector.shape_cast %55 : vector<1x1x32xf32> to vector<1x32xf32>
    %57 = vector.broadcast %56 : vector<1x32xf32> to vector<64x32xf32>
    %58 = arith.addf %54, %57 : vector<64x32xf32>
    %59 = vector.shape_cast %58 : vector<64x32xf32> to vector<4x16x32xf32>
    %60 = vector.extract_strided_slice %43 {offsets = [0, 0], sizes = [4, 8], strides = [1, 1]} : vector<4x32xf32> to vector<4x8xf32>
    %61 = vector.shape_cast %60 : vector<4x8xf32> to vector<4x1x8xf32>
    %62 = vector.extract_strided_slice %51 {offsets = [0, 0, 0], sizes = [4, 16, 8], strides = [1, 1, 1]} : vector<4x16x32xf32> to vector<4x16x8xf32>
    %63 = vector.extract_strided_slice %59 {offsets = [0, 0, 0], sizes = [4, 16, 8], strides = [1, 1, 1]} : vector<4x16x32xf32> to vector<4x16x8xf32>
    "tpu.trace_start"() <{level = 10 : i32, message = "bqe,bke->bqk"}> : () -> ()
    %cst_43 = arith.constant dense<0.000000e+00> : vector<4x1x16xf32>
    %64 = tpu.matmul %61, %62, %cst_43 {dimension_numbers = #tpu.dot_dimension_numbers<[2], [2], [1], [1], [0, 0, 0, 1, 1, 1], [0], [0]>} : vector<4x1x8xf32>, vector<4x16x8xf32>, vector<4x1x16xf32> -> vector<4x1x16xf32>
    "tpu.trace_stop"() : () -> ()
    %cst_44 = arith.constant 0.353553385 : f32
    %65 = vector.broadcast %cst_44 : f32 to vector<4x1x16xf32>
    %66 = arith.mulf %64, %65 : vector<4x1x16xf32>
    %67 = arith.addf %66, %33 : vector<4x1x16xf32>
    %cst_45 = arith.constant dense<0xFF800000> : vector<4x1xf32>
    %68 = vector.multi_reduction <maximumf>, %67, %cst_45 [2] : vector<4x1x16xf32> to vector<4x1xf32>
    %69 = vector.shape_cast %68 : vector<4x1xf32> to vector<4x1x1xf32>
    %70 = vector.broadcast %69 : vector<4x1x1xf32> to vector<4x1x16xf32>
    %71 = arith.subf %67, %70 : vector<4x1x16xf32>
    %72 = math.exp %71 : vector<4x1x16xf32>
    %cst_46 = arith.constant dense<0.000000e+00> : vector<4x1xf32>
    %73 = vector.multi_reduction <add>, %72, %cst_46 [2] : vector<4x1x16xf32> to vector<4x1xf32>
    %74 = vector.shape_cast %73 : vector<4x1xf32> to vector<4x1x1xf32>
    %75 = vector.broadcast %74 : vector<4x1x1xf32> to vector<4x1x16xf32>
    %76 = arith.divf %72, %75 : vector<4x1x16xf32>
    "tpu.trace_start"() <{level = 10 : i32, message = "bqk,bkd->bqd"}> : () -> ()
    %cst_47 = arith.constant dense<0.000000e+00> : vector<4x1x8xf32>
    %77 = tpu.matmul %76, %63, %cst_47 {dimension_numbers = #tpu.dot_dimension_numbers<[2], [1], [1], [2], [0, 0, 0, 1, 1, 2], [0], [0]>} : vector<4x1x16xf32>, vector<4x16x8xf32>, vector<4x1x8xf32> -> vector<4x1x8xf32>
    "tpu.trace_stop"() : () -> ()
    %78 = vector.shape_cast %77 : vector<4x1x8xf32> to vector<4x8xf32>
    %79 = vector.extract_strided_slice %43 {offsets = [0, 8], sizes = [4, 8], strides = [1, 1]} : vector<4x32xf32> to vector<4x8xf32>
    %80 = vector.shape_cast %79 : vector<4x8xf32> to vector<4x1x8xf32>
    %81 = vector.extract_strided_slice %51 {offsets = [0, 0, 8], sizes = [4, 16, 8], strides = [1, 1, 1]} : vector<4x16x32xf32> to vector<4x16x8xf32>
    %82 = vector.extract_strided_slice %59 {offsets = [0, 0, 8], sizes = [4, 16, 8], strides = [1, 1, 1]} : vector<4x16x32xf32> to vector<4x16x8xf32>
    "tpu.trace_start"() <{level = 10 : i32, message = "bqe,bke->bqk"}> : () -> ()
    %cst_48 = arith.constant dense<0.000000e+00> : vector<4x1x16xf32>
    %83 = tpu.matmul %80, %81, %cst_48 {dimension_numbers = #tpu.dot_dimension_numbers<[2], [2], [1], [1], [0, 0, 0, 1, 1, 1], [0], [0]>} : vector<4x1x8xf32>, vector<4x16x8xf32>, vector<4x1x16xf32> -> vector<4x1x16xf32>
    "tpu.trace_stop"() : () -> ()
    %cst_49 = arith.constant 0.353553385 : f32
    %84 = vector.broadcast %cst_49 : f32 to vector<4x1x16xf32>
    %85 = arith.mulf %83, %84 : vector<4x1x16xf32>
    %86 = arith.addf %85, %33 : vector<4x1x16xf32>
    %cst_50 = arith.constant dense<0xFF800000> : vector<4x1xf32>
    %87 = vector.multi_reduction <maximumf>, %86, %cst_50 [2] : vector<4x1x16xf32> to vector<4x1xf32>
    %88 = vector.shape_cast %87 : vector<4x1xf32> to vector<4x1x1xf32>
    %89 = vector.broadcast %88 : vector<4x1x1xf32> to vector<4x1x16xf32>
    %90 = arith.subf %86, %89 : vector<4x1x16xf32>
    %91 = math.exp %90 : vector<4x1x16xf32>
    %cst_51 = arith.constant dense<0.000000e+00> : vector<4x1xf32>
    %92 = vector.multi_reduction <add>, %91, %cst_51 [2] : vector<4x1x16xf32> to vector<4x1xf32>
    %93 = vector.shape_cast %92 : vector<4x1xf32> to vector<4x1x1xf32>
    %94 = vector.broadcast %93 : vector<4x1x1xf32> to vector<4x1x16xf32>
    %95 = arith.divf %91, %94 : vector<4x1x16xf32>
    "tpu.trace_start"() <{level = 10 : i32, message = "bqk,bkd->bqd"}> : () -> ()
    %cst_52 = arith.constant dense<0.000000e+00> : vector<4x1x8xf32>
    %96 = tpu.matmul %95, %82, %cst_52 {dimension_numbers = #tpu.dot_dimension_numbers<[2], [1], [1], [2], [0, 0, 0, 1, 1, 2], [0], [0]>} : vector<4x1x16xf32>, vector<4x16x8xf32>, vector<4x1x8xf32> -> vector<4x1x8xf32>
    "tpu.trace_stop"() : () -> ()
    %97 = vector.shape_cast %96 : vector<4x1x8xf32> to vector<4x8xf32>
    %98 = vector.extract_strided_slice %43 {offsets = [0, 16], sizes = [4, 8], strides = [1, 1]} : vector<4x32xf32> to vector<4x8xf32>
    %99 = vector.shape_cast %98 : vector<4x8xf32> to vector<4x1x8xf32>
    %100 = vector.extract_strided_slice %51 {offsets = [0, 0, 16], sizes = [4, 16, 8], strides = [1, 1, 1]} : vector<4x16x32xf32> to vector<4x16x8xf32>
    %101 = vector.extract_strided_slice %59 {offsets = [0, 0, 16], sizes = [4, 16, 8], strides = [1, 1, 1]} : vector<4x16x32xf32> to vector<4x16x8xf32>
    "tpu.trace_start"() <{level = 10 : i32, message = "bqe,bke->bqk"}> : () -> ()
    %cst_53 = arith.constant dense<0.000000e+00> : vector<4x1x16xf32>
    %102 = tpu.matmul %99, %100, %cst_53 {dimension_numbers = #tpu.dot_dimension_numbers<[2], [2], [1], [1], [0, 0, 0, 1, 1, 1], [0], [0]>} : vector<4x1x8xf32>, vector<4x16x8xf32>, vector<4x1x16xf32> -> vector<4x1x16xf32>
    "tpu.trace_stop"() : () -> ()
    %cst_54 = arith.constant 0.353553385 : f32
    %103 = vector.broadcast %cst_54 : f32 to vector<4x1x16xf32>
    %104 = arith.mulf %102, %103 : vector<4x1x16xf32>
    %105 = arith.addf %104, %33 : vector<4x1x16xf32>
    %cst_55 = arith.constant dense<0xFF800000> : vector<4x1xf32>
    %106 = vector.multi_reduction <maximumf>, %105, %cst_55 [2] : vector<4x1x16xf32> to vector<4x1xf32>
    %107 = vector.shape_cast %106 : vector<4x1xf32> to vector<4x1x1xf32>
    %108 = vector.broadcast %107 : vector<4x1x1xf32> to vector<4x1x16xf32>
    %109 = arith.subf %105, %108 : vector<4x1x16xf32>
    %110 = math.exp %109 : vector<4x1x16xf32>
    %cst_56 = arith.constant dense<0.000000e+00> : vector<4x1xf32>
    %111 = vector.multi_reduction <add>, %110, %cst_56 [2] : vector<4x1x16xf32> to vector<4x1xf32>
    %112 = vector.shape_cast %111 : vector<4x1xf32> to vector<4x1x1xf32>
    %113 = vector.broadcast %112 : vector<4x1x1xf32> to vector<4x1x16xf32>
    %114 = arith.divf %110, %113 : vector<4x1x16xf32>
    "tpu.trace_start"() <{level = 10 : i32, message = "bqk,bkd->bqd"}> : () -> ()
    %cst_57 = arith.constant dense<0.000000e+00> : vector<4x1x8xf32>
    %115 = tpu.matmul %114, %101, %cst_57 {dimension_numbers = #tpu.dot_dimension_numbers<[2], [1], [1], [2], [0, 0, 0, 1, 1, 2], [0], [0]>} : vector<4x1x16xf32>, vector<4x16x8xf32>, vector<4x1x8xf32> -> vector<4x1x8xf32>
    "tpu.trace_stop"() : () -> ()
    %116 = vector.shape_cast %115 : vector<4x1x8xf32> to vector<4x8xf32>
    %117 = vector.extract_strided_slice %43 {offsets = [0, 24], sizes = [4, 8], strides = [1, 1]} : vector<4x32xf32> to vector<4x8xf32>
    %118 = vector.shape_cast %117 : vector<4x8xf32> to vector<4x1x8xf32>
    %119 = vector.extract_strided_slice %51 {offsets = [0, 0, 24], sizes = [4, 16, 8], strides = [1, 1, 1]} : vector<4x16x32xf32> to vector<4x16x8xf32>
    %120 = vector.extract_strided_slice %59 {offsets = [0, 0, 24], sizes = [4, 16, 8], strides = [1, 1, 1]} : vector<4x16x32xf32> to vector<4x16x8xf32>
    "tpu.trace_start"() <{level = 10 : i32, message = "bqe,bke->bqk"}> : () -> ()
    %cst_58 = arith.constant dense<0.000000e+00> : vector<4x1x16xf32>
    %121 = tpu.matmul %118, %119, %cst_58 {dimension_numbers = #tpu.dot_dimension_numbers<[2], [2], [1], [1], [0, 0, 0, 1, 1, 1], [0], [0]>} : vector<4x1x8xf32>, vector<4x16x8xf32>, vector<4x1x16xf32> -> vector<4x1x16xf32>
    "tpu.trace_stop"() : () -> ()
    %cst_59 = arith.constant 0.353553385 : f32
    %122 = vector.broadcast %cst_59 : f32 to vector<4x1x16xf32>
    %123 = arith.mulf %121, %122 : vector<4x1x16xf32>
    %124 = arith.addf %123, %33 : vector<4x1x16xf32>
    %cst_60 = arith.constant dense<0xFF800000> : vector<4x1xf32>
    %125 = vector.multi_reduction <maximumf>, %124, %cst_60 [2] : vector<4x1x16xf32> to vector<4x1xf32>
    %126 = vector.shape_cast %125 : vector<4x1xf32> to vector<4x1x1xf32>
    %127 = vector.broadcast %126 : vector<4x1x1xf32> to vector<4x1x16xf32>
    %128 = arith.subf %124, %127 : vector<4x1x16xf32>
    %129 = math.exp %128 : vector<4x1x16xf32>
    %cst_61 = arith.constant dense<0.000000e+00> : vector<4x1xf32>
    %130 = vector.multi_reduction <add>, %129, %cst_61 [2] : vector<4x1x16xf32> to vector<4x1xf32>
    %131 = vector.shape_cast %130 : vector<4x1xf32> to vector<4x1x1xf32>
    %132 = vector.broadcast %131 : vector<4x1x1xf32> to vector<4x1x16xf32>
    %133 = arith.divf %129, %132 : vector<4x1x16xf32>
    "tpu.trace_start"() <{level = 10 : i32, message = "bqk,bkd->bqd"}> : () -> ()
    %cst_62 = arith.constant dense<0.000000e+00> : vector<4x1x8xf32>
    %134 = tpu.matmul %133, %120, %cst_62 {dimension_numbers = #tpu.dot_dimension_numbers<[2], [1], [1], [2], [0, 0, 0, 1, 1, 2], [0], [0]>} : vector<4x1x16xf32>, vector<4x16x8xf32>, vector<4x1x8xf32> -> vector<4x1x8xf32>
    "tpu.trace_stop"() : () -> ()
    %135 = vector.shape_cast %134 : vector<4x1x8xf32> to vector<4x8xf32>
    %136 = tpu.concatenate %78, %97, %116, %135 in 1 : vector<4x8xf32>, vector<4x8xf32>, vector<4x8xf32>, vector<4x8xf32> -> vector<4x32xf32>
    %137 = arith.truncf %136 : vector<4x32xf32> to vector<4x32xbf16>
    %c0_63 = arith.constant 0 : index
    %c0_64 = arith.constant 0 : index
    %138 = vector.load %arg10[%c0_63, %c0_64] : memref<32x32xbf16, #tpu.memory_space<vmem>>, vector<32x32xbf16>
    %cst_65 = arith.constant dense<0.000000e+00> : vector<4x32xf32>
    %139 = tpu.matmul %137, %138, %cst_65 {dimension_numbers = #tpu.dot_dimension_numbers<[1], [0], [0], [1], [0, 0, 1, 1], [], []>} : vector<4x32xbf16>, vector<32x32xbf16>, vector<4x32xf32> -> vector<4x32xf32>
    %c0_66 = arith.constant 0 : index
    %c0_67 = arith.constant 0 : index
    %140 = vector.load %arg11[%c0_66, %c0_67] : memref<1x32xf32, #tpu.memory_space<vmem>>, vector<1x32xf32>
    %141 = vector.broadcast %140 : vector<1x32xf32> to vector<4x32xf32>
    %142 = arith.addf %139, %141 : vector<4x32xf32>
    %143 = arith.addf %31, %142 : vector<4x32xf32>
    %c0_68 = arith.constant 0 : index
    %c0_69 = arith.constant 0 : index
    %144 = vector.load %arg12[%c0_68, %c0_69] : memref<1x32xf32, #tpu.memory_space<vmem>>, vector<1x32xf32>
    %c0_70 = arith.constant 0 : index
    %c0_71 = arith.constant 0 : index
    %145 = vector.load %arg13[%c0_70, %c0_71] : memref<1x32xf32, #tpu.memory_space<vmem>>, vector<1x32xf32>
    %cst_72 = arith.constant dense<0.000000e+00> : vector<4xf32>
    %146 = vector.multi_reduction <add>, %143, %cst_72 [1] : vector<4x32xf32> to vector<4xf32>
    %147 = vector.shape_cast %146 : vector<4xf32> to vector<4x1xf32>
    %cst_73 = arith.constant 3.200000e+01 : f32
    %148 = vector.broadcast %cst_73 : f32 to vector<4x1xf32>
    %149 = arith.divf %147, %148 : vector<4x1xf32>
    %150 = vector.broadcast %149 : vector<4x1xf32> to vector<4x32xf32>
    %151 = arith.subf %143, %150 : vector<4x32xf32>
    %152 = arith.mulf %151, %151 : vector<4x32xf32>
    %cst_74 = arith.constant dense<0.000000e+00> : vector<4xf32>
    %153 = vector.multi_reduction <add>, %152, %cst_74 [1] : vector<4x32xf32> to vector<4xf32>
    %154 = vector.shape_cast %153 : vector<4xf32> to vector<4x1xf32>
    %cst_75 = arith.constant 0.0322580636 : f32
    %155 = vector.broadcast %cst_75 : f32 to vector<4x1xf32>
    %156 = arith.mulf %154, %155 : vector<4x1xf32>
    %157 = vector.broadcast %144 : vector<1x32xf32> to vector<4x32xf32>
    %158 = arith.mulf %157, %151 : vector<4x32xf32>
    %159 = math.sqrt %156 : vector<4x1xf32>
    %cst_76 = arith.constant 9.99999997E-7 : f32
    %160 = vector.broadcast %cst_76 : f32 to vector<4x1xf32>
    %161 = arith.addf %159, %160 : vector<4x1xf32>
    %162 = vector.broadcast %161 : vector<4x1xf32> to vector<4x32xf32>
    %163 = arith.divf %158, %162 : vector<4x32xf32>
    %164 = vector.broadcast %145 : vector<1x32xf32> to vector<4x32xf32>
    %165 = arith.addf %163, %164 : vector<4x32xf32>
    %c0_77 = arith.constant 0 : index
    %c0_78 = arith.constant 0 : index
    %c0_79 = arith.constant 0 : index
    %166 = vector.load %arg2[%c0_77, %c0_78, %c0_79] : memref<4x8x32xf32, #tpu.memory_space<vmem>>, vector<4x8x32xf32>
    %c0_80 = arith.constant 0 : index
    %c0_81 = arith.constant 0 : index
    %c0_82 = arith.constant 0 : index
    %167 = vector.load %arg5[%c0_80, %c0_81, %c0_82] : memref<4x1x8xf32, #tpu.memory_space<vmem>>, vector<4x1x8xf32>
    %168 = vector.shape_cast %166 : vector<4x8x32xf32> to vector<32x32xf32>
    %169 = arith.truncf %168 : vector<32x32xf32> to vector<32x32xbf16>
    %170 = arith.truncf %165 : vector<4x32xf32> to vector<4x32xbf16>
    %c0_83 = arith.constant 0 : index
    %c0_84 = arith.constant 0 : index
    %c0_85 = arith.constant 0 : index
    %171 = vector.load %arg14[%c0_83, %c0_84, %c0_85] : memref<3x32x32xbf16, #tpu.memory_space<vmem>>, vector<1x32x32xbf16>
    %172 = vector.shape_cast %171 : vector<1x32x32xbf16> to vector<32x32xbf16>
    %cst_86 = arith.constant dense<0.000000e+00> : vector<4x32xf32>
    %173 = tpu.matmul %170, %172, %cst_86 {dimension_numbers = #tpu.dot_dimension_numbers<[1], [0], [0], [1], [0, 0, 1, 1], [], []>} : vector<4x32xbf16>, vector<32x32xbf16>, vector<4x32xf32> -> vector<4x32xf32>
    %c0_87 = arith.constant 0 : index
    %c0_88 = arith.constant 0 : index
    %c0_89 = arith.constant 0 : index
    %174 = vector.load %arg15[%c0_87, %c0_88, %c0_89] : memref<3x1x32xf32, #tpu.memory_space<vmem>>, vector<1x1x32xf32>
    %175 = vector.shape_cast %174 : vector<1x1x32xf32> to vector<1x32xf32>
    %176 = vector.broadcast %175 : vector<1x32xf32> to vector<4x32xf32>
    %177 = arith.addf %173, %176 : vector<4x32xf32>
    %c1_90 = arith.constant 1 : index
    %c0_91 = arith.constant 0 : index
    %c0_92 = arith.constant 0 : index
    %178 = vector.load %arg14[%c1_90, %c0_91, %c0_92] : memref<3x32x32xbf16, #tpu.memory_space<vmem>>, vector<1x32x32xbf16>
    %179 = vector.shape_cast %178 : vector<1x32x32xbf16> to vector<32x32xbf16>
    %cst_93 = arith.constant dense<0.000000e+00> : vector<32x32xf32>
    %180 = tpu.matmul %169, %179, %cst_93 {dimension_numbers = #tpu.dot_dimension_numbers<[1], [0], [0], [1], [0, 0, 1, 1], [], []>} : vector<32x32xbf16>, vector<32x32xbf16>, vector<32x32xf32> -> vector<32x32xf32>
    %c1_94 = arith.constant 1 : index
    %c0_95 = arith.constant 0 : index
    %c0_96 = arith.constant 0 : index
    %181 = vector.load %arg15[%c1_94, %c0_95, %c0_96] : memref<3x1x32xf32, #tpu.memory_space<vmem>>, vector<1x1x32xf32>
    %182 = vector.shape_cast %181 : vector<1x1x32xf32> to vector<1x32xf32>
    %183 = vector.broadcast %182 : vector<1x32xf32> to vector<32x32xf32>
    %184 = arith.addf %180, %183 : vector<32x32xf32>
    %185 = vector.shape_cast %184 : vector<32x32xf32> to vector<4x8x32xf32>
    %c2_97 = arith.constant 2 : index
    %c0_98 = arith.constant 0 : index
    %c0_99 = arith.constant 0 : index
    %186 = vector.load %arg14[%c2_97, %c0_98, %c0_99] : memref<3x32x32xbf16, #tpu.memory_space<vmem>>, vector<1x32x32xbf16>
    %187 = vector.shape_cast %186 : vector<1x32x32xbf16> to vector<32x32xbf16>
    %cst_100 = arith.constant dense<0.000000e+00> : vector<32x32xf32>
    %188 = tpu.matmul %169, %187, %cst_100 {dimension_numbers = #tpu.dot_dimension_numbers<[1], [0], [0], [1], [0, 0, 1, 1], [], []>} : vector<32x32xbf16>, vector<32x32xbf16>, vector<32x32xf32> -> vector<32x32xf32>
    %c2_101 = arith.constant 2 : index
    %c0_102 = arith.constant 0 : index
    %c0_103 = arith.constant 0 : index
    %189 = vector.load %arg15[%c2_101, %c0_102, %c0_103] : memref<3x1x32xf32, #tpu.memory_space<vmem>>, vector<1x1x32xf32>
    %190 = vector.shape_cast %189 : vector<1x1x32xf32> to vector<1x32xf32>
    %191 = vector.broadcast %190 : vector<1x32xf32> to vector<32x32xf32>
    %192 = arith.addf %188, %191 : vector<32x32xf32>
    %193 = vector.shape_cast %192 : vector<32x32xf32> to vector<4x8x32xf32>
    %194 = vector.extract_strided_slice %177 {offsets = [0, 0], sizes = [4, 8], strides = [1, 1]} : vector<4x32xf32> to vector<4x8xf32>
    %195 = vector.shape_cast %194 : vector<4x8xf32> to vector<4x1x8xf32>
    %196 = vector.extract_strided_slice %185 {offsets = [0, 0, 0], sizes = [4, 8, 8], strides = [1, 1, 1]} : vector<4x8x32xf32> to vector<4x8x8xf32>
    %197 = vector.extract_strided_slice %193 {offsets = [0, 0, 0], sizes = [4, 8, 8], strides = [1, 1, 1]} : vector<4x8x32xf32> to vector<4x8x8xf32>
    "tpu.trace_start"() <{level = 10 : i32, message = "bqe,bke->bqk"}> : () -> ()
    %cst_104 = arith.constant dense<0.000000e+00> : vector<4x1x8xf32>
    %198 = tpu.matmul %195, %196, %cst_104 {dimension_numbers = #tpu.dot_dimension_numbers<[2], [2], [1], [1], [0, 0, 0, 1, 1, 1], [0], [0]>} : vector<4x1x8xf32>, vector<4x8x8xf32>, vector<4x1x8xf32> -> vector<4x1x8xf32>
    "tpu.trace_stop"() : () -> ()
    %cst_105 = arith.constant 0.353553385 : f32
    %199 = vector.broadcast %cst_105 : f32 to vector<4x1x8xf32>
    %200 = arith.mulf %198, %199 : vector<4x1x8xf32>
    %201 = arith.addf %200, %167 : vector<4x1x8xf32>
    %cst_106 = arith.constant dense<0xFF800000> : vector<4x1xf32>
    %202 = vector.multi_reduction <maximumf>, %201, %cst_106 [2] : vector<4x1x8xf32> to vector<4x1xf32>
    %203 = vector.shape_cast %202 : vector<4x1xf32> to vector<4x1x1xf32>
    %204 = vector.broadcast %203 : vector<4x1x1xf32> to vector<4x1x8xf32>
    %205 = arith.subf %201, %204 : vector<4x1x8xf32>
    %206 = math.exp %205 : vector<4x1x8xf32>
    %cst_107 = arith.constant dense<0.000000e+00> : vector<4x1xf32>
    %207 = vector.multi_reduction <add>, %206, %cst_107 [2] : vector<4x1x8xf32> to vector<4x1xf32>
    %208 = vector.shape_cast %207 : vector<4x1xf32> to vector<4x1x1xf32>
    %209 = vector.broadcast %208 : vector<4x1x1xf32> to vector<4x1x8xf32>
    %210 = arith.divf %206, %209 : vector<4x1x8xf32>
    "tpu.trace_start"() <{level = 10 : i32, message = "bqk,bkd->bqd"}> : () -> ()
    %cst_108 = arith.constant dense<0.000000e+00> : vector<4x1x8xf32>
    %211 = tpu.matmul %210, %197, %cst_108 {dimension_numbers = #tpu.dot_dimension_numbers<[2], [1], [1], [2], [0, 0, 0, 1, 1, 2], [0], [0]>} : vector<4x1x8xf32>, vector<4x8x8xf32>, vector<4x1x8xf32> -> vector<4x1x8xf32>
    "tpu.trace_stop"() : () -> ()
    %212 = vector.shape_cast %211 : vector<4x1x8xf32> to vector<4x8xf32>
    %213 = vector.extract_strided_slice %177 {offsets = [0, 8], sizes = [4, 8], strides = [1, 1]} : vector<4x32xf32> to vector<4x8xf32>
    %214 = vector.shape_cast %213 : vector<4x8xf32> to vector<4x1x8xf32>
    %215 = vector.extract_strided_slice %185 {offsets = [0, 0, 8], sizes = [4, 8, 8], strides = [1, 1, 1]} : vector<4x8x32xf32> to vector<4x8x8xf32>
    %216 = vector.extract_strided_slice %193 {offsets = [0, 0, 8], sizes = [4, 8, 8], strides = [1, 1, 1]} : vector<4x8x32xf32> to vector<4x8x8xf32>
    "tpu.trace_start"() <{level = 10 : i32, message = "bqe,bke->bqk"}> : () -> ()
    %cst_109 = arith.constant dense<0.000000e+00> : vector<4x1x8xf32>
    %217 = tpu.matmul %214, %215, %cst_109 {dimension_numbers = #tpu.dot_dimension_numbers<[2], [2], [1], [1], [0, 0, 0, 1, 1, 1], [0], [0]>} : vector<4x1x8xf32>, vector<4x8x8xf32>, vector<4x1x8xf32> -> vector<4x1x8xf32>
    "tpu.trace_stop"() : () -> ()
    %cst_110 = arith.constant 0.353553385 : f32
    %218 = vector.broadcast %cst_110 : f32 to vector<4x1x8xf32>
    %219 = arith.mulf %217, %218 : vector<4x1x8xf32>
    %220 = arith.addf %219, %167 : vector<4x1x8xf32>
    %cst_111 = arith.constant dense<0xFF800000> : vector<4x1xf32>
    %221 = vector.multi_reduction <maximumf>, %220, %cst_111 [2] : vector<4x1x8xf32> to vector<4x1xf32>
    %222 = vector.shape_cast %221 : vector<4x1xf32> to vector<4x1x1xf32>
    %223 = vector.broadcast %222 : vector<4x1x1xf32> to vector<4x1x8xf32>
    %224 = arith.subf %220, %223 : vector<4x1x8xf32>
    %225 = math.exp %224 : vector<4x1x8xf32>
    %cst_112 = arith.constant dense<0.000000e+00> : vector<4x1xf32>
    %226 = vector.multi_reduction <add>, %225, %cst_112 [2] : vector<4x1x8xf32> to vector<4x1xf32>
    %227 = vector.shape_cast %226 : vector<4x1xf32> to vector<4x1x1xf32>
    %228 = vector.broadcast %227 : vector<4x1x1xf32> to vector<4x1x8xf32>
    %229 = arith.divf %225, %228 : vector<4x1x8xf32>
    "tpu.trace_start"() <{level = 10 : i32, message = "bqk,bkd->bqd"}> : () -> ()
    %cst_113 = arith.constant dense<0.000000e+00> : vector<4x1x8xf32>
    %230 = tpu.matmul %229, %216, %cst_113 {dimension_numbers = #tpu.dot_dimension_numbers<[2], [1], [1], [2], [0, 0, 0, 1, 1, 2], [0], [0]>} : vector<4x1x8xf32>, vector<4x8x8xf32>, vector<4x1x8xf32> -> vector<4x1x8xf32>
    "tpu.trace_stop"() : () -> ()
    %231 = vector.shape_cast %230 : vector<4x1x8xf32> to vector<4x8xf32>
    %232 = vector.extract_strided_slice %177 {offsets = [0, 16], sizes = [4, 8], strides = [1, 1]} : vector<4x32xf32> to vector<4x8xf32>
    %233 = vector.shape_cast %232 : vector<4x8xf32> to vector<4x1x8xf32>
    %234 = vector.extract_strided_slice %185 {offsets = [0, 0, 16], sizes = [4, 8, 8], strides = [1, 1, 1]} : vector<4x8x32xf32> to vector<4x8x8xf32>
    %235 = vector.extract_strided_slice %193 {offsets = [0, 0, 16], sizes = [4, 8, 8], strides = [1, 1, 1]} : vector<4x8x32xf32> to vector<4x8x8xf32>
    "tpu.trace_start"() <{level = 10 : i32, message = "bqe,bke->bqk"}> : () -> ()
    %cst_114 = arith.constant dense<0.000000e+00> : vector<4x1x8xf32>
    %236 = tpu.matmul %233, %234, %cst_114 {dimension_numbers = #tpu.dot_dimension_numbers<[2], [2], [1], [1], [0, 0, 0, 1, 1, 1], [0], [0]>} : vector<4x1x8xf32>, vector<4x8x8xf32>, vector<4x1x8xf32> -> vector<4x1x8xf32>
    "tpu.trace_stop"() : () -> ()
    %cst_115 = arith.constant 0.353553385 : f32
    %237 = vector.broadcast %cst_115 : f32 to vector<4x1x8xf32>
    %238 = arith.mulf %236, %237 : vector<4x1x8xf32>
    %239 = arith.addf %238, %167 : vector<4x1x8xf32>
    %cst_116 = arith.constant dense<0xFF800000> : vector<4x1xf32>
    %240 = vector.multi_reduction <maximumf>, %239, %cst_116 [2] : vector<4x1x8xf32> to vector<4x1xf32>
    %241 = vector.shape_cast %240 : vector<4x1xf32> to vector<4x1x1xf32>
    %242 = vector.broadcast %241 : vector<4x1x1xf32> to vector<4x1x8xf32>
    %243 = arith.subf %239, %242 : vector<4x1x8xf32>
    %244 = math.exp %243 : vector<4x1x8xf32>
    %cst_117 = arith.constant dense<0.000000e+00> : vector<4x1xf32>
    %245 = vector.multi_reduction <add>, %244, %cst_117 [2] : vector<4x1x8xf32> to vector<4x1xf32>
    %246 = vector.shape_cast %245 : vector<4x1xf32> to vector<4x1x1xf32>
    %247 = vector.broadcast %246 : vector<4x1x1xf32> to vector<4x1x8xf32>
    %248 = arith.divf %244, %247 : vector<4x1x8xf32>
    "tpu.trace_start"() <{level = 10 : i32, message = "bqk,bkd->bqd"}> : () -> ()
    %cst_118 = arith.constant dense<0.000000e+00> : vector<4x1x8xf32>
    %249 = tpu.matmul %248, %235, %cst_118 {dimension_numbers = #tpu.dot_dimension_numbers<[2], [1], [1], [2], [0, 0, 0, 1, 1, 2], [0], [0]>} : vector<4x1x8xf32>, vector<4x8x8xf32>, vector<4x1x8xf32> -> vector<4x1x8xf32>
    "tpu.trace_stop"() : () -> ()
    %250 = vector.shape_cast %249 : vector<4x1x8xf32> to vector<4x8xf32>
    %251 = vector.extract_strided_slice %177 {offsets = [0, 24], sizes = [4, 8], strides = [1, 1]} : vector<4x32xf32> to vector<4x8xf32>
    %252 = vector.shape_cast %251 : vector<4x8xf32> to vector<4x1x8xf32>
    %253 = vector.extract_strided_slice %185 {offsets = [0, 0, 24], sizes = [4, 8, 8], strides = [1, 1, 1]} : vector<4x8x32xf32> to vector<4x8x8xf32>
    %254 = vector.extract_strided_slice %193 {offsets = [0, 0, 24], sizes = [4, 8, 8], strides = [1, 1, 1]} : vector<4x8x32xf32> to vector<4x8x8xf32>
    "tpu.trace_start"() <{level = 10 : i32, message = "bqe,bke->bqk"}> : () -> ()
    %cst_119 = arith.constant dense<0.000000e+00> : vector<4x1x8xf32>
    %255 = tpu.matmul %252, %253, %cst_119 {dimension_numbers = #tpu.dot_dimension_numbers<[2], [2], [1], [1], [0, 0, 0, 1, 1, 1], [0], [0]>} : vector<4x1x8xf32>, vector<4x8x8xf32>, vector<4x1x8xf32> -> vector<4x1x8xf32>
    "tpu.trace_stop"() : () -> ()
    %cst_120 = arith.constant 0.353553385 : f32
    %256 = vector.broadcast %cst_120 : f32 to vector<4x1x8xf32>
    %257 = arith.mulf %255, %256 : vector<4x1x8xf32>
    %258 = arith.addf %257, %167 : vector<4x1x8xf32>
    %cst_121 = arith.constant dense<0xFF800000> : vector<4x1xf32>
    %259 = vector.multi_reduction <maximumf>, %258, %cst_121 [2] : vector<4x1x8xf32> to vector<4x1xf32>
    %260 = vector.shape_cast %259 : vector<4x1xf32> to vector<4x1x1xf32>
    %261 = vector.broadcast %260 : vector<4x1x1xf32> to vector<4x1x8xf32>
    %262 = arith.subf %258, %261 : vector<4x1x8xf32>
    %263 = math.exp %262 : vector<4x1x8xf32>
    %cst_122 = arith.constant dense<0.000000e+00> : vector<4x1xf32>
    %264 = vector.multi_reduction <add>, %263, %cst_122 [2] : vector<4x1x8xf32> to vector<4x1xf32>
    %265 = vector.shape_cast %264 : vector<4x1xf32> to vector<4x1x1xf32>
    %266 = vector.broadcast %265 : vector<4x1x1xf32> to vector<4x1x8xf32>
    %267 = arith.divf %263, %266 : vector<4x1x8xf32>
    "tpu.trace_start"() <{level = 10 : i32, message = "bqk,bkd->bqd"}> : () -> ()
    %cst_123 = arith.constant dense<0.000000e+00> : vector<4x1x8xf32>
    %268 = tpu.matmul %267, %254, %cst_123 {dimension_numbers = #tpu.dot_dimension_numbers<[2], [1], [1], [2], [0, 0, 0, 1, 1, 2], [0], [0]>} : vector<4x1x8xf32>, vector<4x8x8xf32>, vector<4x1x8xf32> -> vector<4x1x8xf32>
    "tpu.trace_stop"() : () -> ()
    %269 = vector.shape_cast %268 : vector<4x1x8xf32> to vector<4x8xf32>
    %270 = tpu.concatenate %212, %231, %250, %269 in 1 : vector<4x8xf32>, vector<4x8xf32>, vector<4x8xf32>, vector<4x8xf32> -> vector<4x32xf32>
    %271 = arith.truncf %270 : vector<4x32xf32> to vector<4x32xbf16>
    %c0_124 = arith.constant 0 : index
    %c0_125 = arith.constant 0 : index
    %272 = vector.load %arg16[%c0_124, %c0_125] : memref<32x32xbf16, #tpu.memory_space<vmem>>, vector<32x32xbf16>
    %cst_126 = arith.constant dense<0.000000e+00> : vector<4x32xf32>
    %273 = tpu.matmul %271, %272, %cst_126 {dimension_numbers = #tpu.dot_dimension_numbers<[1], [0], [0], [1], [0, 0, 1, 1], [], []>} : vector<4x32xbf16>, vector<32x32xbf16>, vector<4x32xf32> -> vector<4x32xf32>
    %c0_127 = arith.constant 0 : index
    %c0_128 = arith.constant 0 : index
    %274 = vector.load %arg17[%c0_127, %c0_128] : memref<1x32xf32, #tpu.memory_space<vmem>>, vector<1x32xf32>
    %275 = vector.broadcast %274 : vector<1x32xf32> to vector<4x32xf32>
    %276 = arith.addf %273, %275 : vector<4x32xf32>
    %277 = arith.addf %143, %276 : vector<4x32xf32>
    %c0_129 = arith.constant 0 : index
    %c0_130 = arith.constant 0 : index
    %278 = vector.load %arg18[%c0_129, %c0_130] : memref<1x32xf32, #tpu.memory_space<vmem>>, vector<1x32xf32>
    %c0_131 = arith.constant 0 : index
    %c0_132 = arith.constant 0 : index
    %279 = vector.load %arg19[%c0_131, %c0_132] : memref<1x32xf32, #tpu.memory_space<vmem>>, vector<1x32xf32>
    %cst_133 = arith.constant dense<0.000000e+00> : vector<4xf32>
    %280 = vector.multi_reduction <add>, %277, %cst_133 [1] : vector<4x32xf32> to vector<4xf32>
    %281 = vector.shape_cast %280 : vector<4xf32> to vector<4x1xf32>
    %cst_134 = arith.constant 3.200000e+01 : f32
    %282 = vector.broadcast %cst_134 : f32 to vector<4x1xf32>
    %283 = arith.divf %281, %282 : vector<4x1xf32>
    %284 = vector.broadcast %283 : vector<4x1xf32> to vector<4x32xf32>
    %285 = arith.subf %277, %284 : vector<4x32xf32>
    %286 = arith.mulf %285, %285 : vector<4x32xf32>
    %cst_135 = arith.constant dense<0.000000e+00> : vector<4xf32>
    %287 = vector.multi_reduction <add>, %286, %cst_135 [1] : vector<4x32xf32> to vector<4xf32>
    %288 = vector.shape_cast %287 : vector<4xf32> to vector<4x1xf32>
    %cst_136 = arith.constant 0.0322580636 : f32
    %289 = vector.broadcast %cst_136 : f32 to vector<4x1xf32>
    %290 = arith.mulf %288, %289 : vector<4x1xf32>
    %291 = vector.broadcast %278 : vector<1x32xf32> to vector<4x32xf32>
    %292 = arith.mulf %291, %285 : vector<4x32xf32>
    %293 = math.sqrt %290 : vector<4x1xf32>
    %cst_137 = arith.constant 9.99999997E-7 : f32
    %294 = vector.broadcast %cst_137 : f32 to vector<4x1xf32>
    %295 = arith.addf %293, %294 : vector<4x1xf32>
    %296 = vector.broadcast %295 : vector<4x1xf32> to vector<4x32xf32>
    %297 = arith.divf %292, %296 : vector<4x32xf32>
    %298 = vector.broadcast %279 : vector<1x32xf32> to vector<4x32xf32>
    %299 = arith.addf %297, %298 : vector<4x32xf32>
    %300 = arith.truncf %299 : vector<4x32xf32> to vector<4x32xbf16>
    %c0_138 = arith.constant 0 : index
    %c0_139 = arith.constant 0 : index
    %301 = vector.load %arg20[%c0_138, %c0_139] : memref<32x64xbf16, #tpu.memory_space<vmem>>, vector<32x64xbf16>
    %cst_140 = arith.constant dense<0.000000e+00> : vector<4x64xf32>
    %302 = tpu.matmul %300, %301, %cst_140 {dimension_numbers = #tpu.dot_dimension_numbers<[1], [0], [0], [1], [0, 0, 1, 1], [], []>} : vector<4x32xbf16>, vector<32x64xbf16>, vector<4x64xf32> -> vector<4x64xf32>
    %c0_141 = arith.constant 0 : index
    %c0_142 = arith.constant 0 : index
    %303 = vector.load %arg21[%c0_141, %c0_142] : memref<1x64xf32, #tpu.memory_space<vmem>>, vector<1x64xf32>
    %304 = vector.broadcast %303 : vector<1x64xf32> to vector<4x64xf32>
    %305 = arith.addf %302, %304 : vector<4x64xf32>
    %cst_143 = arith.constant 0.000000e+00 : f32
    %306 = vector.broadcast %cst_143 : f32 to vector<4x64xf32>
    %307 = arith.maximumf %305, %306 : vector<4x64xf32>
    %308 = arith.truncf %307 : vector<4x64xf32> to vector<4x64xbf16>
    %c0_144 = arith.constant 0 : index
    %c0_145 = arith.constant 0 : index
    %309 = vector.load %arg22[%c0_144, %c0_145] : memref<64x32xbf16, #tpu.memory_space<vmem>>, vector<64x32xbf16>
    %cst_146 = arith.constant dense<0.000000e+00> : vector<4x32xf32>
    %310 = tpu.matmul %308, %309, %cst_146 {dimension_numbers = #tpu.dot_dimension_numbers<[1], [0], [0], [1], [0, 0, 1, 1], [], []>} : vector<4x64xbf16>, vector<64x32xbf16>, vector<4x32xf32> -> vector<4x32xf32>
    %c0_147 = arith.constant 0 : index
    %c0_148 = arith.constant 0 : index
    %311 = vector.load %arg23[%c0_147, %c0_148] : memref<1x32xf32, #tpu.memory_space<vmem>>, vector<1x32xf32>
    %312 = vector.broadcast %311 : vector<1x32xf32> to vector<4x32xf32>
    %313 = arith.addf %310, %312 : vector<4x32xf32>
    %314 = arith.addf %277, %313 : vector<4x32xf32>
    %315 = vector.shape_cast %314 : vector<4x32xf32> to vector<4x1x32xf32>
    %c0_149 = arith.constant 0 : index
    %c0_150 = arith.constant 0 : index
    %c0_151 = arith.constant 0 : index
    %316 = vector.load %arg24[%c0_149, %c0_150, %c0_151] : memref<4x1x32xf32, #tpu.memory_space<vmem>>, vector<4x1x32xf32>
    tpu.vector_store %arg24[%c0_149, %c0_150, %c0_151], %315 {strides = array<i32>} : memref<4x1x32xf32, #tpu.memory_space<vmem>>, vector<4x1x32xf32>,
    return
  }
  func.func @transform_0(%arg0: i32) -> (i32, i32, i32) {
    %c0_i32 = arith.constant 0 : i32
    %c0_i32_0 = arith.constant 0 : i32
    %c0_i32_1 = arith.constant 0 : i32
    return %arg0, %c0_i32, %c0_i32_0 : i32, i32, i32
  }
  func.func @transform_1(%arg0: i32) -> (i32, i32, i32) {
    %c0_i32 = arith.constant 0 : i32
    %c0_i32_0 = arith.constant 0 : i32
    %c0_i32_1 = arith.constant 0 : i32
    return %arg0, %c0_i32, %c0_i32_0 : i32, i32, i32
  }
  func.func @transform_2(%arg0: i32) -> (i32, i32, i32) {
    %c0_i32 = arith.constant 0 : i32
    %c0_i32_0 = arith.constant 0 : i32
    %c0_i32_1 = arith.constant 0 : i32
    return %arg0, %c0_i32, %c0_i32_0 : i32, i32, i32
  }
  func.func @transform_3(%arg0: i32) -> (i32, i32, i32) {
    %c0_i32 = arith.constant 0 : i32
    %c0_i32_0 = arith.constant 0 : i32
    %c0_i32_1 = arith.constant 0 : i32
    return %arg0, %c0_i32, %c0_i32_0 : i32, i32, i32
  }
  func.func @transform_4(%arg0: i32) -> (i32, i32, i32) {
    %c0_i32 = arith.constant 0 : i32
    %c0_i32_0 = arith.constant 0 : i32
    %c0_i32_1 = arith.constant 0 : i32
    return %arg0, %c0_i32, %c0_i32_0 : i32, i32, i32
  }
  func.func @transform_5(%arg0: i32) -> (i32, i32) {
    %c0_i32 = arith.constant 0 : i32
    %c0_i32_0 = arith.constant 0 : i32
    %c0_i32_1 = arith.constant 0 : i32
    return %c0_i32, %c0_i32_0 : i32, i32
  }
  func.func @transform_6(%arg0: i32) -> (i32, i32) {
    %c0_i32 = arith.constant 0 : i32
    %c0_i32_0 = arith.constant 0 : i32
    %c0_i32_1 = arith.constant 0 : i32
    return %c0_i32, %c0_i32_0 : i32, i32
  }
  func.func @transform_7(%arg0: i32) -> (i32, i32, i32) {
    %c0_i32 = arith.constant 0 : i32
    %c0_i32_0 = arith.constant 0 : i32
    %c0_i32_1 = arith.constant 0 : i32
    %c0_i32_2 = arith.constant 0 : i32
    return %c0_i32, %c0_i32_0, %c0_i32_1 : i32, i32, i32
  }
  func.func @transform_8(%arg0: i32) -> (i32, i32, i32) {
    %c0_i32 = arith.constant 0 : i32
    %c0_i32_0 = arith.constant 0 : i32
    %c0_i32_1 = arith.constant 0 : i32
    %c0_i32_2 = arith.constant 0 : i32
    return %c0_i32, %c0_i32_0, %c0_i32_1 : i32, i32, i32
  }
  func.func @transform_9(%arg0: i32) -> (i32, i32) {
    %c0_i32 = arith.constant 0 : i32
    %c0_i32_0 = arith.constant 0 : i32
    %c0_i32_1 = arith.constant 0 : i32
    return %c0_i32, %c0_i32_0 : i32, i32
  }
  func.func @transform_10(%arg0: i32) -> (i32, i32) {
    %c0_i32 = arith.constant 0 : i32
    %c0_i32_0 = arith.constant 0 : i32
    %c0_i32_1 = arith.constant 0 : i32
    return %c0_i32, %c0_i32_0 : i32, i32
  }
  func.func @transform_11(%arg0: i32) -> (i32, i32) {
    %c0_i32 = arith.constant 0 : i32
    %c0_i32_0 = arith.constant 0 : i32
    %c0_i32_1 = arith.constant 0 : i32
    return %c0_i32, %c0_i32_0 : i32, i32
  }
  func.func @transform_12(%arg0: i32) -> (i32, i32) {
    %c0_i32 = arith.constant 0 : i32
    %c0_i32_0 = arith.constant 0 : i32
    %c0_i32_1 = arith.constant 0 : i32
    return %c0_i32, %c0_i32_0 : i32, i32
  }
  func.func @transform_13(%arg0: i32) -> (i32, i32, i32) {
    %c0_i32 = arith.constant 0 : i32
    %c0_i32_0 = arith.constant 0 : i32
    %c0_i32_1 = arith.constant 0 : i32
    %c0_i32_2 = arith.constant 0 : i32
    return %c0_i32, %c0_i32_0, %c0_i32_1 : i32, i32, i32
  }
  func.func @transform_14(%arg0: i32) -> (i32, i32, i32) {
    %c0_i32 = arith.constant 0 : i32
    %c0_i32_0 = arith.constant 0 : i32
    %c0_i32_1 = arith.constant 0 : i32
    %c0_i32_2 = arith.constant 0 : i32
    return %c0_i32, %c0_i32_0, %c0_i32_1 : i32, i32, i32
  }
  func.func @transform_15(%arg0: i32) -> (i32, i32) {
    %c0_i32 = arith.constant 0 : i32
    %c0_i32_0 = arith.constant 0 : i32
    %c0_i32_1 = arith.constant 0 : i32
    return %c0_i32, %c0_i32_0 : i32, i32
  }
  func.func @transform_16(%arg0: i32) -> (i32, i32) {
    %c0_i32 = arith.constant 0 : i32
    %c0_i32_0 = arith.constant 0 : i32
    %c0_i32_1 = arith.constant 0 : i32
    return %c0_i32, %c0_i32_0 : i32, i32
  }
  func.func @transform_17(%arg0: i32) -> (i32, i32) {
    %c0_i32 = arith.constant 0 : i32
    %c0_i32_0 = arith.constant 0 : i32
    %c0_i32_1 = arith.constant 0 : i32
    return %c0_i32, %c0_i32_0 : i32, i32
  }
  func.func @transform_18(%arg0: i32) -> (i32, i32) {
    %c0_i32 = arith.constant 0 : i32
    %c0_i32_0 = arith.constant 0 : i32
    %c0_i32_1 = arith.constant 0 : i32
    return %c0_i32, %c0_i32_0 : i32, i32
  }
  func.func @transform_19(%arg0: i32) -> (i32, i32) {
    %c0_i32 = arith.constant 0 : i32
    %c0_i32_0 = arith.constant 0 : i32
    %c0_i32_1 = arith.constant 0 : i32
    return %c0_i32, %c0_i32_0 : i32, i32
  }
  func.func @transform_20(%arg0: i32) -> (i32, i32) {
    %c0_i32 = arith.constant 0 : i32
    %c0_i32_0 = arith.constant 0 : i32
    %c0_i32_1 = arith.constant 0 : i32
    return %c0_i32, %c0_i32_0 : i32, i32
  }
  func.func @transform_21(%arg0: i32) -> (i32, i32) {
    %c0_i32 = arith.constant 0 : i32
    %c0_i32_0 = arith.constant 0 : i32
    %c0_i32_1 = arith.constant 0 : i32
    return %c0_i32, %c0_i32_0 : i32, i32
  }
  func.func @transform_22(%arg0: i32) -> (i32, i32) {
    %c0_i32 = arith.constant 0 : i32
    %c0_i32_0 = arith.constant 0 : i32
    %c0_i32_1 = arith.constant 0 : i32
    return %c0_i32, %c0_i32_0 : i32, i32
  }
  func.func @transform_23(%arg0: i32) -> (i32, i32, i32) {
    %c0_i32 = arith.constant 0 : i32
    %c0_i32_0 = arith.constant 0 : i32
    %c0_i32_1 = arith.constant 0 : i32
    return %arg0, %c0_i32, %c0_i32_0 : i32, i32, i32
  }
}

</mosaic_0001>

<llo_original>
// kernel: decoder_layer.1
$region0: #{decoder_layer.1}
  #allocation0 [shape = 'u32[]', space=smem, size = 0x4, offset = 0x4, fixed_abs, tag = 'smem constant byte address 0x4 - core index']
  #allocation1 [shape = 'u32[144,128]{1,0:T(1,128)}', space=vmem, size = 0x12000, scoped, tag = 'internal scratch']
  #allocation2 [shape = 'f32[4,16,32]{2,1,0:T(8,128)}', space=vmem, size = 0x8000, scoped, tag = 'scratch operand']
  %s0 = inlined_call_operand.vmem [shape: f32[8,8,32], index: 0, kind: input, shape index: {}]
  %s1 = inlined_call_operand.vmem [shape: f32[8,8,32], index: 1, kind: input, shape index: {}]
  %s2 = inlined_call_operand.vmem [shape: f32[8,8,32], index: 2, kind: input, shape index: {}]
  %s3 = inlined_call_operand.vmem [shape: f32[8,1,16], index: 3, kind: input, shape index: {}]
  %s4 = inlined_call_operand.vmem [shape: f32[8,1,8], index: 4, kind: input, shape index: {}]
  %s5 = inlined_call_operand.vmem [shape: f32[1,32], index: 5, kind: input, shape index: {}]
  %s6 = inlined_call_operand.vmem [shape: f32[1,32], index: 6, kind: input, shape index: {}]
  %s7 = inlined_call_operand.vmem [shape: bf16[3,32,32], index: 7, kind: input, shape index: {}]
  %s8 = inlined_call_operand.vmem [shape: f32[3,1,32], index: 8, kind: input, shape index: {}]
  %s9 = inlined_call_operand.vmem [shape: bf16[32,32], index: 9, kind: input, shape index: {}]
  %s10 = inlined_call_operand.vmem [shape: f32[1,32], index: 10, kind: input, shape index: {}]
  %s11 = inlined_call_operand.vmem [shape: f32[1,32], index: 11, kind: input, shape index: {}]
  %s12 = inlined_call_operand.vmem [shape: f32[1,32], index: 12, kind: input, shape index: {}]
  %s13 = inlined_call_operand.vmem [shape: bf16[3,32,32], index: 13, kind: input, shape index: {}]
  %s14 = inlined_call_operand.vmem [shape: f32[3,1,32], index: 14, kind: input, shape index: {}]
  %s15 = inlined_call_operand.vmem [shape: bf16[32,32], index: 15, kind: input, shape index: {}]
  %s16 = inlined_call_operand.vmem [shape: f32[1,32], index: 16, kind: input, shape index: {}]
  %s17 = inlined_call_operand.vmem [shape: f32[1,32], index: 17, kind: input, shape index: {}]
  %s18 = inlined_call_operand.vmem [shape: f32[1,32], index: 18, kind: input, shape index: {}]
  %s19 = inlined_call_operand.vmem [shape: bf16[32,64], index: 19, kind: input, shape index: {}]
  %s20 = inlined_call_operand.vmem [shape: f32[1,64], index: 20, kind: input, shape index: {}]
  %s21 = inlined_call_operand.vmem [shape: bf16[64,32], index: 21, kind: input, shape index: {}]
  %s22 = inlined_call_operand.vmem [shape: f32[1,32], index: 22, kind: input, shape index: {}]
  %s23 = inlined_call_operand.hbm [shape: f32[8,1,32], index: 23, kind: output, shape index: {}]
  %s24 = sld [smem:[#allocation0]]
  $region125: #{decoder_layer.1} parent=0
    _
  %s26 = ssub.s32 1, %s24
  %s27 = scalar_select 0, %s26, %s24
  $region1: #{decoder_layer.1} parent=0
    #allocation3 [shape = 'u8[4096]{0}', space=vmem, size = 0x1000, scoped, tag = 'output window, operand 0']
    #allocation4 [shape = 's32[2]{0}', space=sflag, size = 0x8, scoped, tag = 'scoped memory for decoder_layer.1']
    %28 = vsyncpa [#allocation4], 0
    %s29 = scalar_lea.sflag [#allocation4], 1
    %30 = vsyncpa %s29, 0
    loop: start=0, step=1, limit=4
    $region2: #{decoder_layer.1} parent=1 // loop_pre_header
      _
    $region3: #{decoder_layer.1} parent=1 // loop_header
      %s32 = sphi 0, %s36
      %p33 = scmp.ge.s32.totalorder %s32, 4
      %s42 = sphi 0, %s44
      %s45 = sphi 0, %s42
      %s46 = sphi 0, %s45
      %s62 = sphi 0, %s46
      %s68 = sphi 0, %s70
      %s71 = sphi 0, %s68
      %s72 = sphi 0, %s71
      %s88 = sphi 0, %s72
      %s94 = sphi 0, %s96
      %s97 = sphi 0, %s94
      %s98 = sphi 0, %s97
      %s114 = sphi 0, %s98
      %s120 = sphi 0, %s122
      %s123 = sphi 0, %s120
      %s124 = sphi 0, %s123
      %s140 = sphi 0, %s124
      %s146 = sphi 0, %s148
      %s149 = sphi 0, %s146
      %s150 = sphi 0, %s149
      %s166 = sphi 0, %s150
      %s170 = sphi 0, %s170
      %s172 = sphi 0, %s170
      %s173 = sphi 0, %s172
      %s187 = sphi 0, %s173
      %s191 = sphi 0, %s191
      %s193 = sphi 0, %s191
      %s194 = sphi 0, %s193
      %s208 = sphi 0, %s194
      %s212 = sphi 0, %s212
      %s214 = sphi 0, %s212
      %s215 = sphi 0, %s214
      %s229 = sphi 0, %s215
      %s233 = sphi 0, %s233
      %s235 = sphi 0, %s233
      %s236 = sphi 0, %s235
      %s250 = sphi 0, %s236
      %s254 = sphi 0, %s254
      %s256 = sphi 0, %s254
      %s257 = sphi 0, %s256
      %s271 = sphi 0, %s257
      %s275 = sphi 0, %s275
      %s277 = sphi 0, %s275
      %s278 = sphi 0, %s277
      %s292 = sphi 0, %s278
      %s296 = sphi 0, %s296
      %s298 = sphi 0, %s296
      %s299 = sphi 0, %s298
      %s313 = sphi 0, %s299
      %s317 = sphi 0, %s317
      %s319 = sphi 0, %s317
      %s320 = sphi 0, %s319
      %s334 = sphi 0, %s320
      %s338 = sphi 0, %s338
      %s340 = sphi 0, %s338
      %s341 = sphi 0, %s340
      %s355 = sphi 0, %s341
      %s359 = sphi 0, %s359
      %s361 = sphi 0, %s359
      %s362 = sphi 0, %s361
      %s376 = sphi 0, %s362
      %s380 = sphi 0, %s380
      %s382 = sphi 0, %s380
      %s383 = sphi 0, %s382
      %s397 = sphi 0, %s383
      %s401 = sphi 0, %s401
      %s403 = sphi 0, %s401
      %s404 = sphi 0, %s403
      %s418 = sphi 0, %s404
      %s422 = sphi 0, %s422
      %s424 = sphi 0, %s422
      %s425 = sphi 0, %s424
      %s439 = sphi 0, %s425
      %s443 = sphi 0, %s443
      %s445 = sphi 0, %s443
      %s446 = sphi 0, %s445
      %s460 = sphi 0, %s446
      %s464 = sphi 0, %s464
      %s466 = sphi 0, %s464
      %s467 = sphi 0, %s466
      %s481 = sphi 0, %s467
      %s485 = sphi 0, %s485
      %s487 = sphi 0, %s485
      %s488 = sphi 0, %s487
      %s502 = sphi 0, %s488
      %s506 = sphi 0, %s506
      %s508 = sphi 0, %s506
      %s509 = sphi 0, %s508
      %s523 = sphi 0, %s509
      %s527 = sphi 0, %s527
      %s529 = sphi 0, %s527
      %s530 = sphi 0, %s529
      %s544 = sphi 0, %s530
      %s550 = sphi 0, %s552
      %s553 = sphi 0, %s550
      %s554 = sphi 0, %s553
      %s570 = sphi 0, %s554
    $region4: #{decoder_layer.1} parent=1 // loop_header_branch
      %35 = sbr.rel (%p33) target = $region8
    $region5: #{decoder_layer.1} parent=1 // loop_body
      %s37 = ssub.s32 %s32, 1
      %s38 = ssub.s32 %s32, 2
      %s39 = sadd.s32 %s32, 1
      %s40 = ssub.s32 %s32, %s39
      %p41 = scmp.eq.s32.totalorder %s40, 0
      %s43 = sadd.s32 %s42, 1
      %s44 = scalar_select %p41, %s42, %s43
      %p47 = pneg %p41
      %p48 = scmp.eq.s32.totalorder %s32, 1
      %p49 = por %p47, %p48
      %p50 = scmp.ne.s32.totalorder %s42, %s45
      %p51 = scmp.eq.s32.totalorder %s32, 0
      %p52 = por %p50, %p51
      %p53 = scmp.ne.s32.totalorder %s42, %s45
      %p54 = scmp.eq.s32.totalorder %s37, 1
      %p55 = por %p53, %p54
      %p56 = scmp.ne.s32.totalorder %s45, %s46
      %p57 = scmp.eq.s32.totalorder %s37, 0
      %p58 = por %p56, %p57
      %p59 = scmp.ne.s32.totalorder %s45, %s46
      %p60 = scmp.eq.s32.totalorder %s38, 1
      %p61 = por %p59, %p60
      %p63 = scmp.ne.s32.totalorder %s46, %s62
      %p64 = scmp.eq.s32.totalorder %s38, 0
      %p65 = por %p63, %p64
      %s66 = ssub.s32 %s32, %s39
      %p67 = scmp.eq.s32.totalorder %s66, 0
      %s69 = sadd.s32 %s68, 1
      %s70 = scalar_select %p67, %s68, %s69
      %p73 = pneg %p67
      %p74 = scmp.eq.s32.totalorder %s32, 1
      %p75 = por %p73, %p74
      %p76 = scmp.ne.s32.totalorder %s68, %s71
      %p77 = scmp.eq.s32.totalorder %s32, 0
      %p78 = por %p76, %p77
      %p79 = scmp.ne.s32.totalorder %s68, %s71
      %p80 = scmp.eq.s32.totalorder %s37, 1
      %p81 = por %p79, %p80
      %p82 = scmp.ne.s32.totalorder %s71, %s72
      %p83 = scmp.eq.s32.totalorder %s37, 0
      %p84 = por %p82, %p83
      %p85 = scmp.ne.s32.totalorder %s71, %s72
      %p86 = scmp.eq.s32.totalorder %s38, 1
      %p87 = por %p85, %p86
      %p89 = scmp.ne.s32.totalorder %s72, %s88
      %p90 = scmp.eq.s32.totalorder %s38, 0
      %p91 = por %p89, %p90
      %s92 = ssub.s32 %s32, %s39
      %p93 = scmp.eq.s32.totalorder %s92, 0
      %s95 = sadd.s32 %s94, 1
      %s96 = scalar_select %p93, %s94, %s95
      %p99 = pneg %p93
      %p100 = scmp.eq.s32.totalorder %s32, 1
      %p101 = por %p99, %p100
      %p102 = scmp.ne.s32.totalorder %s94, %s97
      %p103 = scmp.eq.s32.totalorder %s32, 0
      %p104 = por %p102, %p103
      %p105 = scmp.ne.s32.totalorder %s94, %s97
      %p106 = scmp.eq.s32.totalorder %s37, 1
      %p107 = por %p105, %p106
      %p108 = scmp.ne.s32.totalorder %s97, %s98
      %p109 = scmp.eq.s32.totalorder %s37, 0
      %p110 = por %p108, %p109
      %p111 = scmp.ne.s32.totalorder %s97, %s98
      %p112 = scmp.eq.s32.totalorder %s38, 1
      %p113 = por %p111, %p112
      %p115 = scmp.ne.s32.totalorder %s98, %s114
      %p116 = scmp.eq.s32.totalorder %s38, 0
      %p117 = por %p115, %p116
      %s118 = ssub.s32 %s32, %s39
      %p119 = scmp.eq.s32.totalorder %s118, 0
      %s121 = sadd.s32 %s120, 1
      %s122 = scalar_select %p119, %s120, %s121
      %p125 = pneg %p119
      %p126 = scmp.eq.s32.totalorder %s32, 1
      %p127 = por %p125, %p126
      %p128 = scmp.ne.s32.totalorder %s120, %s123
      %p129 = scmp.eq.s32.totalorder %s32, 0
      %p130 = por %p128, %p129
      %p131 = scmp.ne.s32.totalorder %s120, %s123
      %p132 = scmp.eq.s32.totalorder %s37, 1
      %p133 = por %p131, %p132
      %p134 = scmp.ne.s32.totalorder %s123, %s124
      %p135 = scmp.eq.s32.totalorder %s37, 0
      %p136 = por %p134, %p135
      %p137 = scmp.ne.s32.totalorder %s123, %s124
      %p138 = scmp.eq.s32.totalorder %s38, 1
      %p139 = por %p137, %p138
      %p141 = scmp.ne.s32.totalorder %s124, %s140
      %p142 = scmp.eq.s32.totalorder %s38, 0
      %p143 = por %p141, %p142
      %s144 = ssub.s32 %s32, %s39
      %p145 = scmp.eq.s32.totalorder %s144, 0
      %s147 = sadd.s32 %s146, 1
      %s148 = scalar_select %p145, %s146, %s147
      %p151 = pneg %p145
      %p152 = scmp.eq.s32.totalorder %s32, 1
      %p153 = por %p151, %p152
      %p154 = scmp.ne.s32.totalorder %s146, %s149
      %p155 = scmp.eq.s32.totalorder %s32, 0
      %p156 = por %p154, %p155
      %p157 = scmp.ne.s32.totalorder %s146, %s149
      %p158 = scmp.eq.s32.totalorder %s37, 1
      %p159 = por %p157, %p158
      %p160 = scmp.ne.s32.totalorder %s149, %s150
      %p161 = scmp.eq.s32.totalorder %s37, 0
      %p162 = por %p160, %p161
      %p163 = scmp.ne.s32.totalorder %s149, %s150
      %p164 = scmp.eq.s32.totalorder %s38, 1
      %p165 = por %p163, %p164
      %p167 = scmp.ne.s32.totalorder %s150, %s166
      %p168 = scmp.eq.s32.totalorder %s38, 0
      %p169 = por %p167, %p168
      %s171 = sadd.s32 %s170, 1
      %p174 = scmp.eq.s32.totalorder %s32, 1
      %p175 = scmp.ne.s32.totalorder %s170, %s172
      %p176 = scmp.eq.s32.totalorder %s32, 0
      %p177 = por %p175, %p176
      %p178 = scmp.ne.s32.totalorder %s170, %s172
      %p179 = scmp.eq.s32.totalorder %s37, 1
      %p180 = por %p178, %p179
      %p181 = scmp.ne.s32.totalorder %s172, %s173
      %p182 = scmp.eq.s32.totalorder %s37, 0
      %p183 = por %p181, %p182
      %p184 = scmp.ne.s32.totalorder %s172, %s173
      %p185 = scmp.eq.s32.totalorder %s38, 1
      %p186 = por %p184, %p185
      %p188 = scmp.ne.s32.totalorder %s173, %s187
      %p189 = scmp.eq.s32.totalorder %s38, 0
      %p190 = por %p188, %p189
      %s192 = sadd.s32 %s191, 1
      %p195 = scmp.eq.s32.totalorder %s32, 1
      %p196 = scmp.ne.s32.totalorder %s191, %s193
      %p197 = scmp.eq.s32.totalorder %s32, 0
      %p198 = por %p196, %p197
      %p199 = scmp.ne.s32.totalorder %s191, %s193
      %p200 = scmp.eq.s32.totalorder %s37, 1
      %p201 = por %p199, %p200
      %p202 = scmp.ne.s32.totalorder %s193, %s194
      %p203 = scmp.eq.s32.totalorder %s37, 0
      %p204 = por %p202, %p203
      %p205 = scmp.ne.s32.totalorder %s193, %s194
      %p206 = scmp.eq.s32.totalorder %s38, 1
      %p207 = por %p205, %p206
      %p209 = scmp.ne.s32.totalorder %s194, %s208
      %p210 = scmp.eq.s32.totalorder %s38, 0
      %p211 = por %p209, %p210
      %s213 = sadd.s32 %s212, 1
      %p216 = scmp.eq.s32.totalorder %s32, 1
      %p217 = scmp.ne.s32.totalorder %s212, %s214
      %p218 = scmp.eq.s32.totalorder %s32, 0
      %p219 = por %p217, %p218
      %p220 = scmp.ne.s32.totalorder %s212, %s214
      %p221 = scmp.eq.s32.totalorder %s37, 1
      %p222 = por %p220, %p221
      %p223 = scmp.ne.s32.totalorder %s214, %s215
      %p224 = scmp.eq.s32.totalorder %s37, 0
      %p225 = por %p223, %p224
      %p226 = scmp.ne.s32.totalorder %s214, %s215
      %p227 = scmp.eq.s32.totalorder %s38, 1
      %p228 = por %p226, %p227
      %p230 = scmp.ne.s32.totalorder %s215, %s229
      %p231 = scmp.eq.s32.totalorder %s38, 0
      %p232 = por %p230, %p231
      %s234 = sadd.s32 %s233, 1
      %p237 = scmp.eq.s32.totalorder %s32, 1
      %p238 = scmp.ne.s32.totalorder %s233, %s235
      %p239 = scmp.eq.s32.totalorder %s32, 0
      %p240 = por %p238, %p239
      %p241 = scmp.ne.s32.totalorder %s233, %s235
      %p242 = scmp.eq.s32.totalorder %s37, 1
      %p243 = por %p241, %p242
      %p244 = scmp.ne.s32.totalorder %s235, %s236
      %p245 = scmp.eq.s32.totalorder %s37, 0
      %p246 = por %p244, %p245
      %p247 = scmp.ne.s32.totalorder %s235, %s236
      %p248 = scmp.eq.s32.totalorder %s38, 1
      %p249 = por %p247, %p248
      %p251 = scmp.ne.s32.totalorder %s236, %s250
      %p252 = scmp.eq.s32.totalorder %s38, 0
      %p253 = por %p251, %p252
      %s255 = sadd.s32 %s254, 1
      %p258 = scmp.eq.s32.totalorder %s32, 1
      %p259 = scmp.ne.s32.totalorder %s254, %s256
      %p260 = scmp.eq.s32.totalorder %s32, 0
      %p261 = por %p259, %p260
      %p262 = scmp.ne.s32.totalorder %s254, %s256
      %p263 = scmp.eq.s32.totalorder %s37, 1
      %p264 = por %p262, %p263
      %p265 = scmp.ne.s32.totalorder %s256, %s257
      %p266 = scmp.eq.s32.totalorder %s37, 0
      %p267 = por %p265, %p266
      %p268 = scmp.ne.s32.totalorder %s256, %s257
      %p269 = scmp.eq.s32.totalorder %s38, 1
      %p270 = por %p268, %p269
      %p272 = scmp.ne.s32.totalorder %s257, %s271
      %p273 = scmp.eq.s32.totalorder %s38, 0
      %p274 = por %p272, %p273
      %s276 = sadd.s32 %s275, 1
      %p279 = scmp.eq.s32.totalorder %s32, 1
      %p280 = scmp.ne.s32.totalorder %s275, %s277
      %p281 = scmp.eq.s32.totalorder %s32, 0
      %p282 = por %p280, %p281
      %p283 = scmp.ne.s32.totalorder %s275, %s277
      %p284 = scmp.eq.s32.totalorder %s37, 1
      %p285 = por %p283, %p284
      %p286 = scmp.ne.s32.totalorder %s277, %s278
      %p287 = scmp.eq.s32.totalorder %s37, 0
      %p288 = por %p286, %p287
      %p289 = scmp.ne.s32.totalorder %s277, %s278
      %p290 = scmp.eq.s32.totalorder %s38, 1
      %p291 = por %p289, %p290
      %p293 = scmp.ne.s32.totalorder %s278, %s292
      %p294 = scmp.eq.s32.totalorder %s38, 0
      %p295 = por %p293, %p294
      %s297 = sadd.s32 %s296, 1
      %p300 = scmp.eq.s32.totalorder %s32, 1
      %p301 = scmp.ne.s32.totalorder %s296, %s298
      %p302 = scmp.eq.s32.totalorder %s32, 0
      %p303 = por %p301, %p302
      %p304 = scmp.ne.s32.totalorder %s296, %s298
      %p305 = scmp.eq.s32.totalorder %s37, 1
      %p306 = por %p304, %p305
      %p307 = scmp.ne.s32.totalorder %s298, %s299
      %p308 = scmp.eq.s32.totalorder %s37, 0
      %p309 = por %p307, %p308
      %p310 = scmp.ne.s32.totalorder %s298, %s299
      %p311 = scmp.eq.s32.totalorder %s38, 1
      %p312 = por %p310, %p311
      %p314 = scmp.ne.s32.totalorder %s299, %s313
      %p315 = scmp.eq.s32.totalorder %s38, 0
      %p316 = por %p314, %p315
      %s318 = sadd.s32 %s317, 1
      %p321 = scmp.eq.s32.totalorder %s32, 1
      %p322 = scmp.ne.s32.totalorder %s317, %s319
      %p323 = scmp.eq.s32.totalorder %s32, 0
      %p324 = por %p322, %p323
      %p325 = scmp.ne.s32.totalorder %s317, %s319
      %p326 = scmp.eq.s32.totalorder %s37, 1
      %p327 = por %p325, %p326
      %p328 = scmp.ne.s32.totalorder %s319, %s320
      %p329 = scmp.eq.s32.totalorder %s37, 0
      %p330 = por %p328, %p329
      %p331 = scmp.ne.s32.totalorder %s319, %s320
      %p332 = scmp.eq.s32.totalorder %s38, 1
      %p333 = por %p331, %p332
      %p335 = scmp.ne.s32.totalorder %s320, %s334
      %p336 = scmp.eq.s32.totalorder %s38, 0
      %p337 = por %p335, %p336
      %s339 = sadd.s32 %s338, 1
      %p342 = scmp.eq.s32.totalorder %s32, 1
      %p343 = scmp.ne.s32.totalorder %s338, %s340
      %p344 = scmp.eq.s32.totalorder %s32, 0
      %p345 = por %p343, %p344
      %p346 = scmp.ne.s32.totalorder %s338, %s340
      %p347 = scmp.eq.s32.totalorder %s37, 1
      %p348 = por %p346, %p347
      %p349 = scmp.ne.s32.totalorder %s340, %s341
      %p350 = scmp.eq.s32.totalorder %s37, 0
      %p351 = por %p349, %p350
      %p352 = scmp.ne.s32.totalorder %s340, %s341
      %p353 = scmp.eq.s32.totalorder %s38, 1
      %p354 = por %p352, %p353
      %p356 = scmp.ne.s32.totalorder %s341, %s355
      %p357 = scmp.eq.s32.totalorder %s38, 0
      %p358 = por %p356, %p357
      %s360 = sadd.s32 %s359, 1
      %p363 = scmp.eq.s32.totalorder %s32, 1
      %p364 = scmp.ne.s32.totalorder %s359, %s361
      %p365 = scmp.eq.s32.totalorder %s32, 0
      %p366 = por %p364, %p365
      %p367 = scmp.ne.s32.totalorder %s359, %s361
      %p368 = scmp.eq.s32.totalorder %s37, 1
      %p369 = por %p367, %p368
      %p370 = scmp.ne.s32.totalorder %s361, %s362
      %p371 = scmp.eq.s32.totalorder %s37, 0
      %p372 = por %p370, %p371
      %p373 = scmp.ne.s32.totalorder %s361, %s362
      %p374 = scmp.eq.s32.totalorder %s38, 1
      %p375 = por %p373, %p374
      %p377 = scmp.ne.s32.totalorder %s362, %s376
      %p378 = scmp.eq.s32.totalorder %s38, 0
      %p379 = por %p377, %p378
      %s381 = sadd.s32 %s380, 1
      %p384 = scmp.eq.s32.totalorder %s32, 1
      %p385 = scmp.ne.s32.totalorder %s380, %s382
      %p386 = scmp.eq.s32.totalorder %s32, 0
      %p387 = por %p385, %p386
      %p388 = scmp.ne.s32.totalorder %s380, %s382
      %p389 = scmp.eq.s32.totalorder %s37, 1
      %p390 = por %p388, %p389
      %p391 = scmp.ne.s32.totalorder %s382, %s383
      %p392 = scmp.eq.s32.totalorder %s37, 0
      %p393 = por %p391, %p392
      %p394 = scmp.ne.s32.totalorder %s382, %s383
      %p395 = scmp.eq.s32.totalorder %s38, 1
      %p396 = por %p394, %p395
      %p398 = scmp.ne.s32.totalorder %s383, %s397
      %p399 = scmp.eq.s32.totalorder %s38, 0
      %p400 = por %p398, %p399
      %s402 = sadd.s32 %s401, 1
      %p405 = scmp.eq.s32.totalorder %s32, 1
      %p406 = scmp.ne.s32.totalorder %s401, %s403
      %p407 = scmp.eq.s32.totalorder %s32, 0
      %p408 = por %p406, %p407
      %p409 = scmp.ne.s32.totalorder %s401, %s403
      %p410 = scmp.eq.s32.totalorder %s37, 1
      %p411 = por %p409, %p410
      %p412 = scmp.ne.s32.totalorder %s403, %s404
      %p413 = scmp.eq.s32.totalorder %s37, 0
      %p414 = por %p412, %p413
      %p415 = scmp.ne.s32.totalorder %s403, %s404
      %p416 = scmp.eq.s32.totalorder %s38, 1
      %p417 = por %p415, %p416
      %p419 = scmp.ne.s32.totalorder %s404, %s418
      %p420 = scmp.eq.s32.totalorder %s38, 0
      %p421 = por %p419, %p420
      %s423 = sadd.s32 %s422, 1
      %p426 = scmp.eq.s32.totalorder %s32, 1
      %p427 = scmp.ne.s32.totalorder %s422, %s424
      %p428 = scmp.eq.s32.totalorder %s32, 0
      %p429 = por %p427, %p428
      %p430 = scmp.ne.s32.totalorder %s422, %s424
      %p431 = scmp.eq.s32.totalorder %s37, 1
      %p432 = por %p430, %p431
      %p433 = scmp.ne.s32.totalorder %s424, %s425
      %p434 = scmp.eq.s32.totalorder %s37, 0
      %p435 = por %p433, %p434
      %p436 = scmp.ne.s32.totalorder %s424, %s425
      %p437 = scmp.eq.s32.totalorder %s38, 1
      %p438 = por %p436, %p437
      %p440 = scmp.ne.s32.totalorder %s425, %s439
      %p441 = scmp.eq.s32.totalorder %s38, 0
      %p442 = por %p440, %p441
      %s444 = sadd.s32 %s443, 1
      %p447 = scmp.eq.s32.totalorder %s32, 1
      %p448 = scmp.ne.s32.totalorder %s443, %s445
      %p449 = scmp.eq.s32.totalorder %s32, 0
      %p450 = por %p448, %p449
      %p451 = scmp.ne.s32.totalorder %s443, %s445
      %p452 = scmp.eq.s32.totalorder %s37, 1
      %p453 = por %p451, %p452
      %p454 = scmp.ne.s32.totalorder %s445, %s446
      %p455 = scmp.eq.s32.totalorder %s37, 0
      %p456 = por %p454, %p455
      %p457 = scmp.ne.s32.totalorder %s445, %s446
      %p458 = scmp.eq.s32.totalorder %s38, 1
      %p459 = por %p457, %p458
      %p461 = scmp.ne.s32.totalorder %s446, %s460
      %p462 = scmp.eq.s32.totalorder %s38, 0
      %p463 = por %p461, %p462
      %s465 = sadd.s32 %s464, 1
      %p468 = scmp.eq.s32.totalorder %s32, 1
      %p469 = scmp.ne.s32.totalorder %s464, %s466
      %p470 = scmp.eq.s32.totalorder %s32, 0
      %p471 = por %p469, %p470
      %p472 = scmp.ne.s32.totalorder %s464, %s466
      %p473 = scmp.eq.s32.totalorder %s37, 1
      %p474 = por %p472, %p473
      %p475 = scmp.ne.s32.totalorder %s466, %s467
      %p476 = scmp.eq.s32.totalorder %s37, 0
      %p477 = por %p475, %p476
      %p478 = scmp.ne.s32.totalorder %s466, %s467
      %p479 = scmp.eq.s32.totalorder %s38, 1
      %p480 = por %p478, %p479
      %p482 = scmp.ne.s32.totalorder %s467, %s481
      %p483 = scmp.eq.s32.totalorder %s38, 0
      %p484 = por %p482, %p483
      %s486 = sadd.s32 %s485, 1
      %p489 = scmp.eq.s32.totalorder %s32, 1
      %p490 = scmp.ne.s32.totalorder %s485, %s487
      %p491 = scmp.eq.s32.totalorder %s32, 0
      %p492 = por %p490, %p491
      %p493 = scmp.ne.s32.totalorder %s485, %s487
      %p494 = scmp.eq.s32.totalorder %s37, 1
      %p495 = por %p493, %p494
      %p496 = scmp.ne.s32.totalorder %s487, %s488
      %p497 = scmp.eq.s32.totalorder %s37, 0
      %p498 = por %p496, %p497
      %p499 = scmp.ne.s32.totalorder %s487, %s488
      %p500 = scmp.eq.s32.totalorder %s38, 1
      %p501 = por %p499, %p500
      %p503 = scmp.ne.s32.totalorder %s488, %s502
      %p504 = scmp.eq.s32.totalorder %s38, 0
      %p505 = por %p503, %p504
      %s507 = sadd.s32 %s506, 1
      %p510 = scmp.eq.s32.totalorder %s32, 1
      %p511 = scmp.ne.s32.totalorder %s506, %s508
      %p512 = scmp.eq.s32.totalorder %s32, 0
      %p513 = por %p511, %p512
      %p514 = scmp.ne.s32.totalorder %s506, %s508
      %p515 = scmp.eq.s32.totalorder %s37, 1
      %p516 = por %p514, %p515
      %p517 = scmp.ne.s32.totalorder %s508, %s509
      %p518 = scmp.eq.s32.totalorder %s37, 0
      %p519 = por %p517, %p518
      %p520 = scmp.ne.s32.totalorder %s508, %s509
      %p521 = scmp.eq.s32.totalorder %s38, 1
      %p522 = por %p520, %p521
      %p524 = scmp.ne.s32.totalorder %s509, %s523
      %p525 = scmp.eq.s32.totalorder %s38, 0
      %p526 = por %p524, %p525
      %s528 = sadd.s32 %s527, 1
      %p531 = scmp.eq.s32.totalorder %s32, 1
      %p532 = scmp.ne.s32.totalorder %s527, %s529
      %p533 = scmp.eq.s32.totalorder %s32, 0
      %p534 = por %p532, %p533
      %p535 = scmp.ne.s32.totalorder %s527, %s529
      %p536 = scmp.eq.s32.totalorder %s37, 1
      %p537 = por %p535, %p536
      %p538 = scmp.ne.s32.totalorder %s529, %s530
      %p539 = scmp.eq.s32.totalorder %s37, 0
      %p540 = por %p538, %p539
      %p541 = scmp.ne.s32.totalorder %s529, %s530
      %p542 = scmp.eq.s32.totalorder %s38, 1
      %p543 = por %p541, %p542
      %p545 = scmp.ne.s32.totalorder %s530, %s544
      %p546 = scmp.eq.s32.totalorder %s38, 0
      %p547 = por %p545, %p546
      %s548 = ssub.s32 %s32, %s39
      %p549 = scmp.eq.s32.totalorder %s548, 0
      %s551 = sadd.s32 %s550, 1
      %s552 = scalar_select %p549, %s550, %s551
      %p555 = pneg %p549
      %p556 = scmp.eq.s32.totalorder %s32, 1
      %p557 = por %p555, %p556
      %p558 = scmp.ne.s32.totalorder %s550, %s553
      %p559 = scmp.eq.s32.totalorder %s32, 0
      %p560 = por %p558, %p559
      %p561 = scmp.ne.s32.totalorder %s550, %s553
      %p562 = scmp.eq.s32.totalorder %s37, 1
      %p563 = por %p561, %p562
      %p564 = scmp.ne.s32.totalorder %s553, %s554
      %p565 = scmp.eq.s32.totalorder %s37, 0
      %p566 = por %p564, %p565
      %p567 = scmp.ne.s32.totalorder %s553, %s554
      %p568 = scmp.eq.s32.totalorder %s38, 1
      %p569 = por %p567, %p568
      %p571 = scmp.ne.s32.totalorder %s554, %s570
      %p572 = scmp.eq.s32.totalorder %s38, 0
      %p573 = por %p571, %p572
      %p574 = scmp.le.s32.totalorder 1, %s32
      %p575 = scmp.lt.s32.totalorder %s32, 3
      %p576 = pnand %p574, %p575
      %p577 = pneg %p576
      // Predicated region
      $region9: #{decoder_layer.1} parent=5 // pred_check
        _
      $region10: #{decoder_layer.1} parent=5 // pred_check_branch
        %579 = sbr.rel (%p576) target = $region12
      $region11: #{decoder_layer.1} parent=5 // pred_region
        %s580 = ssub.s32 %s32, 1
        // Predicated region
        $region13: #{decoder_layer.1} parent=11 // pred_check
          %p581 = pneg %p183
        $region14: #{decoder_layer.1} parent=11 // pred_check_branch
          %583 = sbr.rel (%p581) target = $region16
        $region15: #{decoder_layer.1} parent=11 // pred_region
          _
        $region16: #{decoder_layer.1} parent=11 // pred_fallthru
          _
        // Predicated region
        $region17: #{decoder_layer.1} parent=11 // pred_check
          %p584 = pneg %p204
        $region18: #{decoder_layer.1} parent=11 // pred_check_branch
          %586 = sbr.rel (%p584) target = $region20
        $region19: #{decoder_layer.1} parent=11 // pred_region
          _
        $region20: #{decoder_layer.1} parent=11 // pred_fallthru
          _
        // Predicated region
        $region21: #{decoder_layer.1} parent=11 // pred_check
          %p587 = pneg %p225
        $region22: #{decoder_layer.1} parent=11 // pred_check_branch
          %589 = sbr.rel (%p587) target = $region24
        $region23: #{decoder_layer.1} parent=11 // pred_region
          _
        $region24: #{decoder_layer.1} parent=11 // pred_fallthru
          _
        // Predicated region
        $region25: #{decoder_layer.1} parent=11 // pred_check
          %p590 = pneg %p246
        $region26: #{decoder_layer.1} parent=11 // pred_check_branch
          %592 = sbr.rel (%p590) target = $region28
        $region27: #{decoder_layer.1} parent=11 // pred_region
          _
        $region28: #{decoder_layer.1} parent=11 // pred_fallthru
          _
        // Predicated region
        $region29: #{decoder_layer.1} parent=11 // pred_check
          %p593 = pneg %p267
        $region30: #{decoder_layer.1} parent=11 // pred_check_branch
          %595 = sbr.rel (%p593) target = $region32
        $region31: #{decoder_layer.1} parent=11 // pred_region
          _
        $region32: #{decoder_layer.1} parent=11 // pred_fallthru
          _
        // Predicated region
        $region33: #{decoder_layer.1} parent=11 // pred_check
          %p596 = pneg %p288
        $region34: #{decoder_layer.1} parent=11 // pred_check_branch
          %598 = sbr.rel (%p596) target = $region36
        $region35: #{decoder_layer.1} parent=11 // pred_region
          _
        $region36: #{decoder_layer.1} parent=11 // pred_fallthru
          _
        // Predicated region
        $region37: #{decoder_layer.1} parent=11 // pred_check
          %p599 = pneg %p309
        $region38: #{decoder_layer.1} parent=11 // pred_check_branch
          %601 = sbr.rel (%p599) target = $region40
        $region39: #{decoder_layer.1} parent=11 // pred_region
          _
        $region40: #{decoder_layer.1} parent=11 // pred_fallthru
          _
        // Predicated region
        $region41: #{decoder_layer.1} parent=11 // pred_check
          %p602 = pneg %p330
        $region42: #{decoder_layer.1} parent=11 // pred_check_branch
          %604 = sbr.rel (%p602) target = $region44
        $region43: #{decoder_layer.1} parent=11 // pred_region
          _
        $region44: #{decoder_layer.1} parent=11 // pred_fallthru
          _
        // Predicated region
        $region45: #{decoder_layer.1} parent=11 // pred_check
          %p605 = pneg %p351
        $region46: #{decoder_layer.1} parent=11 // pred_check_branch
          %607 = sbr.rel (%p605) target = $region48
        $region47: #{decoder_layer.1} parent=11 // pred_region
          _
        $region48: #{decoder_layer.1} parent=11 // pred_fallthru
          _
        // Predicated region
        $region49: #{decoder_layer.1} parent=11 // pred_check
          %p608 = pneg %p372
        $region50: #{decoder_layer.1} parent=11 // pred_check_branch
          %610 = sbr.rel (%p608) target = $region52
        $region51: #{decoder_layer.1} parent=11 // pred_region
          _
        $region52: #{decoder_layer.1} parent=11 // pred_fallthru
          _
        // Predicated region
        $region53: #{decoder_layer.1} parent=11 // pred_check
          %p611 = pneg %p393
        $region54: #{decoder_layer.1} parent=11 // pred_check_branch
          %613 = sbr.rel (%p611) target = $region56
        $region55: #{decoder_layer.1} parent=11 // pred_region
          _
        $region56: #{decoder_layer.1} parent=11 // pred_fallthru
          _
        // Predicated region
        $region57: #{decoder_layer.1} parent=11 // pred_check
          %p614 = pneg %p414
        $region58: #{decoder_layer.1} parent=11 // pred_check_branch
          %616 = sbr.rel (%p614) target = $region60
        $region59: #{decoder_layer.1} parent=11 // pred_region
          _
        $region60: #{decoder_layer.1} parent=11 // pred_fallthru
          _
        // Predicated region
        $region61: #{decoder_layer.1} parent=11 // pred_check
          %p617 = pneg %p435
        $region62: #{decoder_layer.1} parent=11 // pred_check_branch
          %619 = sbr.rel (%p617) target = $region64
        $region63: #{decoder_layer.1} parent=11 // pred_region
          _
        $region64: #{decoder_layer.1} parent=11 // pred_fallthru
          _
        // Predicated region
        $region65: #{decoder_layer.1} parent=11 // pred_check
          %p620 = pneg %p456
        $region66: #{decoder_layer.1} parent=11 // pred_check_branch
          %622 = sbr.rel (%p620) target = $region68
        $region67: #{decoder_layer.1} parent=11 // pred_region
          _
        $region68: #{decoder_layer.1} parent=11 // pred_fallthru
          _
        // Predicated region
        $region69: #{decoder_layer.1} parent=11 // pred_check
          %p623 = pneg %p477
        $region70: #{decoder_layer.1} parent=11 // pred_check_branch
          %625 = sbr.rel (%p623) target = $region72
        $region71: #{decoder_layer.1} parent=11 // pred_region
          _
        $region72: #{decoder_layer.1} parent=11 // pred_fallthru
          _
        // Predicated region
        $region73: #{decoder_layer.1} parent=11 // pred_check
          %p626 = pneg %p498
        $region74: #{decoder_layer.1} parent=11 // pred_check_branch
          %628 = sbr.rel (%p626) target = $region76
        $region75: #{decoder_layer.1} parent=11 // pred_region
          _
        $region76: #{decoder_layer.1} parent=11 // pred_fallthru
          _
        // Predicated region
        $region77: #{decoder_layer.1} parent=11 // pred_check
          %p629 = pneg %p519
        $region78: #{decoder_layer.1} parent=11 // pred_check_branch
          %631 = sbr.rel (%p629) target = $region80
        $region79: #{decoder_layer.1} parent=11 // pred_region
          _
        $region80: #{decoder_layer.1} parent=11 // pred_fallthru
          _
        // Predicated region
        $region81: #{decoder_layer.1} parent=11 // pred_check
          %p632 = pneg %p540
        $region82: #{decoder_layer.1} parent=11 // pred_check_branch
          %634 = sbr.rel (%p632) target = $region84
        $region83: #{decoder_layer.1} parent=11 // pred_region
          _
        $region84: #{decoder_layer.1} parent=11 // pred_fallthru
          _
      $region12: #{decoder_layer.1} parent=5 // pred_fallthru
        _
      %p635 = scmp.lt.s32.totalorder %s32, 2
      // Predicated region
      $region85: #{decoder_layer.1} parent=5 // pred_check
        %p636 = pneg %p635
      $region86: #{decoder_layer.1} parent=5 // pred_check_branch
        %638 = sbr.rel (%p636) target = $region88
      $region87: #{decoder_layer.1} parent=5 // pred_region
        // Predicated region
        $region89: #{decoder_layer.1} parent=87 // pred_check
          %p639 = pneg %p52
        $region90: #{decoder_layer.1} parent=87 // pred_check_branch
          %641 = sbr.rel (%p639) target = $region92
        $region91: #{decoder_layer.1} parent=87 // pred_region
          %s642 = smul.u32 4, %s32
          %p643 = scmp.lt.s32.totalorder %s642, 7
          %s644 = scalar_select %p643, %s642, 7
          %s645 = smul.addr %s644, 8
          %s646 = scalar_lea.vmem %s0, %s645
          %s647 = smul.u32 4, %s32
        $region92: #{decoder_layer.1} parent=87 // pred_fallthru
          _
        // Predicated region
        $region93: #{decoder_layer.1} parent=87 // pred_check
          %p648 = pneg %p78
        $region94: #{decoder_layer.1} parent=87 // pred_check_branch
          %650 = sbr.rel (%p648) target = $region96
        $region95: #{decoder_layer.1} parent=87 // pred_region
          %s651 = smul.u32 4, %s32
          %p652 = scmp.lt.s32.totalorder %s651, 7
          %s653 = scalar_select %p652, %s651, 7
          %s654 = smul.addr %s653, 8
          %s655 = scalar_lea.vmem %s1, %s654
          %s656 = smul.u32 4, %s32
        $region96: #{decoder_layer.1} parent=87 // pred_fallthru
          _
        // Predicated region
        $region97: #{decoder_layer.1} parent=87 // pred_check
          %p657 = pneg %p104
        $region98: #{decoder_layer.1} parent=87 // pred_check_branch
          %659 = sbr.rel (%p657) target = $region100
        $region99: #{decoder_layer.1} parent=87 // pred_region
          %s660 = smul.u32 4, %s32
          %p661 = scmp.lt.s32.totalorder %s660, 7
          %s662 = scalar_select %p661, %s660, 7
          %s663 = smul.addr %s662, 8
          %s664 = scalar_lea.vmem %s2, %s663
          %s665 = smul.u32 4, %s32
        $region100: #{decoder_layer.1} parent=87 // pred_fallthru
          _
        // Predicated region
        $region101: #{decoder_layer.1} parent=87 // pred_check
          %p666 = pneg %p130
        $region102: #{decoder_layer.1} parent=87 // pred_check_branch
          %668 = sbr.rel (%p666) target = $region104
        $region103: #{decoder_layer.1} parent=87 // pred_region
          %s669 = smul.u32 4, %s32
          %p670 = scmp.lt.s32.totalorder %s669, 7
          %s671 = scalar_select %p670, %s669, 7
          %s672 = scalar_lea.vmem %s3, %s671
          %s673 = smul.u32 4, %s32
        $region104: #{decoder_layer.1} parent=87 // pred_fallthru
          _
        // Predicated region
        $region105: #{decoder_layer.1} parent=87 // pred_check
          %p674 = pneg %p156
        $region106: #{decoder_layer.1} parent=87 // pred_check_branch
          %676 = sbr.rel (%p674) target = $region108
        $region107: #{decoder_layer.1} parent=87 // pred_region
          %s677 = smul.u32 4, %s32
          %p678 = scmp.lt.s32.totalorder %s677, 7
          %s679 = scalar_select %p678, %s677, 7
          %s680 = scalar_lea.vmem %s4, %s679
          %s681 = smul.u32 4, %s32
        $region108: #{decoder_layer.1} parent=87 // pred_fallthru
          _
      $region88: #{decoder_layer.1} parent=5 // pred_fallthru
        _
      %p682 = scmp.le.s32.totalorder 1, %s32
      %p683 = scmp.lt.s32.totalorder %s32, 3
      %p684 = pnand %p682, %p683
      %p685 = pneg %p684
      // Predicated region
      $region109: #{decoder_layer.1} parent=5 // pred_check
        _
      $region110: #{decoder_layer.1} parent=5 // pred_check_branch
        %687 = sbr.rel (%p684) target = $region112
      $region111: #{decoder_layer.1} parent=5 // pred_region
        %s688 = ssub.s32 %s32, 1
        %s689 = smul.u32 4, %s37
        %p690 = scmp.lt.s32.totalorder %s689, 7
        %s691 = scalar_select %p690, %s689, 7
        %s692 = smul.addr %s691, 8
        %s693 = scalar_lea.vmem %s0, %s692
        %p694 = pneg %p58
        %p695 = pneg %p55
        %s696 = smul.u32 4, %s37
        %p697 = scmp.lt.s32.totalorder %s696, 7
        %s698 = scalar_select %p697, %s696, 7
        %s699 = smul.addr %s698, 8
        %s700 = scalar_lea.vmem %s1, %s699
        %p701 = pneg %p84
        %p702 = pneg %p81
        %s703 = smul.u32 4, %s37
        %p704 = scmp.lt.s32.totalorder %s703, 7
        %s705 = scalar_select %p704, %s703, 7
        %s706 = smul.addr %s705, 8
        %s707 = scalar_lea.vmem %s2, %s706
        %p708 = pneg %p110
        %p709 = pneg %p107
        %s710 = smul.u32 4, %s37
        %p711 = scmp.lt.s32.totalorder %s710, 7
        %s712 = scalar_select %p711, %s710, 7
        %s713 = scalar_lea.vmem %s3, %s712
        %p714 = pneg %p136
        %p715 = pneg %p133
        %s716 = smul.u32 4, %s37
        %p717 = scmp.lt.s32.totalorder %s716, 7
        %s718 = scalar_select %p717, %s716, 7
        %s719 = scalar_lea.vmem %s4, %s718
        %p720 = pneg %p162
        %p721 = pneg %p159
        %p722 = pneg %p183
        %p723 = pneg %p180
        %p724 = pneg %p204
        %p725 = pneg %p201
        %p726 = pneg %p225
        %p727 = pneg %p222
        %p728 = pneg %p246
        %p729 = pneg %p243
        %p730 = pneg %p267
        %p731 = pneg %p264
        %p732 = pneg %p288
        %p733 = pneg %p285
        %p734 = pneg %p309
        %p735 = pneg %p306
        %p736 = pneg %p330
        %p737 = pneg %p327
        %p738 = pneg %p351
        %p739 = pneg %p348
        %p740 = pneg %p372
        %p741 = pneg %p369
        %p742 = pneg %p393
        %p743 = pneg %p390
        %p744 = pneg %p414
        %p745 = pneg %p411
        %p746 = pneg %p435
        %p747 = pneg %p432
        %p748 = pneg %p456
        %p749 = pneg %p453
        %p750 = pneg %p477
        %p751 = pneg %p474
        %p752 = pneg %p498
        %p753 = pneg %p495
        %p754 = pneg %p519
        %p755 = pneg %p516
        %p756 = pneg %p540
        %p757 = pneg %p537
        %p758 = pneg %p566
        %p759 = pneg %p563
        %s760 = sand.u32 %s553, 1
        %s761 = scalar_lea.sflag [#allocation4], %s760
        %s762 = sand.u32 %s553, 1
        %s763 = smul.addr %s762, 4
        %s764 = scalar_lea.vmem [#allocation3], %s763
        %s765 = smul.u32 4, %s37
        %p766 = scmp.lt.s32.totalorder %s765, 7
        %s767 = scalar_select %p766, %s765, 7
        %s768 = smul.addr %s767, 8
        %s769 = scalar_lea.vmem %s0, %s768
        %s770 = smul.u32 4, %s37
        %s771 = smul.u32 4, %s37
        %p772 = scmp.lt.s32.totalorder %s771, 7
        %s773 = scalar_select %p772, %s771, 7
        %s774 = smul.addr %s773, 8
        %s775 = scalar_lea.vmem %s1, %s774
        %s776 = smul.u32 4, %s37
        %s777 = smul.u32 4, %s37
        %p778 = scmp.lt.s32.totalorder %s777, 7
        %s779 = scalar_select %p778, %s777, 7
        %s780 = smul.addr %s779, 8
        %s781 = scalar_lea.vmem %s2, %s780
        %s782 = smul.u32 4, %s37
        %s783 = smul.u32 4, %s37
        %p784 = scmp.lt.s32.totalorder %s783, 7
        %s785 = scalar_select %p784, %s783, 7
        %s786 = scalar_lea.vmem %s3, %s785
        %s787 = smul.u32 4, %s37
        %s788 = smul.u32 4, %s37
        %p789 = scmp.lt.s32.totalorder %s788, 7
        %s790 = scalar_select %p789, %s788, 7
        %s791 = scalar_lea.vmem %s4, %s790
        %s792 = smul.u32 4, %s37
        %s793 = smul.u32 4, %s37
        %v795 = vld [vmem:[%s769] sm:$0xff]
        %v796 = vld [vmem:[%s769 + $0x8] sm:$0xff]
        %v797 = vld [vmem:[%s769 + $0x10] sm:$0xff]
        %v798 = vld [vmem:[%s769 + $0x18] sm:$0xff]
        %v799 = vld [vmem:[%s5] sm:$0x1]
        %v800 = vld [vmem:[%s6] sm:$0x1]
        %vm801 = vcmask 261120
        %v802 = vsel %vm801, %v795, 0.0
        %803 = vadd.xlane.f32.xlu0 %v802
        %v804 = vpop.xlane.xlu0 %803
        %v805 = vsel %vm801, %v796, 0.0
        %806 = vadd.xlane.f32.xlu0 %v805
        %v807 = vpop.xlane.xlu0 %806
        %v808 = vsel %vm801, %v797, 0.0
        %809 = vadd.xlane.f32.xlu0 %v808
        %v810 = vpop.xlane.xlu0 %809
        %v811 = vsel %vm801, %v798, 0.0
        %812 = vadd.xlane.f32.xlu0 %v811
        %v813 = vpop.xlane.xlu0 %812
        %v814 = vrcp.pop 32.0
        %v815 = vmul.f32 %v804, %v814
        %v816 = vmul.f32 %v807, %v814
        %v817 = vmul.f32 %v810, %v814
        %v818 = vmul.f32 %v813, %v814
        %v819 = vsub.f32 %v795, %v815
        %v820 = vsub.f32 %v796, %v816
        %v821 = vsub.f32 %v797, %v817
        %v822 = vsub.f32 %v798, %v818
        %v823 = vmul.f32 %v819, %v819
        %v824 = vmul.f32 %v820, %v820
        %v825 = vmul.f32 %v821, %v821
        %v826 = vmul.f32 %v822, %v822
        %v827 = vsel %vm801, %v823, 0.0
        %828 = vadd.xlane.f32.xlu0 %v827
        %v829 = vpop.xlane.xlu0 %828
        %v830 = vsel %vm801, %v824, 0.0
        %831 = vadd.xlane.f32.xlu0 %v830
        %v832 = vpop.xlane.xlu0 %831
        %v833 = vsel %vm801, %v825, 0.0
        %834 = vadd.xlane.f32.xlu0 %v833
        %v835 = vpop.xlane.xlu0 %834
        %v836 = vsel %vm801, %v826, 0.0
        %837 = vadd.xlane.f32.xlu0 %v836
        %v838 = vpop.xlane.xlu0 %837
        %v839 = vmul.f32 %v829, 0.032258064
        %v840 = vmul.f32 %v832, 0.032258064
        %v841 = vmul.f32 %v835, 0.032258064
        %v842 = vmul.f32 %v838, 0.032258064
        %v844 = vlaneseq
        %v845 = vshrl.u32 %v844, 7
        %v846 = vsub.s32 0, %v845
        %v847 = vrot.slane %v799, %v846
        %v849 = vmul.f32 %v847, %v819
        %v850 = vmul.f32 %v847, %v820
        %v851 = vmul.f32 %v847, %v821
        %v852 = vmul.f32 %v847, %v822
        %v853 = vrsqrt.pop %v839
        %v854 = vmul.f32 %v839, %v853
        %vm855 = vcmp.eq.f32.partialorder %v839, inf
        %v856 = vsel %vm855, %v839, %v854
        %vm857 = vcmp.eq.f32.partialorder %v839, 0.0
        %v858 = vand.u32 %v839, 2147483648
        %v859 = vsel %vm857, %v858, %v856
        %v860 = vrsqrt.pop %v840
        %v861 = vmul.f32 %v840, %v860
        %vm862 = vcmp.eq.f32.partialorder %v840, inf
        %v863 = vsel %vm862, %v840, %v861
        %vm864 = vcmp.eq.f32.partialorder %v840, 0.0
        %v865 = vand.u32 %v840, 2147483648
        %v866 = vsel %vm864, %v865, %v863
        %v867 = vrsqrt.pop %v841
        %v868 = vmul.f32 %v841, %v867
        %vm869 = vcmp.eq.f32.partialorder %v841, inf
        %v870 = vsel %vm869, %v841, %v868
        %vm871 = vcmp.eq.f32.partialorder %v841, 0.0
        %v872 = vand.u32 %v841, 2147483648
        %v873 = vsel %vm871, %v872, %v870
        %v874 = vrsqrt.pop %v842
        %v875 = vmul.f32 %v842, %v874
        %vm876 = vcmp.eq.f32.partialorder %v842, inf
        %v877 = vsel %vm876, %v842, %v875
        %vm878 = vcmp.eq.f32.partialorder %v842, 0.0
        %v879 = vand.u32 %v842, 2147483648
        %v880 = vsel %vm878, %v879, %v877
        %v881 = vadd.f32 %v859, 1e-06
        %v882 = vadd.f32 %v866, 1e-06
        %v883 = vadd.f32 %v873, 1e-06
        %v884 = vadd.f32 %v880, 1e-06
        %v885 = vrcp.pop %v881
        %v886 = vmul.f32 %v849, %v885
        %v887 = vrcp.pop %v882
        %v888 = vmul.f32 %v850, %v887
        %v889 = vrcp.pop %v883
        %v890 = vmul.f32 %v851, %v889
        %v891 = vrcp.pop %v884
        %v892 = vmul.f32 %v852, %v891
        %v894 = vlaneseq
        %v895 = vshrl.u32 %v894, 7
        %v896 = vsub.s32 0, %v895
        %v897 = vrot.slane %v800, %v896
        %v899 = vadd.f32 %v886, %v897
        %v900 = vadd.f32 %v888, %v897
        %v901 = vadd.f32 %v890, %v897
        %v902 = vadd.f32 %v892, %v897
        %v903 = vld [vmem:[%s781] sm:$0xff]
        %v904 = vld [vmem:[%s781 + $0x8] sm:$0xff]
        %v905 = vld [vmem:[%s781 + $0x10] sm:$0xff]
        %v906 = vld [vmem:[%s781 + $0x18] sm:$0xff]
        %907 = vst.msk [vmem:[#allocation2] sm:$0xff] %vm801, %v903
        %908 = vst.msk [vmem:[#allocation2 + $0x10] sm:$0xff] %vm801, %v904
        %909 = vst.msk [vmem:[#allocation2 + $0x20] sm:$0xff] %vm801, %v905
        %910 = vst.msk [vmem:[#allocation2 + $0x30] sm:$0xff] %vm801, %v906
        %911 = vst.msk [vmem:[#allocation2 + $0x8] sm:$0xff] %vm801, %v899
        %912 = vst.msk [vmem:[#allocation2 + $0x18] sm:$0xff] %vm801, %v900
        %913 = vst.msk [vmem:[#allocation2 + $0x28] sm:$0xff] %vm801, %v901
        %914 = vst.msk [vmem:[#allocation2 + $0x38] sm:$0xff] %vm801, %v902
        %v915 = vld [vmem:[#allocation2] sm:$0xff]
        %v916 = vld [vmem:[#allocation2 + $0x8] sm:$0xff]
        %v917 = vld [vmem:[#allocation2 + $0x10] sm:$0xff]
        %v918 = vld [vmem:[#allocation2 + $0x18] sm:$0xff]
        %v919 = vld [vmem:[#allocation2 + $0x20] sm:$0xff]
        %v920 = vld [vmem:[#allocation2 + $0x28] sm:$0xff]
        %v921 = vld [vmem:[#allocation2 + $0x30] sm:$0xff]
        %v922 = vld [vmem:[#allocation2 + $0x38] sm:$0xff]
        %v923 = vld [vmem:[%s786] sm:$0x1]
        %v924 = vld [vmem:[%s786 + $0x1] sm:$0x1]
        %v925 = vld [vmem:[%s786 + $0x2] sm:$0x1]
        %v926 = vld [vmem:[%s786 + $0x3] sm:$0x1]
        %v927 = vpack.c.bf16 %v916, %v915
        %v928 = vpack.c.bf16 %v918, %v917
        %v929 = vpack.c.bf16 %v920, %v919
        %v930 = vpack.c.bf16 %v922, %v921
        %v931 = vpack.c.bf16 %v899, %v899
        %v932 = vpack.c.bf16 %v900, %v900
        %v933 = vpack.c.bf16 %v901, %v901
        %v934 = vpack.c.bf16 %v902, %v902
        %v935 = vld [vmem:[%s7] sm:$0xf]
        %v936 = vld [vmem:[%s7 + $0x4] sm:$0xf]
        %v937 = vld [vmem:[%s7 + $0x8] sm:$0xf]
        %v938 = vld [vmem:[%s7 + $0xc] sm:$0xf]
        %v939 = vld [vmem:[%s8] sm:$0x1]
        %v941 = vlaneseq
        %v942 = vshrl.u32 %v941, 7
        %v943 = vsub.s32 0, %v942
        %v944 = vrot.slane %v939, %v943
        %v950 = vunpack.c.l.b16 %v931
        %v951 = vunpack.c.l.b16 %v932
        %v952 = vunpack.c.l.b16 %v933
        %v953 = vunpack.c.l.b16 %v934
        %v954 = vrot.slane %v950, 7
        %v955 = vrot.slane %v951, 6
        %vm956 = vcmask 1041409
        %v957 = vsel %vm956, %v955, %v954
        %v958 = vrot.slane %v952, 5
        %vm959 = vcmask 1042434
        %v960 = vsel %vm959, %v958, %v957
        %v961 = vrot.slane %v953, 4
        %vm962 = vcmask 1043459
        %v963 = vsel %vm962, %v961, %v960
        %v964 = vpack.c.b16 %v963, %v963
        %v969 = vunpack.c.l.b16 %v935
        %v970 = vunpack.c.l.b16 %v936
        %v971 = vunpack.c.l.b16 %v937
        %v972 = vunpack.c.l.b16 %v938
        %v973 = vpack.c.b16 %v970, %v969
        %v974 = vpack.c.b16 %v972, %v971
        %v978 = vsel %vm801, %v964, 0
        %980 = vmatprep.subr.bf16.mxu0 0
        %981 = vmatpush1.bf16.msra.mxu0 0
        %982 = vmatprep.subr.bf16.mxu0 0
        %983 = vmatpush1.bf16.msra.mxu0 0
        %984 = vmatprep.subr.bf16.mxu0 0
        %985 = vmatpush1.bf16.msra.mxu0 0
        %986 = vmatprep.subr.bf16.mxu0 0
        %987 = vmatpush1.bf16.msra.mxu0 0
        %988 = vmatprep.subr.bf16.mxu0 0
        %989 = vmatpush1.bf16.msra.mxu0 0
        %990 = vmatprep.subr.bf16.mxu0 0
        %991 = vmatpush1.bf16.msra.mxu0 0
        %992 = vmatprep.subr.bf16.mxu0 0
        %993 = vmatpush1.bf16.msra.mxu0 %v974
        %994 = vmatprep.subr.bf16.mxu0 0
        %995 = vmatpush1.bf16.msra.mxu0 %v973
        %996 = vmatprep.subr.bf16.mxu0 0
        %997 = vmatpush2.bf16.msra.mxu0 0
        %998 = vmatprep.subr.bf16.mxu0 0
        %999 = vmatpush2.bf16.msra.mxu0 0
        %1000 = vmatprep.subr.bf16.mxu0 0
        %1001 = vmatpush2.bf16.msra.mxu0 0
        %1002 = vmatprep.subr.bf16.mxu0 0
        %1003 = vmatpush2.bf16.msra.mxu0 0
        %1004 = vmatprep.subr.bf16.mxu0 0
        %1005 = vmatpush2.bf16.msra.mxu0 0
        %1006 = vmatprep.subr.bf16.mxu0 0
        %1007 = vmatpush2.bf16.msra.mxu0 0
        %1008 = vmatprep.subr.bf16.mxu0 0
        %1009 = vmatpush2.bf16.msra.mxu0 0
        %1010 = vmatprep.subr.bf16.mxu0 0
        %1011 = vmatpush2.bf16.msra.mxu0 0
        %1012 = vmatprep.mubr.bf16.mxu0 0
        %1013 = vmatmul.mubr.bf16.gmra.mxu0 %v978
        %v1014 = vpop.f32.mrf.mxu0
        %v1015 = vadd.f32 %v944, %v1014
        %v1016 = vpop.f32.mrf.mxu0
        %v1017 = vpop.f32.mrf.mxu0
        %v1018 = vpop.f32.mrf.mxu0
        %1019 = vdwg.mxu0
        %s1020 = scalar_lea.vmem %s7, 16
        %v1021 = vld [vmem:[%s1020] sm:$0xf]
        %v1022 = vld [vmem:[%s1020 + $0x4] sm:$0xf]
        %v1023 = vld [vmem:[%s1020 + $0x8] sm:$0xf]
        %v1024 = vld [vmem:[%s1020 + $0xc] sm:$0xf]
        %s1025 = scalar_lea.vmem %s8, 1
        %v1026 = vld [vmem:[%s1025] sm:$0x1]
        %v1028 = vlaneseq
        %v1029 = vshrl.u32 %v1028, 7
        %v1030 = vsub.s32 0, %v1029
        %v1031 = vrot.slane %v1026, %v1030
        %v1037 = vunpack.c.l.b16 %v1021
        %v1038 = vunpack.c.l.b16 %v1022
        %v1039 = vunpack.c.l.b16 %v1023
        %v1040 = vunpack.c.l.b16 %v1024
        %v1041 = vpack.c.b16 %v1038, %v1037
        %v1042 = vpack.c.b16 %v1040, %v1039
        %v1046 = vsel %vm801, %v927, 0
        %v1049 = vsel %vm801, %v928, 0
        %v1052 = vsel %vm801, %v929, 0
        %v1055 = vsel %vm801, %v930, 0
        %1057 = vmatprep.subr.bf16.mxu0 0
        %1058 = vmatpush1.bf16.msra.mxu0 0
        %1059 = vmatprep.subr.bf16.mxu0 0
        %1060 = vmatpush1.bf16.msra.mxu0 0
        %1061 = vmatprep.subr.bf16.mxu0 0
        %1062 = vmatpush1.bf16.msra.mxu0 0
        %1063 = vmatprep.subr.bf16.mxu0 0
        %1064 = vmatpush1.bf16.msra.mxu0 0
        %1065 = vmatprep.subr.bf16.mxu0 0
        %1066 = vmatpush1.bf16.msra.mxu0 0
        %1067 = vmatprep.subr.bf16.mxu0 0
        %1068 = vmatpush1.bf16.msra.mxu0 0
        %1069 = vmatprep.subr.bf16.mxu0 0
        %1070 = vmatpush1.bf16.msra.mxu0 %v1042
        %1071 = vmatprep.subr.bf16.mxu0 0
        %1072 = vmatpush1.bf16.msra.mxu0 %v1041
        %1073 = vmatprep.subr.bf16.mxu0 0
        %1074 = vmatpush2.bf16.msra.mxu0 0
        %1075 = vmatprep.subr.bf16.mxu0 0
        %1076 = vmatpush2.bf16.msra.mxu0 0
        %1077 = vmatprep.subr.bf16.mxu0 0
        %1078 = vmatpush2.bf16.msra.mxu0 0
        %1079 = vmatprep.subr.bf16.mxu0 0
        %1080 = vmatpush2.bf16.msra.mxu0 0
        %1081 = vmatprep.subr.bf16.mxu0 0
        %1082 = vmatpush2.bf16.msra.mxu0 0
        %1083 = vmatprep.subr.bf16.mxu0 0
        %1084 = vmatpush2.bf16.msra.mxu0 0
        %1085 = vmatprep.subr.bf16.mxu0 0
        %1086 = vmatpush2.bf16.msra.mxu0 0
        %1087 = vmatprep.subr.bf16.mxu0 0
        %1088 = vmatpush2.bf16.msra.mxu0 0
        %1089 = vmatprep.mubr.bf16.mxu0 0
        %1090 = vmatmul.mubr.bf16.gmra.mxu0 %v1046
        %v1091 = vpop.f32.mrf.mxu0
        %v1092 = vadd.f32 %v1031, %v1091
        %v1093 = vpop.f32.mrf.mxu0
        %v1094 = vpop.f32.mrf.mxu0
        %v1095 = vadd.f32 %v1031, %v1094
        %v1096 = vpop.f32.mrf.mxu0
        %1097 = vmatprep.mubr.bf16.mxu0 0
        %1098 = vmatmul.mubr.bf16.gmra.mxu0 %v1049
        %v1099 = vpop.f32.mrf.mxu0
        %v1100 = vadd.f32 %v1031, %v1099
        %v1101 = vpop.f32.mrf.mxu0
        %v1102 = vpop.f32.mrf.mxu0
        %v1103 = vadd.f32 %v1031, %v1102
        %v1104 = vpop.f32.mrf.mxu0
        %1105 = vmatprep.mubr.bf16.mxu0 0
        %1106 = vmatmul.mubr.bf16.gmra.mxu0 %v1052
        %v1107 = vpop.f32.mrf.mxu0
        %v1108 = vadd.f32 %v1031, %v1107
        %v1109 = vpop.f32.mrf.mxu0
        %v1110 = vpop.f32.mrf.mxu0
        %v1111 = vadd.f32 %v1031, %v1110
        %v1112 = vpop.f32.mrf.mxu0
        %1113 = vmatprep.mubr.bf16.mxu0 0
        %1114 = vmatmul.mubr.bf16.gmra.mxu0 %v1055
        %v1115 = vpop.f32.mrf.mxu0
        %v1116 = vadd.f32 %v1031, %v1115
        %v1117 = vpop.f32.mrf.mxu0
        %v1118 = vpop.f32.mrf.mxu0
        %v1119 = vadd.f32 %v1031, %v1118
        %v1120 = vpop.f32.mrf.mxu0
        %1121 = vdwg.mxu0
        %s1122 = scalar_lea.vmem %s7, 32
        %v1123 = vld [vmem:[%s1122] sm:$0xf]
        %v1124 = vld [vmem:[%s1122 + $0x4] sm:$0xf]
        %v1125 = vld [vmem:[%s1122 + $0x8] sm:$0xf]
        %v1126 = vld [vmem:[%s1122 + $0xc] sm:$0xf]
        %s1127 = scalar_lea.vmem %s8, 2
        %v1128 = vld [vmem:[%s1127] sm:$0x1]
        %v1130 = vlaneseq
        %v1131 = vshrl.u32 %v1130, 7
        %v1132 = vsub.s32 0, %v1131
        %v1133 = vrot.slane %v1128, %v1132
        %v1139 = vunpack.c.l.b16 %v1123
        %v1140 = vunpack.c.l.b16 %v1124
        %v1141 = vunpack.c.l.b16 %v1125
        %v1142 = vunpack.c.l.b16 %v1126
        %v1143 = vpack.c.b16 %v1140, %v1139
        %v1144 = vpack.c.b16 %v1142, %v1141
        %1147 = vmatprep.subr.bf16.mxu0 0
        %1148 = vmatpush1.bf16.msra.mxu0 0
        %1149 = vmatprep.subr.bf16.mxu0 0
        %1150 = vmatpush1.bf16.msra.mxu0 0
        %1151 = vmatprep.subr.bf16.mxu0 0
        %1152 = vmatpush1.bf16.msra.mxu0 0
        %1153 = vmatprep.subr.bf16.mxu0 0
        %1154 = vmatpush1.bf16.msra.mxu0 0
        %1155 = vmatprep.subr.bf16.mxu0 0
        %1156 = vmatpush1.bf16.msra.mxu0 0
        %1157 = vmatprep.subr.bf16.mxu0 0
        %1158 = vmatpush1.bf16.msra.mxu0 0
        %1159 = vmatprep.subr.bf16.mxu0 0
        %1160 = vmatpush1.bf16.msra.mxu0 %v1144
        %1161 = vmatprep.subr.bf16.mxu0 0
        %1162 = vmatpush1.bf16.msra.mxu0 %v1143
        %1163 = vmatprep.subr.bf16.mxu0 0
        %1164 = vmatpush2.bf16.msra.mxu0 0
        %1165 = vmatprep.subr.bf16.mxu0 0
        %1166 = vmatpush2.bf16.msra.mxu0 0
        %1167 = vmatprep.subr.bf16.mxu0 0
        %1168 = vmatpush2.bf16.msra.mxu0 0
        %1169 = vmatprep.subr.bf16.mxu0 0
        %1170 = vmatpush2.bf16.msra.mxu0 0
        %1171 = vmatprep.subr.bf16.mxu0 0
        %1172 = vmatpush2.bf16.msra.mxu0 0
        %1173 = vmatprep.subr.bf16.mxu0 0
        %1174 = vmatpush2.bf16.msra.mxu0 0
        %1175 = vmatprep.subr.bf16.mxu0 0
        %1176 = vmatpush2.bf16.msra.mxu0 0
        %1177 = vmatprep.subr.bf16.mxu0 0
        %1178 = vmatpush2.bf16.msra.mxu0 0
        %1179 = vmatprep.mubr.bf16.mxu0 0
        %1180 = vmatmul.mubr.bf16.gmra.mxu0 %v1046
        %v1181 = vpop.f32.mrf.mxu0
        %v1182 = vadd.f32 %v1133, %v1181
        %v1183 = vpop.f32.mrf.mxu0
        %v1184 = vpop.f32.mrf.mxu0
        %v1185 = vadd.f32 %v1133, %v1184
        %v1186 = vpop.f32.mrf.mxu0
        %1187 = vmatprep.mubr.bf16.mxu0 0
        %1188 = vmatmul.mubr.bf16.gmra.mxu0 %v1049
        %v1189 = vpop.f32.mrf.mxu0
        %v1190 = vadd.f32 %v1133, %v1189
        %v1191 = vpop.f32.mrf.mxu0
        %v1192 = vpop.f32.mrf.mxu0
        %v1193 = vadd.f32 %v1133, %v1192
        %v1194 = vpop.f32.mrf.mxu0
        %1195 = vmatprep.mubr.bf16.mxu0 0
        %1196 = vmatmul.mubr.bf16.gmra.mxu0 %v1052
        %v1197 = vpop.f32.mrf.mxu0
        %v1198 = vadd.f32 %v1133, %v1197
        %v1199 = vpop.f32.mrf.mxu0
        %v1200 = vpop.f32.mrf.mxu0
        %v1201 = vadd.f32 %v1133, %v1200
        %v1202 = vpop.f32.mrf.mxu0
        %1203 = vmatprep.mubr.bf16.mxu0 0
        %1204 = vmatmul.mubr.bf16.gmra.mxu0 %v1055
        %v1205 = vpop.f32.mrf.mxu0
        %v1206 = vadd.f32 %v1133, %v1205
        %v1207 = vpop.f32.mrf.mxu0
        %v1208 = vpop.f32.mrf.mxu0
        %v1209 = vadd.f32 %v1133, %v1208
        %v1210 = vpop.f32.mrf.mxu0
        %1211 = vdwg.mxu0
        %v1214 = vunpack.c.l.s4 1966171168
        %v1215 = vunpack.c.0.s8 %v1214
        %v1216 = vlaneseq
        %v1217 = vshrl.u32 %v1216, 7
        %v1218 = vsub.s32 %v1215, %v1217
        %v1219 = vrot.slane %v1015, %v1218
        %v1220 = vcombine.high %v1219, %v1219
        %v1222 = vunpack.c.l.s4 1966171168
        %v1223 = vunpack.c.0.s8 %v1222
        %v1224 = vlaneseq
        %v1225 = vshrl.u32 %v1224, 7
        %v1226 = vsub.s32 %v1223, %v1225
        %v1227 = vrot.slane %v1219, %v1226
        %v1229 = vunpack.c.l.s4 1966171168
        %v1230 = vunpack.c.0.s8 %v1229
        %v1231 = vlaneseq
        %v1232 = vshrl.u32 %v1231, 7
        %v1233 = vsub.s32 %v1230, %v1232
        %v1234 = vrot.slane %v1220, %v1233
        %v1235 = vcombine.high %v1227, %v1227
        %v1236 = vcombine.high %v1234, %v1234
        %vm1237 = vcmask 64512
        %v1238 = vsel %vm1237, %v1227, 0
        %v1241 = vsel %vm1237, %v1092, 0
        %v1244 = vsel %vm1237, %v1095, 0
        %1246 = vmatprep.subr.mxu0 0.0
        %1247 = vmatpush1.xpose.msra.mxu0 0.0
        %1248 = vmatprep.subr.mxu0 0.0
        %1249 = vmatpush1.xpose.msra.mxu0 0.0
        %1250 = vmatprep.subr.mxu0 0.0
        %1251 = vmatpush1.xpose.msra.mxu0 0.0
        %1252 = vmatprep.subr.mxu0 0.0
        %1253 = vmatpush1.xpose.msra.mxu0 0.0
        %1254 = vmatprep.subr.mxu0 0.0
        %1255 = vmatpush1.xpose.msra.mxu0 0.0
        %1256 = vmatprep.subr.mxu0 0.0
        %1257 = vmatpush1.xpose.msra.mxu0 0.0
        %1258 = vmatprep.subr.mxu0 0.0
        %1259 = vmatpush1.xpose.msra.mxu0 0.0
        %1260 = vmatprep.subr.mxu0 0.0
        %1261 = vmatpush1.xpose.msra.mxu0 0.0
        %1262 = vmatprep.subr.mxu0 0.0
        %1263 = vmatpush1.xpose.msra.mxu0 0.0
        %1264 = vmatprep.subr.mxu0 0.0
        %1265 = vmatpush1.xpose.msra.mxu0 0.0
        %1266 = vmatprep.subr.mxu0 0.0
        %1267 = vmatpush1.xpose.msra.mxu0 0.0
        %1268 = vmatprep.subr.mxu0 0.0
        %1269 = vmatpush1.xpose.msra.mxu0 0.0
        %1270 = vmatprep.subr.mxu0 0.0
        %1271 = vmatpush1.xpose.msra.mxu0 0.0
        %1272 = vmatprep.subr.mxu0 0.0
        %1273 = vmatpush1.xpose.msra.mxu0 0.0
        %1274 = vmatprep.subr.mxu0 0.0
        %1275 = vmatpush1.xpose.msra.mxu0 %v1244
        %1276 = vmatprep.subr.mxu0 0.0
        %1277 = vmatpush1.xpose.msra.mxu0 %v1241
        %1278 = vmatprep.subr.mxu0 0.0
        %1279 = vmatpush2.xpose.msra.mxu0 0.0
        %1280 = vmatprep.subr.mxu0 0.0
        %1281 = vmatpush2.xpose.msra.mxu0 0.0
        %1282 = vmatprep.subr.mxu0 0.0
        %1283 = vmatpush2.xpose.msra.mxu0 0.0
        %1284 = vmatprep.subr.mxu0 0.0
        %1285 = vmatpush2.xpose.msra.mxu0 0.0
        %1286 = vmatprep.subr.mxu0 0.0
        %1287 = vmatpush2.xpose.msra.mxu0 0.0
        %1288 = vmatprep.subr.mxu0 0.0
        %1289 = vmatpush2.xpose.msra.mxu0 0.0
        %1290 = vmatprep.subr.mxu0 0.0
        %1291 = vmatpush2.xpose.msra.mxu0 0.0
        %1292 = vmatprep.subr.mxu0 0.0
        %1293 = vmatpush2.xpose.msra.mxu0 0.0
        %1294 = vmatprep.subr.mxu0 0.0
        %1295 = vmatpush2.xpose.msra.mxu0 0.0
        %1296 = vmatprep.subr.mxu0 0.0
        %1297 = vmatpush2.xpose.msra.mxu0 0.0
        %1298 = vmatprep.subr.mxu0 0.0
        %1299 = vmatpush2.xpose.msra.mxu0 0.0
        %1300 = vmatprep.subr.mxu0 0.0
        %1301 = vmatpush2.xpose.msra.mxu0 0.0
        %1302 = vmatprep.subr.mxu0 0.0
        %1303 = vmatpush2.xpose.msra.mxu0 0.0
        %1304 = vmatprep.subr.mxu0 0.0
        %1305 = vmatpush2.xpose.msra.mxu0 0.0
        %1306 = vmatprep.subr.mxu0 0.0
        %1307 = vmatpush2.xpose.msra.mxu0 0.0
        %1308 = vmatprep.subr.mxu0 0.0
        %1309 = vmatpush2.xpose.msra.mxu0 0.0
        %1310 = vmatprep.mubr.f32.mxu0 0.0
        %1311 = vmatmul.mubr.f32.gmra.mxu0 %v1238
        %v1312 = vpop.f32.mrf.mxu0
        %v1313 = vadd.f32 0.0, %v1312
        %v1314 = vpop.f32.mrf.mxu0
        %1315 = vdwg.mxu0
        %v1316 = vsel %vm1237, %v1234, 0
        %v1319 = vsel %vm1237, %v1100, 0
        %v1322 = vsel %vm1237, %v1103, 0
        %1324 = vmatprep.subr.mxu0 0.0
        %1325 = vmatpush1.xpose.msra.mxu0 0.0
        %1326 = vmatprep.subr.mxu0 0.0
        %1327 = vmatpush1.xpose.msra.mxu0 0.0
        %1328 = vmatprep.subr.mxu0 0.0
        %1329 = vmatpush1.xpose.msra.mxu0 0.0
        %1330 = vmatprep.subr.mxu0 0.0
        %1331 = vmatpush1.xpose.msra.mxu0 0.0
        %1332 = vmatprep.subr.mxu0 0.0
        %1333 = vmatpush1.xpose.msra.mxu0 0.0
        %1334 = vmatprep.subr.mxu0 0.0
        %1335 = vmatpush1.xpose.msra.mxu0 0.0
        %1336 = vmatprep.subr.mxu0 0.0
        %1337 = vmatpush1.xpose.msra.mxu0 0.0
        %1338 = vmatprep.subr.mxu0 0.0
        %1339 = vmatpush1.xpose.msra.mxu0 0.0
        %1340 = vmatprep.subr.mxu0 0.0
        %1341 = vmatpush1.xpose.msra.mxu0 0.0
        %1342 = vmatprep.subr.mxu0 0.0
        %1343 = vmatpush1.xpose.msra.mxu0 0.0
        %1344 = vmatprep.subr.mxu0 0.0
        %1345 = vmatpush1.xpose.msra.mxu0 0.0
        %1346 = vmatprep.subr.mxu0 0.0
        %1347 = vmatpush1.xpose.msra.mxu0 0.0
        %1348 = vmatprep.subr.mxu0 0.0
        %1349 = vmatpush1.xpose.msra.mxu0 0.0
        %1350 = vmatprep.subr.mxu0 0.0
        %1351 = vmatpush1.xpose.msra.mxu0 0.0
        %1352 = vmatprep.subr.mxu0 0.0
        %1353 = vmatpush1.xpose.msra.mxu0 %v1322
        %1354 = vmatprep.subr.mxu0 0.0
        %1355 = vmatpush1.xpose.msra.mxu0 %v1319
        %1356 = vmatprep.subr.mxu0 0.0
        %1357 = vmatpush2.xpose.msra.mxu0 0.0
        %1358 = vmatprep.subr.mxu0 0.0
        %1359 = vmatpush2.xpose.msra.mxu0 0.0
        %1360 = vmatprep.subr.mxu0 0.0
        %1361 = vmatpush2.xpose.msra.mxu0 0.0
        %1362 = vmatprep.subr.mxu0 0.0
        %1363 = vmatpush2.xpose.msra.mxu0 0.0
        %1364 = vmatprep.subr.mxu0 0.0
        %1365 = vmatpush2.xpose.msra.mxu0 0.0
        %1366 = vmatprep.subr.mxu0 0.0
        %1367 = vmatpush2.xpose.msra.mxu0 0.0
        %1368 = vmatprep.subr.mxu0 0.0
        %1369 = vmatpush2.xpose.msra.mxu0 0.0
        %1370 = vmatprep.subr.mxu0 0.0
        %1371 = vmatpush2.xpose.msra.mxu0 0.0
        %1372 = vmatprep.subr.mxu0 0.0
        %1373 = vmatpush2.xpose.msra.mxu0 0.0
        %1374 = vmatprep.subr.mxu0 0.0
        %1375 = vmatpush2.xpose.msra.mxu0 0.0
        %1376 = vmatprep.subr.mxu0 0.0
        %1377 = vmatpush2.xpose.msra.mxu0 0.0
        %1378 = vmatprep.subr.mxu0 0.0
        %1379 = vmatpush2.xpose.msra.mxu0 0.0
        %1380 = vmatprep.subr.mxu0 0.0
        %1381 = vmatpush2.xpose.msra.mxu0 0.0
        %1382 = vmatprep.subr.mxu0 0.0
        %1383 = vmatpush2.xpose.msra.mxu0 0.0
        %1384 = vmatprep.subr.mxu0 0.0
        %1385 = vmatpush2.xpose.msra.mxu0 0.0
        %1386 = vmatprep.subr.mxu0 0.0
        %1387 = vmatpush2.xpose.msra.mxu0 0.0
        %1388 = vmatprep.mubr.f32.mxu0 0.0
        %1389 = vmatmul.mubr.f32.gmra.mxu0 %v1316
        %v1390 = vpop.f32.mrf.mxu0
        %v1391 = vadd.f32 0.0, %v1390
        %v1392 = vpop.f32.mrf.mxu0
        %1393 = vdwg.mxu0
        %v1394 = vsel %vm1237, %v1235, 0
        %v1397 = vsel %vm1237, %v1108, 0
        %v1400 = vsel %vm1237, %v1111, 0
        %1402 = vmatprep.subr.mxu0 0.0
        %1403 = vmatpush1.xpose.msra.mxu0 0.0
        %1404 = vmatprep.subr.mxu0 0.0
        %1405 = vmatpush1.xpose.msra.mxu0 0.0
        %1406 = vmatprep.subr.mxu0 0.0
        %1407 = vmatpush1.xpose.msra.mxu0 0.0
        %1408 = vmatprep.subr.mxu0 0.0
        %1409 = vmatpush1.xpose.msra.mxu0 0.0
        %1410 = vmatprep.subr.mxu0 0.0
        %1411 = vmatpush1.xpose.msra.mxu0 0.0
        %1412 = vmatprep.subr.mxu0 0.0
        %1413 = vmatpush1.xpose.msra.mxu0 0.0
        %1414 = vmatprep.subr.mxu0 0.0
        %1415 = vmatpush1.xpose.msra.mxu0 0.0
        %1416 = vmatprep.subr.mxu0 0.0
        %1417 = vmatpush1.xpose.msra.mxu0 0.0
        %1418 = vmatprep.subr.mxu0 0.0
        %1419 = vmatpush1.xpose.msra.mxu0 0.0
        %1420 = vmatprep.subr.mxu0 0.0
        %1421 = vmatpush1.xpose.msra.mxu0 0.0
        %1422 = vmatprep.subr.mxu0 0.0
        %1423 = vmatpush1.xpose.msra.mxu0 0.0
        %1424 = vmatprep.subr.mxu0 0.0
        %1425 = vmatpush1.xpose.msra.mxu0 0.0
        %1426 = vmatprep.subr.mxu0 0.0
        %1427 = vmatpush1.xpose.msra.mxu0 0.0
        %1428 = vmatprep.subr.mxu0 0.0
        %1429 = vmatpush1.xpose.msra.mxu0 0.0
        %1430 = vmatprep.subr.mxu0 0.0
        %1431 = vmatpush1.xpose.msra.mxu0 %v1400
        %1432 = vmatprep.subr.mxu0 0.0
        %1433 = vmatpush1.xpose.msra.mxu0 %v1397
        %1434 = vmatprep.subr.mxu0 0.0
        %1435 = vmatpush2.xpose.msra.mxu0 0.0
        %1436 = vmatprep.subr.mxu0 0.0
        %1437 = vmatpush2.xpose.msra.mxu0 0.0
        %1438 = vmatprep.subr.mxu0 0.0
        %1439 = vmatpush2.xpose.msra.mxu0 0.0
        %1440 = vmatprep.subr.mxu0 0.0
        %1441 = vmatpush2.xpose.msra.mxu0 0.0
        %1442 = vmatprep.subr.mxu0 0.0
        %1443 = vmatpush2.xpose.msra.mxu0 0.0
        %1444 = vmatprep.subr.mxu0 0.0
        %1445 = vmatpush2.xpose.msra.mxu0 0.0
        %1446 = vmatprep.subr.mxu0 0.0
        %1447 = vmatpush2.xpose.msra.mxu0 0.0
        %1448 = vmatprep.subr.mxu0 0.0
        %1449 = vmatpush2.xpose.msra.mxu0 0.0
        %1450 = vmatprep.subr.mxu0 0.0
        %1451 = vmatpush2.xpose.msra.mxu0 0.0
        %1452 = vmatprep.subr.mxu0 0.0
        %1453 = vmatpush2.xpose.msra.mxu0 0.0
        %1454 = vmatprep.subr.mxu0 0.0
        %1455 = vmatpush2.xpose.msra.mxu0 0.0
        %1456 = vmatprep.subr.mxu0 0.0
        %1457 = vmatpush2.xpose.msra.mxu0 0.0
        %1458 = vmatprep.subr.mxu0 0.0
        %1459 = vmatpush2.xpose.msra.mxu0 0.0
        %1460 = vmatprep.subr.mxu0 0.0
        %1461 = vmatpush2.xpose.msra.mxu0 0.0
        %1462 = vmatprep.subr.mxu0 0.0
        %1463 = vmatpush2.xpose.msra.mxu0 0.0
        %1464 = vmatprep.subr.mxu0 0.0
        %1465 = vmatpush2.xpose.msra.mxu0 0.0
        %1466 = vmatprep.mubr.f32.mxu0 0.0
        %1467 = vmatmul.mubr.f32.gmra.mxu0 %v1394
        %v1468 = vpop.f32.mrf.mxu0
        %v1469 = vadd.f32 0.0, %v1468
        %v1470 = vpop.f32.mrf.mxu0
        %1471 = vdwg.mxu0
        %v1472 = vsel %vm1237, %v1236, 0
        %v1475 = vsel %vm1237, %v1116, 0
        %v1478 = vsel %vm1237, %v1119, 0
        %1480 = vmatprep.subr.mxu0 0.0
        %1481 = vmatpush1.xpose.msra.mxu0 0.0
        %1482 = vmatprep.subr.mxu0 0.0
        %1483 = vmatpush1.xpose.msra.mxu0 0.0
        %1484 = vmatprep.subr.mxu0 0.0
        %1485 = vmatpush1.xpose.msra.mxu0 0.0
        %1486 = vmatprep.subr.mxu0 0.0
        %1487 = vmatpush1.xpose.msra.mxu0 0.0
        %1488 = vmatprep.subr.mxu0 0.0
        %1489 = vmatpush1.xpose.msra.mxu0 0.0
        %1490 = vmatprep.subr.mxu0 0.0
        %1491 = vmatpush1.xpose.msra.mxu0 0.0
        %1492 = vmatprep.subr.mxu0 0.0
        %1493 = vmatpush1.xpose.msra.mxu0 0.0
        %1494 = vmatprep.subr.mxu0 0.0
        %1495 = vmatpush1.xpose.msra.mxu0 0.0
        %1496 = vmatprep.subr.mxu0 0.0
        %1497 = vmatpush1.xpose.msra.mxu0 0.0
        %1498 = vmatprep.subr.mxu0 0.0
        %1499 = vmatpush1.xpose.msra.mxu0 0.0
        %1500 = vmatprep.subr.mxu0 0.0
        %1501 = vmatpush1.xpose.msra.mxu0 0.0
        %1502 = vmatprep.subr.mxu0 0.0
        %1503 = vmatpush1.xpose.msra.mxu0 0.0
        %1504 = vmatprep.subr.mxu0 0.0
        %1505 = vmatpush1.xpose.msra.mxu0 0.0
        %1506 = vmatprep.subr.mxu0 0.0
        %1507 = vmatpush1.xpose.msra.mxu0 0.0
        %1508 = vmatprep.subr.mxu0 0.0
        %1509 = vmatpush1.xpose.msra.mxu0 %v1478
        %1510 = vmatprep.subr.mxu0 0.0
        %1511 = vmatpush1.xpose.msra.mxu0 %v1475
        %1512 = vmatprep.subr.mxu0 0.0
        %1513 = vmatpush2.xpose.msra.mxu0 0.0
        %1514 = vmatprep.subr.mxu0 0.0
        %1515 = vmatpush2.xpose.msra.mxu0 0.0
        %1516 = vmatprep.subr.mxu0 0.0
        %1517 = vmatpush2.xpose.msra.mxu0 0.0
        %1518 = vmatprep.subr.mxu0 0.0
        %1519 = vmatpush2.xpose.msra.mxu0 0.0
        %1520 = vmatprep.subr.mxu0 0.0
        %1521 = vmatpush2.xpose.msra.mxu0 0.0
        %1522 = vmatprep.subr.mxu0 0.0
        %1523 = vmatpush2.xpose.msra.mxu0 0.0
        %1524 = vmatprep.subr.mxu0 0.0
        %1525 = vmatpush2.xpose.msra.mxu0 0.0
        %1526 = vmatprep.subr.mxu0 0.0
        %1527 = vmatpush2.xpose.msra.mxu0 0.0
        %1528 = vmatprep.subr.mxu0 0.0
        %1529 = vmatpush2.xpose.msra.mxu0 0.0
        %1530 = vmatprep.subr.mxu0 0.0
        %1531 = vmatpush2.xpose.msra.mxu0 0.0
        %1532 = vmatprep.subr.mxu0 0.0
        %1533 = vmatpush2.xpose.msra.mxu0 0.0
        %1534 = vmatprep.subr.mxu0 0.0
        %1535 = vmatpush2.xpose.msra.mxu0 0.0
        %1536 = vmatprep.subr.mxu0 0.0
        %1537 = vmatpush2.xpose.msra.mxu0 0.0
        %1538 = vmatprep.subr.mxu0 0.0
        %1539 = vmatpush2.xpose.msra.mxu0 0.0
        %1540 = vmatprep.subr.mxu0 0.0
        %1541 = vmatpush2.xpose.msra.mxu0 0.0
        %1542 = vmatprep.subr.mxu0 0.0
        %1543 = vmatpush2.xpose.msra.mxu0 0.0
        %1544 = vmatprep.mubr.f32.mxu0 0.0
        %1545 = vmatmul.mubr.f32.gmra.mxu0 %v1472
        %v1546 = vpop.f32.mrf.mxu0
        %v1547 = vadd.f32 0.0, %v1546
        %v1548 = vpop.f32.mrf.mxu0
        %1549 = vdwg.mxu0
        %v1550 = vmul.f32 %v1313, 0.35355338
        %v1551 = vmul.f32 %v1391, 0.35355338
        %v1552 = vmul.f32 %v1469, 0.35355338
        %v1553 = vmul.f32 %v1547, 0.35355338
        %v1554 = vadd.f32 %v1550, %v923
        %v1555 = vadd.f32 %v1551, %v924
        %v1556 = vadd.f32 %v1552, %v925
        %v1557 = vadd.f32 %v1553, %v926
        %vm1558 = vcmask 122880
        %v1559 = vsel %vm1558, %v1554, -inf
        %1560 = vmax.xlane.f32.xlu0 %v1559
        %v1561 = vpop.xlane.xlu0 %1560
        %v1562 = vsel %vm1558, %v1555, -inf
        %1563 = vmax.xlane.f32.xlu0 %v1562
        %v1564 = vpop.xlane.xlu0 %1563
        %v1565 = vsel %vm1558, %v1556, -inf
        %1566 = vmax.xlane.f32.xlu0 %v1565
        %v1567 = vpop.xlane.xlu0 %1566
        %v1568 = vsel %vm1558, %v1557, -inf
        %1569 = vmax.xlane.f32.xlu0 %v1568
        %v1570 = vpop.xlane.xlu0 %1569
        %v1571 = vsub.f32 %v1554, %v1561
        %v1572 = vsub.f32 %v1555, %v1564
        %v1573 = vsub.f32 %v1556, %v1567
        %v1574 = vsub.f32 %v1557, %v1570
        %v1575 = vmul.f32 %v1571, 1.442695
        %v1576 = vpow.pop %v1575
        %v1577 = vmul.f32 %v1572, 1.442695
        %v1578 = vpow.pop %v1577
        %v1579 = vmul.f32 %v1573, 1.442695
        %v1580 = vpow.pop %v1579
        %v1581 = vmul.f32 %v1574, 1.442695
        %v1582 = vpow.pop %v1581
        %v1583 = vsel %vm1558, %v1576, 0.0
        %1584 = vadd.xlane.f32.xlu0 %v1583
        %v1585 = vpop.xlane.xlu0 %1584
        %v1586 = vsel %vm1558, %v1578, 0.0
        %1587 = vadd.xlane.f32.xlu0 %v1586
        %v1588 = vpop.xlane.xlu0 %1587
        %v1589 = vsel %vm1558, %v1580, 0.0
        %1590 = vadd.xlane.f32.xlu0 %v1589
        %v1591 = vpop.xlane.xlu0 %1590
        %v1592 = vsel %vm1558, %v1582, 0.0
        %1593 = vadd.xlane.f32.xlu0 %v1592
        %v1594 = vpop.xlane.xlu0 %1593
        %v1595 = vrcp.pop %v1585
        %v1596 = vmul.f32 %v1576, %v1595
        %v1597 = vrcp.pop %v1588
        %v1598 = vmul.f32 %v1578, %v1597
        %v1599 = vrcp.pop %v1591
        %v1600 = vmul.f32 %v1580, %v1599
        %v1601 = vrcp.pop %v1594
        %v1602 = vmul.f32 %v1582, %v1601
        %vm1603 = vcmask 130048
        %v1605 = vsel %vm1603, %v1596, 0
        %1607 = vmatprep.subr.mxu0 0.0
        %1608 = vmatpush1.msra.mxu0 0.0
        %1609 = vmatprep.subr.mxu0 0.0
        %1610 = vmatpush1.msra.mxu0 0.0
        %1611 = vmatprep.subr.mxu0 0.0
        %1612 = vmatpush1.msra.mxu0 0.0
        %1613 = vmatprep.subr.mxu0 0.0
        %1614 = vmatpush1.msra.mxu0 0.0
        %1615 = vmatprep.subr.mxu0 0.0
        %1616 = vmatpush1.msra.mxu0 0.0
        %1617 = vmatprep.subr.mxu0 0.0
        %1618 = vmatpush1.msra.mxu0 0.0
        %1619 = vmatprep.subr.mxu0 0.0
        %1620 = vmatpush1.msra.mxu0 0.0
        %1621 = vmatprep.subr.mxu0 0.0
        %1622 = vmatpush1.msra.mxu0 0.0
        %1623 = vmatprep.subr.mxu0 0.0
        %1624 = vmatpush1.msra.mxu0 0.0
        %1625 = vmatprep.subr.mxu0 0.0
        %1626 = vmatpush1.msra.mxu0 0.0
        %1627 = vmatprep.subr.mxu0 0.0
        %1628 = vmatpush1.msra.mxu0 0.0
        %1629 = vmatprep.subr.mxu0 0.0
        %1630 = vmatpush1.msra.mxu0 0.0
        %1631 = vmatprep.subr.mxu0 0.0
        %1632 = vmatpush1.msra.mxu0 0.0
        %1633 = vmatprep.subr.mxu0 0.0
        %1634 = vmatpush1.msra.mxu0 0.0
        %1635 = vmatprep.subr.mxu0 0.0
        %1636 = vmatpush1.msra.mxu0 %v1185
        %1637 = vmatprep.subr.mxu0 0.0
        %1638 = vmatpush1.msra.mxu0 %v1182
        %1639 = vmatprep.subr.mxu0 0.0
        %1640 = vmatpush2.msra.mxu0 0.0
        %1641 = vmatprep.subr.mxu0 0.0
        %1642 = vmatpush2.msra.mxu0 0.0
        %1643 = vmatprep.subr.mxu0 0.0
        %1644 = vmatpush2.msra.mxu0 0.0
        %1645 = vmatprep.subr.mxu0 0.0
        %1646 = vmatpush2.msra.mxu0 0.0
        %1647 = vmatprep.subr.mxu0 0.0
        %1648 = vmatpush2.msra.mxu0 0.0
        %1649 = vmatprep.subr.mxu0 0.0
        %1650 = vmatpush2.msra.mxu0 0.0
        %1651 = vmatprep.subr.mxu0 0.0
        %1652 = vmatpush2.msra.mxu0 0.0
        %1653 = vmatprep.subr.mxu0 0.0
        %1654 = vmatpush2.msra.mxu0 0.0
        %1655 = vmatprep.subr.mxu0 0.0
        %1656 = vmatpush2.msra.mxu0 0.0
        %1657 = vmatprep.subr.mxu0 0.0
        %1658 = vmatpush2.msra.mxu0 0.0
        %1659 = vmatprep.subr.mxu0 0.0
        %1660 = vmatpush2.msra.mxu0 0.0
        %1661 = vmatprep.subr.mxu0 0.0
        %1662 = vmatpush2.msra.mxu0 0.0
        %1663 = vmatprep.subr.mxu0 0.0
        %1664 = vmatpush2.msra.mxu0 0.0
        %1665 = vmatprep.subr.mxu0 0.0
        %1666 = vmatpush2.msra.mxu0 0.0
        %1667 = vmatprep.subr.mxu0 0.0
        %1668 = vmatpush2.msra.mxu0 0.0
        %1669 = vmatprep.subr.mxu0 0.0
        %1670 = vmatpush2.msra.mxu0 0.0
        %1671 = vmatprep.mubr.f32.mxu0 0.0
        %1672 = vmatmul.mubr.f32.gmra.mxu0 %v1605
        %v1673 = vpop.f32.mrf.mxu0
        %v1674 = vadd.f32 0.0, %v1673
        %v1675 = vpop.f32.mrf.mxu0
        %1676 = vdwg.mxu0
        %v1678 = vsel %vm1603, %v1598, 0
        %1680 = vmatprep.subr.mxu0 0.0
        %1681 = vmatpush1.msra.mxu0 0.0
        %1682 = vmatprep.subr.mxu0 0.0
        %1683 = vmatpush1.msra.mxu0 0.0
        %1684 = vmatprep.subr.mxu0 0.0
        %1685 = vmatpush1.msra.mxu0 0.0
        %1686 = vmatprep.subr.mxu0 0.0
        %1687 = vmatpush1.msra.mxu0 0.0
        %1688 = vmatprep.subr.mxu0 0.0
        %1689 = vmatpush1.msra.mxu0 0.0
        %1690 = vmatprep.subr.mxu0 0.0
        %1691 = vmatpush1.msra.mxu0 0.0
        %1692 = vmatprep.subr.mxu0 0.0
        %1693 = vmatpush1.msra.mxu0 0.0
        %1694 = vmatprep.subr.mxu0 0.0
        %1695 = vmatpush1.msra.mxu0 0.0
        %1696 = vmatprep.subr.mxu0 0.0
        %1697 = vmatpush1.msra.mxu0 0.0
        %1698 = vmatprep.subr.mxu0 0.0
        %1699 = vmatpush1.msra.mxu0 0.0
        %1700 = vmatprep.subr.mxu0 0.0
        %1701 = vmatpush1.msra.mxu0 0.0
        %1702 = vmatprep.subr.mxu0 0.0
        %1703 = vmatpush1.msra.mxu0 0.0
        %1704 = vmatprep.subr.mxu0 0.0
        %1705 = vmatpush1.msra.mxu0 0.0
        %1706 = vmatprep.subr.mxu0 0.0
        %1707 = vmatpush1.msra.mxu0 0.0
        %1708 = vmatprep.subr.mxu0 0.0
        %1709 = vmatpush1.msra.mxu0 %v1193
        %1710 = vmatprep.subr.mxu0 0.0
        %1711 = vmatpush1.msra.mxu0 %v1190
        %1712 = vmatprep.subr.mxu0 0.0
        %1713 = vmatpush2.msra.mxu0 0.0
        %1714 = vmatprep.subr.mxu0 0.0
        %1715 = vmatpush2.msra.mxu0 0.0
        %1716 = vmatprep.subr.mxu0 0.0
        %1717 = vmatpush2.msra.mxu0 0.0
        %1718 = vmatprep.subr.mxu0 0.0
        %1719 = vmatpush2.msra.mxu0 0.0
        %1720 = vmatprep.subr.mxu0 0.0
        %1721 = vmatpush2.msra.mxu0 0.0
        %1722 = vmatprep.subr.mxu0 0.0
        %1723 = vmatpush2.msra.mxu0 0.0
        %1724 = vmatprep.subr.mxu0 0.0
        %1725 = vmatpush2.msra.mxu0 0.0
        %1726 = vmatprep.subr.mxu0 0.0
        %1727 = vmatpush2.msra.mxu0 0.0
        %1728 = vmatprep.subr.mxu0 0.0
        %1729 = vmatpush2.msra.mxu0 0.0
        %1730 = vmatprep.subr.mxu0 0.0
        %1731 = vmatpush2.msra.mxu0 0.0
        %1732 = vmatprep.subr.mxu0 0.0
        %1733 = vmatpush2.msra.mxu0 0.0
        %1734 = vmatprep.subr.mxu0 0.0
        %1735 = vmatpush2.msra.mxu0 0.0
        %1736 = vmatprep.subr.mxu0 0.0
        %1737 = vmatpush2.msra.mxu0 0.0
        %1738 = vmatprep.subr.mxu0 0.0
        %1739 = vmatpush2.msra.mxu0 0.0
        %1740 = vmatprep.subr.mxu0 0.0
        %1741 = vmatpush2.msra.mxu0 0.0
        %1742 = vmatprep.subr.mxu0 0.0
        %1743 = vmatpush2.msra.mxu0 0.0
        %1744 = vmatprep.mubr.f32.mxu0 0.0
        %1745 = vmatmul.mubr.f32.gmra.mxu0 %v1678
        %v1746 = vpop.f32.mrf.mxu0
        %v1747 = vadd.f32 0.0, %v1746
        %v1748 = vpop.f32.mrf.mxu0
        %1749 = vdwg.mxu0
        %v1751 = vsel %vm1603, %v1600, 0
        %1753 = vmatprep.subr.mxu0 0.0
        %1754 = vmatpush1.msra.mxu0 0.0
        %1755 = vmatprep.subr.mxu0 0.0
        %1756 = vmatpush1.msra.mxu0 0.0
        %1757 = vmatprep.subr.mxu0 0.0
        %1758 = vmatpush1.msra.mxu0 0.0
        %1759 = vmatprep.subr.mxu0 0.0
        %1760 = vmatpush1.msra.mxu0 0.0
        %1761 = vmatprep.subr.mxu0 0.0
        %1762 = vmatpush1.msra.mxu0 0.0
        %1763 = vmatprep.subr.mxu0 0.0
        %1764 = vmatpush1.msra.mxu0 0.0
        %1765 = vmatprep.subr.mxu0 0.0
        %1766 = vmatpush1.msra.mxu0 0.0
        %1767 = vmatprep.subr.mxu0 0.0
        %1768 = vmatpush1.msra.mxu0 0.0
        %1769 = vmatprep.subr.mxu0 0.0
        %1770 = vmatpush1.msra.mxu0 0.0
        %1771 = vmatprep.subr.mxu0 0.0
        %1772 = vmatpush1.msra.mxu0 0.0
        %1773 = vmatprep.subr.mxu0 0.0
        %1774 = vmatpush1.msra.mxu0 0.0
        %1775 = vmatprep.subr.mxu0 0.0
        %1776 = vmatpush1.msra.mxu0 0.0
        %1777 = vmatprep.subr.mxu0 0.0
        %1778 = vmatpush1.msra.mxu0 0.0
        %1779 = vmatprep.subr.mxu0 0.0
        %1780 = vmatpush1.msra.mxu0 0.0
        %1781 = vmatprep.subr.mxu0 0.0
        %1782 = vmatpush1.msra.mxu0 %v1201
        %1783 = vmatprep.subr.mxu0 0.0
        %1784 = vmatpush1.msra.mxu0 %v1198
        %1785 = vmatprep.subr.mxu0 0.0
        %1786 = vmatpush2.msra.mxu0 0.0
        %1787 = vmatprep.subr.mxu0 0.0
        %1788 = vmatpush2.msra.mxu0 0.0
        %1789 = vmatprep.subr.mxu0 0.0
        %1790 = vmatpush2.msra.mxu0 0.0
        %1791 = vmatprep.subr.mxu0 0.0
        %1792 = vmatpush2.msra.mxu0 0.0
        %1793 = vmatprep.subr.mxu0 0.0
        %1794 = vmatpush2.msra.mxu0 0.0
        %1795 = vmatprep.subr.mxu0 0.0
        %1796 = vmatpush2.msra.mxu0 0.0
        %1797 = vmatprep.subr.mxu0 0.0
        %1798 = vmatpush2.msra.mxu0 0.0
        %1799 = vmatprep.subr.mxu0 0.0
        %1800 = vmatpush2.msra.mxu0 0.0
        %1801 = vmatprep.subr.mxu0 0.0
        %1802 = vmatpush2.msra.mxu0 0.0
        %1803 = vmatprep.subr.mxu0 0.0
        %1804 = vmatpush2.msra.mxu0 0.0
        %1805 = vmatprep.subr.mxu0 0.0
        %1806 = vmatpush2.msra.mxu0 0.0
        %1807 = vmatprep.subr.mxu0 0.0
        %1808 = vmatpush2.msra.mxu0 0.0
        %1809 = vmatprep.subr.mxu0 0.0
        %1810 = vmatpush2.msra.mxu0 0.0
        %1811 = vmatprep.subr.mxu0 0.0
        %1812 = vmatpush2.msra.mxu0 0.0
        %1813 = vmatprep.subr.mxu0 0.0
        %1814 = vmatpush2.msra.mxu0 0.0
        %1815 = vmatprep.subr.mxu0 0.0
        %1816 = vmatpush2.msra.mxu0 0.0
        %1817 = vmatprep.mubr.f32.mxu0 0.0
        %1818 = vmatmul.mubr.f32.gmra.mxu0 %v1751
        %v1819 = vpop.f32.mrf.mxu0
        %v1820 = vadd.f32 0.0, %v1819
        %v1821 = vpop.f32.mrf.mxu0
        %1822 = vdwg.mxu0
        %v1824 = vsel %vm1603, %v1602, 0
        %1826 = vmatprep.subr.mxu0 0.0
        %1827 = vmatpush1.msra.mxu0 0.0
        %1828 = vmatprep.subr.mxu0 0.0
        %1829 = vmatpush1.msra.mxu0 0.0
        %1830 = vmatprep.subr.mxu0 0.0
        %1831 = vmatpush1.msra.mxu0 0.0
        %1832 = vmatprep.subr.mxu0 0.0
        %1833 = vmatpush1.msra.mxu0 0.0
        %1834 = vmatprep.subr.mxu0 0.0
        %1835 = vmatpush1.msra.mxu0 0.0
        %1836 = vmatprep.subr.mxu0 0.0
        %1837 = vmatpush1.msra.mxu0 0.0
        %1838 = vmatprep.subr.mxu0 0.0
        %1839 = vmatpush1.msra.mxu0 0.0
        %1840 = vmatprep.subr.mxu0 0.0
        %1841 = vmatpush1.msra.mxu0 0.0
        %1842 = vmatprep.subr.mxu0 0.0
        %1843 = vmatpush1.msra.mxu0 0.0
        %1844 = vmatprep.subr.mxu0 0.0
        %1845 = vmatpush1.msra.mxu0 0.0
        %1846 = vmatprep.subr.mxu0 0.0
        %1847 = vmatpush1.msra.mxu0 0.0
        %1848 = vmatprep.subr.mxu0 0.0
        %1849 = vmatpush1.msra.mxu0 0.0
        %1850 = vmatprep.subr.mxu0 0.0
        %1851 = vmatpush1.msra.mxu0 0.0
        %1852 = vmatprep.subr.mxu0 0.0
        %1853 = vmatpush1.msra.mxu0 0.0
        %1854 = vmatprep.subr.mxu0 0.0
        %1855 = vmatpush1.msra.mxu0 %v1209
        %1856 = vmatprep.subr.mxu0 0.0
        %1857 = vmatpush1.msra.mxu0 %v1206
        %1858 = vmatprep.subr.mxu0 0.0
        %1859 = vmatpush2.msra.mxu0 0.0
        %1860 = vmatprep.subr.mxu0 0.0
        %1861 = vmatpush2.msra.mxu0 0.0
        %1862 = vmatprep.subr.mxu0 0.0
        %1863 = vmatpush2.msra.mxu0 0.0
        %1864 = vmatprep.subr.mxu0 0.0
        %1865 = vmatpush2.msra.mxu0 0.0
        %1866 = vmatprep.subr.mxu0 0.0
        %1867 = vmatpush2.msra.mxu0 0.0
        %1868 = vmatprep.subr.mxu0 0.0
        %1869 = vmatpush2.msra.mxu0 0.0
        %1870 = vmatprep.subr.mxu0 0.0
        %1871 = vmatpush2.msra.mxu0 0.0
        %1872 = vmatprep.subr.mxu0 0.0
        %1873 = vmatpush2.msra.mxu0 0.0
        %1874 = vmatprep.subr.mxu0 0.0
        %1875 = vmatpush2.msra.mxu0 0.0
        %1876 = vmatprep.subr.mxu0 0.0
        %1877 = vmatpush2.msra.mxu0 0.0
        %1878 = vmatprep.subr.mxu0 0.0
        %1879 = vmatpush2.msra.mxu0 0.0
        %1880 = vmatprep.subr.mxu0 0.0
        %1881 = vmatpush2.msra.mxu0 0.0
        %1882 = vmatprep.subr.mxu0 0.0
        %1883 = vmatpush2.msra.mxu0 0.0
        %1884 = vmatprep.subr.mxu0 0.0
        %1885 = vmatpush2.msra.mxu0 0.0
        %1886 = vmatprep.subr.mxu0 0.0
        %1887 = vmatpush2.msra.mxu0 0.0
        %1888 = vmatprep.subr.mxu0 0.0
        %1889 = vmatpush2.msra.mxu0 0.0
        %1890 = vmatprep.mubr.f32.mxu0 0.0
        %1891 = vmatmul.mubr.f32.gmra.mxu0 %v1824
        %v1892 = vpop.f32.mrf.mxu0
        %v1893 = vadd.f32 0.0, %v1892
        %v1894 = vpop.f32.mrf.mxu0
        %1895 = vdwg.mxu0
        %v1896 = vlaneseq
        %v1897 = vshrl.u32 %v1896, 7
        %v1898 = vsub.s32 0, %v1897
        %v1899 = vrot.slane %v1227, %v1898
        %1900 = vrot.lane.b32.xlu0 %v1899, 120
        %v1901 = vpop.permute.xlu0 %1900
        %1902 = vrot.lane.b32.xlu0 %v1092, 120
        %v1903 = vpop.permute.xlu0 %1902
        %1904 = vrot.lane.b32.xlu0 %v1095, 120
        %v1905 = vpop.permute.xlu0 %1904
        %v1906 = vsel %vm1237, %v1901, 0
        %v1908 = vsel %vm1237, %v1903, 0
        %v1910 = vsel %vm1237, %v1905, 0
        %1912 = vmatprep.subr.mxu0 0.0
        %1913 = vmatpush1.xpose.msra.mxu0 0.0
        %1914 = vmatprep.subr.mxu0 0.0
        %1915 = vmatpush1.xpose.msra.mxu0 0.0
        %1916 = vmatprep.subr.mxu0 0.0
        %1917 = vmatpush1.xpose.msra.mxu0 0.0
        %1918 = vmatprep.subr.mxu0 0.0
        %1919 = vmatpush1.xpose.msra.mxu0 0.0
        %1920 = vmatprep.subr.mxu0 0.0
        %1921 = vmatpush1.xpose.msra.mxu0 0.0
        %1922 = vmatprep.subr.mxu0 0.0
        %1923 = vmatpush1.xpose.msra.mxu0 0.0
        %1924 = vmatprep.subr.mxu0 0.0
        %1925 = vmatpush1.xpose.msra.mxu0 0.0
        %1926 = vmatprep.subr.mxu0 0.0
        %1927 = vmatpush1.xpose.msra.mxu0 0.0
        %1928 = vmatprep.subr.mxu0 0.0
        %1929 = vmatpush1.xpose.msra.mxu0 0.0
        %1930 = vmatprep.subr.mxu0 0.0
        %1931 = vmatpush1.xpose.msra.mxu0 0.0
        %1932 = vmatprep.subr.mxu0 0.0
        %1933 = vmatpush1.xpose.msra.mxu0 0.0
        %1934 = vmatprep.subr.mxu0 0.0
        %1935 = vmatpush1.xpose.msra.mxu0 0.0
        %1936 = vmatprep.subr.mxu0 0.0
        %1937 = vmatpush1.xpose.msra.mxu0 0.0
        %1938 = vmatprep.subr.mxu0 0.0
        %1939 = vmatpush1.xpose.msra.mxu0 0.0
        %1940 = vmatprep.subr.mxu0 0.0
        %1941 = vmatpush1.xpose.msra.mxu0 %v1910
        %1942 = vmatprep.subr.mxu0 0.0
        %1943 = vmatpush1.xpose.msra.mxu0 %v1908
        %1944 = vmatprep.subr.mxu0 0.0
        %1945 = vmatpush2.xpose.msra.mxu0 0.0
        %1946 = vmatprep.subr.mxu0 0.0
        %1947 = vmatpush2.xpose.msra.mxu0 0.0
        %1948 = vmatprep.subr.mxu0 0.0
        %1949 = vmatpush2.xpose.msra.mxu0 0.0
        %1950 = vmatprep.subr.mxu0 0.0
        %1951 = vmatpush2.xpose.msra.mxu0 0.0
        %1952 = vmatprep.subr.mxu0 0.0
        %1953 = vmatpush2.xpose.msra.mxu0 0.0
        %1954 = vmatprep.subr.mxu0 0.0
        %1955 = vmatpush2.xpose.msra.mxu0 0.0
        %1956 = vmatprep.subr.mxu0 0.0
        %1957 = vmatpush2.xpose.msra.mxu0 0.0
        %1958 = vmatprep.subr.mxu0 0.0
        %1959 = vmatpush2.xpose.msra.mxu0 0.0
        %1960 = vmatprep.subr.mxu0 0.0
        %1961 = vmatpush2.xpose.msra.mxu0 0.0
        %1962 = vmatprep.subr.mxu0 0.0
        %1963 = vmatpush2.xpose.msra.mxu0 0.0
        %1964 = vmatprep.subr.mxu0 0.0
        %1965 = vmatpush2.xpose.msra.mxu0 0.0
        %1966 = vmatprep.subr.mxu0 0.0
        %1967 = vmatpush2.xpose.msra.mxu0 0.0
        %1968 = vmatprep.subr.mxu0 0.0
        %1969 = vmatpush2.xpose.msra.mxu0 0.0
        %1970 = vmatprep.subr.mxu0 0.0
        %1971 = vmatpush2.xpose.msra.mxu0 0.0
        %1972 = vmatprep.subr.mxu0 0.0
        %1973 = vmatpush2.xpose.msra.mxu0 0.0
        %1974 = vmatprep.subr.mxu0 0.0
        %1975 = vmatpush2.xpose.msra.mxu0 0.0
        %1976 = vmatprep.mubr.f32.mxu0 0.0
        %1977 = vmatmul.mubr.f32.gmra.mxu0 %v1906
        %v1978 = vpop.f32.mrf.mxu0
        %v1979 = vadd.f32 0.0, %v1978
        %v1980 = vpop.f32.mrf.mxu0
        %1981 = vdwg.mxu0
        %v1982 = vlaneseq
        %v1983 = vshrl.u32 %v1982, 7
        %v1984 = vsub.s32 0, %v1983
        %v1985 = vrot.slane %v1234, %v1984
        %1986 = vrot.lane.b32.xlu0 %v1985, 120
        %v1987 = vpop.permute.xlu0 %1986
        %1988 = vrot.lane.b32.xlu0 %v1100, 120
        %v1989 = vpop.permute.xlu0 %1988
        %1990 = vrot.lane.b32.xlu0 %v1103, 120
        %v1991 = vpop.permute.xlu0 %1990
        %v1992 = vsel %vm1237, %v1987, 0
        %v1994 = vsel %vm1237, %v1989, 0
        %v1996 = vsel %vm1237, %v1991, 0
        %1998 = vmatprep.subr.mxu0 0.0
        %1999 = vmatpush1.xpose.msra.mxu0 0.0
        %2000 = vmatprep.subr.mxu0 0.0
        %2001 = vmatpush1.xpose.msra.mxu0 0.0
        %2002 = vmatprep.subr.mxu0 0.0
        %2003 = vmatpush1.xpose.msra.mxu0 0.0
        %2004 = vmatprep.subr.mxu0 0.0
        %2005 = vmatpush1.xpose.msra.mxu0 0.0
        %2006 = vmatprep.subr.mxu0 0.0
        %2007 = vmatpush1.xpose.msra.mxu0 0.0
        %2008 = vmatprep.subr.mxu0 0.0
        %2009 = vmatpush1.xpose.msra.mxu0 0.0
        %2010 = vmatprep.subr.mxu0 0.0
        %2011 = vmatpush1.xpose.msra.mxu0 0.0
        %2012 = vmatprep.subr.mxu0 0.0
        %2013 = vmatpush1.xpose.msra.mxu0 0.0
        %2014 = vmatprep.subr.mxu0 0.0
        %2015 = vmatpush1.xpose.msra.mxu0 0.0
        %2016 = vmatprep.subr.mxu0 0.0
        %2017 = vmatpush1.xpose.msra.mxu0 0.0
        %2018 = vmatprep.subr.mxu0 0.0
        %2019 = vmatpush1.xpose.msra.mxu0 0.0
        %2020 = vmatprep.subr.mxu0 0.0
        %2021 = vmatpush1.xpose.msra.mxu0 0.0
        %2022 = vmatprep.subr.mxu0 0.0
        %2023 = vmatpush1.xpose.msra.mxu0 0.0
        %2024 = vmatprep.subr.mxu0 0.0
        %2025 = vmatpush1.xpose.msra.mxu0 0.0
        %2026 = vmatprep.subr.mxu0 0.0
        %2027 = vmatpush1.xpose.msra.mxu0 %v1996
        %2028 = vmatprep.subr.mxu0 0.0
        %2029 = vmatpush1.xpose.msra.mxu0 %v1994
        %2030 = vmatprep.subr.mxu0 0.0
        %2031 = vmatpush2.xpose.msra.mxu0 0.0
        %2032 = vmatprep.subr.mxu0 0.0
        %2033 = vmatpush2.xpose.msra.mxu0 0.0
        %2034 = vmatprep.subr.mxu0 0.0
        %2035 = vmatpush2.xpose.msra.mxu0 0.0
        %2036 = vmatprep.subr.mxu0 0.0
        %2037 = vmatpush2.xpose.msra.mxu0 0.0
        %2038 = vmatprep.subr.mxu0 0.0
        %2039 = vmatpush2.xpose.msra.mxu0 0.0
        %2040 = vmatprep.subr.mxu0 0.0
        %2041 = vmatpush2.xpose.msra.mxu0 0.0
        %2042 = vmatprep.subr.mxu0 0.0
        %2043 = vmatpush2.xpose.msra.mxu0 0.0
        %2044 = vmatprep.subr.mxu0 0.0
        %2045 = vmatpush2.xpose.msra.mxu0 0.0
        %2046 = vmatprep.subr.mxu0 0.0
        %2047 = vmatpush2.xpose.msra.mxu0 0.0
        %2048 = vmatprep.subr.mxu0 0.0
        %2049 = vmatpush2.xpose.msra.mxu0 0.0
        %2050 = vmatprep.subr.mxu0 0.0
        %2051 = vmatpush2.xpose.msra.mxu0 0.0
        %2052 = vmatprep.subr.mxu0 0.0
        %2053 = vmatpush2.xpose.msra.mxu0 0.0
        %2054 = vmatprep.subr.mxu0 0.0
        %2055 = vmatpush2.xpose.msra.mxu0 0.0
        %2056 = vmatprep.subr.mxu0 0.0
        %2057 = vmatpush2.xpose.msra.mxu0 0.0
        %2058 = vmatprep.subr.mxu0 0.0
        %2059 = vmatpush2.xpose.msra.mxu0 0.0
        %2060 = vmatprep.subr.mxu0 0.0
        %2061 = vmatpush2.xpose.msra.mxu0 0.0
        %2062 = vmatprep.mubr.f32.mxu0 0.0
        %2063 = vmatmul.mubr.f32.gmra.mxu0 %v1992
        %v2064 = vpop.f32.mrf.mxu0
        %v2065 = vadd.f32 0.0, %v2064
        %v2066 = vpop.f32.mrf.mxu0
        %2067 = vdwg.mxu0
        %v2068 = vlaneseq
        %v2069 = vshrl.u32 %v2068, 7
        %v2070 = vsub.s32 0, %v2069
        %v2071 = vrot.slane %v1235, %v2070
        %2072 = vrot.lane.b32.xlu0 %v2071, 120
        %v2073 = vpop.permute.xlu0 %2072
        %2074 = vrot.lane.b32.xlu0 %v1108, 120
        %v2075 = vpop.permute.xlu0 %2074
        %2076 = vrot.lane.b32.xlu0 %v1111, 120
        %v2077 = vpop.permute.xlu0 %2076
        %v2078 = vsel %vm1237, %v2073, 0
        %v2080 = vsel %vm1237, %v2075, 0
        %v2082 = vsel %vm1237, %v2077, 0
        %2084 = vmatprep.subr.mxu0 0.0
        %2085 = vmatpush1.xpose.msra.mxu0 0.0
        %2086 = vmatprep.subr.mxu0 0.0
        %2087 = vmatpush1.xpose.msra.mxu0 0.0
        %2088 = vmatprep.subr.mxu0 0.0
        %2089 = vmatpush1.xpose.msra.mxu0 0.0
        %2090 = vmatprep.subr.mxu0 0.0
        %2091 = vmatpush1.xpose.msra.mxu0 0.0
        %2092 = vmatprep.subr.mxu0 0.0
        %2093 = vmatpush1.xpose.msra.mxu0 0.0
        %2094 = vmatprep.subr.mxu0 0.0
        %2095 = vmatpush1.xpose.msra.mxu0 0.0
        %2096 = vmatprep.subr.mxu0 0.0
        %2097 = vmatpush1.xpose.msra.mxu0 0.0
        %2098 = vmatprep.subr.mxu0 0.0
        %2099 = vmatpush1.xpose.msra.mxu0 0.0
        %2100 = vmatprep.subr.mxu0 0.0
        %2101 = vmatpush1.xpose.msra.mxu0 0.0
        %2102 = vmatprep.subr.mxu0 0.0
        %2103 = vmatpush1.xpose.msra.mxu0 0.0
        %2104 = vmatprep.subr.mxu0 0.0
        %2105 = vmatpush1.xpose.msra.mxu0 0.0
        %2106 = vmatprep.subr.mxu0 0.0
        %2107 = vmatpush1.xpose.msra.mxu0 0.0
        %2108 = vmatprep.subr.mxu0 0.0
        %2109 = vmatpush1.xpose.msra.mxu0 0.0
        %2110 = vmatprep.subr.mxu0 0.0
        %2111 = vmatpush1.xpose.msra.mxu0 0.0
        %2112 = vmatprep.subr.mxu0 0.0
        %2113 = vmatpush1.xpose.msra.mxu0 %v2082
        %2114 = vmatprep.subr.mxu0 0.0
        %2115 = vmatpush1.xpose.msra.mxu0 %v2080
        %2116 = vmatprep.subr.mxu0 0.0
        %2117 = vmatpush2.xpose.msra.mxu0 0.0
        %2118 = vmatprep.subr.mxu0 0.0
        %2119 = vmatpush2.xpose.msra.mxu0 0.0
        %2120 = vmatprep.subr.mxu0 0.0
        %2121 = vmatpush2.xpose.msra.mxu0 0.0
        %2122 = vmatprep.subr.mxu0 0.0
        %2123 = vmatpush2.xpose.msra.mxu0 0.0
        %2124 = vmatprep.subr.mxu0 0.0
        %2125 = vmatpush2.xpose.msra.mxu0 0.0
        %2126 = vmatprep.subr.mxu0 0.0
        %2127 = vmatpush2.xpose.msra.mxu0 0.0
        %2128 = vmatprep.subr.mxu0 0.0
        %2129 = vmatpush2.xpose.msra.mxu0 0.0
        %2130 = vmatprep.subr.mxu0 0.0
        %2131 = vmatpush2.xpose.msra.mxu0 0.0
        %2132 = vmatprep.subr.mxu0 0.0
        %2133 = vmatpush2.xpose.msra.mxu0 0.0
        %2134 = vmatprep.subr.mxu0 0.0
        %2135 = vmatpush2.xpose.msra.mxu0 0.0
        %2136 = vmatprep.subr.mxu0 0.0
        %2137 = vmatpush2.xpose.msra.mxu0 0.0
        %2138 = vmatprep.subr.mxu0 0.0
        %2139 = vmatpush2.xpose.msra.mxu0 0.0
        %2140 = vmatprep.subr.mxu0 0.0
        %2141 = vmatpush2.xpose.msra.mxu0 0.0
        %2142 = vmatprep.subr.mxu0 0.0
        %2143 = vmatpush2.xpose.msra.mxu0 0.0
        %2144 = vmatprep.subr.mxu0 0.0
        %2145 = vmatpush2.xpose.msra.mxu0 0.0
        %2146 = vmatprep.subr.mxu0 0.0
        %2147 = vmatpush2.xpose.msra.mxu0 0.0
        %2148 = vmatprep.mubr.f32.mxu0 0.0
        %2149 = vmatmul.mubr.f32.gmra.mxu0 %v2078
        %v2150 = vpop.f32.mrf.mxu0
        %v2151 = vadd.f32 0.0, %v2150
        %v2152 = vpop.f32.mrf.mxu0
        %2153 = vdwg.mxu0
        %v2154 = vlaneseq
        %v2155 = vshrl.u32 %v2154, 7
        %v2156 = vsub.s32 0, %v2155
        %v2157 = vrot.slane %v1236, %v2156
        %2158 = vrot.lane.b32.xlu0 %v2157, 120
        %v2159 = vpop.permute.xlu0 %2158
        %2160 = vrot.lane.b32.xlu0 %v1116, 120
        %v2161 = vpop.permute.xlu0 %2160
        %2162 = vrot.lane.b32.xlu0 %v1119, 120
        %v2163 = vpop.permute.xlu0 %2162
        %v2164 = vsel %vm1237, %v2159, 0
        %v2166 = vsel %vm1237, %v2161, 0
        %v2168 = vsel %vm1237, %v2163, 0
        %2170 = vmatprep.subr.mxu0 0.0
        %2171 = vmatpush1.xpose.msra.mxu0 0.0
        %2172 = vmatprep.subr.mxu0 0.0
        %2173 = vmatpush1.xpose.msra.mxu0 0.0
        %2174 = vmatprep.subr.mxu0 0.0
        %2175 = vmatpush1.xpose.msra.mxu0 0.0
        %2176 = vmatprep.subr.mxu0 0.0
        %2177 = vmatpush1.xpose.msra.mxu0 0.0
        %2178 = vmatprep.subr.mxu0 0.0
        %2179 = vmatpush1.xpose.msra.mxu0 0.0
        %2180 = vmatprep.subr.mxu0 0.0
        %2181 = vmatpush1.xpose.msra.mxu0 0.0
        %2182 = vmatprep.subr.mxu0 0.0
        %2183 = vmatpush1.xpose.msra.mxu0 0.0
        %2184 = vmatprep.subr.mxu0 0.0
        %2185 = vmatpush1.xpose.msra.mxu0 0.0
        %2186 = vmatprep.subr.mxu0 0.0
        %2187 = vmatpush1.xpose.msra.mxu0 0.0
        %2188 = vmatprep.subr.mxu0 0.0
        %2189 = vmatpush1.xpose.msra.mxu0 0.0
        %2190 = vmatprep.subr.mxu0 0.0
        %2191 = vmatpush1.xpose.msra.mxu0 0.0
        %2192 = vmatprep.subr.mxu0 0.0
        %2193 = vmatpush1.xpose.msra.mxu0 0.0
        %2194 = vmatprep.subr.mxu0 0.0
        %2195 = vmatpush1.xpose.msra.mxu0 0.0
        %2196 = vmatprep.subr.mxu0 0.0
        %2197 = vmatpush1.xpose.msra.mxu0 0.0
        %2198 = vmatprep.subr.mxu0 0.0
        %2199 = vmatpush1.xpose.msra.mxu0 %v2168
        %2200 = vmatprep.subr.mxu0 0.0
        %2201 = vmatpush1.xpose.msra.mxu0 %v2166
        %2202 = vmatprep.subr.mxu0 0.0
        %2203 = vmatpush2.xpose.msra.mxu0 0.0
        %2204 = vmatprep.subr.mxu0 0.0
        %2205 = vmatpush2.xpose.msra.mxu0 0.0
        %2206 = vmatprep.subr.mxu0 0.0
        %2207 = vmatpush2.xpose.msra.mxu0 0.0
        %2208 = vmatprep.subr.mxu0 0.0
        %2209 = vmatpush2.xpose.msra.mxu0 0.0
        %2210 = vmatprep.subr.mxu0 0.0
        %2211 = vmatpush2.xpose.msra.mxu0 0.0
        %2212 = vmatprep.subr.mxu0 0.0
        %2213 = vmatpush2.xpose.msra.mxu0 0.0
        %2214 = vmatprep.subr.mxu0 0.0
        %2215 = vmatpush2.xpose.msra.mxu0 0.0
        %2216 = vmatprep.subr.mxu0 0.0
        %2217 = vmatpush2.xpose.msra.mxu0 0.0
        %2218 = vmatprep.subr.mxu0 0.0
        %2219 = vmatpush2.xpose.msra.mxu0 0.0
        %2220 = vmatprep.subr.mxu0 0.0
        %2221 = vmatpush2.xpose.msra.mxu0 0.0
        %2222 = vmatprep.subr.mxu0 0.0
        %2223 = vmatpush2.xpose.msra.mxu0 0.0
        %2224 = vmatprep.subr.mxu0 0.0
        %2225 = vmatpush2.xpose.msra.mxu0 0.0
        %2226 = vmatprep.subr.mxu0 0.0
        %2227 = vmatpush2.xpose.msra.mxu0 0.0
        %2228 = vmatprep.subr.mxu0 0.0
        %2229 = vmatpush2.xpose.msra.mxu0 0.0
        %2230 = vmatprep.subr.mxu0 0.0
        %2231 = vmatpush2.xpose.msra.mxu0 0.0
        %2232 = vmatprep.subr.mxu0 0.0
        %2233 = vmatpush2.xpose.msra.mxu0 0.0
        %2234 = vmatprep.mubr.f32.mxu0 0.0
        %2235 = vmatmul.mubr.f32.gmra.mxu0 %v2164
        %v2236 = vpop.f32.mrf.mxu0
        %v2237 = vadd.f32 0.0, %v2236
        %v2238 = vpop.f32.mrf.mxu0
        %2239 = vdwg.mxu0
        %v2240 = vmul.f32 %v1979, 0.35355338
        %v2241 = vmul.f32 %v2065, 0.35355338
        %v2242 = vmul.f32 %v2151, 0.35355338
        %v2243 = vmul.f32 %v2237, 0.35355338
        %v2244 = vadd.f32 %v2240, %v923
        %v2245 = vadd.f32 %v2241, %v924
        %v2246 = vadd.f32 %v2242, %v925
        %v2247 = vadd.f32 %v2243, %v926
        %v2248 = vsel %vm1558, %v2244, -inf
        %2249 = vmax.xlane.f32.xlu0 %v2248
        %v2250 = vpop.xlane.xlu0 %2249
        %v2251 = vsel %vm1558, %v2245, -inf
        %2252 = vmax.xlane.f32.xlu0 %v2251
        %v2253 = vpop.xlane.xlu0 %2252
        %v2254 = vsel %vm1558, %v2246, -inf
        %2255 = vmax.xlane.f32.xlu0 %v2254
        %v2256 = vpop.xlane.xlu0 %2255
        %v2257 = vsel %vm1558, %v2247, -inf
        %2258 = vmax.xlane.f32.xlu0 %v2257
        %v2259 = vpop.xlane.xlu0 %2258
        %v2260 = vsub.f32 %v2244, %v2250
        %v2261 = vsub.f32 %v2245, %v2253
        %v2262 = vsub.f32 %v2246, %v2256
        %v2263 = vsub.f32 %v2247, %v2259
        %v2264 = vmul.f32 %v2260, 1.442695
        %v2265 = vpow.pop %v2264
        %v2266 = vmul.f32 %v2261, 1.442695
        %v2267 = vpow.pop %v2266
        %v2268 = vmul.f32 %v2262, 1.442695
        %v2269 = vpow.pop %v2268
        %v2270 = vmul.f32 %v2263, 1.442695
        %v2271 = vpow.pop %v2270
        %v2272 = vsel %vm1558, %v2265, 0.0
        %2273 = vadd.xlane.f32.xlu0 %v2272
        %v2274 = vpop.xlane.xlu0 %2273
        %v2275 = vsel %vm1558, %v2267, 0.0
        %2276 = vadd.xlane.f32.xlu0 %v2275
        %v2277 = vpop.xlane.xlu0 %2276
        %v2278 = vsel %vm1558, %v2269, 0.0
        %2279 = vadd.xlane.f32.xlu0 %v2278
        %v2280 = vpop.xlane.xlu0 %2279
        %v2281 = vsel %vm1558, %v2271, 0.0
        %2282 = vadd.xlane.f32.xlu0 %v2281
        %v2283 = vpop.xlane.xlu0 %2282
        %v2284 = vrcp.pop %v2274
        %v2285 = vmul.f32 %v2265, %v2284
        %v2286 = vrcp.pop %v2277
        %v2287 = vmul.f32 %v2267, %v2286
        %v2288 = vrcp.pop %v2280
        %v2289 = vmul.f32 %v2269, %v2288
        %v2290 = vrcp.pop %v2283
        %v2291 = vmul.f32 %v2271, %v2290
        %2294 = vrot.lane.b32.xlu0 %v1182, 120
        %v2295 = vpop.permute.xlu0 %2294
        %2296 = vrot.lane.b32.xlu0 %v1185, 120
        %v2297 = vpop.permute.xlu0 %2296
        %v2301 = vsel %vm1603, %v2285, 0
        %2303 = vmatprep.subr.mxu0 0.0
        %2304 = vmatpush1.msra.mxu0 0.0
        %2305 = vmatprep.subr.mxu0 0.0
        %2306 = vmatpush1.msra.mxu0 0.0
        %2307 = vmatprep.subr.mxu0 0.0
        %2308 = vmatpush1.msra.mxu0 0.0
        %2309 = vmatprep.subr.mxu0 0.0
        %2310 = vmatpush1.msra.mxu0 0.0
        %2311 = vmatprep.subr.mxu0 0.0
        %2312 = vmatpush1.msra.mxu0 0.0
        %2313 = vmatprep.subr.mxu0 0.0
        %2314 = vmatpush1.msra.mxu0 0.0
        %2315 = vmatprep.subr.mxu0 0.0
        %2316 = vmatpush1.msra.mxu0 0.0
        %2317 = vmatprep.subr.mxu0 0.0
        %2318 = vmatpush1.msra.mxu0 0.0
        %2319 = vmatprep.subr.mxu0 0.0
        %2320 = vmatpush1.msra.mxu0 0.0
        %2321 = vmatprep.subr.mxu0 0.0
        %2322 = vmatpush1.msra.mxu0 0.0
        %2323 = vmatprep.subr.mxu0 0.0
        %2324 = vmatpush1.msra.mxu0 0.0
        %2325 = vmatprep.subr.mxu0 0.0
        %2326 = vmatpush1.msra.mxu0 0.0
        %2327 = vmatprep.subr.mxu0 0.0
        %2328 = vmatpush1.msra.mxu0 0.0
        %2329 = vmatprep.subr.mxu0 0.0
        %2330 = vmatpush1.msra.mxu0 0.0
        %2331 = vmatprep.subr.mxu0 0.0
        %2332 = vmatpush1.msra.mxu0 %v2297
        %2333 = vmatprep.subr.mxu0 0.0
        %2334 = vmatpush1.msra.mxu0 %v2295
        %2335 = vmatprep.subr.mxu0 0.0
        %2336 = vmatpush2.msra.mxu0 0.0
        %2337 = vmatprep.subr.mxu0 0.0
        %2338 = vmatpush2.msra.mxu0 0.0
        %2339 = vmatprep.subr.mxu0 0.0
        %2340 = vmatpush2.msra.mxu0 0.0
        %2341 = vmatprep.subr.mxu0 0.0
        %2342 = vmatpush2.msra.mxu0 0.0
        %2343 = vmatprep.subr.mxu0 0.0
        %2344 = vmatpush2.msra.mxu0 0.0
        %2345 = vmatprep.subr.mxu0 0.0
        %2346 = vmatpush2.msra.mxu0 0.0
        %2347 = vmatprep.subr.mxu0 0.0
        %2348 = vmatpush2.msra.mxu0 0.0
        %2349 = vmatprep.subr.mxu0 0.0
        %2350 = vmatpush2.msra.mxu0 0.0
        %2351 = vmatprep.subr.mxu0 0.0
        %2352 = vmatpush2.msra.mxu0 0.0
        %2353 = vmatprep.subr.mxu0 0.0
        %2354 = vmatpush2.msra.mxu0 0.0
        %2355 = vmatprep.subr.mxu0 0.0
        %2356 = vmatpush2.msra.mxu0 0.0
        %2357 = vmatprep.subr.mxu0 0.0
        %2358 = vmatpush2.msra.mxu0 0.0
        %2359 = vmatprep.subr.mxu0 0.0
        %2360 = vmatpush2.msra.mxu0 0.0
        %2361 = vmatprep.subr.mxu0 0.0
        %2362 = vmatpush2.msra.mxu0 0.0
        %2363 = vmatprep.subr.mxu0 0.0
        %2364 = vmatpush2.msra.mxu0 0.0
        %2365 = vmatprep.subr.mxu0 0.0
        %2366 = vmatpush2.msra.mxu0 0.0
        %2367 = vmatprep.mubr.f32.mxu0 0.0
        %2368 = vmatmul.mubr.f32.gmra.mxu0 %v2301
        %v2369 = vpop.f32.mrf.mxu0
        %v2370 = vadd.f32 0.0, %v2369
        %v2371 = vpop.f32.mrf.mxu0
        %2372 = vdwg.mxu0
        %2375 = vrot.lane.b32.xlu0 %v1190, 120
        %v2376 = vpop.permute.xlu0 %2375
        %2377 = vrot.lane.b32.xlu0 %v1193, 120
        %v2378 = vpop.permute.xlu0 %2377
        %v2382 = vsel %vm1603, %v2287, 0
        %2384 = vmatprep.subr.mxu0 0.0
        %2385 = vmatpush1.msra.mxu0 0.0
        %2386 = vmatprep.subr.mxu0 0.0
        %2387 = vmatpush1.msra.mxu0 0.0
        %2388 = vmatprep.subr.mxu0 0.0
        %2389 = vmatpush1.msra.mxu0 0.0
        %2390 = vmatprep.subr.mxu0 0.0
        %2391 = vmatpush1.msra.mxu0 0.0
        %2392 = vmatprep.subr.mxu0 0.0
        %2393 = vmatpush1.msra.mxu0 0.0
        %2394 = vmatprep.subr.mxu0 0.0
        %2395 = vmatpush1.msra.mxu0 0.0
        %2396 = vmatprep.subr.mxu0 0.0
        %2397 = vmatpush1.msra.mxu0 0.0
        %2398 = vmatprep.subr.mxu0 0.0
        %2399 = vmatpush1.msra.mxu0 0.0
        %2400 = vmatprep.subr.mxu0 0.0
        %2401 = vmatpush1.msra.mxu0 0.0
        %2402 = vmatprep.subr.mxu0 0.0
        %2403 = vmatpush1.msra.mxu0 0.0
        %2404 = vmatprep.subr.mxu0 0.0
        %2405 = vmatpush1.msra.mxu0 0.0
        %2406 = vmatprep.subr.mxu0 0.0
        %2407 = vmatpush1.msra.mxu0 0.0
        %2408 = vmatprep.subr.mxu0 0.0
        %2409 = vmatpush1.msra.mxu0 0.0
        %2410 = vmatprep.subr.mxu0 0.0
        %2411 = vmatpush1.msra.mxu0 0.0
        %2412 = vmatprep.subr.mxu0 0.0
        %2413 = vmatpush1.msra.mxu0 %v2378
        %2414 = vmatprep.subr.mxu0 0.0
        %2415 = vmatpush1.msra.mxu0 %v2376
        %2416 = vmatprep.subr.mxu0 0.0
        %2417 = vmatpush2.msra.mxu0 0.0
        %2418 = vmatprep.subr.mxu0 0.0
        %2419 = vmatpush2.msra.mxu0 0.0
        %2420 = vmatprep.subr.mxu0 0.0
        %2421 = vmatpush2.msra.mxu0 0.0
        %2422 = vmatprep.subr.mxu0 0.0
        %2423 = vmatpush2.msra.mxu0 0.0
        %2424 = vmatprep.subr.mxu0 0.0
        %2425 = vmatpush2.msra.mxu0 0.0
        %2426 = vmatprep.subr.mxu0 0.0
        %2427 = vmatpush2.msra.mxu0 0.0
        %2428 = vmatprep.subr.mxu0 0.0
        %2429 = vmatpush2.msra.mxu0 0.0
        %2430 = vmatprep.subr.mxu0 0.0
        %2431 = vmatpush2.msra.mxu0 0.0
        %2432 = vmatprep.subr.mxu0 0.0
        %2433 = vmatpush2.msra.mxu0 0.0
        %2434 = vmatprep.subr.mxu0 0.0
        %2435 = vmatpush2.msra.mxu0 0.0
        %2436 = vmatprep.subr.mxu0 0.0
        %2437 = vmatpush2.msra.mxu0 0.0
        %2438 = vmatprep.subr.mxu0 0.0
        %2439 = vmatpush2.msra.mxu0 0.0
        %2440 = vmatprep.subr.mxu0 0.0
        %2441 = vmatpush2.msra.mxu0 0.0
        %2442 = vmatprep.subr.mxu0 0.0
        %2443 = vmatpush2.msra.mxu0 0.0
        %2444 = vmatprep.subr.mxu0 0.0
        %2445 = vmatpush2.msra.mxu0 0.0
        %2446 = vmatprep.subr.mxu0 0.0
        %2447 = vmatpush2.msra.mxu0 0.0
        %2448 = vmatprep.mubr.f32.mxu0 0.0
        %2449 = vmatmul.mubr.f32.gmra.mxu0 %v2382
        %v2450 = vpop.f32.mrf.mxu0
        %v2451 = vadd.f32 0.0, %v2450
        %v2452 = vpop.f32.mrf.mxu0
        %2453 = vdwg.mxu0
        %2456 = vrot.lane.b32.xlu0 %v1198, 120
        %v2457 = vpop.permute.xlu0 %2456
        %2458 = vrot.lane.b32.xlu0 %v1201, 120
        %v2459 = vpop.permute.xlu0 %2458
        %v2463 = vsel %vm1603, %v2289, 0
        %2465 = vmatprep.subr.mxu0 0.0
        %2466 = vmatpush1.msra.mxu0 0.0
        %2467 = vmatprep.subr.mxu0 0.0
        %2468 = vmatpush1.msra.mxu0 0.0
        %2469 = vmatprep.subr.mxu0 0.0
        %2470 = vmatpush1.msra.mxu0 0.0
        %2471 = vmatprep.subr.mxu0 0.0
        %2472 = vmatpush1.msra.mxu0 0.0
        %2473 = vmatprep.subr.mxu0 0.0
        %2474 = vmatpush1.msra.mxu0 0.0
        %2475 = vmatprep.subr.mxu0 0.0
        %2476 = vmatpush1.msra.mxu0 0.0
        %2477 = vmatprep.subr.mxu0 0.0
        %2478 = vmatpush1.msra.mxu0 0.0
        %2479 = vmatprep.subr.mxu0 0.0
        %2480 = vmatpush1.msra.mxu0 0.0
        %2481 = vmatprep.subr.mxu0 0.0
        %2482 = vmatpush1.msra.mxu0 0.0
        %2483 = vmatprep.subr.mxu0 0.0
        %2484 = vmatpush1.msra.mxu0 0.0
        %2485 = vmatprep.subr.mxu0 0.0
        %2486 = vmatpush1.msra.mxu0 0.0
        %2487 = vmatprep.subr.mxu0 0.0
        %2488 = vmatpush1.msra.mxu0 0.0
        %2489 = vmatprep.subr.mxu0 0.0
        %2490 = vmatpush1.msra.mxu0 0.0
        %2491 = vmatprep.subr.mxu0 0.0
        %2492 = vmatpush1.msra.mxu0 0.0
        %2493 = vmatprep.subr.mxu0 0.0
        %2494 = vmatpush1.msra.mxu0 %v2459
        %2495 = vmatprep.subr.mxu0 0.0
        %2496 = vmatpush1.msra.mxu0 %v2457
        %2497 = vmatprep.subr.mxu0 0.0
        %2498 = vmatpush2.msra.mxu0 0.0
        %2499 = vmatprep.subr.mxu0 0.0
        %2500 = vmatpush2.msra.mxu0 0.0
        %2501 = vmatprep.subr.mxu0 0.0
        %2502 = vmatpush2.msra.mxu0 0.0
        %2503 = vmatprep.subr.mxu0 0.0
        %2504 = vmatpush2.msra.mxu0 0.0
        %2505 = vmatprep.subr.mxu0 0.0
        %2506 = vmatpush2.msra.mxu0 0.0
        %2507 = vmatprep.subr.mxu0 0.0
        %2508 = vmatpush2.msra.mxu0 0.0
        %2509 = vmatprep.subr.mxu0 0.0
        %2510 = vmatpush2.msra.mxu0 0.0
        %2511 = vmatprep.subr.mxu0 0.0
        %2512 = vmatpush2.msra.mxu0 0.0
        %2513 = vmatprep.subr.mxu0 0.0
        %2514 = vmatpush2.msra.mxu0 0.0
        %2515 = vmatprep.subr.mxu0 0.0
        %2516 = vmatpush2.msra.mxu0 0.0
        %2517 = vmatprep.subr.mxu0 0.0
        %2518 = vmatpush2.msra.mxu0 0.0
        %2519 = vmatprep.subr.mxu0 0.0
        %2520 = vmatpush2.msra.mxu0 0.0
        %2521 = vmatprep.subr.mxu0 0.0
        %2522 = vmatpush2.msra.mxu0 0.0
        %2523 = vmatprep.subr.mxu0 0.0
        %2524 = vmatpush2.msra.mxu0 0.0
        %2525 = vmatprep.subr.mxu0 0.0
        %2526 = vmatpush2.msra.mxu0 0.0
        %2527 = vmatprep.subr.mxu0 0.0
        %2528 = vmatpush2.msra.mxu0 0.0
        %2529 = vmatprep.mubr.f32.mxu0 0.0
        %2530 = vmatmul.mubr.f32.gmra.mxu0 %v2463
        %v2531 = vpop.f32.mrf.mxu0
        %v2532 = vadd.f32 0.0, %v2531
        %v2533 = vpop.f32.mrf.mxu0
        %2534 = vdwg.mxu0
        %2537 = vrot.lane.b32.xlu0 %v1206, 120
        %v2538 = vpop.permute.xlu0 %2537
        %2539 = vrot.lane.b32.xlu0 %v1209, 120
        %v2540 = vpop.permute.xlu0 %2539
        %v2544 = vsel %vm1603, %v2291, 0
        %2546 = vmatprep.subr.mxu0 0.0
        %2547 = vmatpush1.msra.mxu0 0.0
        %2548 = vmatprep.subr.mxu0 0.0
        %2549 = vmatpush1.msra.mxu0 0.0
        %2550 = vmatprep.subr.mxu0 0.0
        %2551 = vmatpush1.msra.mxu0 0.0
        %2552 = vmatprep.subr.mxu0 0.0
        %2553 = vmatpush1.msra.mxu0 0.0
        %2554 = vmatprep.subr.mxu0 0.0
        %2555 = vmatpush1.msra.mxu0 0.0
        %2556 = vmatprep.subr.mxu0 0.0
        %2557 = vmatpush1.msra.mxu0 0.0
        %2558 = vmatprep.subr.mxu0 0.0
        %2559 = vmatpush1.msra.mxu0 0.0
        %2560 = vmatprep.subr.mxu0 0.0
        %2561 = vmatpush1.msra.mxu0 0.0
        %2562 = vmatprep.subr.mxu0 0.0
        %2563 = vmatpush1.msra.mxu0 0.0
        %2564 = vmatprep.subr.mxu0 0.0
        %2565 = vmatpush1.msra.mxu0 0.0
        %2566 = vmatprep.subr.mxu0 0.0
        %2567 = vmatpush1.msra.mxu0 0.0
        %2568 = vmatprep.subr.mxu0 0.0
        %2569 = vmatpush1.msra.mxu0 0.0
        %2570 = vmatprep.subr.mxu0 0.0
        %2571 = vmatpush1.msra.mxu0 0.0
        %2572 = vmatprep.subr.mxu0 0.0
        %2573 = vmatpush1.msra.mxu0 0.0
        %2574 = vmatprep.subr.mxu0 0.0
        %2575 = vmatpush1.msra.mxu0 %v2540
        %2576 = vmatprep.subr.mxu0 0.0
        %2577 = vmatpush1.msra.mxu0 %v2538
        %2578 = vmatprep.subr.mxu0 0.0
        %2579 = vmatpush2.msra.mxu0 0.0
        %2580 = vmatprep.subr.mxu0 0.0
        %2581 = vmatpush2.msra.mxu0 0.0
        %2582 = vmatprep.subr.mxu0 0.0
        %2583 = vmatpush2.msra.mxu0 0.0
        %2584 = vmatprep.subr.mxu0 0.0
        %2585 = vmatpush2.msra.mxu0 0.0
        %2586 = vmatprep.subr.mxu0 0.0
        %2587 = vmatpush2.msra.mxu0 0.0
        %2588 = vmatprep.subr.mxu0 0.0
        %2589 = vmatpush2.msra.mxu0 0.0
        %2590 = vmatprep.subr.mxu0 0.0
        %2591 = vmatpush2.msra.mxu0 0.0
        %2592 = vmatprep.subr.mxu0 0.0
        %2593 = vmatpush2.msra.mxu0 0.0
        %2594 = vmatprep.subr.mxu0 0.0
        %2595 = vmatpush2.msra.mxu0 0.0
        %2596 = vmatprep.subr.mxu0 0.0
        %2597 = vmatpush2.msra.mxu0 0.0
        %2598 = vmatprep.subr.mxu0 0.0
        %2599 = vmatpush2.msra.mxu0 0.0
        %2600 = vmatprep.subr.mxu0 0.0
        %2601 = vmatpush2.msra.mxu0 0.0
        %2602 = vmatprep.subr.mxu0 0.0
        %2603 = vmatpush2.msra.mxu0 0.0
        %2604 = vmatprep.subr.mxu0 0.0
        %2605 = vmatpush2.msra.mxu0 0.0
        %2606 = vmatprep.subr.mxu0 0.0
        %2607 = vmatpush2.msra.mxu0 0.0
        %2608 = vmatprep.subr.mxu0 0.0
        %2609 = vmatpush2.msra.mxu0 0.0
        %2610 = vmatprep.mubr.f32.mxu0 0.0
        %2611 = vmatmul.mubr.f32.gmra.mxu0 %v2544
        %v2612 = vpop.f32.mrf.mxu0
        %v2613 = vadd.f32 0.0, %v2612
        %v2614 = vpop.f32.mrf.mxu0
        %2615 = vdwg.mxu0
        %2616 = vrot.lane.b32.xlu0 %v1899, 112
        %v2617 = vpop.permute.xlu0 %2616
        %2618 = vrot.lane.b32.xlu0 %v1092, 112
        %v2619 = vpop.permute.xlu0 %2618
        %2620 = vrot.lane.b32.xlu0 %v1095, 112
        %v2621 = vpop.permute.xlu0 %2620
        %v2622 = vsel %vm1237, %v2617, 0
        %v2624 = vsel %vm1237, %v2619, 0
        %v2626 = vsel %vm1237, %v2621, 0
        %2628 = vmatprep.subr.mxu0 0.0
        %2629 = vmatpush1.xpose.msra.mxu0 0.0
        %2630 = vmatprep.subr.mxu0 0.0
        %2631 = vmatpush1.xpose.msra.mxu0 0.0
        %2632 = vmatprep.subr.mxu0 0.0
        %2633 = vmatpush1.xpose.msra.mxu0 0.0
        %2634 = vmatprep.subr.mxu0 0.0
        %2635 = vmatpush1.xpose.msra.mxu0 0.0
        %2636 = vmatprep.subr.mxu0 0.0
        %2637 = vmatpush1.xpose.msra.mxu0 0.0
        %2638 = vmatprep.subr.mxu0 0.0
        %2639 = vmatpush1.xpose.msra.mxu0 0.0
        %2640 = vmatprep.subr.mxu0 0.0
        %2641 = vmatpush1.xpose.msra.mxu0 0.0
        %2642 = vmatprep.subr.mxu0 0.0
        %2643 = vmatpush1.xpose.msra.mxu0 0.0
        %2644 = vmatprep.subr.mxu0 0.0
        %2645 = vmatpush1.xpose.msra.mxu0 0.0
        %2646 = vmatprep.subr.mxu0 0.0
        %2647 = vmatpush1.xpose.msra.mxu0 0.0
        %2648 = vmatprep.subr.mxu0 0.0
        %2649 = vmatpush1.xpose.msra.mxu0 0.0
        %2650 = vmatprep.subr.mxu0 0.0
        %2651 = vmatpush1.xpose.msra.mxu0 0.0
        %2652 = vmatprep.subr.mxu0 0.0
        %2653 = vmatpush1.xpose.msra.mxu0 0.0
        %2654 = vmatprep.subr.mxu0 0.0
        %2655 = vmatpush1.xpose.msra.mxu0 0.0
        %2656 = vmatprep.subr.mxu0 0.0
        %2657 = vmatpush1.xpose.msra.mxu0 %v2626
        %2658 = vmatprep.subr.mxu0 0.0
        %2659 = vmatpush1.xpose.msra.mxu0 %v2624
        %2660 = vmatprep.subr.mxu0 0.0
        %2661 = vmatpush2.xpose.msra.mxu0 0.0
        %2662 = vmatprep.subr.mxu0 0.0
        %2663 = vmatpush2.xpose.msra.mxu0 0.0
        %2664 = vmatprep.subr.mxu0 0.0
        %2665 = vmatpush2.xpose.msra.mxu0 0.0
        %2666 = vmatprep.subr.mxu0 0.0
        %2667 = vmatpush2.xpose.msra.mxu0 0.0
        %2668 = vmatprep.subr.mxu0 0.0
        %2669 = vmatpush2.xpose.msra.mxu0 0.0
        %2670 = vmatprep.subr.mxu0 0.0
        %2671 = vmatpush2.xpose.msra.mxu0 0.0
        %2672 = vmatprep.subr.mxu0 0.0
        %2673 = vmatpush2.xpose.msra.mxu0 0.0
        %2674 = vmatprep.subr.mxu0 0.0
        %2675 = vmatpush2.xpose.msra.mxu0 0.0
        %2676 = vmatprep.subr.mxu0 0.0
        %2677 = vmatpush2.xpose.msra.mxu0 0.0
        %2678 = vmatprep.subr.mxu0 0.0
        %2679 = vmatpush2.xpose.msra.mxu0 0.0
        %2680 = vmatprep.subr.mxu0 0.0
        %2681 = vmatpush2.xpose.msra.mxu0 0.0
        %2682 = vmatprep.subr.mxu0 0.0
        %2683 = vmatpush2.xpose.msra.mxu0 0.0
        %2684 = vmatprep.subr.mxu0 0.0
        %2685 = vmatpush2.xpose.msra.mxu0 0.0
        %2686 = vmatprep.subr.mxu0 0.0
        %2687 = vmatpush2.xpose.msra.mxu0 0.0
        %2688 = vmatprep.subr.mxu0 0.0
        %2689 = vmatpush2.xpose.msra.mxu0 0.0
        %2690 = vmatprep.subr.mxu0 0.0
        %2691 = vmatpush2.xpose.msra.mxu0 0.0
        %2692 = vmatprep.mubr.f32.mxu0 0.0
        %2693 = vmatmul.mubr.f32.gmra.mxu0 %v2622
        %v2694 = vpop.f32.mrf.mxu0
        %v2695 = vadd.f32 0.0, %v2694
        %v2696 = vpop.f32.mrf.mxu0
        %2697 = vdwg.mxu0
        %2698 = vrot.lane.b32.xlu0 %v1985, 112
        %v2699 = vpop.permute.xlu0 %2698
        %2700 = vrot.lane.b32.xlu0 %v1100, 112
        %v2701 = vpop.permute.xlu0 %2700
        %2702 = vrot.lane.b32.xlu0 %v1103, 112
        %v2703 = vpop.permute.xlu0 %2702
        %v2704 = vsel %vm1237, %v2699, 0
        %v2706 = vsel %vm1237, %v2701, 0
        %v2708 = vsel %vm1237, %v2703, 0
        %2710 = vmatprep.subr.mxu0 0.0
        %2711 = vmatpush1.xpose.msra.mxu0 0.0
        %2712 = vmatprep.subr.mxu0 0.0
        %2713 = vmatpush1.xpose.msra.mxu0 0.0
        %2714 = vmatprep.subr.mxu0 0.0
        %2715 = vmatpush1.xpose.msra.mxu0 0.0
        %2716 = vmatprep.subr.mxu0 0.0
        %2717 = vmatpush1.xpose.msra.mxu0 0.0
        %2718 = vmatprep.subr.mxu0 0.0
        %2719 = vmatpush1.xpose.msra.mxu0 0.0
        %2720 = vmatprep.subr.mxu0 0.0
        %2721 = vmatpush1.xpose.msra.mxu0 0.0
        %2722 = vmatprep.subr.mxu0 0.0
        %2723 = vmatpush1.xpose.msra.mxu0 0.0
        %2724 = vmatprep.subr.mxu0 0.0
        %2725 = vmatpush1.xpose.msra.mxu0 0.0
        %2726 = vmatprep.subr.mxu0 0.0
        %2727 = vmatpush1.xpose.msra.mxu0 0.0
        %2728 = vmatprep.subr.mxu0 0.0
        %2729 = vmatpush1.xpose.msra.mxu0 0.0
        %2730 = vmatprep.subr.mxu0 0.0
        %2731 = vmatpush1.xpose.msra.mxu0 0.0
        %2732 = vmatprep.subr.mxu0 0.0
        %2733 = vmatpush1.xpose.msra.mxu0 0.0
        %2734 = vmatprep.subr.mxu0 0.0
        %2735 = vmatpush1.xpose.msra.mxu0 0.0
        %2736 = vmatprep.subr.mxu0 0.0
        %2737 = vmatpush1.xpose.msra.mxu0 0.0
        %2738 = vmatprep.subr.mxu0 0.0
        %2739 = vmatpush1.xpose.msra.mxu0 %v2708
        %2740 = vmatprep.subr.mxu0 0.0
        %2741 = vmatpush1.xpose.msra.mxu0 %v2706
        %2742 = vmatprep.subr.mxu0 0.0
        %2743 = vmatpush2.xpose.msra.mxu0 0.0
        %2744 = vmatprep.subr.mxu0 0.0
        %2745 = vmatpush2.xpose.msra.mxu0 0.0
        %2746 = vmatprep.subr.mxu0 0.0
        %2747 = vmatpush2.xpose.msra.mxu0 0.0
        %2748 = vmatprep.subr.mxu0 0.0
        %2749 = vmatpush2.xpose.msra.mxu0 0.0
        %2750 = vmatprep.subr.mxu0 0.0
        %2751 = vmatpush2.xpose.msra.mxu0 0.0
        %2752 = vmatprep.subr.mxu0 0.0
        %2753 = vmatpush2.xpose.msra.mxu0 0.0
        %2754 = vmatprep.subr.mxu0 0.0
        %2755 = vmatpush2.xpose.msra.mxu0 0.0
        %2756 = vmatprep.subr.mxu0 0.0
        %2757 = vmatpush2.xpose.msra.mxu0 0.0
        %2758 = vmatprep.subr.mxu0 0.0
        %2759 = vmatpush2.xpose.msra.mxu0 0.0
        %2760 = vmatprep.subr.mxu0 0.0
        %2761 = vmatpush2.xpose.msra.mxu0 0.0
        %2762 = vmatprep.subr.mxu0 0.0
        %2763 = vmatpush2.xpose.msra.mxu0 0.0
        %2764 = vmatprep.subr.mxu0 0.0
        %2765 = vmatpush2.xpose.msra.mxu0 0.0
        %2766 = vmatprep.subr.mxu0 0.0
        %2767 = vmatpush2.xpose.msra.mxu0 0.0
        %2768 = vmatprep.subr.mxu0 0.0
        %2769 = vmatpush2.xpose.msra.mxu0 0.0
        %2770 = vmatprep.subr.mxu0 0.0
        %2771 = vmatpush2.xpose.msra.mxu0 0.0
        %2772 = vmatprep.subr.mxu0 0.0
        %2773 = vmatpush2.xpose.msra.mxu0 0.0
        %2774 = vmatprep.mubr.f32.mxu0 0.0
        %2775 = vmatmul.mubr.f32.gmra.mxu0 %v2704
        %v2776 = vpop.f32.mrf.mxu0
        %v2777 = vadd.f32 0.0, %v2776
        %v2778 = vpop.f32.mrf.mxu0
        %2779 = vdwg.mxu0
        %2780 = vrot.lane.b32.xlu0 %v2071, 112
        %v2781 = vpop.permute.xlu0 %2780
        %2782 = vrot.lane.b32.xlu0 %v1108, 112
        %v2783 = vpop.permute.xlu0 %2782
        %2784 = vrot.lane.b32.xlu0 %v1111, 112
        %v2785 = vpop.permute.xlu0 %2784
        %v2786 = vsel %vm1237, %v2781, 0
        %v2788 = vsel %vm1237, %v2783, 0
        %v2790 = vsel %vm1237, %v2785, 0
        %2792 = vmatprep.subr.mxu0 0.0
        %2793 = vmatpush1.xpose.msra.mxu0 0.0
        %2794 = vmatprep.subr.mxu0 0.0
        %2795 = vmatpush1.xpose.msra.mxu0 0.0
        %2796 = vmatprep.subr.mxu0 0.0
        %2797 = vmatpush1.xpose.msra.mxu0 0.0
        %2798 = vmatprep.subr.mxu0 0.0
        %2799 = vmatpush1.xpose.msra.mxu0 0.0
        %2800 = vmatprep.subr.mxu0 0.0
        %2801 = vmatpush1.xpose.msra.mxu0 0.0
        %2802 = vmatprep.subr.mxu0 0.0
        %2803 = vmatpush1.xpose.msra.mxu0 0.0
        %2804 = vmatprep.subr.mxu0 0.0
        %2805 = vmatpush1.xpose.msra.mxu0 0.0
        %2806 = vmatprep.subr.mxu0 0.0
        %2807 = vmatpush1.xpose.msra.mxu0 0.0
        %2808 = vmatprep.subr.mxu0 0.0
        %2809 = vmatpush1.xpose.msra.mxu0 0.0
        %2810 = vmatprep.subr.mxu0 0.0
        %2811 = vmatpush1.xpose.msra.mxu0 0.0
        %2812 = vmatprep.subr.mxu0 0.0
        %2813 = vmatpush1.xpose.msra.mxu0 0.0
        %2814 = vmatprep.subr.mxu0 0.0
        %2815 = vmatpush1.xpose.msra.mxu0 0.0
        %2816 = vmatprep.subr.mxu0 0.0
        %2817 = vmatpush1.xpose.msra.mxu0 0.0
        %2818 = vmatprep.subr.mxu0 0.0
        %2819 = vmatpush1.xpose.msra.mxu0 0.0
        %2820 = vmatprep.subr.mxu0 0.0
        %2821 = vmatpush1.xpose.msra.mxu0 %v2790
        %2822 = vmatprep.subr.mxu0 0.0
        %2823 = vmatpush1.xpose.msra.mxu0 %v2788
        %2824 = vmatprep.subr.mxu0 0.0
        %2825 = vmatpush2.xpose.msra.mxu0 0.0
        %2826 = vmatprep.subr.mxu0 0.0
        %2827 = vmatpush2.xpose.msra.mxu0 0.0
        %2828 = vmatprep.subr.mxu0 0.0
        %2829 = vmatpush2.xpose.msra.mxu0 0.0
        %2830 = vmatprep.subr.mxu0 0.0
        %2831 = vmatpush2.xpose.msra.mxu0 0.0
        %2832 = vmatprep.subr.mxu0 0.0
        %2833 = vmatpush2.xpose.msra.mxu0 0.0
        %2834 = vmatprep.subr.mxu0 0.0
        %2835 = vmatpush2.xpose.msra.mxu0 0.0
        %2836 = vmatprep.subr.mxu0 0.0
        %2837 = vmatpush2.xpose.msra.mxu0 0.0
        %2838 = vmatprep.subr.mxu0 0.0
        %2839 = vmatpush2.xpose.msra.mxu0 0.0
        %2840 = vmatprep.subr.mxu0 0.0
        %2841 = vmatpush2.xpose.msra.mxu0 0.0
        %2842 = vmatprep.subr.mxu0 0.0
        %2843 = vmatpush2.xpose.msra.mxu0 0.0
        %2844 = vmatprep.subr.mxu0 0.0
        %2845 = vmatpush2.xpose.msra.mxu0 0.0
        %2846 = vmatprep.subr.mxu0 0.0
        %2847 = vmatpush2.xpose.msra.mxu0 0.0
        %2848 = vmatprep.subr.mxu0 0.0
        %2849 = vmatpush2.xpose.msra.mxu0 0.0
        %2850 = vmatprep.subr.mxu0 0.0
        %2851 = vmatpush2.xpose.msra.mxu0 0.0
        %2852 = vmatprep.subr.mxu0 0.0
        %2853 = vmatpush2.xpose.msra.mxu0 0.0
        %2854 = vmatprep.subr.mxu0 0.0
        %2855 = vmatpush2.xpose.msra.mxu0 0.0
        %2856 = vmatprep.mubr.f32.mxu0 0.0
        %2857 = vmatmul.mubr.f32.gmra.mxu0 %v2786
        %v2858 = vpop.f32.mrf.mxu0
        %v2859 = vadd.f32 0.0, %v2858
        %v2860 = vpop.f32.mrf.mxu0
        %2861 = vdwg.mxu0
        %2862 = vrot.lane.b32.xlu0 %v2157, 112
        %v2863 = vpop.permute.xlu0 %2862
        %2864 = vrot.lane.b32.xlu0 %v1116, 112
        %v2865 = vpop.permute.xlu0 %2864
        %2866 = vrot.lane.b32.xlu0 %v1119, 112
        %v2867 = vpop.permute.xlu0 %2866
        %v2868 = vsel %vm1237, %v2863, 0
        %v2870 = vsel %vm1237, %v2865, 0
        %v2872 = vsel %vm1237, %v2867, 0
        %2874 = vmatprep.subr.mxu0 0.0
        %2875 = vmatpush1.xpose.msra.mxu0 0.0
        %2876 = vmatprep.subr.mxu0 0.0
        %2877 = vmatpush1.xpose.msra.mxu0 0.0
        %2878 = vmatprep.subr.mxu0 0.0
        %2879 = vmatpush1.xpose.msra.mxu0 0.0
        %2880 = vmatprep.subr.mxu0 0.0
        %2881 = vmatpush1.xpose.msra.mxu0 0.0
        %2882 = vmatprep.subr.mxu0 0.0
        %2883 = vmatpush1.xpose.msra.mxu0 0.0
        %2884 = vmatprep.subr.mxu0 0.0
        %2885 = vmatpush1.xpose.msra.mxu0 0.0
        %2886 = vmatprep.subr.mxu0 0.0
        %2887 = vmatpush1.xpose.msra.mxu0 0.0
        %2888 = vmatprep.subr.mxu0 0.0
        %2889 = vmatpush1.xpose.msra.mxu0 0.0
        %2890 = vmatprep.subr.mxu0 0.0
        %2891 = vmatpush1.xpose.msra.mxu0 0.0
        %2892 = vmatprep.subr.mxu0 0.0
        %2893 = vmatpush1.xpose.msra.mxu0 0.0
        %2894 = vmatprep.subr.mxu0 0.0
        %2895 = vmatpush1.xpose.msra.mxu0 0.0
        %2896 = vmatprep.subr.mxu0 0.0
        %2897 = vmatpush1.xpose.msra.mxu0 0.0
        %2898 = vmatprep.subr.mxu0 0.0
        %2899 = vmatpush1.xpose.msra.mxu0 0.0
        %2900 = vmatprep.subr.mxu0 0.0
        %2901 = vmatpush1.xpose.msra.mxu0 0.0
        %2902 = vmatprep.subr.mxu0 0.0
        %2903 = vmatpush1.xpose.msra.mxu0 %v2872
        %2904 = vmatprep.subr.mxu0 0.0
        %2905 = vmatpush1.xpose.msra.mxu0 %v2870
        %2906 = vmatprep.subr.mxu0 0.0
        %2907 = vmatpush2.xpose.msra.mxu0 0.0
        %2908 = vmatprep.subr.mxu0 0.0
        %2909 = vmatpush2.xpose.msra.mxu0 0.0
        %2910 = vmatprep.subr.mxu0 0.0
        %2911 = vmatpush2.xpose.msra.mxu0 0.0
        %2912 = vmatprep.subr.mxu0 0.0
        %2913 = vmatpush2.xpose.msra.mxu0 0.0
        %2914 = vmatprep.subr.mxu0 0.0
        %2915 = vmatpush2.xpose.msra.mxu0 0.0
        %2916 = vmatprep.subr.mxu0 0.0
        %2917 = vmatpush2.xpose.msra.mxu0 0.0
        %2918 = vmatprep.subr.mxu0 0.0
        %2919 = vmatpush2.xpose.msra.mxu0 0.0
        %2920 = vmatprep.subr.mxu0 0.0
        %2921 = vmatpush2.xpose.msra.mxu0 0.0
        %2922 = vmatprep.subr.mxu0 0.0
        %2923 = vmatpush2.xpose.msra.mxu0 0.0
        %2924 = vmatprep.subr.mxu0 0.0
        %2925 = vmatpush2.xpose.msra.mxu0 0.0
        %2926 = vmatprep.subr.mxu0 0.0
        %2927 = vmatpush2.xpose.msra.mxu0 0.0
        %2928 = vmatprep.subr.mxu0 0.0
        %2929 = vmatpush2.xpose.msra.mxu0 0.0
        %2930 = vmatprep.subr.mxu0 0.0
        %2931 = vmatpush2.xpose.msra.mxu0 0.0
        %2932 = vmatprep.subr.mxu0 0.0
        %2933 = vmatpush2.xpose.msra.mxu0 0.0
        %2934 = vmatprep.subr.mxu0 0.0
        %2935 = vmatpush2.xpose.msra.mxu0 0.0
        %2936 = vmatprep.subr.mxu0 0.0
        %2937 = vmatpush2.xpose.msra.mxu0 0.0
        %2938 = vmatprep.mubr.f32.mxu0 0.0
        %2939 = vmatmul.mubr.f32.gmra.mxu0 %v2868
        %v2940 = vpop.f32.mrf.mxu0
        %v2941 = vadd.f32 0.0, %v2940
        %v2942 = vpop.f32.mrf.mxu0
        %2943 = vdwg.mxu0
        %v2944 = vmul.f32 %v2695, 0.35355338
        %v2945 = vmul.f32 %v2777, 0.35355338
        %v2946 = vmul.f32 %v2859, 0.35355338
        %v2947 = vmul.f32 %v2941, 0.35355338
        %v2948 = vadd.f32 %v2944, %v923
        %v2949 = vadd.f32 %v2945, %v924
        %v2950 = vadd.f32 %v2946, %v925
        %v2951 = vadd.f32 %v2947, %v926
        %v2952 = vsel %vm1558, %v2948, -inf
        %2953 = vmax.xlane.f32.xlu0 %v2952
        %v2954 = vpop.xlane.xlu0 %2953
        %v2955 = vsel %vm1558, %v2949, -inf
        %2956 = vmax.xlane.f32.xlu0 %v2955
        %v2957 = vpop.xlane.xlu0 %2956
        %v2958 = vsel %vm1558, %v2950, -inf
        %2959 = vmax.xlane.f32.xlu0 %v2958
        %v2960 = vpop.xlane.xlu0 %2959
        %v2961 = vsel %vm1558, %v2951, -inf
        %2962 = vmax.xlane.f32.xlu0 %v2961
        %v2963 = vpop.xlane.xlu0 %2962
        %v2964 = vsub.f32 %v2948, %v2954
        %v2965 = vsub.f32 %v2949, %v2957
        %v2966 = vsub.f32 %v2950, %v2960
        %v2967 = vsub.f32 %v2951, %v2963
        %v2968 = vmul.f32 %v2964, 1.442695
        %v2969 = vpow.pop %v2968
        %v2970 = vmul.f32 %v2965, 1.442695
        %v2971 = vpow.pop %v2970
        %v2972 = vmul.f32 %v2966, 1.442695
        %v2973 = vpow.pop %v2972
        %v2974 = vmul.f32 %v2967, 1.442695
        %v2975 = vpow.pop %v2974
        %v2976 = vsel %vm1558, %v2969, 0.0
        %2977 = vadd.xlane.f32.xlu0 %v2976
        %v2978 = vpop.xlane.xlu0 %2977
        %v2979 = vsel %vm1558, %v2971, 0.0
        %2980 = vadd.xlane.f32.xlu0 %v2979
        %v2981 = vpop.xlane.xlu0 %2980
        %v2982 = vsel %vm1558, %v2973, 0.0
        %2983 = vadd.xlane.f32.xlu0 %v2982
        %v2984 = vpop.xlane.xlu0 %2983
        %v2985 = vsel %vm1558, %v2975, 0.0
        %2986 = vadd.xlane.f32.xlu0 %v2985
        %v2987 = vpop.xlane.xlu0 %2986
        %v2988 = vrcp.pop %v2978
        %v2989 = vmul.f32 %v2969, %v2988
        %v2990 = vrcp.pop %v2981
        %v2991 = vmul.f32 %v2971, %v2990
        %v2992 = vrcp.pop %v2984
        %v2993 = vmul.f32 %v2973, %v2992
        %v2994 = vrcp.pop %v2987
        %v2995 = vmul.f32 %v2975, %v2994
        %2996 = vrot.lane.b32.xlu0 %v1182, 112
        %v2997 = vpop.permute.xlu0 %2996
        %2998 = vrot.lane.b32.xlu0 %v1185, 112
        %v2999 = vpop.permute.xlu0 %2998
        %v3003 = vsel %vm1603, %v2989, 0
        %3005 = vmatprep.subr.mxu0 0.0
        %3006 = vmatpush1.msra.mxu0 0.0
        %3007 = vmatprep.subr.mxu0 0.0
        %3008 = vmatpush1.msra.mxu0 0.0
        %3009 = vmatprep.subr.mxu0 0.0
        %3010 = vmatpush1.msra.mxu0 0.0
        %3011 = vmatprep.subr.mxu0 0.0
        %3012 = vmatpush1.msra.mxu0 0.0
        %3013 = vmatprep.subr.mxu0 0.0
        %3014 = vmatpush1.msra.mxu0 0.0
        %3015 = vmatprep.subr.mxu0 0.0
        %3016 = vmatpush1.msra.mxu0 0.0
        %3017 = vmatprep.subr.mxu0 0.0
        %3018 = vmatpush1.msra.mxu0 0.0
        %3019 = vmatprep.subr.mxu0 0.0
        %3020 = vmatpush1.msra.mxu0 0.0
        %3021 = vmatprep.subr.mxu0 0.0
        %3022 = vmatpush1.msra.mxu0 0.0
        %3023 = vmatprep.subr.mxu0 0.0
        %3024 = vmatpush1.msra.mxu0 0.0
        %3025 = vmatprep.subr.mxu0 0.0
        %3026 = vmatpush1.msra.mxu0 0.0
        %3027 = vmatprep.subr.mxu0 0.0
        %3028 = vmatpush1.msra.mxu0 0.0
        %3029 = vmatprep.subr.mxu0 0.0
        %3030 = vmatpush1.msra.mxu0 0.0
        %3031 = vmatprep.subr.mxu0 0.0
        %3032 = vmatpush1.msra.mxu0 0.0
        %3033 = vmatprep.subr.mxu0 0.0
        %3034 = vmatpush1.msra.mxu0 %v2999
        %3035 = vmatprep.subr.mxu0 0.0
        %3036 = vmatpush1.msra.mxu0 %v2997
        %3037 = vmatprep.subr.mxu0 0.0
        %3038 = vmatpush2.msra.mxu0 0.0
        %3039 = vmatprep.subr.mxu0 0.0
        %3040 = vmatpush2.msra.mxu0 0.0
        %3041 = vmatprep.subr.mxu0 0.0
        %3042 = vmatpush2.msra.mxu0 0.0
        %3043 = vmatprep.subr.mxu0 0.0
        %3044 = vmatpush2.msra.mxu0 0.0
        %3045 = vmatprep.subr.mxu0 0.0
        %3046 = vmatpush2.msra.mxu0 0.0
        %3047 = vmatprep.subr.mxu0 0.0
        %3048 = vmatpush2.msra.mxu0 0.0
        %3049 = vmatprep.subr.mxu0 0.0
        %3050 = vmatpush2.msra.mxu0 0.0
        %3051 = vmatprep.subr.mxu0 0.0
        %3052 = vmatpush2.msra.mxu0 0.0
        %3053 = vmatprep.subr.mxu0 0.0
        %3054 = vmatpush2.msra.mxu0 0.0
        %3055 = vmatprep.subr.mxu0 0.0
        %3056 = vmatpush2.msra.mxu0 0.0
        %3057 = vmatprep.subr.mxu0 0.0
        %3058 = vmatpush2.msra.mxu0 0.0
        %3059 = vmatprep.subr.mxu0 0.0
        %3060 = vmatpush2.msra.mxu0 0.0
        %3061 = vmatprep.subr.mxu0 0.0
        %3062 = vmatpush2.msra.mxu0 0.0
        %3063 = vmatprep.subr.mxu0 0.0
        %3064 = vmatpush2.msra.mxu0 0.0
        %3065 = vmatprep.subr.mxu0 0.0
        %3066 = vmatpush2.msra.mxu0 0.0
        %3067 = vmatprep.subr.mxu0 0.0
        %3068 = vmatpush2.msra.mxu0 0.0
        %3069 = vmatprep.mubr.f32.mxu0 0.0
        %3070 = vmatmul.mubr.f32.gmra.mxu0 %v3003
        %v3071 = vpop.f32.mrf.mxu0
        %v3072 = vadd.f32 0.0, %v3071
        %v3073 = vpop.f32.mrf.mxu0
        %3074 = vdwg.mxu0
        %3075 = vrot.lane.b32.xlu0 %v1190, 112
        %v3076 = vpop.permute.xlu0 %3075
        %3077 = vrot.lane.b32.xlu0 %v1193, 112
        %v3078 = vpop.permute.xlu0 %3077
        %v3082 = vsel %vm1603, %v2991, 0
        %3084 = vmatprep.subr.mxu0 0.0
        %3085 = vmatpush1.msra.mxu0 0.0
        %3086 = vmatprep.subr.mxu0 0.0
        %3087 = vmatpush1.msra.mxu0 0.0
        %3088 = vmatprep.subr.mxu0 0.0
        %3089 = vmatpush1.msra.mxu0 0.0
        %3090 = vmatprep.subr.mxu0 0.0
        %3091 = vmatpush1.msra.mxu0 0.0
        %3092 = vmatprep.subr.mxu0 0.0
        %3093 = vmatpush1.msra.mxu0 0.0
        %3094 = vmatprep.subr.mxu0 0.0
        %3095 = vmatpush1.msra.mxu0 0.0
        %3096 = vmatprep.subr.mxu0 0.0
        %3097 = vmatpush1.msra.mxu0 0.0
        %3098 = vmatprep.subr.mxu0 0.0
        %3099 = vmatpush1.msra.mxu0 0.0
        %3100 = vmatprep.subr.mxu0 0.0
        %3101 = vmatpush1.msra.mxu0 0.0
        %3102 = vmatprep.subr.mxu0 0.0
        %3103 = vmatpush1.msra.mxu0 0.0
        %3104 = vmatprep.subr.mxu0 0.0
        %3105 = vmatpush1.msra.mxu0 0.0
        %3106 = vmatprep.subr.mxu0 0.0
        %3107 = vmatpush1.msra.mxu0 0.0
        %3108 = vmatprep.subr.mxu0 0.0
        %3109 = vmatpush1.msra.mxu0 0.0
        %3110 = vmatprep.subr.mxu0 0.0
        %3111 = vmatpush1.msra.mxu0 0.0
        %3112 = vmatprep.subr.mxu0 0.0
        %3113 = vmatpush1.msra.mxu0 %v3078
        %3114 = vmatprep.subr.mxu0 0.0
        %3115 = vmatpush1.msra.mxu0 %v3076
        %3116 = vmatprep.subr.mxu0 0.0
        %3117 = vmatpush2.msra.mxu0 0.0
        %3118 = vmatprep.subr.mxu0 0.0
        %3119 = vmatpush2.msra.mxu0 0.0
        %3120 = vmatprep.subr.mxu0 0.0
        %3121 = vmatpush2.msra.mxu0 0.0
        %3122 = vmatprep.subr.mxu0 0.0
        %3123 = vmatpush2.msra.mxu0 0.0
        %3124 = vmatprep.subr.mxu0 0.0
        %3125 = vmatpush2.msra.mxu0 0.0
        %3126 = vmatprep.subr.mxu0 0.0
        %3127 = vmatpush2.msra.mxu0 0.0
        %3128 = vmatprep.subr.mxu0 0.0
        %3129 = vmatpush2.msra.mxu0 0.0
        %3130 = vmatprep.subr.mxu0 0.0
        %3131 = vmatpush2.msra.mxu0 0.0
        %3132 = vmatprep.subr.mxu0 0.0
        %3133 = vmatpush2.msra.mxu0 0.0
        %3134 = vmatprep.subr.mxu0 0.0
        %3135 = vmatpush2.msra.mxu0 0.0
        %3136 = vmatprep.subr.mxu0 0.0
        %3137 = vmatpush2.msra.mxu0 0.0
        %3138 = vmatprep.subr.mxu0 0.0
        %3139 = vmatpush2.msra.mxu0 0.0
        %3140 = vmatprep.subr.mxu0 0.0
        %3141 = vmatpush2.msra.mxu0 0.0
        %3142 = vmatprep.subr.mxu0 0.0
        %3143 = vmatpush2.msra.mxu0 0.0
        %3144 = vmatprep.subr.mxu0 0.0
        %3145 = vmatpush2.msra.mxu0 0.0
        %3146 = vmatprep.subr.mxu0 0.0
        %3147 = vmatpush2.msra.mxu0 0.0
        %3148 = vmatprep.mubr.f32.mxu0 0.0
        %3149 = vmatmul.mubr.f32.gmra.mxu0 %v3082
        %v3150 = vpop.f32.mrf.mxu0
        %v3151 = vadd.f32 0.0, %v3150
        %v3152 = vpop.f32.mrf.mxu0
        %3153 = vdwg.mxu0
        %3154 = vrot.lane.b32.xlu0 %v1198, 112
        %v3155 = vpop.permute.xlu0 %3154
        %3156 = vrot.lane.b32.xlu0 %v1201, 112
        %v3157 = vpop.permute.xlu0 %3156
        %v3161 = vsel %vm1603, %v2993, 0
        %3163 = vmatprep.subr.mxu0 0.0
        %3164 = vmatpush1.msra.mxu0 0.0
        %3165 = vmatprep.subr.mxu0 0.0
        %3166 = vmatpush1.msra.mxu0 0.0
        %3167 = vmatprep.subr.mxu0 0.0
        %3168 = vmatpush1.msra.mxu0 0.0
        %3169 = vmatprep.subr.mxu0 0.0
        %3170 = vmatpush1.msra.mxu0 0.0
        %3171 = vmatprep.subr.mxu0 0.0
        %3172 = vmatpush1.msra.mxu0 0.0
        %3173 = vmatprep.subr.mxu0 0.0
        %3174 = vmatpush1.msra.mxu0 0.0
        %3175 = vmatprep.subr.mxu0 0.0
        %3176 = vmatpush1.msra.mxu0 0.0
        %3177 = vmatprep.subr.mxu0 0.0
        %3178 = vmatpush1.msra.mxu0 0.0
        %3179 = vmatprep.subr.mxu0 0.0
        %3180 = vmatpush1.msra.mxu0 0.0
        %3181 = vmatprep.subr.mxu0 0.0
        %3182 = vmatpush1.msra.mxu0 0.0
        %3183 = vmatprep.subr.mxu0 0.0
        %3184 = vmatpush1.msra.mxu0 0.0
        %3185 = vmatprep.subr.mxu0 0.0
        %3186 = vmatpush1.msra.mxu0 0.0
        %3187 = vmatprep.subr.mxu0 0.0
        %3188 = vmatpush1.msra.mxu0 0.0
        %3189 = vmatprep.subr.mxu0 0.0
        %3190 = vmatpush1.msra.mxu0 0.0
        %3191 = vmatprep.subr.mxu0 0.0
        %3192 = vmatpush1.msra.mxu0 %v3157
        %3193 = vmatprep.subr.mxu0 0.0
        %3194 = vmatpush1.msra.mxu0 %v3155
        %3195 = vmatprep.subr.mxu0 0.0
        %3196 = vmatpush2.msra.mxu0 0.0
        %3197 = vmatprep.subr.mxu0 0.0
        %3198 = vmatpush2.msra.mxu0 0.0
        %3199 = vmatprep.subr.mxu0 0.0
        %3200 = vmatpush2.msra.mxu0 0.0
        %3201 = vmatprep.subr.mxu0 0.0
        %3202 = vmatpush2.msra.mxu0 0.0
        %3203 = vmatprep.subr.mxu0 0.0
        %3204 = vmatpush2.msra.mxu0 0.0
        %3205 = vmatprep.subr.mxu0 0.0
        %3206 = vmatpush2.msra.mxu0 0.0
        %3207 = vmatprep.subr.mxu0 0.0
        %3208 = vmatpush2.msra.mxu0 0.0
        %3209 = vmatprep.subr.mxu0 0.0
        %3210 = vmatpush2.msra.mxu0 0.0
        %3211 = vmatprep.subr.mxu0 0.0
        %3212 = vmatpush2.msra.mxu0 0.0
        %3213 = vmatprep.subr.mxu0 0.0
        %3214 = vmatpush2.msra.mxu0 0.0
        %3215 = vmatprep.subr.mxu0 0.0
        %3216 = vmatpush2.msra.mxu0 0.0
        %3217 = vmatprep.subr.mxu0 0.0
        %3218 = vmatpush2.msra.mxu0 0.0
        %3219 = vmatprep.subr.mxu0 0.0
        %3220 = vmatpush2.msra.mxu0 0.0
        %3221 = vmatprep.subr.mxu0 0.0
        %3222 = vmatpush2.msra.mxu0 0.0
        %3223 = vmatprep.subr.mxu0 0.0
        %3224 = vmatpush2.msra.mxu0 0.0
        %3225 = vmatprep.subr.mxu0 0.0
        %3226 = vmatpush2.msra.mxu0 0.0
        %3227 = vmatprep.mubr.f32.mxu0 0.0
        %3228 = vmatmul.mubr.f32.gmra.mxu0 %v3161
        %v3229 = vpop.f32.mrf.mxu0
        %v3230 = vadd.f32 0.0, %v3229
        %v3231 = vpop.f32.mrf.mxu0
        %3232 = vdwg.mxu0
        %3233 = vrot.lane.b32.xlu0 %v1206, 112
        %v3234 = vpop.permute.xlu0 %3233
        %3235 = vrot.lane.b32.xlu0 %v1209, 112
        %v3236 = vpop.permute.xlu0 %3235
        %v3240 = vsel %vm1603, %v2995, 0
        %3242 = vmatprep.subr.mxu0 0.0
        %3243 = vmatpush1.msra.mxu0 0.0
        %3244 = vmatprep.subr.mxu0 0.0
        %3245 = vmatpush1.msra.mxu0 0.0
        %3246 = vmatprep.subr.mxu0 0.0
        %3247 = vmatpush1.msra.mxu0 0.0
        %3248 = vmatprep.subr.mxu0 0.0
        %3249 = vmatpush1.msra.mxu0 0.0
        %3250 = vmatprep.subr.mxu0 0.0
        %3251 = vmatpush1.msra.mxu0 0.0
        %3252 = vmatprep.subr.mxu0 0.0
        %3253 = vmatpush1.msra.mxu0 0.0
        %3254 = vmatprep.subr.mxu0 0.0
        %3255 = vmatpush1.msra.mxu0 0.0
        %3256 = vmatprep.subr.mxu0 0.0
        %3257 = vmatpush1.msra.mxu0 0.0
        %3258 = vmatprep.subr.mxu0 0.0
        %3259 = vmatpush1.msra.mxu0 0.0
        %3260 = vmatprep.subr.mxu0 0.0
        %3261 = vmatpush1.msra.mxu0 0.0
        %3262 = vmatprep.subr.mxu0 0.0
        %3263 = vmatpush1.msra.mxu0 0.0
        %3264 = vmatprep.subr.mxu0 0.0
        %3265 = vmatpush1.msra.mxu0 0.0
        %3266 = vmatprep.subr.mxu0 0.0
        %3267 = vmatpush1.msra.mxu0 0.0
        %3268 = vmatprep.subr.mxu0 0.0
        %3269 = vmatpush1.msra.mxu0 0.0
        %3270 = vmatprep.subr.mxu0 0.0
        %3271 = vmatpush1.msra.mxu0 %v3236
        %3272 = vmatprep.subr.mxu0 0.0
        %3273 = vmatpush1.msra.mxu0 %v3234
        %3274 = vmatprep.subr.mxu0 0.0
        %3275 = vmatpush2.msra.mxu0 0.0
        %3276 = vmatprep.subr.mxu0 0.0
        %3277 = vmatpush2.msra.mxu0 0.0
        %3278 = vmatprep.subr.mxu0 0.0
        %3279 = vmatpush2.msra.mxu0 0.0
        %3280 = vmatprep.subr.mxu0 0.0
        %3281 = vmatpush2.msra.mxu0 0.0
        %3282 = vmatprep.subr.mxu0 0.0
        %3283 = vmatpush2.msra.mxu0 0.0
        %3284 = vmatprep.subr.mxu0 0.0
        %3285 = vmatpush2.msra.mxu0 0.0
        %3286 = vmatprep.subr.mxu0 0.0
        %3287 = vmatpush2.msra.mxu0 0.0
        %3288 = vmatprep.subr.mxu0 0.0
        %3289 = vmatpush2.msra.mxu0 0.0
        %3290 = vmatprep.subr.mxu0 0.0
        %3291 = vmatpush2.msra.mxu0 0.0
        %3292 = vmatprep.subr.mxu0 0.0
        %3293 = vmatpush2.msra.mxu0 0.0
        %3294 = vmatprep.subr.mxu0 0.0
        %3295 = vmatpush2.msra.mxu0 0.0
        %3296 = vmatprep.subr.mxu0 0.0
        %3297 = vmatpush2.msra.mxu0 0.0
        %3298 = vmatprep.subr.mxu0 0.0
        %3299 = vmatpush2.msra.mxu0 0.0
        %3300 = vmatprep.subr.mxu0 0.0
        %3301 = vmatpush2.msra.mxu0 0.0
        %3302 = vmatprep.subr.mxu0 0.0
        %3303 = vmatpush2.msra.mxu0 0.0
        %3304 = vmatprep.subr.mxu0 0.0
        %3305 = vmatpush2.msra.mxu0 0.0
        %3306 = vmatprep.mubr.f32.mxu0 0.0
        %3307 = vmatmul.mubr.f32.gmra.mxu0 %v3240
        %v3308 = vpop.f32.mrf.mxu0
        %v3309 = vadd.f32 0.0, %v3308
        %v3310 = vpop.f32.mrf.mxu0
        %3311 = vdwg.mxu0
        %3312 = vrot.lane.b32.xlu0 %v1899, 104
        %v3313 = vpop.permute.xlu0 %3312
        %3314 = vrot.lane.b32.xlu0 %v1092, 104
        %v3315 = vpop.permute.xlu0 %3314
        %3316 = vrot.lane.b32.xlu0 %v1095, 104
        %v3317 = vpop.permute.xlu0 %3316
        %v3318 = vsel %vm1237, %v3313, 0
        %v3320 = vsel %vm1237, %v3315, 0
        %v3322 = vsel %vm1237, %v3317, 0
        %3324 = vmatprep.subr.mxu0 0.0
        %3325 = vmatpush1.xpose.msra.mxu0 0.0
        %3326 = vmatprep.subr.mxu0 0.0
        %3327 = vmatpush1.xpose.msra.mxu0 0.0
        %3328 = vmatprep.subr.mxu0 0.0
        %3329 = vmatpush1.xpose.msra.mxu0 0.0
        %3330 = vmatprep.subr.mxu0 0.0
        %3331 = vmatpush1.xpose.msra.mxu0 0.0
        %3332 = vmatprep.subr.mxu0 0.0
        %3333 = vmatpush1.xpose.msra.mxu0 0.0
        %3334 = vmatprep.subr.mxu0 0.0
        %3335 = vmatpush1.xpose.msra.mxu0 0.0
        %3336 = vmatprep.subr.mxu0 0.0
        %3337 = vmatpush1.xpose.msra.mxu0 0.0
        %3338 = vmatprep.subr.mxu0 0.0
        %3339 = vmatpush1.xpose.msra.mxu0 0.0
        %3340 = vmatprep.subr.mxu0 0.0
        %3341 = vmatpush1.xpose.msra.mxu0 0.0
        %3342 = vmatprep.subr.mxu0 0.0
        %3343 = vmatpush1.xpose.msra.mxu0 0.0
        %3344 = vmatprep.subr.mxu0 0.0
        %3345 = vmatpush1.xpose.msra.mxu0 0.0
        %3346 = vmatprep.subr.mxu0 0.0
        %3347 = vmatpush1.xpose.msra.mxu0 0.0
        %3348 = vmatprep.subr.mxu0 0.0
        %3349 = vmatpush1.xpose.msra.mxu0 0.0
        %3350 = vmatprep.subr.mxu0 0.0
        %3351 = vmatpush1.xpose.msra.mxu0 0.0
        %3352 = vmatprep.subr.mxu0 0.0
        %3353 = vmatpush1.xpose.msra.mxu0 %v3322
        %3354 = vmatprep.subr.mxu0 0.0
        %3355 = vmatpush1.xpose.msra.mxu0 %v3320
        %3356 = vmatprep.subr.mxu0 0.0
        %3357 = vmatpush2.xpose.msra.mxu0 0.0
        %3358 = vmatprep.subr.mxu0 0.0
        %3359 = vmatpush2.xpose.msra.mxu0 0.0
        %3360 = vmatprep.subr.mxu0 0.0
        %3361 = vmatpush2.xpose.msra.mxu0 0.0
        %3362 = vmatprep.subr.mxu0 0.0
        %3363 = vmatpush2.xpose.msra.mxu0 0.0
        %3364 = vmatprep.subr.mxu0 0.0
        %3365 = vmatpush2.xpose.msra.mxu0 0.0
        %3366 = vmatprep.subr.mxu0 0.0
        %3367 = vmatpush2.xpose.msra.mxu0 0.0
        %3368 = vmatprep.subr.mxu0 0.0
        %3369 = vmatpush2.xpose.msra.mxu0 0.0
        %3370 = vmatprep.subr.mxu0 0.0
        %3371 = vmatpush2.xpose.msra.mxu0 0.0
        %3372 = vmatprep.subr.mxu0 0.0
        %3373 = vmatpush2.xpose.msra.mxu0 0.0
        %3374 = vmatprep.subr.mxu0 0.0
        %3375 = vmatpush2.xpose.msra.mxu0 0.0
        %3376 = vmatprep.subr.mxu0 0.0
        %3377 = vmatpush2.xpose.msra.mxu0 0.0
        %3378 = vmatprep.subr.mxu0 0.0
        %3379 = vmatpush2.xpose.msra.mxu0 0.0
        %3380 = vmatprep.subr.mxu0 0.0
        %3381 = vmatpush2.xpose.msra.mxu0 0.0
        %3382 = vmatprep.subr.mxu0 0.0
        %3383 = vmatpush2.xpose.msra.mxu0 0.0
        %3384 = vmatprep.subr.mxu0 0.0
        %3385 = vmatpush2.xpose.msra.mxu0 0.0
        %3386 = vmatprep.subr.mxu0 0.0
        %3387 = vmatpush2.xpose.msra.mxu0 0.0
        %3388 = vmatprep.mubr.f32.mxu0 0.0
        %3389 = vmatmul.mubr.f32.gmra.mxu0 %v3318
        %v3390 = vpop.f32.mrf.mxu0
        %v3391 = vadd.f32 0.0, %v3390
        %v3392 = vpop.f32.mrf.mxu0
        %3393 = vdwg.mxu0
        %3394 = vrot.lane.b32.xlu0 %v1985, 104
        %v3395 = vpop.permute.xlu0 %3394
        %3396 = vrot.lane.b32.xlu0 %v1100, 104
        %v3397 = vpop.permute.xlu0 %3396
        %3398 = vrot.lane.b32.xlu0 %v1103, 104
        %v3399 = vpop.permute.xlu0 %3398
        %v3400 = vsel %vm1237, %v3395, 0
        %v3402 = vsel %vm1237, %v3397, 0
        %v3404 = vsel %vm1237, %v3399, 0
        %3406 = vmatprep.subr.mxu0 0.0
        %3407 = vmatpush1.xpose.msra.mxu0 0.0
        %3408 = vmatprep.subr.mxu0 0.0
        %3409 = vmatpush1.xpose.msra.mxu0 0.0
        %3410 = vmatprep.subr.mxu0 0.0
        %3411 = vmatpush1.xpose.msra.mxu0 0.0
        %3412 = vmatprep.subr.mxu0 0.0
        %3413 = vmatpush1.xpose.msra.mxu0 0.0
        %3414 = vmatprep.subr.mxu0 0.0
        %3415 = vmatpush1.xpose.msra.mxu0 0.0
        %3416 = vmatprep.subr.mxu0 0.0
        %3417 = vmatpush1.xpose.msra.mxu0 0.0
        %3418 = vmatprep.subr.mxu0 0.0
        %3419 = vmatpush1.xpose.msra.mxu0 0.0
        %3420 = vmatprep.subr.mxu0 0.0
        %3421 = vmatpush1.xpose.msra.mxu0 0.0
        %3422 = vmatprep.subr.mxu0 0.0
        %3423 = vmatpush1.xpose.msra.mxu0 0.0
        %3424 = vmatprep.subr.mxu0 0.0
        %3425 = vmatpush1.xpose.msra.mxu0 0.0
        %3426 = vmatprep.subr.mxu0 0.0
        %3427 = vmatpush1.xpose.msra.mxu0 0.0
        %3428 = vmatprep.subr.mxu0 0.0
        %3429 = vmatpush1.xpose.msra.mxu0 0.0
        %3430 = vmatprep.subr.mxu0 0.0
        %3431 = vmatpush1.xpose.msra.mxu0 0.0
        %3432 = vmatprep.subr.mxu0 0.0
        %3433 = vmatpush1.xpose.msra.mxu0 0.0
        %3434 = vmatprep.subr.mxu0 0.0
        %3435 = vmatpush1.xpose.msra.mxu0 %v3404
        %3436 = vmatprep.subr.mxu0 0.0
        %3437 = vmatpush1.xpose.msra.mxu0 %v3402
        %3438 = vmatprep.subr.mxu0 0.0
        %3439 = vmatpush2.xpose.msra.mxu0 0.0
        %3440 = vmatprep.subr.mxu0 0.0
        %3441 = vmatpush2.xpose.msra.mxu0 0.0
        %3442 = vmatprep.subr.mxu0 0.0
        %3443 = vmatpush2.xpose.msra.mxu0 0.0
        %3444 = vmatprep.subr.mxu0 0.0
        %3445 = vmatpush2.xpose.msra.mxu0 0.0
        %3446 = vmatprep.subr.mxu0 0.0
        %3447 = vmatpush2.xpose.msra.mxu0 0.0
        %3448 = vmatprep.subr.mxu0 0.0
        %3449 = vmatpush2.xpose.msra.mxu0 0.0
        %3450 = vmatprep.subr.mxu0 0.0
        %3451 = vmatpush2.xpose.msra.mxu0 0.0
        %3452 = vmatprep.subr.mxu0 0.0
        %3453 = vmatpush2.xpose.msra.mxu0 0.0
        %3454 = vmatprep.subr.mxu0 0.0
        %3455 = vmatpush2.xpose.msra.mxu0 0.0
        %3456 = vmatprep.subr.mxu0 0.0
        %3457 = vmatpush2.xpose.msra.mxu0 0.0
        %3458 = vmatprep.subr.mxu0 0.0
        %3459 = vmatpush2.xpose.msra.mxu0 0.0
        %3460 = vmatprep.subr.mxu0 0.0
        %3461 = vmatpush2.xpose.msra.mxu0 0.0
        %3462 = vmatprep.subr.mxu0 0.0
        %3463 = vmatpush2.xpose.msra.mxu0 0.0
        %3464 = vmatprep.subr.mxu0 0.0
        %3465 = vmatpush2.xpose.msra.mxu0 0.0
        %3466 = vmatprep.subr.mxu0 0.0
        %3467 = vmatpush2.xpose.msra.mxu0 0.0
        %3468 = vmatprep.subr.mxu0 0.0
        %3469 = vmatpush2.xpose.msra.mxu0 0.0
        %3470 = vmatprep.mubr.f32.mxu0 0.0
        %3471 = vmatmul.mubr.f32.gmra.mxu0 %v3400
        %v3472 = vpop.f32.mrf.mxu0
        %v3473 = vadd.f32 0.0, %v3472
        %v3474 = vpop.f32.mrf.mxu0
        %3475 = vdwg.mxu0
        %3476 = vrot.lane.b32.xlu0 %v2071, 104
        %v3477 = vpop.permute.xlu0 %3476
        %3478 = vrot.lane.b32.xlu0 %v1108, 104
        %v3479 = vpop.permute.xlu0 %3478
        %3480 = vrot.lane.b32.xlu0 %v1111, 104
        %v3481 = vpop.permute.xlu0 %3480
        %v3482 = vsel %vm1237, %v3477, 0
        %v3484 = vsel %vm1237, %v3479, 0
        %v3486 = vsel %vm1237, %v3481, 0
        %3488 = vmatprep.subr.mxu0 0.0
        %3489 = vmatpush1.xpose.msra.mxu0 0.0
        %3490 = vmatprep.subr.mxu0 0.0
        %3491 = vmatpush1.xpose.msra.mxu0 0.0
        %3492 = vmatprep.subr.mxu0 0.0
        %3493 = vmatpush1.xpose.msra.mxu0 0.0
        %3494 = vmatprep.subr.mxu0 0.0
        %3495 = vmatpush1.xpose.msra.mxu0 0.0
        %3496 = vmatprep.subr.mxu0 0.0
        %3497 = vmatpush1.xpose.msra.mxu0 0.0
        %3498 = vmatprep.subr.mxu0 0.0
        %3499 = vmatpush1.xpose.msra.mxu0 0.0
        %3500 = vmatprep.subr.mxu0 0.0
        %3501 = vmatpush1.xpose.msra.mxu0 0.0
        %3502 = vmatprep.subr.mxu0 0.0
        %3503 = vmatpush1.xpose.msra.mxu0 0.0
        %3504 = vmatprep.subr.mxu0 0.0
        %3505 = vmatpush1.xpose.msra.mxu0 0.0
        %3506 = vmatprep.subr.mxu0 0.0
        %3507 = vmatpush1.xpose.msra.mxu0 0.0
        %3508 = vmatprep.subr.mxu0 0.0
        %3509 = vmatpush1.xpose.msra.mxu0 0.0
        %3510 = vmatprep.subr.mxu0 0.0
        %3511 = vmatpush1.xpose.msra.mxu0 0.0
        %3512 = vmatprep.subr.mxu0 0.0
        %3513 = vmatpush1.xpose.msra.mxu0 0.0
        %3514 = vmatprep.subr.mxu0 0.0
        %3515 = vmatpush1.xpose.msra.mxu0 0.0
        %3516 = vmatprep.subr.mxu0 0.0
        %3517 = vmatpush1.xpose.msra.mxu0 %v3486
        %3518 = vmatprep.subr.mxu0 0.0
        %3519 = vmatpush1.xpose.msra.mxu0 %v3484
        %3520 = vmatprep.subr.mxu0 0.0
        %3521 = vmatpush2.xpose.msra.mxu0 0.0
        %3522 = vmatprep.subr.mxu0 0.0
        %3523 = vmatpush2.xpose.msra.mxu0 0.0
        %3524 = vmatprep.subr.mxu0 0.0
        %3525 = vmatpush2.xpose.msra.mxu0 0.0
        %3526 = vmatprep.subr.mxu0 0.0
        %3527 = vmatpush2.xpose.msra.mxu0 0.0
        %3528 = vmatprep.subr.mxu0 0.0
        %3529 = vmatpush2.xpose.msra.mxu0 0.0
        %3530 = vmatprep.subr.mxu0 0.0
        %3531 = vmatpush2.xpose.msra.mxu0 0.0
        %3532 = vmatprep.subr.mxu0 0.0
        %3533 = vmatpush2.xpose.msra.mxu0 0.0
        %3534 = vmatprep.subr.mxu0 0.0
        %3535 = vmatpush2.xpose.msra.mxu0 0.0
        %3536 = vmatprep.subr.mxu0 0.0
        %3537 = vmatpush2.xpose.msra.mxu0 0.0
        %3538 = vmatprep.subr.mxu0 0.0
        %3539 = vmatpush2.xpose.msra.mxu0 0.0
        %3540 = vmatprep.subr.mxu0 0.0
        %3541 = vmatpush2.xpose.msra.mxu0 0.0
        %3542 = vmatprep.subr.mxu0 0.0
        %3543 = vmatpush2.xpose.msra.mxu0 0.0
        %3544 = vmatprep.subr.mxu0 0.0
        %3545 = vmatpush2.xpose.msra.mxu0 0.0
        %3546 = vmatprep.subr.mxu0 0.0
        %3547 = vmatpush2.xpose.msra.mxu0 0.0
        %3548 = vmatprep.subr.mxu0 0.0
        %3549 = vmatpush2.xpose.msra.mxu0 0.0
        %3550 = vmatprep.subr.mxu0 0.0
        %3551 = vmatpush2.xpose.msra.mxu0 0.0
        %3552 = vmatprep.mubr.f32.mxu0 0.0
        %3553 = vmatmul.mubr.f32.gmra.mxu0 %v3482
        %v3554 = vpop.f32.mrf.mxu0
        %v3555 = vadd.f32 0.0, %v3554
        %v3556 = vpop.f32.mrf.mxu0
        %3557 = vdwg.mxu0
        %3558 = vrot.lane.b32.xlu0 %v2157, 104
        %v3559 = vpop.permute.xlu0 %3558
        %3560 = vrot.lane.b32.xlu0 %v1116, 104
        %v3561 = vpop.permute.xlu0 %3560
        %3562 = vrot.lane.b32.xlu0 %v1119, 104
        %v3563 = vpop.permute.xlu0 %3562
        %v3564 = vsel %vm1237, %v3559, 0
        %v3566 = vsel %vm1237, %v3561, 0
        %v3568 = vsel %vm1237, %v3563, 0
        %3570 = vmatprep.subr.mxu0 0.0
        %3571 = vmatpush1.xpose.msra.mxu0 0.0
        %3572 = vmatprep.subr.mxu0 0.0
        %3573 = vmatpush1.xpose.msra.mxu0 0.0
        %3574 = vmatprep.subr.mxu0 0.0
        %3575 = vmatpush1.xpose.msra.mxu0 0.0
        %3576 = vmatprep.subr.mxu0 0.0
        %3577 = vmatpush1.xpose.msra.mxu0 0.0
        %3578 = vmatprep.subr.mxu0 0.0
        %3579 = vmatpush1.xpose.msra.mxu0 0.0
        %3580 = vmatprep.subr.mxu0 0.0
        %3581 = vmatpush1.xpose.msra.mxu0 0.0
        %3582 = vmatprep.subr.mxu0 0.0
        %3583 = vmatpush1.xpose.msra.mxu0 0.0
        %3584 = vmatprep.subr.mxu0 0.0
        %3585 = vmatpush1.xpose.msra.mxu0 0.0
        %3586 = vmatprep.subr.mxu0 0.0
        %3587 = vmatpush1.xpose.msra.mxu0 0.0
        %3588 = vmatprep.subr.mxu0 0.0
        %3589 = vmatpush1.xpose.msra.mxu0 0.0
        %3590 = vmatprep.subr.mxu0 0.0
        %3591 = vmatpush1.xpose.msra.mxu0 0.0
        %3592 = vmatprep.subr.mxu0 0.0
        %3593 = vmatpush1.xpose.msra.mxu0 0.0
        %3594 = vmatprep.subr.mxu0 0.0
        %3595 = vmatpush1.xpose.msra.mxu0 0.0
        %3596 = vmatprep.subr.mxu0 0.0
        %3597 = vmatpush1.xpose.msra.mxu0 0.0
        %3598 = vmatprep.subr.mxu0 0.0
        %3599 = vmatpush1.xpose.msra.mxu0 %v3568
        %3600 = vmatprep.subr.mxu0 0.0
        %3601 = vmatpush1.xpose.msra.mxu0 %v3566
        %3602 = vmatprep.subr.mxu0 0.0
        %3603 = vmatpush2.xpose.msra.mxu0 0.0
        %3604 = vmatprep.subr.mxu0 0.0
        %3605 = vmatpush2.xpose.msra.mxu0 0.0
        %3606 = vmatprep.subr.mxu0 0.0
        %3607 = vmatpush2.xpose.msra.mxu0 0.0
        %3608 = vmatprep.subr.mxu0 0.0
        %3609 = vmatpush2.xpose.msra.mxu0 0.0
        %3610 = vmatprep.subr.mxu0 0.0
        %3611 = vmatpush2.xpose.msra.mxu0 0.0
        %3612 = vmatprep.subr.mxu0 0.0
        %3613 = vmatpush2.xpose.msra.mxu0 0.0
        %3614 = vmatprep.subr.mxu0 0.0
        %3615 = vmatpush2.xpose.msra.mxu0 0.0
        %3616 = vmatprep.subr.mxu0 0.0
        %3617 = vmatpush2.xpose.msra.mxu0 0.0
        %3618 = vmatprep.subr.mxu0 0.0
        %3619 = vmatpush2.xpose.msra.mxu0 0.0
        %3620 = vmatprep.subr.mxu0 0.0
        %3621 = vmatpush2.xpose.msra.mxu0 0.0
        %3622 = vmatprep.subr.mxu0 0.0
        %3623 = vmatpush2.xpose.msra.mxu0 0.0
        %3624 = vmatprep.subr.mxu0 0.0
        %3625 = vmatpush2.xpose.msra.mxu0 0.0
        %3626 = vmatprep.subr.mxu0 0.0
        %3627 = vmatpush2.xpose.msra.mxu0 0.0
        %3628 = vmatprep.subr.mxu0 0.0
        %3629 = vmatpush2.xpose.msra.mxu0 0.0
        %3630 = vmatprep.subr.mxu0 0.0
        %3631 = vmatpush2.xpose.msra.mxu0 0.0
        %3632 = vmatprep.subr.mxu0 0.0
        %3633 = vmatpush2.xpose.msra.mxu0 0.0
        %3634 = vmatprep.mubr.f32.mxu0 0.0
        %3635 = vmatmul.mubr.f32.gmra.mxu0 %v3564
        %v3636 = vpop.f32.mrf.mxu0
        %v3637 = vadd.f32 0.0, %v3636
        %v3638 = vpop.f32.mrf.mxu0
        %3639 = vdwg.mxu0
        %v3640 = vmul.f32 %v3391, 0.35355338
        %v3641 = vmul.f32 %v3473, 0.35355338
        %v3642 = vmul.f32 %v3555, 0.35355338
        %v3643 = vmul.f32 %v3637, 0.35355338
        %v3644 = vadd.f32 %v3640, %v923
        %v3645 = vadd.f32 %v3641, %v924
        %v3646 = vadd.f32 %v3642, %v925
        %v3647 = vadd.f32 %v3643, %v926
        %v3648 = vsel %vm1558, %v3644, -inf
        %3649 = vmax.xlane.f32.xlu0 %v3648
        %v3650 = vpop.xlane.xlu0 %3649
        %v3651 = vsel %vm1558, %v3645, -inf
        %3652 = vmax.xlane.f32.xlu0 %v3651
        %v3653 = vpop.xlane.xlu0 %3652
        %v3654 = vsel %vm1558, %v3646, -inf
        %3655 = vmax.xlane.f32.xlu0 %v3654
        %v3656 = vpop.xlane.xlu0 %3655
        %v3657 = vsel %vm1558, %v3647, -inf
        %3658 = vmax.xlane.f32.xlu0 %v3657
        %v3659 = vpop.xlane.xlu0 %3658
        %v3660 = vsub.f32 %v3644, %v3650
        %v3661 = vsub.f32 %v3645, %v3653
        %v3662 = vsub.f32 %v3646, %v3656
        %v3663 = vsub.f32 %v3647, %v3659
        %v3664 = vmul.f32 %v3660, 1.442695
        %v3665 = vpow.pop %v3664
        %v3666 = vmul.f32 %v3661, 1.442695
        %v3667 = vpow.pop %v3666
        %v3668 = vmul.f32 %v3662, 1.442695
        %v3669 = vpow.pop %v3668
        %v3670 = vmul.f32 %v3663, 1.442695
        %v3671 = vpow.pop %v3670
        %v3672 = vsel %vm1558, %v3665, 0.0
        %3673 = vadd.xlane.f32.xlu0 %v3672
        %v3674 = vpop.xlane.xlu0 %3673
        %v3675 = vsel %vm1558, %v3667, 0.0
        %3676 = vadd.xlane.f32.xlu0 %v3675
        %v3677 = vpop.xlane.xlu0 %3676
        %v3678 = vsel %vm1558, %v3669, 0.0
        %3679 = vadd.xlane.f32.xlu0 %v3678
        %v3680 = vpop.xlane.xlu0 %3679
        %v3681 = vsel %vm1558, %v3671, 0.0
        %3682 = vadd.xlane.f32.xlu0 %v3681
        %v3683 = vpop.xlane.xlu0 %3682
        %v3684 = vrcp.pop %v3674
        %v3685 = vmul.f32 %v3665, %v3684
        %v3686 = vrcp.pop %v3677
        %v3687 = vmul.f32 %v3667, %v3686
        %v3688 = vrcp.pop %v3680
        %v3689 = vmul.f32 %v3669, %v3688
        %v3690 = vrcp.pop %v3683
        %v3691 = vmul.f32 %v3671, %v3690
        %3692 = vrot.lane.b32.xlu0 %v1182, 104
        %v3693 = vpop.permute.xlu0 %3692
        %3694 = vrot.lane.b32.xlu0 %v1185, 104
        %v3695 = vpop.permute.xlu0 %3694
        %v3699 = vsel %vm1603, %v3685, 0
        %3701 = vmatprep.subr.mxu0 0.0
        %3702 = vmatpush1.msra.mxu0 0.0
        %3703 = vmatprep.subr.mxu0 0.0
        %3704 = vmatpush1.msra.mxu0 0.0
        %3705 = vmatprep.subr.mxu0 0.0
        %3706 = vmatpush1.msra.mxu0 0.0
        %3707 = vmatprep.subr.mxu0 0.0
        %3708 = vmatpush1.msra.mxu0 0.0
        %3709 = vmatprep.subr.mxu0 0.0
        %3710 = vmatpush1.msra.mxu0 0.0
        %3711 = vmatprep.subr.mxu0 0.0
        %3712 = vmatpush1.msra.mxu0 0.0
        %3713 = vmatprep.subr.mxu0 0.0
        %3714 = vmatpush1.msra.mxu0 0.0
        %3715 = vmatprep.subr.mxu0 0.0
        %3716 = vmatpush1.msra.mxu0 0.0
        %3717 = vmatprep.subr.mxu0 0.0
        %3718 = vmatpush1.msra.mxu0 0.0
        %3719 = vmatprep.subr.mxu0 0.0
        %3720 = vmatpush1.msra.mxu0 0.0
        %3721 = vmatprep.subr.mxu0 0.0
        %3722 = vmatpush1.msra.mxu0 0.0
        %3723 = vmatprep.subr.mxu0 0.0
        %3724 = vmatpush1.msra.mxu0 0.0
        %3725 = vmatprep.subr.mxu0 0.0
        %3726 = vmatpush1.msra.mxu0 0.0
        %3727 = vmatprep.subr.mxu0 0.0
        %3728 = vmatpush1.msra.mxu0 0.0
        %3729 = vmatprep.subr.mxu0 0.0
        %3730 = vmatpush1.msra.mxu0 %v3695
        %3731 = vmatprep.subr.mxu0 0.0
        %3732 = vmatpush1.msra.mxu0 %v3693
        %3733 = vmatprep.subr.mxu0 0.0
        %3734 = vmatpush2.msra.mxu0 0.0
        %3735 = vmatprep.subr.mxu0 0.0
        %3736 = vmatpush2.msra.mxu0 0.0
        %3737 = vmatprep.subr.mxu0 0.0
        %3738 = vmatpush2.msra.mxu0 0.0
        %3739 = vmatprep.subr.mxu0 0.0
        %3740 = vmatpush2.msra.mxu0 0.0
        %3741 = vmatprep.subr.mxu0 0.0
        %3742 = vmatpush2.msra.mxu0 0.0
        %3743 = vmatprep.subr.mxu0 0.0
        %3744 = vmatpush2.msra.mxu0 0.0
        %3745 = vmatprep.subr.mxu0 0.0
        %3746 = vmatpush2.msra.mxu0 0.0
        %3747 = vmatprep.subr.mxu0 0.0
        %3748 = vmatpush2.msra.mxu0 0.0
        %3749 = vmatprep.subr.mxu0 0.0
        %3750 = vmatpush2.msra.mxu0 0.0
        %3751 = vmatprep.subr.mxu0 0.0
        %3752 = vmatpush2.msra.mxu0 0.0
        %3753 = vmatprep.subr.mxu0 0.0
        %3754 = vmatpush2.msra.mxu0 0.0
        %3755 = vmatprep.subr.mxu0 0.0
        %3756 = vmatpush2.msra.mxu0 0.0
        %3757 = vmatprep.subr.mxu0 0.0
        %3758 = vmatpush2.msra.mxu0 0.0
        %3759 = vmatprep.subr.mxu0 0.0
        %3760 = vmatpush2.msra.mxu0 0.0
        %3761 = vmatprep.subr.mxu0 0.0
        %3762 = vmatpush2.msra.mxu0 0.0
        %3763 = vmatprep.subr.mxu0 0.0
        %3764 = vmatpush2.msra.mxu0 0.0
        %3765 = vmatprep.mubr.f32.mxu0 0.0
        %3766 = vmatmul.mubr.f32.gmra.mxu0 %v3699
        %v3767 = vpop.f32.mrf.mxu0
        %v3768 = vadd.f32 0.0, %v3767
        %v3769 = vpop.f32.mrf.mxu0
        %3770 = vdwg.mxu0
        %3771 = vrot.lane.b32.xlu0 %v1190, 104
        %v3772 = vpop.permute.xlu0 %3771
        %3773 = vrot.lane.b32.xlu0 %v1193, 104
        %v3774 = vpop.permute.xlu0 %3773
        %v3778 = vsel %vm1603, %v3687, 0
        %3780 = vmatprep.subr.mxu0 0.0
        %3781 = vmatpush1.msra.mxu0 0.0
        %3782 = vmatprep.subr.mxu0 0.0
        %3783 = vmatpush1.msra.mxu0 0.0
        %3784 = vmatprep.subr.mxu0 0.0
        %3785 = vmatpush1.msra.mxu0 0.0
        %3786 = vmatprep.subr.mxu0 0.0
        %3787 = vmatpush1.msra.mxu0 0.0
        %3788 = vmatprep.subr.mxu0 0.0
        %3789 = vmatpush1.msra.mxu0 0.0
        %3790 = vmatprep.subr.mxu0 0.0
        %3791 = vmatpush1.msra.mxu0 0.0
        %3792 = vmatprep.subr.mxu0 0.0
        %3793 = vmatpush1.msra.mxu0 0.0
        %3794 = vmatprep.subr.mxu0 0.0
        %3795 = vmatpush1.msra.mxu0 0.0
        %3796 = vmatprep.subr.mxu0 0.0
        %3797 = vmatpush1.msra.mxu0 0.0
        %3798 = vmatprep.subr.mxu0 0.0
        %3799 = vmatpush1.msra.mxu0 0.0
        %3800 = vmatprep.subr.mxu0 0.0
        %3801 = vmatpush1.msra.mxu0 0.0
        %3802 = vmatprep.subr.mxu0 0.0
        %3803 = vmatpush1.msra.mxu0 0.0
        %3804 = vmatprep.subr.mxu0 0.0
        %3805 = vmatpush1.msra.mxu0 0.0
        %3806 = vmatprep.subr.mxu0 0.0
        %3807 = vmatpush1.msra.mxu0 0.0
        %3808 = vmatprep.subr.mxu0 0.0
        %3809 = vmatpush1.msra.mxu0 %v3774
        %3810 = vmatprep.subr.mxu0 0.0
        %3811 = vmatpush1.msra.mxu0 %v3772
        %3812 = vmatprep.subr.mxu0 0.0
        %3813 = vmatpush2.msra.mxu0 0.0
        %3814 = vmatprep.subr.mxu0 0.0
        %3815 = vmatpush2.msra.mxu0 0.0
        %3816 = vmatprep.subr.mxu0 0.0
        %3817 = vmatpush2.msra.mxu0 0.0
        %3818 = vmatprep.subr.mxu0 0.0
        %3819 = vmatpush2.msra.mxu0 0.0
        %3820 = vmatprep.subr.mxu0 0.0
        %3821 = vmatpush2.msra.mxu0 0.0
        %3822 = vmatprep.subr.mxu0 0.0
        %3823 = vmatpush2.msra.mxu0 0.0
        %3824 = vmatprep.subr.mxu0 0.0
        %3825 = vmatpush2.msra.mxu0 0.0
        %3826 = vmatprep.subr.mxu0 0.0
        %3827 = vmatpush2.msra.mxu0 0.0
        %3828 = vmatprep.subr.mxu0 0.0
        %3829 = vmatpush2.msra.mxu0 0.0
        %3830 = vmatprep.subr.mxu0 0.0
        %3831 = vmatpush2.msra.mxu0 0.0
        %3832 = vmatprep.subr.mxu0 0.0
        %3833 = vmatpush2.msra.mxu0 0.0
        %3834 = vmatprep.subr.mxu0 0.0
        %3835 = vmatpush2.msra.mxu0 0.0
        %3836 = vmatprep.subr.mxu0 0.0
        %3837 = vmatpush2.msra.mxu0 0.0
        %3838 = vmatprep.subr.mxu0 0.0
        %3839 = vmatpush2.msra.mxu0 0.0
        %3840 = vmatprep.subr.mxu0 0.0
        %3841 = vmatpush2.msra.mxu0 0.0
        %3842 = vmatprep.subr.mxu0 0.0
        %3843 = vmatpush2.msra.mxu0 0.0
        %3844 = vmatprep.mubr.f32.mxu0 0.0
        %3845 = vmatmul.mubr.f32.gmra.mxu0 %v3778
        %v3846 = vpop.f32.mrf.mxu0
        %v3847 = vadd.f32 0.0, %v3846
        %v3848 = vpop.f32.mrf.mxu0
        %3849 = vdwg.mxu0
        %3850 = vrot.lane.b32.xlu0 %v1198, 104
        %v3851 = vpop.permute.xlu0 %3850
        %3852 = vrot.lane.b32.xlu0 %v1201, 104
        %v3853 = vpop.permute.xlu0 %3852
        %v3857 = vsel %vm1603, %v3689, 0
        %3859 = vmatprep.subr.mxu0 0.0
        %3860 = vmatpush1.msra.mxu0 0.0
        %3861 = vmatprep.subr.mxu0 0.0
        %3862 = vmatpush1.msra.mxu0 0.0
        %3863 = vmatprep.subr.mxu0 0.0
        %3864 = vmatpush1.msra.mxu0 0.0
        %3865 = vmatprep.subr.mxu0 0.0
        %3866 = vmatpush1.msra.mxu0 0.0
        %3867 = vmatprep.subr.mxu0 0.0
        %3868 = vmatpush1.msra.mxu0 0.0
        %3869 = vmatprep.subr.mxu0 0.0
        %3870 = vmatpush1.msra.mxu0 0.0
        %3871 = vmatprep.subr.mxu0 0.0
        %3872 = vmatpush1.msra.mxu0 0.0
        %3873 = vmatprep.subr.mxu0 0.0
        %3874 = vmatpush1.msra.mxu0 0.0
        %3875 = vmatprep.subr.mxu0 0.0
        %3876 = vmatpush1.msra.mxu0 0.0
        %3877 = vmatprep.subr.mxu0 0.0
        %3878 = vmatpush1.msra.mxu0 0.0
        %3879 = vmatprep.subr.mxu0 0.0
        %3880 = vmatpush1.msra.mxu0 0.0
        %3881 = vmatprep.subr.mxu0 0.0
        %3882 = vmatpush1.msra.mxu0 0.0
        %3883 = vmatprep.subr.mxu0 0.0
        %3884 = vmatpush1.msra.mxu0 0.0
        %3885 = vmatprep.subr.mxu0 0.0
        %3886 = vmatpush1.msra.mxu0 0.0
        %3887 = vmatprep.subr.mxu0 0.0
        %3888 = vmatpush1.msra.mxu0 %v3853
        %3889 = vmatprep.subr.mxu0 0.0
        %3890 = vmatpush1.msra.mxu0 %v3851
        %3891 = vmatprep.subr.mxu0 0.0
        %3892 = vmatpush2.msra.mxu0 0.0
        %3893 = vmatprep.subr.mxu0 0.0
        %3894 = vmatpush2.msra.mxu0 0.0
        %3895 = vmatprep.subr.mxu0 0.0
        %3896 = vmatpush2.msra.mxu0 0.0
        %3897 = vmatprep.subr.mxu0 0.0
        %3898 = vmatpush2.msra.mxu0 0.0
        %3899 = vmatprep.subr.mxu0 0.0
        %3900 = vmatpush2.msra.mxu0 0.0
        %3901 = vmatprep.subr.mxu0 0.0
        %3902 = vmatpush2.msra.mxu0 0.0
        %3903 = vmatprep.subr.mxu0 0.0
        %3904 = vmatpush2.msra.mxu0 0.0
        %3905 = vmatprep.subr.mxu0 0.0
        %3906 = vmatpush2.msra.mxu0 0.0
        %3907 = vmatprep.subr.mxu0 0.0
        %3908 = vmatpush2.msra.mxu0 0.0
        %3909 = vmatprep.subr.mxu0 0.0
        %3910 = vmatpush2.msra.mxu0 0.0
        %3911 = vmatprep.subr.mxu0 0.0
        %3912 = vmatpush2.msra.mxu0 0.0
        %3913 = vmatprep.subr.mxu0 0.0
        %3914 = vmatpush2.msra.mxu0 0.0
        %3915 = vmatprep.subr.mxu0 0.0
        %3916 = vmatpush2.msra.mxu0 0.0
        %3917 = vmatprep.subr.mxu0 0.0
        %3918 = vmatpush2.msra.mxu0 0.0
        %3919 = vmatprep.subr.mxu0 0.0
        %3920 = vmatpush2.msra.mxu0 0.0
        %3921 = vmatprep.subr.mxu0 0.0
        %3922 = vmatpush2.msra.mxu0 0.0
        %3923 = vmatprep.mubr.f32.mxu0 0.0
        %3924 = vmatmul.mubr.f32.gmra.mxu0 %v3857
        %v3925 = vpop.f32.mrf.mxu0
        %v3926 = vadd.f32 0.0, %v3925
        %v3927 = vpop.f32.mrf.mxu0
        %3928 = vdwg.mxu0
        %3929 = vrot.lane.b32.xlu0 %v1206, 104
        %v3930 = vpop.permute.xlu0 %3929
        %3931 = vrot.lane.b32.xlu0 %v1209, 104
        %v3932 = vpop.permute.xlu0 %3931
        %v3936 = vsel %vm1603, %v3691, 0
        %3938 = vmatprep.subr.mxu0 0.0
        %3939 = vmatpush1.msra.mxu0 0.0
        %3940 = vmatprep.subr.mxu0 0.0
        %3941 = vmatpush1.msra.mxu0 0.0
        %3942 = vmatprep.subr.mxu0 0.0
        %3943 = vmatpush1.msra.mxu0 0.0
        %3944 = vmatprep.subr.mxu0 0.0
        %3945 = vmatpush1.msra.mxu0 0.0
        %3946 = vmatprep.subr.mxu0 0.0
        %3947 = vmatpush1.msra.mxu0 0.0
        %3948 = vmatprep.subr.mxu0 0.0
        %3949 = vmatpush1.msra.mxu0 0.0
        %3950 = vmatprep.subr.mxu0 0.0
        %3951 = vmatpush1.msra.mxu0 0.0
        %3952 = vmatprep.subr.mxu0 0.0
        %3953 = vmatpush1.msra.mxu0 0.0
        %3954 = vmatprep.subr.mxu0 0.0
        %3955 = vmatpush1.msra.mxu0 0.0
        %3956 = vmatprep.subr.mxu0 0.0
        %3957 = vmatpush1.msra.mxu0 0.0
        %3958 = vmatprep.subr.mxu0 0.0
        %3959 = vmatpush1.msra.mxu0 0.0
        %3960 = vmatprep.subr.mxu0 0.0
        %3961 = vmatpush1.msra.mxu0 0.0
        %3962 = vmatprep.subr.mxu0 0.0
        %3963 = vmatpush1.msra.mxu0 0.0
        %3964 = vmatprep.subr.mxu0 0.0
        %3965 = vmatpush1.msra.mxu0 0.0
        %3966 = vmatprep.subr.mxu0 0.0
        %3967 = vmatpush1.msra.mxu0 %v3932
        %3968 = vmatprep.subr.mxu0 0.0
        %3969 = vmatpush1.msra.mxu0 %v3930
        %3970 = vmatprep.subr.mxu0 0.0
        %3971 = vmatpush2.msra.mxu0 0.0
        %3972 = vmatprep.subr.mxu0 0.0
        %3973 = vmatpush2.msra.mxu0 0.0
        %3974 = vmatprep.subr.mxu0 0.0
        %3975 = vmatpush2.msra.mxu0 0.0
        %3976 = vmatprep.subr.mxu0 0.0
        %3977 = vmatpush2.msra.mxu0 0.0
        %3978 = vmatprep.subr.mxu0 0.0
        %3979 = vmatpush2.msra.mxu0 0.0
        %3980 = vmatprep.subr.mxu0 0.0
        %3981 = vmatpush2.msra.mxu0 0.0
        %3982 = vmatprep.subr.mxu0 0.0
        %3983 = vmatpush2.msra.mxu0 0.0
        %3984 = vmatprep.subr.mxu0 0.0
        %3985 = vmatpush2.msra.mxu0 0.0
        %3986 = vmatprep.subr.mxu0 0.0
        %3987 = vmatpush2.msra.mxu0 0.0
        %3988 = vmatprep.subr.mxu0 0.0
        %3989 = vmatpush2.msra.mxu0 0.0
        %3990 = vmatprep.subr.mxu0 0.0
        %3991 = vmatpush2.msra.mxu0 0.0
        %3992 = vmatprep.subr.mxu0 0.0
        %3993 = vmatpush2.msra.mxu0 0.0
        %3994 = vmatprep.subr.mxu0 0.0
        %3995 = vmatpush2.msra.mxu0 0.0
        %3996 = vmatprep.subr.mxu0 0.0
        %3997 = vmatpush2.msra.mxu0 0.0
        %3998 = vmatprep.subr.mxu0 0.0
        %3999 = vmatpush2.msra.mxu0 0.0
        %4000 = vmatprep.subr.mxu0 0.0
        %4001 = vmatpush2.msra.mxu0 0.0
        %4002 = vmatprep.mubr.f32.mxu0 0.0
        %4003 = vmatmul.mubr.f32.gmra.mxu0 %v3936
        %v4004 = vpop.f32.mrf.mxu0
        %v4005 = vadd.f32 0.0, %v4004
        %v4006 = vpop.f32.mrf.mxu0
        %4007 = vdwg.mxu0
        %v4012 = vrot.slane %v1747, 7
        %v4013 = vsel %vm956, %v4012, %v1674
        %v4014 = vrot.slane %v1820, 6
        %v4015 = vsel %vm959, %v4014, %v4013
        %v4016 = vrot.slane %v1893, 5
        %v4017 = vsel %vm962, %v4016, %v4015
        %v4023 = vrot.slane %v2451, 7
        %v4024 = vsel %vm956, %v4023, %v2370
        %v4025 = vrot.slane %v2532, 6
        %v4026 = vsel %vm959, %v4025, %v4024
        %v4027 = vrot.slane %v2613, 5
        %v4028 = vsel %vm962, %v4027, %v4026
        %4029 = vrot.lane.b32.xlu0 %v4028, 8
        %v4030 = vpop.permute.xlu0 %4029
        %v4036 = vrot.slane %v3151, 7
        %v4037 = vsel %vm956, %v4036, %v3072
        %v4038 = vrot.slane %v3230, 6
        %v4039 = vsel %vm959, %v4038, %v4037
        %v4040 = vrot.slane %v3309, 5
        %v4041 = vsel %vm962, %v4040, %v4039
        %4042 = vrot.lane.b32.xlu0 %v4041, 16
        %v4043 = vpop.permute.xlu0 %4042
        %v4049 = vrot.slane %v3847, 7
        %v4050 = vsel %vm956, %v4049, %v3768
        %v4051 = vrot.slane %v3926, 6
        %v4052 = vsel %vm959, %v4051, %v4050
        %v4053 = vrot.slane %v4005, 5
        %v4054 = vsel %vm962, %v4053, %v4052
        %4055 = vrot.lane.b32.xlu0 %v4054, 24
        %v4056 = vpop.permute.xlu0 %4055
        %v4058 = vsel %vm1237, %v4017, %v4030
        %v4059 = vsel %vm1603, %v4058, %v4043
        %vm4060 = vcmask 195584
        %v4061 = vsel %vm4060, %v4059, %v4056
        %v4062 = vpack.c.bf16 %v4061, %v4061
        %v4063 = vld [vmem:[%s9] sm:$0xf]
        %v4064 = vld [vmem:[%s9 + $0x4] sm:$0xf]
        %v4065 = vld [vmem:[%s9 + $0x8] sm:$0xf]
        %v4066 = vld [vmem:[%s9 + $0xc] sm:$0xf]
        %v4067 = vld [vmem:[%s10] sm:$0x1]
        %v4069 = vlaneseq
        %v4070 = vshrl.u32 %v4069, 7
        %v4071 = vsub.s32 0, %v4070
        %v4072 = vrot.slane %v4067, %v4071
        %v4078 = vunpack.c.l.b16 %v4063
        %v4079 = vunpack.c.l.b16 %v4064
        %v4080 = vunpack.c.l.b16 %v4065
        %v4081 = vunpack.c.l.b16 %v4066
        %v4082 = vpack.c.b16 %v4079, %v4078
        %v4083 = vpack.c.b16 %v4081, %v4080
        %v4087 = vsel %vm801, %v4062, 0
        %4089 = vmatprep.subr.bf16.mxu0 0
        %4090 = vmatpush1.bf16.msra.mxu0 0
        %4091 = vmatprep.subr.bf16.mxu0 0
        %4092 = vmatpush1.bf16.msra.mxu0 0
        %4093 = vmatprep.subr.bf16.mxu0 0
        %4094 = vmatpush1.bf16.msra.mxu0 0
        %4095 = vmatprep.subr.bf16.mxu0 0
        %4096 = vmatpush1.bf16.msra.mxu0 0
        %4097 = vmatprep.subr.bf16.mxu0 0
        %4098 = vmatpush1.bf16.msra.mxu0 0
        %4099 = vmatprep.subr.bf16.mxu0 0
        %4100 = vmatpush1.bf16.msra.mxu0 0
        %4101 = vmatprep.subr.bf16.mxu0 0
        %4102 = vmatpush1.bf16.msra.mxu0 %v4083
        %4103 = vmatprep.subr.bf16.mxu0 0
        %4104 = vmatpush1.bf16.msra.mxu0 %v4082
        %4105 = vmatprep.subr.bf16.mxu0 0
        %4106 = vmatpush2.bf16.msra.mxu0 0
        %4107 = vmatprep.subr.bf16.mxu0 0
        %4108 = vmatpush2.bf16.msra.mxu0 0
        %4109 = vmatprep.subr.bf16.mxu0 0
        %4110 = vmatpush2.bf16.msra.mxu0 0
        %4111 = vmatprep.subr.bf16.mxu0 0
        %4112 = vmatpush2.bf16.msra.mxu0 0
        %4113 = vmatprep.subr.bf16.mxu0 0
        %4114 = vmatpush2.bf16.msra.mxu0 0
        %4115 = vmatprep.subr.bf16.mxu0 0
        %4116 = vmatpush2.bf16.msra.mxu0 0
        %4117 = vmatprep.subr.bf16.mxu0 0
        %4118 = vmatpush2.bf16.msra.mxu0 0
        %4119 = vmatprep.subr.bf16.mxu0 0
        %4120 = vmatpush2.bf16.msra.mxu0 0
        %4121 = vmatprep.mubr.bf16.mxu0 0
        %4122 = vmatmul.mubr.bf16.gmra.mxu0 %v4087
        %v4123 = vpop.f32.mrf.mxu0
        %v4124 = vadd.f32 %v4072, %v4123
        %v4125 = vpop.f32.mrf.mxu0
        %v4126 = vpop.f32.mrf.mxu0
        %v4127 = vpop.f32.mrf.mxu0
        %4128 = vdwg.mxu0
        %v4130 = vrot.slane %v4124, 1
        %v4131 = vrot.slane %v4124, 2
        %v4132 = vrot.slane %v4124, 3
        %v4133 = vrot.slane %v4124, 4
        %v4138 = vadd.f32 %v795, %v4130
        %v4139 = vadd.f32 %v796, %v4131
        %v4140 = vadd.f32 %v797, %v4132
        %v4141 = vadd.f32 %v798, %v4133
        %v4142 = vld [vmem:[%s11] sm:$0x1]
        %v4143 = vld [vmem:[%s12] sm:$0x1]
        %v4148 = vrot.slane %v4139, 7
        %v4149 = vrot.slane %v4140, 6
        %v4150 = vsel %vm956, %v4149, %v4148
        %v4151 = vrot.slane %v4141, 5
        %v4152 = vsel %vm959, %v4151, %v4150
        %vm4155 = vcmask 261127
        %v4156 = vsel %vm4155, %v4138, 0.0
        %4157 = vadd.xlane.f32.xlu0 %v4156
        %v4158 = vpop.xlane.xlu0 %4157
        %vm4159 = vcmask 256000
        %v4160 = vsel %vm4159, %v4152, 0.0
        %4161 = vadd.xlane.f32.xlu0 %v4160
        %v4162 = vpop.xlane.xlu0 %4161
        %v4163 = vmul.f32 %v4158, %v814
        %v4164 = vmul.f32 %v4162, %v814
        %v4167 = vrot.slane %v4164, 1
        %v4168 = vrot.slane %v4164, 2
        %v4169 = vrot.slane %v4164, 3
        %v4174 = vsub.f32 %v4138, %v4163
        %v4175 = vsub.f32 %v4139, %v4167
        %v4176 = vsub.f32 %v4140, %v4168
        %v4177 = vsub.f32 %v4141, %v4169
        %v4178 = vmul.f32 %v4174, %v4174
        %v4179 = vmul.f32 %v4175, %v4175
        %v4180 = vmul.f32 %v4176, %v4176
        %v4181 = vmul.f32 %v4177, %v4177
        %v4186 = vrot.slane %v4179, 7
        %v4187 = vrot.slane %v4180, 6
        %v4188 = vsel %vm956, %v4187, %v4186
        %v4189 = vrot.slane %v4181, 5
        %v4190 = vsel %vm959, %v4189, %v4188
        %v4193 = vsel %vm4155, %v4178, 0.0
        %4194 = vadd.xlane.f32.xlu0 %v4193
        %v4195 = vpop.xlane.xlu0 %4194
        %v4196 = vsel %vm4159, %v4190, 0.0
        %4197 = vadd.xlane.f32.xlu0 %v4196
        %v4198 = vpop.xlane.xlu0 %4197
        %v4199 = vmul.f32 %v4195, 0.032258064
        %v4200 = vmul.f32 %v4198, 0.032258064
        %v4202 = vlaneseq
        %v4203 = vshrl.u32 %v4202, 7
        %v4204 = vsub.s32 0, %v4203
        %v4205 = vrot.slane %v4142, %v4204
        %v4211 = vrot.slane %v4174, 7
        %v4212 = vrot.slane %v4175, 6
        %v4213 = vsel %vm956, %v4212, %v4211
        %v4214 = vrot.slane %v4176, 5
        %v4215 = vsel %vm959, %v4214, %v4213
        %v4216 = vrot.slane %v4177, 4
        %v4217 = vsel %vm962, %v4216, %v4215
        %v4219 = vmul.f32 %v4205, %v4217
        %v4220 = vrsqrt.pop %v4199
        %v4221 = vmul.f32 %v4199, %v4220
        %vm4222 = vcmp.eq.f32.partialorder %v4199, inf
        %v4223 = vsel %vm4222, %v4199, %v4221
        %vm4224 = vcmp.eq.f32.partialorder %v4199, 0.0
        %v4225 = vand.u32 %v4199, 2147483648
        %v4226 = vsel %vm4224, %v4225, %v4223
        %v4227 = vrsqrt.pop %v4200
        %v4228 = vmul.f32 %v4200, %v4227
        %vm4229 = vcmp.eq.f32.partialorder %v4200, inf
        %v4230 = vsel %vm4229, %v4200, %v4228
        %vm4231 = vcmp.eq.f32.partialorder %v4200, 0.0
        %v4232 = vand.u32 %v4200, 2147483648
        %v4233 = vsel %vm4231, %v4232, %v4230
        %v4234 = vadd.f32 %v4226, 1e-06
        %v4235 = vadd.f32 %v4233, 1e-06
        %vm4238 = vcmask 1040384
        %v4239 = vrot.slane %v4234, 7
        %v4240 = vrot.slane %v4235, 7
        %v4241 = vsel %vm4238, %v4239, %v4240
        %v4243 = vrcp.pop %v4241
        %v4244 = vmul.f32 %v4219, %v4243
        %v4246 = vlaneseq
        %v4247 = vshrl.u32 %v4246, 7
        %v4248 = vsub.s32 0, %v4247
        %v4249 = vrot.slane %v4143, %v4248
        %v4251 = vadd.f32 %v4244, %v4249
        %v4252 = vld [vmem:[%s775] sm:$0xff]
        %v4253 = vld [vmem:[%s775 + $0x8] sm:$0xff]
        %v4254 = vld [vmem:[%s775 + $0x10] sm:$0xff]
        %v4255 = vld [vmem:[%s775 + $0x18] sm:$0xff]
        %v4256 = vld [vmem:[%s791] sm:$0x1]
        %v4257 = vld [vmem:[%s791 + $0x1] sm:$0x1]
        %v4258 = vld [vmem:[%s791 + $0x2] sm:$0x1]
        %v4259 = vld [vmem:[%s791 + $0x3] sm:$0x1]
        %v4260 = vpack.c.bf16 %v4253, %v4252
        %v4261 = vpack.c.bf16 %v4255, %v4254
        %v4262 = vpack.c.bf16 %v4251, %v4251
        %v4263 = vld [vmem:[%s13] sm:$0xf]
        %v4264 = vld [vmem:[%s13 + $0x4] sm:$0xf]
        %v4265 = vld [vmem:[%s13 + $0x8] sm:$0xf]
        %v4266 = vld [vmem:[%s13 + $0xc] sm:$0xf]
        %v4267 = vld [vmem:[%s14] sm:$0x1]
        %v4269 = vlaneseq
        %v4270 = vshrl.u32 %v4269, 7
        %v4271 = vsub.s32 0, %v4270
        %v4272 = vrot.slane %v4267, %v4271
        %v4278 = vunpack.c.l.b16 %v4263
        %v4279 = vunpack.c.l.b16 %v4264
        %v4280 = vunpack.c.l.b16 %v4265
        %v4281 = vunpack.c.l.b16 %v4266
        %v4282 = vpack.c.b16 %v4279, %v4278
        %v4283 = vpack.c.b16 %v4281, %v4280
        %v4287 = vsel %vm801, %v4262, 0
        %4289 = vmatprep.subr.bf16.mxu0 0
        %4290 = vmatpush1.bf16.msra.mxu0 0
        %4291 = vmatprep.subr.bf16.mxu0 0
        %4292 = vmatpush1.bf16.msra.mxu0 0
        %4293 = vmatprep.subr.bf16.mxu0 0
        %4294 = vmatpush1.bf16.msra.mxu0 0
        %4295 = vmatprep.subr.bf16.mxu0 0
        %4296 = vmatpush1.bf16.msra.mxu0 0
        %4297 = vmatprep.subr.bf16.mxu0 0
        %4298 = vmatpush1.bf16.msra.mxu0 0
        %4299 = vmatprep.subr.bf16.mxu0 0
        %4300 = vmatpush1.bf16.msra.mxu0 0
        %4301 = vmatprep.subr.bf16.mxu0 0
        %4302 = vmatpush1.bf16.msra.mxu0 %v4283
        %4303 = vmatprep.subr.bf16.mxu0 0
        %4304 = vmatpush1.bf16.msra.mxu0 %v4282
        %4305 = vmatprep.subr.bf16.mxu0 0
        %4306 = vmatpush2.bf16.msra.mxu0 0
        %4307 = vmatprep.subr.bf16.mxu0 0
        %4308 = vmatpush2.bf16.msra.mxu0 0
        %4309 = vmatprep.subr.bf16.mxu0 0
        %4310 = vmatpush2.bf16.msra.mxu0 0
        %4311 = vmatprep.subr.bf16.mxu0 0
        %4312 = vmatpush2.bf16.msra.mxu0 0
        %4313 = vmatprep.subr.bf16.mxu0 0
        %4314 = vmatpush2.bf16.msra.mxu0 0
        %4315 = vmatprep.subr.bf16.mxu0 0
        %4316 = vmatpush2.bf16.msra.mxu0 0
        %4317 = vmatprep.subr.bf16.mxu0 0
        %4318 = vmatpush2.bf16.msra.mxu0 0
        %4319 = vmatprep.subr.bf16.mxu0 0
        %4320 = vmatpush2.bf16.msra.mxu0 0
        %4321 = vmatprep.mubr.bf16.mxu0 0
        %4322 = vmatmul.mubr.bf16.gmra.mxu0 %v4287
        %v4323 = vpop.f32.mrf.mxu0
        %v4324 = vadd.f32 %v4272, %v4323
        %v4325 = vpop.f32.mrf.mxu0
        %v4326 = vpop.f32.mrf.mxu0
        %v4327 = vpop.f32.mrf.mxu0
        %4328 = vdwg.mxu0
        %s4329 = scalar_lea.vmem %s13, 16
        %v4330 = vld [vmem:[%s4329] sm:$0xf]
        %v4331 = vld [vmem:[%s4329 + $0x4] sm:$0xf]
        %v4332 = vld [vmem:[%s4329 + $0x8] sm:$0xf]
        %v4333 = vld [vmem:[%s4329 + $0xc] sm:$0xf]
        %s4334 = scalar_lea.vmem %s14, 1
        %v4335 = vld [vmem:[%s4334] sm:$0x1]
        %v4337 = vlaneseq
        %v4338 = vshrl.u32 %v4337, 7
        %v4339 = vsub.s32 0, %v4338
        %v4340 = vrot.slane %v4335, %v4339
        %v4346 = vunpack.c.l.b16 %v4330
        %v4347 = vunpack.c.l.b16 %v4331
        %v4348 = vunpack.c.l.b16 %v4332
        %v4349 = vunpack.c.l.b16 %v4333
        %v4350 = vpack.c.b16 %v4347, %v4346
        %v4351 = vpack.c.b16 %v4349, %v4348
        %v4355 = vsel %vm801, %v4260, 0
        %v4358 = vsel %vm801, %v4261, 0
        %4360 = vmatprep.subr.bf16.mxu0 0
        %4361 = vmatpush1.bf16.msra.mxu0 0
        %4362 = vmatprep.subr.bf16.mxu0 0
        %4363 = vmatpush1.bf16.msra.mxu0 0
        %4364 = vmatprep.subr.bf16.mxu0 0
        %4365 = vmatpush1.bf16.msra.mxu0 0
        %4366 = vmatprep.subr.bf16.mxu0 0
        %4367 = vmatpush1.bf16.msra.mxu0 0
        %4368 = vmatprep.subr.bf16.mxu0 0
        %4369 = vmatpush1.bf16.msra.mxu0 0
        %4370 = vmatprep.subr.bf16.mxu0 0
        %4371 = vmatpush1.bf16.msra.mxu0 0
        %4372 = vmatprep.subr.bf16.mxu0 0
        %4373 = vmatpush1.bf16.msra.mxu0 %v4351
        %4374 = vmatprep.subr.bf16.mxu0 0
        %4375 = vmatpush1.bf16.msra.mxu0 %v4350
        %4376 = vmatprep.subr.bf16.mxu0 0
        %4377 = vmatpush2.bf16.msra.mxu0 0
        %4378 = vmatprep.subr.bf16.mxu0 0
        %4379 = vmatpush2.bf16.msra.mxu0 0
        %4380 = vmatprep.subr.bf16.mxu0 0
        %4381 = vmatpush2.bf16.msra.mxu0 0
        %4382 = vmatprep.subr.bf16.mxu0 0
        %4383 = vmatpush2.bf16.msra.mxu0 0
        %4384 = vmatprep.subr.bf16.mxu0 0
        %4385 = vmatpush2.bf16.msra.mxu0 0
        %4386 = vmatprep.subr.bf16.mxu0 0
        %4387 = vmatpush2.bf16.msra.mxu0 0
        %4388 = vmatprep.subr.bf16.mxu0 0
        %4389 = vmatpush2.bf16.msra.mxu0 0
        %4390 = vmatprep.subr.bf16.mxu0 0
        %4391 = vmatpush2.bf16.msra.mxu0 0
        %4392 = vmatprep.mubr.bf16.mxu0 0
        %4393 = vmatmul.mubr.bf16.gmra.mxu0 %v4355
        %v4394 = vpop.f32.mrf.mxu0
        %v4395 = vadd.f32 %v4340, %v4394
        %v4396 = vpop.f32.mrf.mxu0
        %v4397 = vpop.f32.mrf.mxu0
        %v4398 = vadd.f32 %v4340, %v4397
        %v4399 = vpop.f32.mrf.mxu0
        %4400 = vmatprep.mubr.bf16.mxu0 0
        %4401 = vmatmul.mubr.bf16.gmra.mxu0 %v4358
        %v4402 = vpop.f32.mrf.mxu0
        %v4403 = vadd.f32 %v4340, %v4402
        %v4404 = vpop.f32.mrf.mxu0
        %v4405 = vpop.f32.mrf.mxu0
        %v4406 = vadd.f32 %v4340, %v4405
        %v4407 = vpop.f32.mrf.mxu0
        %4408 = vdwg.mxu0
        %s4409 = scalar_lea.vmem %s13, 32
        %v4410 = vld [vmem:[%s4409] sm:$0xf]
        %v4411 = vld [vmem:[%s4409 + $0x4] sm:$0xf]
        %v4412 = vld [vmem:[%s4409 + $0x8] sm:$0xf]
        %v4413 = vld [vmem:[%s4409 + $0xc] sm:$0xf]
        %s4414 = scalar_lea.vmem %s14, 2
        %v4415 = vld [vmem:[%s4414] sm:$0x1]
        %v4417 = vlaneseq
        %v4418 = vshrl.u32 %v4417, 7
        %v4419 = vsub.s32 0, %v4418
        %v4420 = vrot.slane %v4415, %v4419
        %v4426 = vunpack.c.l.b16 %v4410
        %v4427 = vunpack.c.l.b16 %v4411
        %v4428 = vunpack.c.l.b16 %v4412
        %v4429 = vunpack.c.l.b16 %v4413
        %v4430 = vpack.c.b16 %v4427, %v4426
        %v4431 = vpack.c.b16 %v4429, %v4428
        %4434 = vmatprep.subr.bf16.mxu0 0
        %4435 = vmatpush1.bf16.msra.mxu0 0
        %4436 = vmatprep.subr.bf16.mxu0 0
        %4437 = vmatpush1.bf16.msra.mxu0 0
        %4438 = vmatprep.subr.bf16.mxu0 0
        %4439 = vmatpush1.bf16.msra.mxu0 0
        %4440 = vmatprep.subr.bf16.mxu0 0
        %4441 = vmatpush1.bf16.msra.mxu0 0
        %4442 = vmatprep.subr.bf16.mxu0 0
        %4443 = vmatpush1.bf16.msra.mxu0 0
        %4444 = vmatprep.subr.bf16.mxu0 0
        %4445 = vmatpush1.bf16.msra.mxu0 0
        %4446 = vmatprep.subr.bf16.mxu0 0
        %4447 = vmatpush1.bf16.msra.mxu0 %v4431
        %4448 = vmatprep.subr.bf16.mxu0 0
        %4449 = vmatpush1.bf16.msra.mxu0 %v4430
        %4450 = vmatprep.subr.bf16.mxu0 0
        %4451 = vmatpush2.bf16.msra.mxu0 0
        %4452 = vmatprep.subr.bf16.mxu0 0
        %4453 = vmatpush2.bf16.msra.mxu0 0
        %4454 = vmatprep.subr.bf16.mxu0 0
        %4455 = vmatpush2.bf16.msra.mxu0 0
        %4456 = vmatprep.subr.bf16.mxu0 0
        %4457 = vmatpush2.bf16.msra.mxu0 0
        %4458 = vmatprep.subr.bf16.mxu0 0
        %4459 = vmatpush2.bf16.msra.mxu0 0
        %4460 = vmatprep.subr.bf16.mxu0 0
        %4461 = vmatpush2.bf16.msra.mxu0 0
        %4462 = vmatprep.subr.bf16.mxu0 0
        %4463 = vmatpush2.bf16.msra.mxu0 0
        %4464 = vmatprep.subr.bf16.mxu0 0
        %4465 = vmatpush2.bf16.msra.mxu0 0
        %4466 = vmatprep.mubr.bf16.mxu0 0
        %4467 = vmatmul.mubr.bf16.gmra.mxu0 %v4355
        %v4468 = vpop.f32.mrf.mxu0
        %v4469 = vadd.f32 %v4420, %v4468
        %v4470 = vpop.f32.mrf.mxu0
        %v4471 = vpop.f32.mrf.mxu0
        %v4472 = vadd.f32 %v4420, %v4471
        %v4473 = vpop.f32.mrf.mxu0
        %4474 = vmatprep.mubr.bf16.mxu0 0
        %4475 = vmatmul.mubr.bf16.gmra.mxu0 %v4358
        %v4476 = vpop.f32.mrf.mxu0
        %v4477 = vadd.f32 %v4420, %v4476
        %v4478 = vpop.f32.mrf.mxu0
        %v4479 = vpop.f32.mrf.mxu0
        %v4480 = vadd.f32 %v4420, %v4479
        %v4481 = vpop.f32.mrf.mxu0
        %4482 = vdwg.mxu0
        %v4485 = vunpack.c.l.s4 1966171168
        %v4486 = vunpack.c.0.s8 %v4485
        %v4487 = vlaneseq
        %v4488 = vshrl.u32 %v4487, 7
        %v4489 = vsub.s32 %v4486, %v4488
        %v4490 = vrot.slane %v4324, %v4489
        %v4491 = vcombine.high %v4490, %v4490
        %v4493 = vunpack.c.l.s4 1966171168
        %v4494 = vunpack.c.0.s8 %v4493
        %v4495 = vlaneseq
        %v4496 = vshrl.u32 %v4495, 7
        %v4497 = vsub.s32 %v4494, %v4496
        %v4498 = vrot.slane %v4490, %v4497
        %v4500 = vunpack.c.l.s4 1966171168
        %v4501 = vunpack.c.0.s8 %v4500
        %v4502 = vlaneseq
        %v4503 = vshrl.u32 %v4502, 7
        %v4504 = vsub.s32 %v4501, %v4503
        %v4505 = vrot.slane %v4491, %v4504
        %v4506 = vcombine.high %v4498, %v4498
        %v4507 = vcombine.high %v4505, %v4505
        %v4508 = vsel %vm1237, %v4498, 0
        %v4511 = vsel %vm1237, %v4395, 0
        %4513 = vmatprep.subr.mxu0 0.0
        %4514 = vmatpush1.xpose.msra.mxu0 0.0
        %4515 = vmatprep.subr.mxu0 0.0
        %4516 = vmatpush1.xpose.msra.mxu0 0.0
        %4517 = vmatprep.subr.mxu0 0.0
        %4518 = vmatpush1.xpose.msra.mxu0 0.0
        %4519 = vmatprep.subr.mxu0 0.0
        %4520 = vmatpush1.xpose.msra.mxu0 0.0
        %4521 = vmatprep.subr.mxu0 0.0
        %4522 = vmatpush1.xpose.msra.mxu0 0.0
        %4523 = vmatprep.subr.mxu0 0.0
        %4524 = vmatpush1.xpose.msra.mxu0 0.0
        %4525 = vmatprep.subr.mxu0 0.0
        %4526 = vmatpush1.xpose.msra.mxu0 0.0
        %4527 = vmatprep.subr.mxu0 0.0
        %4528 = vmatpush1.xpose.msra.mxu0 0.0
        %4529 = vmatprep.subr.mxu0 0.0
        %4530 = vmatpush1.xpose.msra.mxu0 0.0
        %4531 = vmatprep.subr.mxu0 0.0
        %4532 = vmatpush1.xpose.msra.mxu0 0.0
        %4533 = vmatprep.subr.mxu0 0.0
        %4534 = vmatpush1.xpose.msra.mxu0 0.0
        %4535 = vmatprep.subr.mxu0 0.0
        %4536 = vmatpush1.xpose.msra.mxu0 0.0
        %4537 = vmatprep.subr.mxu0 0.0
        %4538 = vmatpush1.xpose.msra.mxu0 0.0
        %4539 = vmatprep.subr.mxu0 0.0
        %4540 = vmatpush1.xpose.msra.mxu0 0.0
        %4541 = vmatprep.subr.mxu0 0.0
        %4542 = vmatpush1.xpose.msra.mxu0 0.0
        %4543 = vmatprep.subr.mxu0 0.0
        %4544 = vmatpush1.xpose.msra.mxu0 %v4511
        %4545 = vmatprep.subr.mxu0 0.0
        %4546 = vmatpush2.xpose.msra.mxu0 0.0
        %4547 = vmatprep.subr.mxu0 0.0
        %4548 = vmatpush2.xpose.msra.mxu0 0.0
        %4549 = vmatprep.subr.mxu0 0.0
        %4550 = vmatpush2.xpose.msra.mxu0 0.0
        %4551 = vmatprep.subr.mxu0 0.0
        %4552 = vmatpush2.xpose.msra.mxu0 0.0
        %4553 = vmatprep.subr.mxu0 0.0
        %4554 = vmatpush2.xpose.msra.mxu0 0.0
        %4555 = vmatprep.subr.mxu0 0.0
        %4556 = vmatpush2.xpose.msra.mxu0 0.0
        %4557 = vmatprep.subr.mxu0 0.0
        %4558 = vmatpush2.xpose.msra.mxu0 0.0
        %4559 = vmatprep.subr.mxu0 0.0
        %4560 = vmatpush2.xpose.msra.mxu0 0.0
        %4561 = vmatprep.subr.mxu0 0.0
        %4562 = vmatpush2.xpose.msra.mxu0 0.0
        %4563 = vmatprep.subr.mxu0 0.0
        %4564 = vmatpush2.xpose.msra.mxu0 0.0
        %4565 = vmatprep.subr.mxu0 0.0
        %4566 = vmatpush2.xpose.msra.mxu0 0.0
        %4567 = vmatprep.subr.mxu0 0.0
        %4568 = vmatpush2.xpose.msra.mxu0 0.0
        %4569 = vmatprep.subr.mxu0 0.0
        %4570 = vmatpush2.xpose.msra.mxu0 0.0
        %4571 = vmatprep.subr.mxu0 0.0
        %4572 = vmatpush2.xpose.msra.mxu0 0.0
        %4573 = vmatprep.subr.mxu0 0.0
        %4574 = vmatpush2.xpose.msra.mxu0 0.0
        %4575 = vmatprep.subr.mxu0 0.0
        %4576 = vmatpush2.xpose.msra.mxu0 0.0
        %4577 = vmatprep.mubr.f32.mxu0 0.0
        %4578 = vmatmul.mubr.f32.gmra.mxu0 %v4508
        %v4579 = vpop.f32.mrf.mxu0
        %v4580 = vadd.f32 0.0, %v4579
        %v4581 = vpop.f32.mrf.mxu0
        %4582 = vdwg.mxu0
        %v4583 = vsel %vm1237, %v4505, 0
        %v4586 = vsel %vm1237, %v4398, 0
        %4588 = vmatprep.subr.mxu0 0.0
        %4589 = vmatpush1.xpose.msra.mxu0 0.0
        %4590 = vmatprep.subr.mxu0 0.0
        %4591 = vmatpush1.xpose.msra.mxu0 0.0
        %4592 = vmatprep.subr.mxu0 0.0
        %4593 = vmatpush1.xpose.msra.mxu0 0.0
        %4594 = vmatprep.subr.mxu0 0.0
        %4595 = vmatpush1.xpose.msra.mxu0 0.0
        %4596 = vmatprep.subr.mxu0 0.0
        %4597 = vmatpush1.xpose.msra.mxu0 0.0
        %4598 = vmatprep.subr.mxu0 0.0
        %4599 = vmatpush1.xpose.msra.mxu0 0.0
        %4600 = vmatprep.subr.mxu0 0.0
        %4601 = vmatpush1.xpose.msra.mxu0 0.0
        %4602 = vmatprep.subr.mxu0 0.0
        %4603 = vmatpush1.xpose.msra.mxu0 0.0
        %4604 = vmatprep.subr.mxu0 0.0
        %4605 = vmatpush1.xpose.msra.mxu0 0.0
        %4606 = vmatprep.subr.mxu0 0.0
        %4607 = vmatpush1.xpose.msra.mxu0 0.0
        %4608 = vmatprep.subr.mxu0 0.0
        %4609 = vmatpush1.xpose.msra.mxu0 0.0
        %4610 = vmatprep.subr.mxu0 0.0
        %4611 = vmatpush1.xpose.msra.mxu0 0.0
        %4612 = vmatprep.subr.mxu0 0.0
        %4613 = vmatpush1.xpose.msra.mxu0 0.0
        %4614 = vmatprep.subr.mxu0 0.0
        %4615 = vmatpush1.xpose.msra.mxu0 0.0
        %4616 = vmatprep.subr.mxu0 0.0
        %4617 = vmatpush1.xpose.msra.mxu0 0.0
        %4618 = vmatprep.subr.mxu0 0.0
        %4619 = vmatpush1.xpose.msra.mxu0 %v4586
        %4620 = vmatprep.subr.mxu0 0.0
        %4621 = vmatpush2.xpose.msra.mxu0 0.0
        %4622 = vmatprep.subr.mxu0 0.0
        %4623 = vmatpush2.xpose.msra.mxu0 0.0
        %4624 = vmatprep.subr.mxu0 0.0
        %4625 = vmatpush2.xpose.msra.mxu0 0.0
        %4626 = vmatprep.subr.mxu0 0.0
        %4627 = vmatpush2.xpose.msra.mxu0 0.0
        %4628 = vmatprep.subr.mxu0 0.0
        %4629 = vmatpush2.xpose.msra.mxu0 0.0
        %4630 = vmatprep.subr.mxu0 0.0
        %4631 = vmatpush2.xpose.msra.mxu0 0.0
        %4632 = vmatprep.subr.mxu0 0.0
        %4633 = vmatpush2.xpose.msra.mxu0 0.0
        %4634 = vmatprep.subr.mxu0 0.0
        %4635 = vmatpush2.xpose.msra.mxu0 0.0
        %4636 = vmatprep.subr.mxu0 0.0
        %4637 = vmatpush2.xpose.msra.mxu0 0.0
        %4638 = vmatprep.subr.mxu0 0.0
        %4639 = vmatpush2.xpose.msra.mxu0 0.0
        %4640 = vmatprep.subr.mxu0 0.0
        %4641 = vmatpush2.xpose.msra.mxu0 0.0
        %4642 = vmatprep.subr.mxu0 0.0
        %4643 = vmatpush2.xpose.msra.mxu0 0.0
        %4644 = vmatprep.subr.mxu0 0.0
        %4645 = vmatpush2.xpose.msra.mxu0 0.0
        %4646 = vmatprep.subr.mxu0 0.0
        %4647 = vmatpush2.xpose.msra.mxu0 0.0
        %4648 = vmatprep.subr.mxu0 0.0
        %4649 = vmatpush2.xpose.msra.mxu0 0.0
        %4650 = vmatprep.subr.mxu0 0.0
        %4651 = vmatpush2.xpose.msra.mxu0 0.0
        %4652 = vmatprep.mubr.f32.mxu0 0.0
        %4653 = vmatmul.mubr.f32.gmra.mxu0 %v4583
        %v4654 = vpop.f32.mrf.mxu0
        %v4655 = vadd.f32 0.0, %v4654
        %v4656 = vpop.f32.mrf.mxu0
        %4657 = vdwg.mxu0
        %v4658 = vsel %vm1237, %v4506, 0
        %v4661 = vsel %vm1237, %v4403, 0
        %4663 = vmatprep.subr.mxu0 0.0
        %4664 = vmatpush1.xpose.msra.mxu0 0.0
        %4665 = vmatprep.subr.mxu0 0.0
        %4666 = vmatpush1.xpose.msra.mxu0 0.0
        %4667 = vmatprep.subr.mxu0 0.0
        %4668 = vmatpush1.xpose.msra.mxu0 0.0
        %4669 = vmatprep.subr.mxu0 0.0
        %4670 = vmatpush1.xpose.msra.mxu0 0.0
        %4671 = vmatprep.subr.mxu0 0.0
        %4672 = vmatpush1.xpose.msra.mxu0 0.0
        %4673 = vmatprep.subr.mxu0 0.0
        %4674 = vmatpush1.xpose.msra.mxu0 0.0
        %4675 = vmatprep.subr.mxu0 0.0
        %4676 = vmatpush1.xpose.msra.mxu0 0.0
        %4677 = vmatprep.subr.mxu0 0.0
        %4678 = vmatpush1.xpose.msra.mxu0 0.0
        %4679 = vmatprep.subr.mxu0 0.0
        %4680 = vmatpush1.xpose.msra.mxu0 0.0
        %4681 = vmatprep.subr.mxu0 0.0
        %4682 = vmatpush1.xpose.msra.mxu0 0.0
        %4683 = vmatprep.subr.mxu0 0.0
        %4684 = vmatpush1.xpose.msra.mxu0 0.0
        %4685 = vmatprep.subr.mxu0 0.0
        %4686 = vmatpush1.xpose.msra.mxu0 0.0
        %4687 = vmatprep.subr.mxu0 0.0
        %4688 = vmatpush1.xpose.msra.mxu0 0.0
        %4689 = vmatprep.subr.mxu0 0.0
        %4690 = vmatpush1.xpose.msra.mxu0 0.0
        %4691 = vmatprep.subr.mxu0 0.0
        %4692 = vmatpush1.xpose.msra.mxu0 0.0
        %4693 = vmatprep.subr.mxu0 0.0
        %4694 = vmatpush1.xpose.msra.mxu0 %v4661
        %4695 = vmatprep.subr.mxu0 0.0
        %4696 = vmatpush2.xpose.msra.mxu0 0.0
        %4697 = vmatprep.subr.mxu0 0.0
        %4698 = vmatpush2.xpose.msra.mxu0 0.0
        %4699 = vmatprep.subr.mxu0 0.0
        %4700 = vmatpush2.xpose.msra.mxu0 0.0
        %4701 = vmatprep.subr.mxu0 0.0
        %4702 = vmatpush2.xpose.msra.mxu0 0.0
        %4703 = vmatprep.subr.mxu0 0.0
        %4704 = vmatpush2.xpose.msra.mxu0 0.0
        %4705 = vmatprep.subr.mxu0 0.0
        %4706 = vmatpush2.xpose.msra.mxu0 0.0
        %4707 = vmatprep.subr.mxu0 0.0
        %4708 = vmatpush2.xpose.msra.mxu0 0.0
        %4709 = vmatprep.subr.mxu0 0.0
        %4710 = vmatpush2.xpose.msra.mxu0 0.0
        %4711 = vmatprep.subr.mxu0 0.0
        %4712 = vmatpush2.xpose.msra.mxu0 0.0
        %4713 = vmatprep.subr.mxu0 0.0
        %4714 = vmatpush2.xpose.msra.mxu0 0.0
        %4715 = vmatprep.subr.mxu0 0.0
        %4716 = vmatpush2.xpose.msra.mxu0 0.0
        %4717 = vmatprep.subr.mxu0 0.0
        %4718 = vmatpush2.xpose.msra.mxu0 0.0
        %4719 = vmatprep.subr.mxu0 0.0
        %4720 = vmatpush2.xpose.msra.mxu0 0.0
        %4721 = vmatprep.subr.mxu0 0.0
        %4722 = vmatpush2.xpose.msra.mxu0 0.0
        %4723 = vmatprep.subr.mxu0 0.0
        %4724 = vmatpush2.xpose.msra.mxu0 0.0
        %4725 = vmatprep.subr.mxu0 0.0
        %4726 = vmatpush2.xpose.msra.mxu0 0.0
        %4727 = vmatprep.mubr.f32.mxu0 0.0
        %4728 = vmatmul.mubr.f32.gmra.mxu0 %v4658
        %v4729 = vpop.f32.mrf.mxu0
        %v4730 = vadd.f32 0.0, %v4729
        %v4731 = vpop.f32.mrf.mxu0
        %4732 = vdwg.mxu0
        %v4733 = vsel %vm1237, %v4507, 0
        %v4736 = vsel %vm1237, %v4406, 0
        %4738 = vmatprep.subr.mxu0 0.0
        %4739 = vmatpush1.xpose.msra.mxu0 0.0
        %4740 = vmatprep.subr.mxu0 0.0
        %4741 = vmatpush1.xpose.msra.mxu0 0.0
        %4742 = vmatprep.subr.mxu0 0.0
        %4743 = vmatpush1.xpose.msra.mxu0 0.0
        %4744 = vmatprep.subr.mxu0 0.0
        %4745 = vmatpush1.xpose.msra.mxu0 0.0
        %4746 = vmatprep.subr.mxu0 0.0
        %4747 = vmatpush1.xpose.msra.mxu0 0.0
        %4748 = vmatprep.subr.mxu0 0.0
        %4749 = vmatpush1.xpose.msra.mxu0 0.0
        %4750 = vmatprep.subr.mxu0 0.0
        %4751 = vmatpush1.xpose.msra.mxu0 0.0
        %4752 = vmatprep.subr.mxu0 0.0
        %4753 = vmatpush1.xpose.msra.mxu0 0.0
        %4754 = vmatprep.subr.mxu0 0.0
        %4755 = vmatpush1.xpose.msra.mxu0 0.0
        %4756 = vmatprep.subr.mxu0 0.0
        %4757 = vmatpush1.xpose.msra.mxu0 0.0
        %4758 = vmatprep.subr.mxu0 0.0
        %4759 = vmatpush1.xpose.msra.mxu0 0.0
        %4760 = vmatprep.subr.mxu0 0.0
        %4761 = vmatpush1.xpose.msra.mxu0 0.0
        %4762 = vmatprep.subr.mxu0 0.0
        %4763 = vmatpush1.xpose.msra.mxu0 0.0
        %4764 = vmatprep.subr.mxu0 0.0
        %4765 = vmatpush1.xpose.msra.mxu0 0.0
        %4766 = vmatprep.subr.mxu0 0.0
        %4767 = vmatpush1.xpose.msra.mxu0 0.0
        %4768 = vmatprep.subr.mxu0 0.0
        %4769 = vmatpush1.xpose.msra.mxu0 %v4736
        %4770 = vmatprep.subr.mxu0 0.0
        %4771 = vmatpush2.xpose.msra.mxu0 0.0
        %4772 = vmatprep.subr.mxu0 0.0
        %4773 = vmatpush2.xpose.msra.mxu0 0.0
        %4774 = vmatprep.subr.mxu0 0.0
        %4775 = vmatpush2.xpose.msra.mxu0 0.0
        %4776 = vmatprep.subr.mxu0 0.0
        %4777 = vmatpush2.xpose.msra.mxu0 0.0
        %4778 = vmatprep.subr.mxu0 0.0
        %4779 = vmatpush2.xpose.msra.mxu0 0.0
        %4780 = vmatprep.subr.mxu0 0.0
        %4781 = vmatpush2.xpose.msra.mxu0 0.0
        %4782 = vmatprep.subr.mxu0 0.0
        %4783 = vmatpush2.xpose.msra.mxu0 0.0
        %4784 = vmatprep.subr.mxu0 0.0
        %4785 = vmatpush2.xpose.msra.mxu0 0.0
        %4786 = vmatprep.subr.mxu0 0.0
        %4787 = vmatpush2.xpose.msra.mxu0 0.0
        %4788 = vmatprep.subr.mxu0 0.0
        %4789 = vmatpush2.xpose.msra.mxu0 0.0
        %4790 = vmatprep.subr.mxu0 0.0
        %4791 = vmatpush2.xpose.msra.mxu0 0.0
        %4792 = vmatprep.subr.mxu0 0.0
        %4793 = vmatpush2.xpose.msra.mxu0 0.0
        %4794 = vmatprep.subr.mxu0 0.0
        %4795 = vmatpush2.xpose.msra.mxu0 0.0
        %4796 = vmatprep.subr.mxu0 0.0
        %4797 = vmatpush2.xpose.msra.mxu0 0.0
        %4798 = vmatprep.subr.mxu0 0.0
        %4799 = vmatpush2.xpose.msra.mxu0 0.0
        %4800 = vmatprep.subr.mxu0 0.0
        %4801 = vmatpush2.xpose.msra.mxu0 0.0
        %4802 = vmatprep.mubr.f32.mxu0 0.0
        %4803 = vmatmul.mubr.f32.gmra.mxu0 %v4733
        %v4804 = vpop.f32.mrf.mxu0
        %v4805 = vadd.f32 0.0, %v4804
        %v4806 = vpop.f32.mrf.mxu0
        %4807 = vdwg.mxu0
        %v4808 = vmul.f32 %v4580, 0.35355338
        %v4809 = vmul.f32 %v4655, 0.35355338
        %v4810 = vmul.f32 %v4730, 0.35355338
        %v4811 = vmul.f32 %v4805, 0.35355338
        %v4812 = vadd.f32 %v4808, %v4256
        %v4813 = vadd.f32 %v4809, %v4257
        %v4814 = vadd.f32 %v4810, %v4258
        %v4815 = vadd.f32 %v4811, %v4259
        %vm4816 = vcmask 57344
        %v4817 = vsel %vm4816, %v4812, -inf
        %4818 = vmax.xlane.f32.xlu0 %v4817
        %v4819 = vpop.xlane.xlu0 %4818
        %v4820 = vsel %vm4816, %v4813, -inf
        %4821 = vmax.xlane.f32.xlu0 %v4820
        %v4822 = vpop.xlane.xlu0 %4821
        %v4823 = vsel %vm4816, %v4814, -inf
        %4824 = vmax.xlane.f32.xlu0 %v4823
        %v4825 = vpop.xlane.xlu0 %4824
        %v4826 = vsel %vm4816, %v4815, -inf
        %4827 = vmax.xlane.f32.xlu0 %v4826
        %v4828 = vpop.xlane.xlu0 %4827
        %v4829 = vsub.f32 %v4812, %v4819
        %v4830 = vsub.f32 %v4813, %v4822
        %v4831 = vsub.f32 %v4814, %v4825
        %v4832 = vsub.f32 %v4815, %v4828
        %v4833 = vmul.f32 %v4829, 1.442695
        %v4834 = vpow.pop %v4833
        %v4835 = vmul.f32 %v4830, 1.442695
        %v4836 = vpow.pop %v4835
        %v4837 = vmul.f32 %v4831, 1.442695
        %v4838 = vpow.pop %v4837
        %v4839 = vmul.f32 %v4832, 1.442695
        %v4840 = vpow.pop %v4839
        %v4841 = vsel %vm4816, %v4834, 0.0
        %4842 = vadd.xlane.f32.xlu0 %v4841
        %v4843 = vpop.xlane.xlu0 %4842
        %v4844 = vsel %vm4816, %v4836, 0.0
        %4845 = vadd.xlane.f32.xlu0 %v4844
        %v4846 = vpop.xlane.xlu0 %4845
        %v4847 = vsel %vm4816, %v4838, 0.0
        %4848 = vadd.xlane.f32.xlu0 %v4847
        %v4849 = vpop.xlane.xlu0 %4848
        %v4850 = vsel %vm4816, %v4840, 0.0
        %4851 = vadd.xlane.f32.xlu0 %v4850
        %v4852 = vpop.xlane.xlu0 %4851
        %v4853 = vrcp.pop %v4843
        %v4854 = vmul.f32 %v4834, %v4853
        %v4855 = vrcp.pop %v4846
        %v4856 = vmul.f32 %v4836, %v4855
        %v4857 = vrcp.pop %v4849
        %v4858 = vmul.f32 %v4838, %v4857
        %v4859 = vrcp.pop %v4852
        %v4860 = vmul.f32 %v4840, %v4859
        %v4862 = vsel %vm1237, %v4854, 0
        %4864 = vmatprep.subr.mxu0 0.0
        %4865 = vmatpush1.msra.mxu0 0.0
        %4866 = vmatprep.subr.mxu0 0.0
        %4867 = vmatpush1.msra.mxu0 0.0
        %4868 = vmatprep.subr.mxu0 0.0
        %4869 = vmatpush1.msra.mxu0 0.0
        %4870 = vmatprep.subr.mxu0 0.0
        %4871 = vmatpush1.msra.mxu0 0.0
        %4872 = vmatprep.subr.mxu0 0.0
        %4873 = vmatpush1.msra.mxu0 0.0
        %4874 = vmatprep.subr.mxu0 0.0
        %4875 = vmatpush1.msra.mxu0 0.0
        %4876 = vmatprep.subr.mxu0 0.0
        %4877 = vmatpush1.msra.mxu0 0.0
        %4878 = vmatprep.subr.mxu0 0.0
        %4879 = vmatpush1.msra.mxu0 0.0
        %4880 = vmatprep.subr.mxu0 0.0
        %4881 = vmatpush1.msra.mxu0 0.0
        %4882 = vmatprep.subr.mxu0 0.0
        %4883 = vmatpush1.msra.mxu0 0.0
        %4884 = vmatprep.subr.mxu0 0.0
        %4885 = vmatpush1.msra.mxu0 0.0
        %4886 = vmatprep.subr.mxu0 0.0
        %4887 = vmatpush1.msra.mxu0 0.0
        %4888 = vmatprep.subr.mxu0 0.0
        %4889 = vmatpush1.msra.mxu0 0.0
        %4890 = vmatprep.subr.mxu0 0.0
        %4891 = vmatpush1.msra.mxu0 0.0
        %4892 = vmatprep.subr.mxu0 0.0
        %4893 = vmatpush1.msra.mxu0 0.0
        %4894 = vmatprep.subr.mxu0 0.0
        %4895 = vmatpush1.msra.mxu0 %v4469
        %4896 = vmatprep.subr.mxu0 0.0
        %4897 = vmatpush2.msra.mxu0 0.0
        %4898 = vmatprep.subr.mxu0 0.0
        %4899 = vmatpush2.msra.mxu0 0.0
        %4900 = vmatprep.subr.mxu0 0.0
        %4901 = vmatpush2.msra.mxu0 0.0
        %4902 = vmatprep.subr.mxu0 0.0
        %4903 = vmatpush2.msra.mxu0 0.0
        %4904 = vmatprep.subr.mxu0 0.0
        %4905 = vmatpush2.msra.mxu0 0.0
        %4906 = vmatprep.subr.mxu0 0.0
        %4907 = vmatpush2.msra.mxu0 0.0
        %4908 = vmatprep.subr.mxu0 0.0
        %4909 = vmatpush2.msra.mxu0 0.0
        %4910 = vmatprep.subr.mxu0 0.0
        %4911 = vmatpush2.msra.mxu0 0.0
        %4912 = vmatprep.subr.mxu0 0.0
        %4913 = vmatpush2.msra.mxu0 0.0
        %4914 = vmatprep.subr.mxu0 0.0
        %4915 = vmatpush2.msra.mxu0 0.0
        %4916 = vmatprep.subr.mxu0 0.0
        %4917 = vmatpush2.msra.mxu0 0.0
        %4918 = vmatprep.subr.mxu0 0.0
        %4919 = vmatpush2.msra.mxu0 0.0
        %4920 = vmatprep.subr.mxu0 0.0
        %4921 = vmatpush2.msra.mxu0 0.0
        %4922 = vmatprep.subr.mxu0 0.0
        %4923 = vmatpush2.msra.mxu0 0.0
        %4924 = vmatprep.subr.mxu0 0.0
        %4925 = vmatpush2.msra.mxu0 0.0
        %4926 = vmatprep.subr.mxu0 0.0
        %4927 = vmatpush2.msra.mxu0 0.0
        %4928 = vmatprep.mubr.f32.mxu0 0.0
        %4929 = vmatmul.mubr.f32.gmra.mxu0 %v4862
        %v4930 = vpop.f32.mrf.mxu0
        %v4931 = vadd.f32 0.0, %v4930
        %v4932 = vpop.f32.mrf.mxu0
        %4933 = vdwg.mxu0
        %v4935 = vsel %vm1237, %v4856, 0
        %4937 = vmatprep.subr.mxu0 0.0
        %4938 = vmatpush1.msra.mxu0 0.0
        %4939 = vmatprep.subr.mxu0 0.0
        %4940 = vmatpush1.msra.mxu0 0.0
        %4941 = vmatprep.subr.mxu0 0.0
        %4942 = vmatpush1.msra.mxu0 0.0
        %4943 = vmatprep.subr.mxu0 0.0
        %4944 = vmatpush1.msra.mxu0 0.0
        %4945 = vmatprep.subr.mxu0 0.0
        %4946 = vmatpush1.msra.mxu0 0.0
        %4947 = vmatprep.subr.mxu0 0.0
        %4948 = vmatpush1.msra.mxu0 0.0
        %4949 = vmatprep.subr.mxu0 0.0
        %4950 = vmatpush1.msra.mxu0 0.0
        %4951 = vmatprep.subr.mxu0 0.0
        %4952 = vmatpush1.msra.mxu0 0.0
        %4953 = vmatprep.subr.mxu0 0.0
        %4954 = vmatpush1.msra.mxu0 0.0
        %4955 = vmatprep.subr.mxu0 0.0
        %4956 = vmatpush1.msra.mxu0 0.0
        %4957 = vmatprep.subr.mxu0 0.0
        %4958 = vmatpush1.msra.mxu0 0.0
        %4959 = vmatprep.subr.mxu0 0.0
        %4960 = vmatpush1.msra.mxu0 0.0
        %4961 = vmatprep.subr.mxu0 0.0
        %4962 = vmatpush1.msra.mxu0 0.0
        %4963 = vmatprep.subr.mxu0 0.0
        %4964 = vmatpush1.msra.mxu0 0.0
        %4965 = vmatprep.subr.mxu0 0.0
        %4966 = vmatpush1.msra.mxu0 0.0
        %4967 = vmatprep.subr.mxu0 0.0
        %4968 = vmatpush1.msra.mxu0 %v4472
        %4969 = vmatprep.subr.mxu0 0.0
        %4970 = vmatpush2.msra.mxu0 0.0
        %4971 = vmatprep.subr.mxu0 0.0
        %4972 = vmatpush2.msra.mxu0 0.0
        %4973 = vmatprep.subr.mxu0 0.0
        %4974 = vmatpush2.msra.mxu0 0.0
        %4975 = vmatprep.subr.mxu0 0.0
        %4976 = vmatpush2.msra.mxu0 0.0
        %4977 = vmatprep.subr.mxu0 0.0
        %4978 = vmatpush2.msra.mxu0 0.0
        %4979 = vmatprep.subr.mxu0 0.0
        %4980 = vmatpush2.msra.mxu0 0.0
        %4981 = vmatprep.subr.mxu0 0.0
        %4982 = vmatpush2.msra.mxu0 0.0
        %4983 = vmatprep.subr.mxu0 0.0
        %4984 = vmatpush2.msra.mxu0 0.0
        %4985 = vmatprep.subr.mxu0 0.0
        %4986 = vmatpush2.msra.mxu0 0.0
        %4987 = vmatprep.subr.mxu0 0.0
        %4988 = vmatpush2.msra.mxu0 0.0
        %4989 = vmatprep.subr.mxu0 0.0
        %4990 = vmatpush2.msra.mxu0 0.0
        %4991 = vmatprep.subr.mxu0 0.0
        %4992 = vmatpush2.msra.mxu0 0.0
        %4993 = vmatprep.subr.mxu0 0.0
        %4994 = vmatpush2.msra.mxu0 0.0
        %4995 = vmatprep.subr.mxu0 0.0
        %4996 = vmatpush2.msra.mxu0 0.0
        %4997 = vmatprep.subr.mxu0 0.0
        %4998 = vmatpush2.msra.mxu0 0.0
        %4999 = vmatprep.subr.mxu0 0.0
        %5000 = vmatpush2.msra.mxu0 0.0
        %5001 = vmatprep.mubr.f32.mxu0 0.0
        %5002 = vmatmul.mubr.f32.gmra.mxu0 %v4935
        %v5003 = vpop.f32.mrf.mxu0
        %v5004 = vadd.f32 0.0, %v5003
        %v5005 = vpop.f32.mrf.mxu0
        %5006 = vdwg.mxu0
        %v5008 = vsel %vm1237, %v4858, 0
        %5010 = vmatprep.subr.mxu0 0.0
        %5011 = vmatpush1.msra.mxu0 0.0
        %5012 = vmatprep.subr.mxu0 0.0
        %5013 = vmatpush1.msra.mxu0 0.0
        %5014 = vmatprep.subr.mxu0 0.0
        %5015 = vmatpush1.msra.mxu0 0.0
        %5016 = vmatprep.subr.mxu0 0.0
        %5017 = vmatpush1.msra.mxu0 0.0
        %5018 = vmatprep.subr.mxu0 0.0
        %5019 = vmatpush1.msra.mxu0 0.0
        %5020 = vmatprep.subr.mxu0 0.0
        %5021 = vmatpush1.msra.mxu0 0.0
        %5022 = vmatprep.subr.mxu0 0.0
        %5023 = vmatpush1.msra.mxu0 0.0
        %5024 = vmatprep.subr.mxu0 0.0
        %5025 = vmatpush1.msra.mxu0 0.0
        %5026 = vmatprep.subr.mxu0 0.0
        %5027 = vmatpush1.msra.mxu0 0.0
        %5028 = vmatprep.subr.mxu0 0.0
        %5029 = vmatpush1.msra.mxu0 0.0
        %5030 = vmatprep.subr.mxu0 0.0
        %5031 = vmatpush1.msra.mxu0 0.0
        %5032 = vmatprep.subr.mxu0 0.0
        %5033 = vmatpush1.msra.mxu0 0.0
        %5034 = vmatprep.subr.mxu0 0.0
        %5035 = vmatpush1.msra.mxu0 0.0
        %5036 = vmatprep.subr.mxu0 0.0
        %5037 = vmatpush1.msra.mxu0 0.0
        %5038 = vmatprep.subr.mxu0 0.0
        %5039 = vmatpush1.msra.mxu0 0.0
        %5040 = vmatprep.subr.mxu0 0.0
        %5041 = vmatpush1.msra.mxu0 %v4477
        %5042 = vmatprep.subr.mxu0 0.0
        %5043 = vmatpush2.msra.mxu0 0.0
        %5044 = vmatprep.subr.mxu0 0.0
        %5045 = vmatpush2.msra.mxu0 0.0
        %5046 = vmatprep.subr.mxu0 0.0
        %5047 = vmatpush2.msra.mxu0 0.0
        %5048 = vmatprep.subr.mxu0 0.0
        %5049 = vmatpush2.msra.mxu0 0.0
        %5050 = vmatprep.subr.mxu0 0.0
        %5051 = vmatpush2.msra.mxu0 0.0
        %5052 = vmatprep.subr.mxu0 0.0
        %5053 = vmatpush2.msra.mxu0 0.0
        %5054 = vmatprep.subr.mxu0 0.0
        %5055 = vmatpush2.msra.mxu0 0.0
        %5056 = vmatprep.subr.mxu0 0.0
        %5057 = vmatpush2.msra.mxu0 0.0
        %5058 = vmatprep.subr.mxu0 0.0
        %5059 = vmatpush2.msra.mxu0 0.0
        %5060 = vmatprep.subr.mxu0 0.0
        %5061 = vmatpush2.msra.mxu0 0.0
        %5062 = vmatprep.subr.mxu0 0.0
        %5063 = vmatpush2.msra.mxu0 0.0
        %5064 = vmatprep.subr.mxu0 0.0
        %5065 = vmatpush2.msra.mxu0 0.0
        %5066 = vmatprep.subr.mxu0 0.0
        %5067 = vmatpush2.msra.mxu0 0.0
        %5068 = vmatprep.subr.mxu0 0.0
        %5069 = vmatpush2.msra.mxu0 0.0
        %5070 = vmatprep.subr.mxu0 0.0
        %5071 = vmatpush2.msra.mxu0 0.0
        %5072 = vmatprep.subr.mxu0 0.0
        %5073 = vmatpush2.msra.mxu0 0.0
        %5074 = vmatprep.mubr.f32.mxu0 0.0
        %5075 = vmatmul.mubr.f32.gmra.mxu0 %v5008
        %v5076 = vpop.f32.mrf.mxu0
        %v5077 = vadd.f32 0.0, %v5076
        %v5078 = vpop.f32.mrf.mxu0
        %5079 = vdwg.mxu0
        %v5081 = vsel %vm1237, %v4860, 0
        %5083 = vmatprep.subr.mxu0 0.0
        %5084 = vmatpush1.msra.mxu0 0.0
        %5085 = vmatprep.subr.mxu0 0.0
        %5086 = vmatpush1.msra.mxu0 0.0
        %5087 = vmatprep.subr.mxu0 0.0
        %5088 = vmatpush1.msra.mxu0 0.0
        %5089 = vmatprep.subr.mxu0 0.0
        %5090 = vmatpush1.msra.mxu0 0.0
        %5091 = vmatprep.subr.mxu0 0.0
        %5092 = vmatpush1.msra.mxu0 0.0
        %5093 = vmatprep.subr.mxu0 0.0
        %5094 = vmatpush1.msra.mxu0 0.0
        %5095 = vmatprep.subr.mxu0 0.0
        %5096 = vmatpush1.msra.mxu0 0.0
        %5097 = vmatprep.subr.mxu0 0.0
        %5098 = vmatpush1.msra.mxu0 0.0
        %5099 = vmatprep.subr.mxu0 0.0
        %5100 = vmatpush1.msra.mxu0 0.0
        %5101 = vmatprep.subr.mxu0 0.0
        %5102 = vmatpush1.msra.mxu0 0.0
        %5103 = vmatprep.subr.mxu0 0.0
        %5104 = vmatpush1.msra.mxu0 0.0
        %5105 = vmatprep.subr.mxu0 0.0
        %5106 = vmatpush1.msra.mxu0 0.0
        %5107 = vmatprep.subr.mxu0 0.0
        %5108 = vmatpush1.msra.mxu0 0.0
        %5109 = vmatprep.subr.mxu0 0.0
        %5110 = vmatpush1.msra.mxu0 0.0
        %5111 = vmatprep.subr.mxu0 0.0
        %5112 = vmatpush1.msra.mxu0 0.0
        %5113 = vmatprep.subr.mxu0 0.0
        %5114 = vmatpush1.msra.mxu0 %v4480
        %5115 = vmatprep.subr.mxu0 0.0
        %5116 = vmatpush2.msra.mxu0 0.0
        %5117 = vmatprep.subr.mxu0 0.0
        %5118 = vmatpush2.msra.mxu0 0.0
        %5119 = vmatprep.subr.mxu0 0.0
        %5120 = vmatpush2.msra.mxu0 0.0
        %5121 = vmatprep.subr.mxu0 0.0
        %5122 = vmatpush2.msra.mxu0 0.0
        %5123 = vmatprep.subr.mxu0 0.0
        %5124 = vmatpush2.msra.mxu0 0.0
        %5125 = vmatprep.subr.mxu0 0.0
        %5126 = vmatpush2.msra.mxu0 0.0
        %5127 = vmatprep.subr.mxu0 0.0
        %5128 = vmatpush2.msra.mxu0 0.0
        %5129 = vmatprep.subr.mxu0 0.0
        %5130 = vmatpush2.msra.mxu0 0.0
        %5131 = vmatprep.subr.mxu0 0.0
        %5132 = vmatpush2.msra.mxu0 0.0
        %5133 = vmatprep.subr.mxu0 0.0
        %5134 = vmatpush2.msra.mxu0 0.0
        %5135 = vmatprep.subr.mxu0 0.0
        %5136 = vmatpush2.msra.mxu0 0.0
        %5137 = vmatprep.subr.mxu0 0.0
        %5138 = vmatpush2.msra.mxu0 0.0
        %5139 = vmatprep.subr.mxu0 0.0
        %5140 = vmatpush2.msra.mxu0 0.0
        %5141 = vmatprep.subr.mxu0 0.0
        %5142 = vmatpush2.msra.mxu0 0.0
        %5143 = vmatprep.subr.mxu0 0.0
        %5144 = vmatpush2.msra.mxu0 0.0
        %5145 = vmatprep.subr.mxu0 0.0
        %5146 = vmatpush2.msra.mxu0 0.0
        %5147 = vmatprep.mubr.f32.mxu0 0.0
        %5148 = vmatmul.mubr.f32.gmra.mxu0 %v5081
        %v5149 = vpop.f32.mrf.mxu0
        %v5150 = vadd.f32 0.0, %v5149
        %v5151 = vpop.f32.mrf.mxu0
        %5152 = vdwg.mxu0
        %v5153 = vlaneseq
        %v5154 = vshrl.u32 %v5153, 7
        %v5155 = vsub.s32 0, %v5154
        %v5156 = vrot.slane %v4498, %v5155
        %5157 = vrot.lane.b32.xlu0 %v5156, 120
        %v5158 = vpop.permute.xlu0 %5157
        %5159 = vrot.lane.b32.xlu0 %v4395, 120
        %v5160 = vpop.permute.xlu0 %5159
        %v5161 = vsel %vm1237, %v5158, 0
        %v5163 = vsel %vm1237, %v5160, 0
        %5165 = vmatprep.subr.mxu0 0.0
        %5166 = vmatpush1.xpose.msra.mxu0 0.0
        %5167 = vmatprep.subr.mxu0 0.0
        %5168 = vmatpush1.xpose.msra.mxu0 0.0
        %5169 = vmatprep.subr.mxu0 0.0
        %5170 = vmatpush1.xpose.msra.mxu0 0.0
        %5171 = vmatprep.subr.mxu0 0.0
        %5172 = vmatpush1.xpose.msra.mxu0 0.0
        %5173 = vmatprep.subr.mxu0 0.0
        %5174 = vmatpush1.xpose.msra.mxu0 0.0
        %5175 = vmatprep.subr.mxu0 0.0
        %5176 = vmatpush1.xpose.msra.mxu0 0.0
        %5177 = vmatprep.subr.mxu0 0.0
        %5178 = vmatpush1.xpose.msra.mxu0 0.0
        %5179 = vmatprep.subr.mxu0 0.0
        %5180 = vmatpush1.xpose.msra.mxu0 0.0
        %5181 = vmatprep.subr.mxu0 0.0
        %5182 = vmatpush1.xpose.msra.mxu0 0.0
        %5183 = vmatprep.subr.mxu0 0.0
        %5184 = vmatpush1.xpose.msra.mxu0 0.0
        %5185 = vmatprep.subr.mxu0 0.0
        %5186 = vmatpush1.xpose.msra.mxu0 0.0
        %5187 = vmatprep.subr.mxu0 0.0
        %5188 = vmatpush1.xpose.msra.mxu0 0.0
        %5189 = vmatprep.subr.mxu0 0.0
        %5190 = vmatpush1.xpose.msra.mxu0 0.0
        %5191 = vmatprep.subr.mxu0 0.0
        %5192 = vmatpush1.xpose.msra.mxu0 0.0
        %5193 = vmatprep.subr.mxu0 0.0
        %5194 = vmatpush1.xpose.msra.mxu0 0.0
        %5195 = vmatprep.subr.mxu0 0.0
        %5196 = vmatpush1.xpose.msra.mxu0 %v5163
        %5197 = vmatprep.subr.mxu0 0.0
        %5198 = vmatpush2.xpose.msra.mxu0 0.0
        %5199 = vmatprep.subr.mxu0 0.0
        %5200 = vmatpush2.xpose.msra.mxu0 0.0
        %5201 = vmatprep.subr.mxu0 0.0
        %5202 = vmatpush2.xpose.msra.mxu0 0.0
        %5203 = vmatprep.subr.mxu0 0.0
        %5204 = vmatpush2.xpose.msra.mxu0 0.0
        %5205 = vmatprep.subr.mxu0 0.0
        %5206 = vmatpush2.xpose.msra.mxu0 0.0
        %5207 = vmatprep.subr.mxu0 0.0
        %5208 = vmatpush2.xpose.msra.mxu0 0.0
        %5209 = vmatprep.subr.mxu0 0.0
        %5210 = vmatpush2.xpose.msra.mxu0 0.0
        %5211 = vmatprep.subr.mxu0 0.0
        %5212 = vmatpush2.xpose.msra.mxu0 0.0
        %5213 = vmatprep.subr.mxu0 0.0
        %5214 = vmatpush2.xpose.msra.mxu0 0.0
        %5215 = vmatprep.subr.mxu0 0.0
        %5216 = vmatpush2.xpose.msra.mxu0 0.0
        %5217 = vmatprep.subr.mxu0 0.0
        %5218 = vmatpush2.xpose.msra.mxu0 0.0
        %5219 = vmatprep.subr.mxu0 0.0
        %5220 = vmatpush2.xpose.msra.mxu0 0.0
        %5221 = vmatprep.subr.mxu0 0.0
        %5222 = vmatpush2.xpose.msra.mxu0 0.0
        %5223 = vmatprep.subr.mxu0 0.0
        %5224 = vmatpush2.xpose.msra.mxu0 0.0
        %5225 = vmatprep.subr.mxu0 0.0
        %5226 = vmatpush2.xpose.msra.mxu0 0.0
        %5227 = vmatprep.subr.mxu0 0.0
        %5228 = vmatpush2.xpose.msra.mxu0 0.0
        %5229 = vmatprep.mubr.f32.mxu0 0.0
        %5230 = vmatmul.mubr.f32.gmra.mxu0 %v5161
        %v5231 = vpop.f32.mrf.mxu0
        %v5232 = vadd.f32 0.0, %v5231
        %v5233 = vpop.f32.mrf.mxu0
        %5234 = vdwg.mxu0
        %v5235 = vlaneseq
        %v5236 = vshrl.u32 %v5235, 7
        %v5237 = vsub.s32 0, %v5236
        %v5238 = vrot.slane %v4505, %v5237
        %5239 = vrot.lane.b32.xlu0 %v5238, 120
        %v5240 = vpop.permute.xlu0 %5239
        %5241 = vrot.lane.b32.xlu0 %v4398, 120
        %v5242 = vpop.permute.xlu0 %5241
        %v5243 = vsel %vm1237, %v5240, 0
        %v5245 = vsel %vm1237, %v5242, 0
        %5247 = vmatprep.subr.mxu0 0.0
        %5248 = vmatpush1.xpose.msra.mxu0 0.0
        %5249 = vmatprep.subr.mxu0 0.0
        %5250 = vmatpush1.xpose.msra.mxu0 0.0
        %5251 = vmatprep.subr.mxu0 0.0
        %5252 = vmatpush1.xpose.msra.mxu0 0.0
        %5253 = vmatprep.subr.mxu0 0.0
        %5254 = vmatpush1.xpose.msra.mxu0 0.0
        %5255 = vmatprep.subr.mxu0 0.0
        %5256 = vmatpush1.xpose.msra.mxu0 0.0
        %5257 = vmatprep.subr.mxu0 0.0
        %5258 = vmatpush1.xpose.msra.mxu0 0.0
        %5259 = vmatprep.subr.mxu0 0.0
        %5260 = vmatpush1.xpose.msra.mxu0 0.0
        %5261 = vmatprep.subr.mxu0 0.0
        %5262 = vmatpush1.xpose.msra.mxu0 0.0
        %5263 = vmatprep.subr.mxu0 0.0
        %5264 = vmatpush1.xpose.msra.mxu0 0.0
        %5265 = vmatprep.subr.mxu0 0.0
        %5266 = vmatpush1.xpose.msra.mxu0 0.0
        %5267 = vmatprep.subr.mxu0 0.0
        %5268 = vmatpush1.xpose.msra.mxu0 0.0
        %5269 = vmatprep.subr.mxu0 0.0
        %5270 = vmatpush1.xpose.msra.mxu0 0.0
        %5271 = vmatprep.subr.mxu0 0.0
        %5272 = vmatpush1.xpose.msra.mxu0 0.0
        %5273 = vmatprep.subr.mxu0 0.0
        %5274 = vmatpush1.xpose.msra.mxu0 0.0
        %5275 = vmatprep.subr.mxu0 0.0
        %5276 = vmatpush1.xpose.msra.mxu0 0.0
        %5277 = vmatprep.subr.mxu0 0.0
        %5278 = vmatpush1.xpose.msra.mxu0 %v5245
        %5279 = vmatprep.subr.mxu0 0.0
        %5280 = vmatpush2.xpose.msra.mxu0 0.0
        %5281 = vmatprep.subr.mxu0 0.0
        %5282 = vmatpush2.xpose.msra.mxu0 0.0
        %5283 = vmatprep.subr.mxu0 0.0
        %5284 = vmatpush2.xpose.msra.mxu0 0.0
        %5285 = vmatprep.subr.mxu0 0.0
        %5286 = vmatpush2.xpose.msra.mxu0 0.0
        %5287 = vmatprep.subr.mxu0 0.0
        %5288 = vmatpush2.xpose.msra.mxu0 0.0
        %5289 = vmatprep.subr.mxu0 0.0
        %5290 = vmatpush2.xpose.msra.mxu0 0.0
        %5291 = vmatprep.subr.mxu0 0.0
        %5292 = vmatpush2.xpose.msra.mxu0 0.0
        %5293 = vmatprep.subr.mxu0 0.0
        %5294 = vmatpush2.xpose.msra.mxu0 0.0
        %5295 = vmatprep.subr.mxu0 0.0
        %5296 = vmatpush2.xpose.msra.mxu0 0.0
        %5297 = vmatprep.subr.mxu0 0.0
        %5298 = vmatpush2.xpose.msra.mxu0 0.0
        %5299 = vmatprep.subr.mxu0 0.0
        %5300 = vmatpush2.xpose.msra.mxu0 0.0
        %5301 = vmatprep.subr.mxu0 0.0
        %5302 = vmatpush2.xpose.msra.mxu0 0.0
        %5303 = vmatprep.subr.mxu0 0.0
        %5304 = vmatpush2.xpose.msra.mxu0 0.0
        %5305 = vmatprep.subr.mxu0 0.0
        %5306 = vmatpush2.xpose.msra.mxu0 0.0
        %5307 = vmatprep.subr.mxu0 0.0
        %5308 = vmatpush2.xpose.msra.mxu0 0.0
        %5309 = vmatprep.subr.mxu0 0.0
        %5310 = vmatpush2.xpose.msra.mxu0 0.0
        %5311 = vmatprep.mubr.f32.mxu0 0.0
        %5312 = vmatmul.mubr.f32.gmra.mxu0 %v5243
        %v5313 = vpop.f32.mrf.mxu0
        %v5314 = vadd.f32 0.0, %v5313
        %v5315 = vpop.f32.mrf.mxu0
        %5316 = vdwg.mxu0
        %v5317 = vlaneseq
        %v5318 = vshrl.u32 %v5317, 7
        %v5319 = vsub.s32 0, %v5318
        %v5320 = vrot.slane %v4506, %v5319
        %5321 = vrot.lane.b32.xlu0 %v5320, 120
        %v5322 = vpop.permute.xlu0 %5321
        %5323 = vrot.lane.b32.xlu0 %v4403, 120
        %v5324 = vpop.permute.xlu0 %5323
        %v5325 = vsel %vm1237, %v5322, 0
        %v5327 = vsel %vm1237, %v5324, 0
        %5329 = vmatprep.subr.mxu0 0.0
        %5330 = vmatpush1.xpose.msra.mxu0 0.0
        %5331 = vmatprep.subr.mxu0 0.0
        %5332 = vmatpush1.xpose.msra.mxu0 0.0
        %5333 = vmatprep.subr.mxu0 0.0
        %5334 = vmatpush1.xpose.msra.mxu0 0.0
        %5335 = vmatprep.subr.mxu0 0.0
        %5336 = vmatpush1.xpose.msra.mxu0 0.0
        %5337 = vmatprep.subr.mxu0 0.0
        %5338 = vmatpush1.xpose.msra.mxu0 0.0
        %5339 = vmatprep.subr.mxu0 0.0
        %5340 = vmatpush1.xpose.msra.mxu0 0.0
        %5341 = vmatprep.subr.mxu0 0.0
        %5342 = vmatpush1.xpose.msra.mxu0 0.0
        %5343 = vmatprep.subr.mxu0 0.0
        %5344 = vmatpush1.xpose.msra.mxu0 0.0
        %5345 = vmatprep.subr.mxu0 0.0
        %5346 = vmatpush1.xpose.msra.mxu0 0.0
        %5347 = vmatprep.subr.mxu0 0.0
        %5348 = vmatpush1.xpose.msra.mxu0 0.0
        %5349 = vmatprep.subr.mxu0 0.0
        %5350 = vmatpush1.xpose.msra.mxu0 0.0
        %5351 = vmatprep.subr.mxu0 0.0
        %5352 = vmatpush1.xpose.msra.mxu0 0.0
        %5353 = vmatprep.subr.mxu0 0.0
        %5354 = vmatpush1.xpose.msra.mxu0 0.0
        %5355 = vmatprep.subr.mxu0 0.0
        %5356 = vmatpush1.xpose.msra.mxu0 0.0
        %5357 = vmatprep.subr.mxu0 0.0
        %5358 = vmatpush1.xpose.msra.mxu0 0.0
        %5359 = vmatprep.subr.mxu0 0.0
        %5360 = vmatpush1.xpose.msra.mxu0 %v5327
        %5361 = vmatprep.subr.mxu0 0.0
        %5362 = vmatpush2.xpose.msra.mxu0 0.0
        %5363 = vmatprep.subr.mxu0 0.0
        %5364 = vmatpush2.xpose.msra.mxu0 0.0
        %5365 = vmatprep.subr.mxu0 0.0
        %5366 = vmatpush2.xpose.msra.mxu0 0.0
        %5367 = vmatprep.subr.mxu0 0.0
        %5368 = vmatpush2.xpose.msra.mxu0 0.0
        %5369 = vmatprep.subr.mxu0 0.0
        %5370 = vmatpush2.xpose.msra.mxu0 0.0
        %5371 = vmatprep.subr.mxu0 0.0
        %5372 = vmatpush2.xpose.msra.mxu0 0.0
        %5373 = vmatprep.subr.mxu0 0.0
        %5374 = vmatpush2.xpose.msra.mxu0 0.0
        %5375 = vmatprep.subr.mxu0 0.0
        %5376 = vmatpush2.xpose.msra.mxu0 0.0
        %5377 = vmatprep.subr.mxu0 0.0
        %5378 = vmatpush2.xpose.msra.mxu0 0.0
        %5379 = vmatprep.subr.mxu0 0.0
        %5380 = vmatpush2.xpose.msra.mxu0 0.0
        %5381 = vmatprep.subr.mxu0 0.0
        %5382 = vmatpush2.xpose.msra.mxu0 0.0
        %5383 = vmatprep.subr.mxu0 0.0
        %5384 = vmatpush2.xpose.msra.mxu0 0.0
        %5385 = vmatprep.subr.mxu0 0.0
        %5386 = vmatpush2.xpose.msra.mxu0 0.0
        %5387 = vmatprep.subr.mxu0 0.0
        %5388 = vmatpush2.xpose.msra.mxu0 0.0
        %5389 = vmatprep.subr.mxu0 0.0
        %5390 = vmatpush2.xpose.msra.mxu0 0.0
        %5391 = vmatprep.subr.mxu0 0.0
        %5392 = vmatpush2.xpose.msra.mxu0 0.0
        %5393 = vmatprep.mubr.f32.mxu0 0.0
        %5394 = vmatmul.mubr.f32.gmra.mxu0 %v5325
        %v5395 = vpop.f32.mrf.mxu0
        %v5396 = vadd.f32 0.0, %v5395
        %v5397 = vpop.f32.mrf.mxu0
        %5398 = vdwg.mxu0
        %v5399 = vlaneseq
        %v5400 = vshrl.u32 %v5399, 7
        %v5401 = vsub.s32 0, %v5400
        %v5402 = vrot.slane %v4507, %v5401
        %5403 = vrot.lane.b32.xlu0 %v5402, 120
        %v5404 = vpop.permute.xlu0 %5403
        %5405 = vrot.lane.b32.xlu0 %v4406, 120
        %v5406 = vpop.permute.xlu0 %5405
        %v5407 = vsel %vm1237, %v5404, 0
        %v5409 = vsel %vm1237, %v5406, 0
        %5411 = vmatprep.subr.mxu0 0.0
        %5412 = vmatpush1.xpose.msra.mxu0 0.0
        %5413 = vmatprep.subr.mxu0 0.0
        %5414 = vmatpush1.xpose.msra.mxu0 0.0
        %5415 = vmatprep.subr.mxu0 0.0
        %5416 = vmatpush1.xpose.msra.mxu0 0.0
        %5417 = vmatprep.subr.mxu0 0.0
        %5418 = vmatpush1.xpose.msra.mxu0 0.0
        %5419 = vmatprep.subr.mxu0 0.0
        %5420 = vmatpush1.xpose.msra.mxu0 0.0
        %5421 = vmatprep.subr.mxu0 0.0
        %5422 = vmatpush1.xpose.msra.mxu0 0.0
        %5423 = vmatprep.subr.mxu0 0.0
        %5424 = vmatpush1.xpose.msra.mxu0 0.0
        %5425 = vmatprep.subr.mxu0 0.0
        %5426 = vmatpush1.xpose.msra.mxu0 0.0
        %5427 = vmatprep.subr.mxu0 0.0
        %5428 = vmatpush1.xpose.msra.mxu0 0.0
        %5429 = vmatprep.subr.mxu0 0.0
        %5430 = vmatpush1.xpose.msra.mxu0 0.0
        %5431 = vmatprep.subr.mxu0 0.0
        %5432 = vmatpush1.xpose.msra.mxu0 0.0
        %5433 = vmatprep.subr.mxu0 0.0
        %5434 = vmatpush1.xpose.msra.mxu0 0.0
        %5435 = vmatprep.subr.mxu0 0.0
        %5436 = vmatpush1.xpose.msra.mxu0 0.0
        %5437 = vmatprep.subr.mxu0 0.0
        %5438 = vmatpush1.xpose.msra.mxu0 0.0
        %5439 = vmatprep.subr.mxu0 0.0
        %5440 = vmatpush1.xpose.msra.mxu0 0.0
        %5441 = vmatprep.subr.mxu0 0.0
        %5442 = vmatpush1.xpose.msra.mxu0 %v5409
        %5443 = vmatprep.subr.mxu0 0.0
        %5444 = vmatpush2.xpose.msra.mxu0 0.0
        %5445 = vmatprep.subr.mxu0 0.0
        %5446 = vmatpush2.xpose.msra.mxu0 0.0
        %5447 = vmatprep.subr.mxu0 0.0
        %5448 = vmatpush2.xpose.msra.mxu0 0.0
        %5449 = vmatprep.subr.mxu0 0.0
        %5450 = vmatpush2.xpose.msra.mxu0 0.0
        %5451 = vmatprep.subr.mxu0 0.0
        %5452 = vmatpush2.xpose.msra.mxu0 0.0
        %5453 = vmatprep.subr.mxu0 0.0
        %5454 = vmatpush2.xpose.msra.mxu0 0.0
        %5455 = vmatprep.subr.mxu0 0.0
        %5456 = vmatpush2.xpose.msra.mxu0 0.0
        %5457 = vmatprep.subr.mxu0 0.0
        %5458 = vmatpush2.xpose.msra.mxu0 0.0
        %5459 = vmatprep.subr.mxu0 0.0
        %5460 = vmatpush2.xpose.msra.mxu0 0.0
        %5461 = vmatprep.subr.mxu0 0.0
        %5462 = vmatpush2.xpose.msra.mxu0 0.0
        %5463 = vmatprep.subr.mxu0 0.0
        %5464 = vmatpush2.xpose.msra.mxu0 0.0
        %5465 = vmatprep.subr.mxu0 0.0
        %5466 = vmatpush2.xpose.msra.mxu0 0.0
        %5467 = vmatprep.subr.mxu0 0.0
        %5468 = vmatpush2.xpose.msra.mxu0 0.0
        %5469 = vmatprep.subr.mxu0 0.0
        %5470 = vmatpush2.xpose.msra.mxu0 0.0
        %5471 = vmatprep.subr.mxu0 0.0
        %5472 = vmatpush2.xpose.msra.mxu0 0.0
        %5473 = vmatprep.subr.mxu0 0.0
        %5474 = vmatpush2.xpose.msra.mxu0 0.0
        %5475 = vmatprep.mubr.f32.mxu0 0.0
        %5476 = vmatmul.mubr.f32.gmra.mxu0 %v5407
        %v5477 = vpop.f32.mrf.mxu0
        %v5478 = vadd.f32 0.0, %v5477
        %v5479 = vpop.f32.mrf.mxu0
        %5480 = vdwg.mxu0
        %v5481 = vmul.f32 %v5232, 0.35355338
        %v5482 = vmul.f32 %v5314, 0.35355338
        %v5483 = vmul.f32 %v5396, 0.35355338
        %v5484 = vmul.f32 %v5478, 0.35355338
        %v5485 = vadd.f32 %v5481, %v4256
        %v5486 = vadd.f32 %v5482, %v4257
        %v5487 = vadd.f32 %v5483, %v4258
        %v5488 = vadd.f32 %v5484, %v4259
        %v5489 = vsel %vm4816, %v5485, -inf
        %5490 = vmax.xlane.f32.xlu0 %v5489
        %v5491 = vpop.xlane.xlu0 %5490
        %v5492 = vsel %vm4816, %v5486, -inf
        %5493 = vmax.xlane.f32.xlu0 %v5492
        %v5494 = vpop.xlane.xlu0 %5493
        %v5495 = vsel %vm4816, %v5487, -inf
        %5496 = vmax.xlane.f32.xlu0 %v5495
        %v5497 = vpop.xlane.xlu0 %5496
        %v5498 = vsel %vm4816, %v5488, -inf
        %5499 = vmax.xlane.f32.xlu0 %v5498
        %v5500 = vpop.xlane.xlu0 %5499
        %v5501 = vsub.f32 %v5485, %v5491
        %v5502 = vsub.f32 %v5486, %v5494
        %v5503 = vsub.f32 %v5487, %v5497
        %v5504 = vsub.f32 %v5488, %v5500
        %v5505 = vmul.f32 %v5501, 1.442695
        %v5506 = vpow.pop %v5505
        %v5507 = vmul.f32 %v5502, 1.442695
        %v5508 = vpow.pop %v5507
        %v5509 = vmul.f32 %v5503, 1.442695
        %v5510 = vpow.pop %v5509
        %v5511 = vmul.f32 %v5504, 1.442695
        %v5512 = vpow.pop %v5511
        %v5513 = vsel %vm4816, %v5506, 0.0
        %5514 = vadd.xlane.f32.xlu0 %v5513
        %v5515 = vpop.xlane.xlu0 %5514
        %v5516 = vsel %vm4816, %v5508, 0.0
        %5517 = vadd.xlane.f32.xlu0 %v5516
        %v5518 = vpop.xlane.xlu0 %5517
        %v5519 = vsel %vm4816, %v5510, 0.0
        %5520 = vadd.xlane.f32.xlu0 %v5519
        %v5521 = vpop.xlane.xlu0 %5520
        %v5522 = vsel %vm4816, %v5512, 0.0
        %5523 = vadd.xlane.f32.xlu0 %v5522
        %v5524 = vpop.xlane.xlu0 %5523
        %v5525 = vrcp.pop %v5515
        %v5526 = vmul.f32 %v5506, %v5525
        %v5527 = vrcp.pop %v5518
        %v5528 = vmul.f32 %v5508, %v5527
        %v5529 = vrcp.pop %v5521
        %v5530 = vmul.f32 %v5510, %v5529
        %v5531 = vrcp.pop %v5524
        %v5532 = vmul.f32 %v5512, %v5531
        %5534 = vrot.lane.b32.xlu0 %v4469, 120
        %v5535 = vpop.permute.xlu0 %5534
        %v5538 = vsel %vm1237, %v5526, 0
        %5540 = vmatprep.subr.mxu0 0.0
        %5541 = vmatpush1.msra.mxu0 0.0
        %5542 = vmatprep.subr.mxu0 0.0
        %5543 = vmatpush1.msra.mxu0 0.0
        %5544 = vmatprep.subr.mxu0 0.0
        %5545 = vmatpush1.msra.mxu0 0.0
        %5546 = vmatprep.subr.mxu0 0.0
        %5547 = vmatpush1.msra.mxu0 0.0
        %5548 = vmatprep.subr.mxu0 0.0
        %5549 = vmatpush1.msra.mxu0 0.0
        %5550 = vmatprep.subr.mxu0 0.0
        %5551 = vmatpush1.msra.mxu0 0.0
        %5552 = vmatprep.subr.mxu0 0.0
        %5553 = vmatpush1.msra.mxu0 0.0
        %5554 = vmatprep.subr.mxu0 0.0
        %5555 = vmatpush1.msra.mxu0 0.0
        %5556 = vmatprep.subr.mxu0 0.0
        %5557 = vmatpush1.msra.mxu0 0.0
        %5558 = vmatprep.subr.mxu0 0.0
        %5559 = vmatpush1.msra.mxu0 0.0
        %5560 = vmatprep.subr.mxu0 0.0
        %5561 = vmatpush1.msra.mxu0 0.0
        %5562 = vmatprep.subr.mxu0 0.0
        %5563 = vmatpush1.msra.mxu0 0.0
        %5564 = vmatprep.subr.mxu0 0.0
        %5565 = vmatpush1.msra.mxu0 0.0
        %5566 = vmatprep.subr.mxu0 0.0
        %5567 = vmatpush1.msra.mxu0 0.0
        %5568 = vmatprep.subr.mxu0 0.0
        %5569 = vmatpush1.msra.mxu0 0.0
        %5570 = vmatprep.subr.mxu0 0.0
        %5571 = vmatpush1.msra.mxu0 %v5535
        %5572 = vmatprep.subr.mxu0 0.0
        %5573 = vmatpush2.msra.mxu0 0.0
        %5574 = vmatprep.subr.mxu0 0.0
        %5575 = vmatpush2.msra.mxu0 0.0
        %5576 = vmatprep.subr.mxu0 0.0
        %5577 = vmatpush2.msra.mxu0 0.0
        %5578 = vmatprep.subr.mxu0 0.0
        %5579 = vmatpush2.msra.mxu0 0.0
        %5580 = vmatprep.subr.mxu0 0.0
        %5581 = vmatpush2.msra.mxu0 0.0
        %5582 = vmatprep.subr.mxu0 0.0
        %5583 = vmatpush2.msra.mxu0 0.0
        %5584 = vmatprep.subr.mxu0 0.0
        %5585 = vmatpush2.msra.mxu0 0.0
        %5586 = vmatprep.subr.mxu0 0.0
        %5587 = vmatpush2.msra.mxu0 0.0
        %5588 = vmatprep.subr.mxu0 0.0
        %5589 = vmatpush2.msra.mxu0 0.0
        %5590 = vmatprep.subr.mxu0 0.0
        %5591 = vmatpush2.msra.mxu0 0.0
        %5592 = vmatprep.subr.mxu0 0.0
        %5593 = vmatpush2.msra.mxu0 0.0
        %5594 = vmatprep.subr.mxu0 0.0
        %5595 = vmatpush2.msra.mxu0 0.0
        %5596 = vmatprep.subr.mxu0 0.0
        %5597 = vmatpush2.msra.mxu0 0.0
        %5598 = vmatprep.subr.mxu0 0.0
        %5599 = vmatpush2.msra.mxu0 0.0
        %5600 = vmatprep.subr.mxu0 0.0
        %5601 = vmatpush2.msra.mxu0 0.0
        %5602 = vmatprep.subr.mxu0 0.0
        %5603 = vmatpush2.msra.mxu0 0.0
        %5604 = vmatprep.mubr.f32.mxu0 0.0
        %5605 = vmatmul.mubr.f32.gmra.mxu0 %v5538
        %v5606 = vpop.f32.mrf.mxu0
        %v5607 = vadd.f32 0.0, %v5606
        %v5608 = vpop.f32.mrf.mxu0
        %5609 = vdwg.mxu0
        %5611 = vrot.lane.b32.xlu0 %v4472, 120
        %v5612 = vpop.permute.xlu0 %5611
        %v5615 = vsel %vm1237, %v5528, 0
        %5617 = vmatprep.subr.mxu0 0.0
        %5618 = vmatpush1.msra.mxu0 0.0
        %5619 = vmatprep.subr.mxu0 0.0
        %5620 = vmatpush1.msra.mxu0 0.0
        %5621 = vmatprep.subr.mxu0 0.0
        %5622 = vmatpush1.msra.mxu0 0.0
        %5623 = vmatprep.subr.mxu0 0.0
        %5624 = vmatpush1.msra.mxu0 0.0
        %5625 = vmatprep.subr.mxu0 0.0
        %5626 = vmatpush1.msra.mxu0 0.0
        %5627 = vmatprep.subr.mxu0 0.0
        %5628 = vmatpush1.msra.mxu0 0.0
        %5629 = vmatprep.subr.mxu0 0.0
        %5630 = vmatpush1.msra.mxu0 0.0
        %5631 = vmatprep.subr.mxu0 0.0
        %5632 = vmatpush1.msra.mxu0 0.0
        %5633 = vmatprep.subr.mxu0 0.0
        %5634 = vmatpush1.msra.mxu0 0.0
        %5635 = vmatprep.subr.mxu0 0.0
        %5636 = vmatpush1.msra.mxu0 0.0
        %5637 = vmatprep.subr.mxu0 0.0
        %5638 = vmatpush1.msra.mxu0 0.0
        %5639 = vmatprep.subr.mxu0 0.0
        %5640 = vmatpush1.msra.mxu0 0.0
        %5641 = vmatprep.subr.mxu0 0.0
        %5642 = vmatpush1.msra.mxu0 0.0
        %5643 = vmatprep.subr.mxu0 0.0
        %5644 = vmatpush1.msra.mxu0 0.0
        %5645 = vmatprep.subr.mxu0 0.0
        %5646 = vmatpush1.msra.mxu0 0.0
        %5647 = vmatprep.subr.mxu0 0.0
        %5648 = vmatpush1.msra.mxu0 %v5612
        %5649 = vmatprep.subr.mxu0 0.0
        %5650 = vmatpush2.msra.mxu0 0.0
        %5651 = vmatprep.subr.mxu0 0.0
        %5652 = vmatpush2.msra.mxu0 0.0
        %5653 = vmatprep.subr.mxu0 0.0
        %5654 = vmatpush2.msra.mxu0 0.0
        %5655 = vmatprep.subr.mxu0 0.0
        %5656 = vmatpush2.msra.mxu0 0.0
        %5657 = vmatprep.subr.mxu0 0.0
        %5658 = vmatpush2.msra.mxu0 0.0
        %5659 = vmatprep.subr.mxu0 0.0
        %5660 = vmatpush2.msra.mxu0 0.0
        %5661 = vmatprep.subr.mxu0 0.0
        %5662 = vmatpush2.msra.mxu0 0.0
        %5663 = vmatprep.subr.mxu0 0.0
        %5664 = vmatpush2.msra.mxu0 0.0
        %5665 = vmatprep.subr.mxu0 0.0
        %5666 = vmatpush2.msra.mxu0 0.0
        %5667 = vmatprep.subr.mxu0 0.0
        %5668 = vmatpush2.msra.mxu0 0.0
        %5669 = vmatprep.subr.mxu0 0.0
        %5670 = vmatpush2.msra.mxu0 0.0
        %5671 = vmatprep.subr.mxu0 0.0
        %5672 = vmatpush2.msra.mxu0 0.0
        %5673 = vmatprep.subr.mxu0 0.0
        %5674 = vmatpush2.msra.mxu0 0.0
        %5675 = vmatprep.subr.mxu0 0.0
        %5676 = vmatpush2.msra.mxu0 0.0
        %5677 = vmatprep.subr.mxu0 0.0
        %5678 = vmatpush2.msra.mxu0 0.0
        %5679 = vmatprep.subr.mxu0 0.0
        %5680 = vmatpush2.msra.mxu0 0.0
        %5681 = vmatprep.mubr.f32.mxu0 0.0
        %5682 = vmatmul.mubr.f32.gmra.mxu0 %v5615
        %v5683 = vpop.f32.mrf.mxu0
        %v5684 = vadd.f32 0.0, %v5683
        %v5685 = vpop.f32.mrf.mxu0
        %5686 = vdwg.mxu0
        %5688 = vrot.lane.b32.xlu0 %v4477, 120
        %v5689 = vpop.permute.xlu0 %5688
        %v5692 = vsel %vm1237, %v5530, 0
        %5694 = vmatprep.subr.mxu0 0.0
        %5695 = vmatpush1.msra.mxu0 0.0
        %5696 = vmatprep.subr.mxu0 0.0
        %5697 = vmatpush1.msra.mxu0 0.0
        %5698 = vmatprep.subr.mxu0 0.0
        %5699 = vmatpush1.msra.mxu0 0.0
        %5700 = vmatprep.subr.mxu0 0.0
        %5701 = vmatpush1.msra.mxu0 0.0
        %5702 = vmatprep.subr.mxu0 0.0
        %5703 = vmatpush1.msra.mxu0 0.0
        %5704 = vmatprep.subr.mxu0 0.0
        %5705 = vmatpush1.msra.mxu0 0.0
        %5706 = vmatprep.subr.mxu0 0.0
        %5707 = vmatpush1.msra.mxu0 0.0
        %5708 = vmatprep.subr.mxu0 0.0
        %5709 = vmatpush1.msra.mxu0 0.0
        %5710 = vmatprep.subr.mxu0 0.0
        %5711 = vmatpush1.msra.mxu0 0.0
        %5712 = vmatprep.subr.mxu0 0.0
        %5713 = vmatpush1.msra.mxu0 0.0
        %5714 = vmatprep.subr.mxu0 0.0
        %5715 = vmatpush1.msra.mxu0 0.0
        %5716 = vmatprep.subr.mxu0 0.0
        %5717 = vmatpush1.msra.mxu0 0.0
        %5718 = vmatprep.subr.mxu0 0.0
        %5719 = vmatpush1.msra.mxu0 0.0
        %5720 = vmatprep.subr.mxu0 0.0
        %5721 = vmatpush1.msra.mxu0 0.0
        %5722 = vmatprep.subr.mxu0 0.0
        %5723 = vmatpush1.msra.mxu0 0.0
        %5724 = vmatprep.subr.mxu0 0.0
        %5725 = vmatpush1.msra.mxu0 %v5689
        %5726 = vmatprep.subr.mxu0 0.0
        %5727 = vmatpush2.msra.mxu0 0.0
        %5728 = vmatprep.subr.mxu0 0.0
        %5729 = vmatpush2.msra.mxu0 0.0
        %5730 = vmatprep.subr.mxu0 0.0
        %5731 = vmatpush2.msra.mxu0 0.0
        %5732 = vmatprep.subr.mxu0 0.0
        %5733 = vmatpush2.msra.mxu0 0.0
        %5734 = vmatprep.subr.mxu0 0.0
        %5735 = vmatpush2.msra.mxu0 0.0
        %5736 = vmatprep.subr.mxu0 0.0
        %5737 = vmatpush2.msra.mxu0 0.0
        %5738 = vmatprep.subr.mxu0 0.0
        %5739 = vmatpush2.msra.mxu0 0.0
        %5740 = vmatprep.subr.mxu0 0.0
        %5741 = vmatpush2.msra.mxu0 0.0
        %5742 = vmatprep.subr.mxu0 0.0
        %5743 = vmatpush2.msra.mxu0 0.0
        %5744 = vmatprep.subr.mxu0 0.0
        %5745 = vmatpush2.msra.mxu0 0.0
        %5746 = vmatprep.subr.mxu0 0.0
        %5747 = vmatpush2.msra.mxu0 0.0
        %5748 = vmatprep.subr.mxu0 0.0
        %5749 = vmatpush2.msra.mxu0 0.0
        %5750 = vmatprep.subr.mxu0 0.0
        %5751 = vmatpush2.msra.mxu0 0.0
        %5752 = vmatprep.subr.mxu0 0.0
        %5753 = vmatpush2.msra.mxu0 0.0
        %5754 = vmatprep.subr.mxu0 0.0
        %5755 = vmatpush2.msra.mxu0 0.0
        %5756 = vmatprep.subr.mxu0 0.0
        %5757 = vmatpush2.msra.mxu0 0.0
        %5758 = vmatprep.mubr.f32.mxu0 0.0
        %5759 = vmatmul.mubr.f32.gmra.mxu0 %v5692
        %v5760 = vpop.f32.mrf.mxu0
        %v5761 = vadd.f32 0.0, %v5760
        %v5762 = vpop.f32.mrf.mxu0
        %5763 = vdwg.mxu0
        %5765 = vrot.lane.b32.xlu0 %v4480, 120
        %v5766 = vpop.permute.xlu0 %5765
        %v5769 = vsel %vm1237, %v5532, 0
        %5771 = vmatprep.subr.mxu0 0.0
        %5772 = vmatpush1.msra.mxu0 0.0
        %5773 = vmatprep.subr.mxu0 0.0
        %5774 = vmatpush1.msra.mxu0 0.0
        %5775 = vmatprep.subr.mxu0 0.0
        %5776 = vmatpush1.msra.mxu0 0.0
        %5777 = vmatprep.subr.mxu0 0.0
        %5778 = vmatpush1.msra.mxu0 0.0
        %5779 = vmatprep.subr.mxu0 0.0
        %5780 = vmatpush1.msra.mxu0 0.0
        %5781 = vmatprep.subr.mxu0 0.0
        %5782 = vmatpush1.msra.mxu0 0.0
        %5783 = vmatprep.subr.mxu0 0.0
        %5784 = vmatpush1.msra.mxu0 0.0
        %5785 = vmatprep.subr.mxu0 0.0
        %5786 = vmatpush1.msra.mxu0 0.0
        %5787 = vmatprep.subr.mxu0 0.0
        %5788 = vmatpush1.msra.mxu0 0.0
        %5789 = vmatprep.subr.mxu0 0.0
        %5790 = vmatpush1.msra.mxu0 0.0
        %5791 = vmatprep.subr.mxu0 0.0
        %5792 = vmatpush1.msra.mxu0 0.0
        %5793 = vmatprep.subr.mxu0 0.0
        %5794 = vmatpush1.msra.mxu0 0.0
        %5795 = vmatprep.subr.mxu0 0.0
        %5796 = vmatpush1.msra.mxu0 0.0
        %5797 = vmatprep.subr.mxu0 0.0
        %5798 = vmatpush1.msra.mxu0 0.0
        %5799 = vmatprep.subr.mxu0 0.0
        %5800 = vmatpush1.msra.mxu0 0.0
        %5801 = vmatprep.subr.mxu0 0.0
        %5802 = vmatpush1.msra.mxu0 %v5766
        %5803 = vmatprep.subr.mxu0 0.0
        %5804 = vmatpush2.msra.mxu0 0.0
        %5805 = vmatprep.subr.mxu0 0.0
        %5806 = vmatpush2.msra.mxu0 0.0
        %5807 = vmatprep.subr.mxu0 0.0
        %5808 = vmatpush2.msra.mxu0 0.0
        %5809 = vmatprep.subr.mxu0 0.0
        %5810 = vmatpush2.msra.mxu0 0.0
        %5811 = vmatprep.subr.mxu0 0.0
        %5812 = vmatpush2.msra.mxu0 0.0
        %5813 = vmatprep.subr.mxu0 0.0
        %5814 = vmatpush2.msra.mxu0 0.0
        %5815 = vmatprep.subr.mxu0 0.0
        %5816 = vmatpush2.msra.mxu0 0.0
        %5817 = vmatprep.subr.mxu0 0.0
        %5818 = vmatpush2.msra.mxu0 0.0
        %5819 = vmatprep.subr.mxu0 0.0
        %5820 = vmatpush2.msra.mxu0 0.0
        %5821 = vmatprep.subr.mxu0 0.0
        %5822 = vmatpush2.msra.mxu0 0.0
        %5823 = vmatprep.subr.mxu0 0.0
        %5824 = vmatpush2.msra.mxu0 0.0
        %5825 = vmatprep.subr.mxu0 0.0
        %5826 = vmatpush2.msra.mxu0 0.0
        %5827 = vmatprep.subr.mxu0 0.0
        %5828 = vmatpush2.msra.mxu0 0.0
        %5829 = vmatprep.subr.mxu0 0.0
        %5830 = vmatpush2.msra.mxu0 0.0
        %5831 = vmatprep.subr.mxu0 0.0
        %5832 = vmatpush2.msra.mxu0 0.0
        %5833 = vmatprep.subr.mxu0 0.0
        %5834 = vmatpush2.msra.mxu0 0.0
        %5835 = vmatprep.mubr.f32.mxu0 0.0
        %5836 = vmatmul.mubr.f32.gmra.mxu0 %v5769
        %v5837 = vpop.f32.mrf.mxu0
        %v5838 = vadd.f32 0.0, %v5837
        %v5839 = vpop.f32.mrf.mxu0
        %5840 = vdwg.mxu0
        %5841 = vrot.lane.b32.xlu0 %v5156, 112
        %v5842 = vpop.permute.xlu0 %5841
        %5843 = vrot.lane.b32.xlu0 %v4395, 112
        %v5844 = vpop.permute.xlu0 %5843
        %v5845 = vsel %vm1237, %v5842, 0
        %v5847 = vsel %vm1237, %v5844, 0
        %5849 = vmatprep.subr.mxu0 0.0
        %5850 = vmatpush1.xpose.msra.mxu0 0.0
        %5851 = vmatprep.subr.mxu0 0.0
        %5852 = vmatpush1.xpose.msra.mxu0 0.0
        %5853 = vmatprep.subr.mxu0 0.0
        %5854 = vmatpush1.xpose.msra.mxu0 0.0
        %5855 = vmatprep.subr.mxu0 0.0
        %5856 = vmatpush1.xpose.msra.mxu0 0.0
        %5857 = vmatprep.subr.mxu0 0.0
        %5858 = vmatpush1.xpose.msra.mxu0 0.0
        %5859 = vmatprep.subr.mxu0 0.0
        %5860 = vmatpush1.xpose.msra.mxu0 0.0
        %5861 = vmatprep.subr.mxu0 0.0
        %5862 = vmatpush1.xpose.msra.mxu0 0.0
        %5863 = vmatprep.subr.mxu0 0.0
        %5864 = vmatpush1.xpose.msra.mxu0 0.0
        %5865 = vmatprep.subr.mxu0 0.0
        %5866 = vmatpush1.xpose.msra.mxu0 0.0
        %5867 = vmatprep.subr.mxu0 0.0
        %5868 = vmatpush1.xpose.msra.mxu0 0.0
        %5869 = vmatprep.subr.mxu0 0.0
        %5870 = vmatpush1.xpose.msra.mxu0 0.0
        %5871 = vmatprep.subr.mxu0 0.0
        %5872 = vmatpush1.xpose.msra.mxu0 0.0
        %5873 = vmatprep.subr.mxu0 0.0
        %5874 = vmatpush1.xpose.msra.mxu0 0.0
        %5875 = vmatprep.subr.mxu0 0.0
        %5876 = vmatpush1.xpose.msra.mxu0 0.0
        %5877 = vmatprep.subr.mxu0 0.0
        %5878 = vmatpush1.xpose.msra.mxu0 0.0
        %5879 = vmatprep.subr.mxu0 0.0
        %5880 = vmatpush1.xpose.msra.mxu0 %v5847
        %5881 = vmatprep.subr.mxu0 0.0
        %5882 = vmatpush2.xpose.msra.mxu0 0.0
        %5883 = vmatprep.subr.mxu0 0.0
        %5884 = vmatpush2.xpose.msra.mxu0 0.0
        %5885 = vmatprep.subr.mxu0 0.0
        %5886 = vmatpush2.xpose.msra.mxu0 0.0
        %5887 = vmatprep.subr.mxu0 0.0
        %5888 = vmatpush2.xpose.msra.mxu0 0.0
        %5889 = vmatprep.subr.mxu0 0.0
        %5890 = vmatpush2.xpose.msra.mxu0 0.0
        %5891 = vmatprep.subr.mxu0 0.0
        %5892 = vmatpush2.xpose.msra.mxu0 0.0
        %5893 = vmatprep.subr.mxu0 0.0
        %5894 = vmatpush2.xpose.msra.mxu0 0.0
        %5895 = vmatprep.subr.mxu0 0.0
        %5896 = vmatpush2.xpose.msra.mxu0 0.0
        %5897 = vmatprep.subr.mxu0 0.0
        %5898 = vmatpush2.xpose.msra.mxu0 0.0
        %5899 = vmatprep.subr.mxu0 0.0
        %5900 = vmatpush2.xpose.msra.mxu0 0.0
        %5901 = vmatprep.subr.mxu0 0.0
        %5902 = vmatpush2.xpose.msra.mxu0 0.0
        %5903 = vmatprep.subr.mxu0 0.0
        %5904 = vmatpush2.xpose.msra.mxu0 0.0
        %5905 = vmatprep.subr.mxu0 0.0
        %5906 = vmatpush2.xpose.msra.mxu0 0.0
        %5907 = vmatprep.subr.mxu0 0.0
        %5908 = vmatpush2.xpose.msra.mxu0 0.0
        %5909 = vmatprep.subr.mxu0 0.0
        %5910 = vmatpush2.xpose.msra.mxu0 0.0
        %5911 = vmatprep.subr.mxu0 0.0
        %5912 = vmatpush2.xpose.msra.mxu0 0.0
        %5913 = vmatprep.mubr.f32.mxu0 0.0
        %5914 = vmatmul.mubr.f32.gmra.mxu0 %v5845
        %v5915 = vpop.f32.mrf.mxu0
        %v5916 = vadd.f32 0.0, %v5915
        %v5917 = vpop.f32.mrf.mxu0
        %5918 = vdwg.mxu0
        %5919 = vrot.lane.b32.xlu0 %v5238, 112
        %v5920 = vpop.permute.xlu0 %5919
        %5921 = vrot.lane.b32.xlu0 %v4398, 112
        %v5922 = vpop.permute.xlu0 %5921
        %v5923 = vsel %vm1237, %v5920, 0
        %v5925 = vsel %vm1237, %v5922, 0
        %5927 = vmatprep.subr.mxu0 0.0
        %5928 = vmatpush1.xpose.msra.mxu0 0.0
        %5929 = vmatprep.subr.mxu0 0.0
        %5930 = vmatpush1.xpose.msra.mxu0 0.0
        %5931 = vmatprep.subr.mxu0 0.0
        %5932 = vmatpush1.xpose.msra.mxu0 0.0
        %5933 = vmatprep.subr.mxu0 0.0
        %5934 = vmatpush1.xpose.msra.mxu0 0.0
        %5935 = vmatprep.subr.mxu0 0.0
        %5936 = vmatpush1.xpose.msra.mxu0 0.0
        %5937 = vmatprep.subr.mxu0 0.0
        %5938 = vmatpush1.xpose.msra.mxu0 0.0
        %5939 = vmatprep.subr.mxu0 0.0
        %5940 = vmatpush1.xpose.msra.mxu0 0.0
        %5941 = vmatprep.subr.mxu0 0.0
        %5942 = vmatpush1.xpose.msra.mxu0 0.0
        %5943 = vmatprep.subr.mxu0 0.0
        %5944 = vmatpush1.xpose.msra.mxu0 0.0
        %5945 = vmatprep.subr.mxu0 0.0
        %5946 = vmatpush1.xpose.msra.mxu0 0.0
        %5947 = vmatprep.subr.mxu0 0.0
        %5948 = vmatpush1.xpose.msra.mxu0 0.0
        %5949 = vmatprep.subr.mxu0 0.0
        %5950 = vmatpush1.xpose.msra.mxu0 0.0
        %5951 = vmatprep.subr.mxu0 0.0
        %5952 = vmatpush1.xpose.msra.mxu0 0.0
        %5953 = vmatprep.subr.mxu0 0.0
        %5954 = vmatpush1.xpose.msra.mxu0 0.0
        %5955 = vmatprep.subr.mxu0 0.0
        %5956 = vmatpush1.xpose.msra.mxu0 0.0
        %5957 = vmatprep.subr.mxu0 0.0
        %5958 = vmatpush1.xpose.msra.mxu0 %v5925
        %5959 = vmatprep.subr.mxu0 0.0
        %5960 = vmatpush2.xpose.msra.mxu0 0.0
        %5961 = vmatprep.subr.mxu0 0.0
        %5962 = vmatpush2.xpose.msra.mxu0 0.0
        %5963 = vmatprep.subr.mxu0 0.0
        %5964 = vmatpush2.xpose.msra.mxu0 0.0
        %5965 = vmatprep.subr.mxu0 0.0
        %5966 = vmatpush2.xpose.msra.mxu0 0.0
        %5967 = vmatprep.subr.mxu0 0.0
        %5968 = vmatpush2.xpose.msra.mxu0 0.0
        %5969 = vmatprep.subr.mxu0 0.0
        %5970 = vmatpush2.xpose.msra.mxu0 0.0
        %5971 = vmatprep.subr.mxu0 0.0
        %5972 = vmatpush2.xpose.msra.mxu0 0.0
        %5973 = vmatprep.subr.mxu0 0.0
        %5974 = vmatpush2.xpose.msra.mxu0 0.0
        %5975 = vmatprep.subr.mxu0 0.0
        %5976 = vmatpush2.xpose.msra.mxu0 0.0
        %5977 = vmatprep.subr.mxu0 0.0
        %5978 = vmatpush2.xpose.msra.mxu0 0.0
        %5979 = vmatprep.subr.mxu0 0.0
        %5980 = vmatpush2.xpose.msra.mxu0 0.0
        %5981 = vmatprep.subr.mxu0 0.0
        %5982 = vmatpush2.xpose.msra.mxu0 0.0
        %5983 = vmatprep.subr.mxu0 0.0
        %5984 = vmatpush2.xpose.msra.mxu0 0.0
        %5985 = vmatprep.subr.mxu0 0.0
        %5986 = vmatpush2.xpose.msra.mxu0 0.0
        %5987 = vmatprep.subr.mxu0 0.0
        %5988 = vmatpush2.xpose.msra.mxu0 0.0
        %5989 = vmatprep.subr.mxu0 0.0
        %5990 = vmatpush2.xpose.msra.mxu0 0.0
        %5991 = vmatprep.mubr.f32.mxu0 0.0
        %5992 = vmatmul.mubr.f32.gmra.mxu0 %v5923
        %v5993 = vpop.f32.mrf.mxu0
        %v5994 = vadd.f32 0.0, %v5993
        %v5995 = vpop.f32.mrf.mxu0
        %5996 = vdwg.mxu0
        %5997 = vrot.lane.b32.xlu0 %v5320, 112
        %v5998 = vpop.permute.xlu0 %5997
        %5999 = vrot.lane.b32.xlu0 %v4403, 112
        %v6000 = vpop.permute.xlu0 %5999
        %v6001 = vsel %vm1237, %v5998, 0
        %v6003 = vsel %vm1237, %v6000, 0
        %6005 = vmatprep.subr.mxu0 0.0
        %6006 = vmatpush1.xpose.msra.mxu0 0.0
        %6007 = vmatprep.subr.mxu0 0.0
        %6008 = vmatpush1.xpose.msra.mxu0 0.0
        %6009 = vmatprep.subr.mxu0 0.0
        %6010 = vmatpush1.xpose.msra.mxu0 0.0
        %6011 = vmatprep.subr.mxu0 0.0
        %6012 = vmatpush1.xpose.msra.mxu0 0.0
        %6013 = vmatprep.subr.mxu0 0.0
        %6014 = vmatpush1.xpose.msra.mxu0 0.0
        %6015 = vmatprep.subr.mxu0 0.0
        %6016 = vmatpush1.xpose.msra.mxu0 0.0
        %6017 = vmatprep.subr.mxu0 0.0
        %6018 = vmatpush1.xpose.msra.mxu0 0.0
        %6019 = vmatprep.subr.mxu0 0.0
        %6020 = vmatpush1.xpose.msra.mxu0 0.0
        %6021 = vmatprep.subr.mxu0 0.0
        %6022 = vmatpush1.xpose.msra.mxu0 0.0
        %6023 = vmatprep.subr.mxu0 0.0
        %6024 = vmatpush1.xpose.msra.mxu0 0.0
        %6025 = vmatprep.subr.mxu0 0.0
        %6026 = vmatpush1.xpose.msra.mxu0 0.0
        %6027 = vmatprep.subr.mxu0 0.0
        %6028 = vmatpush1.xpose.msra.mxu0 0.0
        %6029 = vmatprep.subr.mxu0 0.0
        %6030 = vmatpush1.xpose.msra.mxu0 0.0
        %6031 = vmatprep.subr.mxu0 0.0
        %6032 = vmatpush1.xpose.msra.mxu0 0.0
        %6033 = vmatprep.subr.mxu0 0.0
        %6034 = vmatpush1.xpose.msra.mxu0 0.0
        %6035 = vmatprep.subr.mxu0 0.0
        %6036 = vmatpush1.xpose.msra.mxu0 %v6003
        %6037 = vmatprep.subr.mxu0 0.0
        %6038 = vmatpush2.xpose.msra.mxu0 0.0
        %6039 = vmatprep.subr.mxu0 0.0
        %6040 = vmatpush2.xpose.msra.mxu0 0.0
        %6041 = vmatprep.subr.mxu0 0.0
        %6042 = vmatpush2.xpose.msra.mxu0 0.0
        %6043 = vmatprep.subr.mxu0 0.0
        %6044 = vmatpush2.xpose.msra.mxu0 0.0
        %6045 = vmatprep.subr.mxu0 0.0
        %6046 = vmatpush2.xpose.msra.mxu0 0.0
        %6047 = vmatprep.subr.mxu0 0.0
        %6048 = vmatpush2.xpose.msra.mxu0 0.0
        %6049 = vmatprep.subr.mxu0 0.0
        %6050 = vmatpush2.xpose.msra.mxu0 0.0
        %6051 = vmatprep.subr.mxu0 0.0
        %6052 = vmatpush2.xpose.msra.mxu0 0.0
        %6053 = vmatprep.subr.mxu0 0.0
        %6054 = vmatpush2.xpose.msra.mxu0 0.0
        %6055 = vmatprep.subr.mxu0 0.0
        %6056 = vmatpush2.xpose.msra.mxu0 0.0
        %6057 = vmatprep.subr.mxu0 0.0
        %6058 = vmatpush2.xpose.msra.mxu0 0.0
        %6059 = vmatprep.subr.mxu0 0.0
        %6060 = vmatpush2.xpose.msra.mxu0 0.0
        %6061 = vmatprep.subr.mxu0 0.0
        %6062 = vmatpush2.xpose.msra.mxu0 0.0
        %6063 = vmatprep.subr.mxu0 0.0
        %6064 = vmatpush2.xpose.msra.mxu0 0.0
        %6065 = vmatprep.subr.mxu0 0.0
        %6066 = vmatpush2.xpose.msra.mxu0 0.0
        %6067 = vmatprep.subr.mxu0 0.0
        %6068 = vmatpush2.xpose.msra.mxu0 0.0
        %6069 = vmatprep.mubr.f32.mxu0 0.0
        %6070 = vmatmul.mubr.f32.gmra.mxu0 %v6001
        %v6071 = vpop.f32.mrf.mxu0
        %v6072 = vadd.f32 0.0, %v6071
        %v6073 = vpop.f32.mrf.mxu0
        %6074 = vdwg.mxu0
        %6075 = vrot.lane.b32.xlu0 %v5402, 112
        %v6076 = vpop.permute.xlu0 %6075
        %6077 = vrot.lane.b32.xlu0 %v4406, 112
        %v6078 = vpop.permute.xlu0 %6077
        %v6079 = vsel %vm1237, %v6076, 0
        %v6081 = vsel %vm1237, %v6078, 0
        %6083 = vmatprep.subr.mxu0 0.0
        %6084 = vmatpush1.xpose.msra.mxu0 0.0
        %6085 = vmatprep.subr.mxu0 0.0
        %6086 = vmatpush1.xpose.msra.mxu0 0.0
        %6087 = vmatprep.subr.mxu0 0.0
        %6088 = vmatpush1.xpose.msra.mxu0 0.0
        %6089 = vmatprep.subr.mxu0 0.0
        %6090 = vmatpush1.xpose.msra.mxu0 0.0
        %6091 = vmatprep.subr.mxu0 0.0
        %6092 = vmatpush1.xpose.msra.mxu0 0.0
        %6093 = vmatprep.subr.mxu0 0.0
        %6094 = vmatpush1.xpose.msra.mxu0 0.0
        %6095 = vmatprep.subr.mxu0 0.0
        %6096 = vmatpush1.xpose.msra.mxu0 0.0
        %6097 = vmatprep.subr.mxu0 0.0
        %6098 = vmatpush1.xpose.msra.mxu0 0.0
        %6099 = vmatprep.subr.mxu0 0.0
        %6100 = vmatpush1.xpose.msra.mxu0 0.0
        %6101 = vmatprep.subr.mxu0 0.0
        %6102 = vmatpush1.xpose.msra.mxu0 0.0
        %6103 = vmatprep.subr.mxu0 0.0
        %6104 = vmatpush1.xpose.msra.mxu0 0.0
        %6105 = vmatprep.subr.mxu0 0.0
        %6106 = vmatpush1.xpose.msra.mxu0 0.0
        %6107 = vmatprep.subr.mxu0 0.0
        %6108 = vmatpush1.xpose.msra.mxu0 0.0
        %6109 = vmatprep.subr.mxu0 0.0
        %6110 = vmatpush1.xpose.msra.mxu0 0.0
        %6111 = vmatprep.subr.mxu0 0.0
        %6112 = vmatpush1.xpose.msra.mxu0 0.0
        %6113 = vmatprep.subr.mxu0 0.0
        %6114 = vmatpush1.xpose.msra.mxu0 %v6081
        %6115 = vmatprep.subr.mxu0 0.0
        %6116 = vmatpush2.xpose.msra.mxu0 0.0
        %6117 = vmatprep.subr.mxu0 0.0
        %6118 = vmatpush2.xpose.msra.mxu0 0.0
        %6119 = vmatprep.subr.mxu0 0.0
        %6120 = vmatpush2.xpose.msra.mxu0 0.0
        %6121 = vmatprep.subr.mxu0 0.0
        %6122 = vmatpush2.xpose.msra.mxu0 0.0
        %6123 = vmatprep.subr.mxu0 0.0
        %6124 = vmatpush2.xpose.msra.mxu0 0.0
        %6125 = vmatprep.subr.mxu0 0.0
        %6126 = vmatpush2.xpose.msra.mxu0 0.0
        %6127 = vmatprep.subr.mxu0 0.0
        %6128 = vmatpush2.xpose.msra.mxu0 0.0
        %6129 = vmatprep.subr.mxu0 0.0
        %6130 = vmatpush2.xpose.msra.mxu0 0.0
        %6131 = vmatprep.subr.mxu0 0.0
        %6132 = vmatpush2.xpose.msra.mxu0 0.0
        %6133 = vmatprep.subr.mxu0 0.0
        %6134 = vmatpush2.xpose.msra.mxu0 0.0
        %6135 = vmatprep.subr.mxu0 0.0
        %6136 = vmatpush2.xpose.msra.mxu0 0.0
        %6137 = vmatprep.subr.mxu0 0.0
        %6138 = vmatpush2.xpose.msra.mxu0 0.0
        %6139 = vmatprep.subr.mxu0 0.0
        %6140 = vmatpush2.xpose.msra.mxu0 0.0
        %6141 = vmatprep.subr.mxu0 0.0
        %6142 = vmatpush2.xpose.msra.mxu0 0.0
        %6143 = vmatprep.subr.mxu0 0.0
        %6144 = vmatpush2.xpose.msra.mxu0 0.0
        %6145 = vmatprep.subr.mxu0 0.0
        %6146 = vmatpush2.xpose.msra.mxu0 0.0
        %6147 = vmatprep.mubr.f32.mxu0 0.0
        %6148 = vmatmul.mubr.f32.gmra.mxu0 %v6079
        %v6149 = vpop.f32.mrf.mxu0
        %v6150 = vadd.f32 0.0, %v6149
        %v6151 = vpop.f32.mrf.mxu0
        %6152 = vdwg.mxu0
        %v6153 = vmul.f32 %v5916, 0.35355338
        %v6154 = vmul.f32 %v5994, 0.35355338
        %v6155 = vmul.f32 %v6072, 0.35355338
        %v6156 = vmul.f32 %v6150, 0.35355338
        %v6157 = vadd.f32 %v6153, %v4256
        %v6158 = vadd.f32 %v6154, %v4257
        %v6159 = vadd.f32 %v6155, %v4258
        %v6160 = vadd.f32 %v6156, %v4259
        %v6161 = vsel %vm4816, %v6157, -inf
        %6162 = vmax.xlane.f32.xlu0 %v6161
        %v6163 = vpop.xlane.xlu0 %6162
        %v6164 = vsel %vm4816, %v6158, -inf
        %6165 = vmax.xlane.f32.xlu0 %v6164
        %v6166 = vpop.xlane.xlu0 %6165
        %v6167 = vsel %vm4816, %v6159, -inf
        %6168 = vmax.xlane.f32.xlu0 %v6167
        %v6169 = vpop.xlane.xlu0 %6168
        %v6170 = vsel %vm4816, %v6160, -inf
        %6171 = vmax.xlane.f32.xlu0 %v6170
        %v6172 = vpop.xlane.xlu0 %6171
        %v6173 = vsub.f32 %v6157, %v6163
        %v6174 = vsub.f32 %v6158, %v6166
        %v6175 = vsub.f32 %v6159, %v6169
        %v6176 = vsub.f32 %v6160, %v6172
        %v6177 = vmul.f32 %v6173, 1.442695
        %v6178 = vpow.pop %v6177
        %v6179 = vmul.f32 %v6174, 1.442695
        %v6180 = vpow.pop %v6179
        %v6181 = vmul.f32 %v6175, 1.442695
        %v6182 = vpow.pop %v6181
        %v6183 = vmul.f32 %v6176, 1.442695
        %v6184 = vpow.pop %v6183
        %v6185 = vsel %vm4816, %v6178, 0.0
        %6186 = vadd.xlane.f32.xlu0 %v6185
        %v6187 = vpop.xlane.xlu0 %6186
        %v6188 = vsel %vm4816, %v6180, 0.0
        %6189 = vadd.xlane.f32.xlu0 %v6188
        %v6190 = vpop.xlane.xlu0 %6189
        %v6191 = vsel %vm4816, %v6182, 0.0
        %6192 = vadd.xlane.f32.xlu0 %v6191
        %v6193 = vpop.xlane.xlu0 %6192
        %v6194 = vsel %vm4816, %v6184, 0.0
        %6195 = vadd.xlane.f32.xlu0 %v6194
        %v6196 = vpop.xlane.xlu0 %6195
        %v6197 = vrcp.pop %v6187
        %v6198 = vmul.f32 %v6178, %v6197
        %v6199 = vrcp.pop %v6190
        %v6200 = vmul.f32 %v6180, %v6199
        %v6201 = vrcp.pop %v6193
        %v6202 = vmul.f32 %v6182, %v6201
        %v6203 = vrcp.pop %v6196
        %v6204 = vmul.f32 %v6184, %v6203
        %6205 = vrot.lane.b32.xlu0 %v4469, 112
        %v6206 = vpop.permute.xlu0 %6205
        %v6209 = vsel %vm1237, %v6198, 0
        %6211 = vmatprep.subr.mxu0 0.0
        %6212 = vmatpush1.msra.mxu0 0.0
        %6213 = vmatprep.subr.mxu0 0.0
        %6214 = vmatpush1.msra.mxu0 0.0
        %6215 = vmatprep.subr.mxu0 0.0
        %6216 = vmatpush1.msra.mxu0 0.0
        %6217 = vmatprep.subr.mxu0 0.0
        %6218 = vmatpush1.msra.mxu0 0.0
        %6219 = vmatprep.subr.mxu0 0.0
        %6220 = vmatpush1.msra.mxu0 0.0
        %6221 = vmatprep.subr.mxu0 0.0
        %6222 = vmatpush1.msra.mxu0 0.0
        %6223 = vmatprep.subr.mxu0 0.0
        %6224 = vmatpush1.msra.mxu0 0.0
        %6225 = vmatprep.subr.mxu0 0.0
        %6226 = vmatpush1.msra.mxu0 0.0
        %6227 = vmatprep.subr.mxu0 0.0
        %6228 = vmatpush1.msra.mxu0 0.0
        %6229 = vmatprep.subr.mxu0 0.0
        %6230 = vmatpush1.msra.mxu0 0.0
        %6231 = vmatprep.subr.mxu0 0.0
        %6232 = vmatpush1.msra.mxu0 0.0
        %6233 = vmatprep.subr.mxu0 0.0
        %6234 = vmatpush1.msra.mxu0 0.0
        %6235 = vmatprep.subr.mxu0 0.0
        %6236 = vmatpush1.msra.mxu0 0.0
        %6237 = vmatprep.subr.mxu0 0.0
        %6238 = vmatpush1.msra.mxu0 0.0
        %6239 = vmatprep.subr.mxu0 0.0
        %6240 = vmatpush1.msra.mxu0 0.0
        %6241 = vmatprep.subr.mxu0 0.0
        %6242 = vmatpush1.msra.mxu0 %v6206
        %6243 = vmatprep.subr.mxu0 0.0
        %6244 = vmatpush2.msra.mxu0 0.0
        %6245 = vmatprep.subr.mxu0 0.0
        %6246 = vmatpush2.msra.mxu0 0.0
        %6247 = vmatprep.subr.mxu0 0.0
        %6248 = vmatpush2.msra.mxu0 0.0
        %6249 = vmatprep.subr.mxu0 0.0
        %6250 = vmatpush2.msra.mxu0 0.0
        %6251 = vmatprep.subr.mxu0 0.0
        %6252 = vmatpush2.msra.mxu0 0.0
        %6253 = vmatprep.subr.mxu0 0.0
        %6254 = vmatpush2.msra.mxu0 0.0
        %6255 = vmatprep.subr.mxu0 0.0
        %6256 = vmatpush2.msra.mxu0 0.0
        %6257 = vmatprep.subr.mxu0 0.0
        %6258 = vmatpush2.msra.mxu0 0.0
        %6259 = vmatprep.subr.mxu0 0.0
        %6260 = vmatpush2.msra.mxu0 0.0
        %6261 = vmatprep.subr.mxu0 0.0
        %6262 = vmatpush2.msra.mxu0 0.0
        %6263 = vmatprep.subr.mxu0 0.0
        %6264 = vmatpush2.msra.mxu0 0.0
        %6265 = vmatprep.subr.mxu0 0.0
        %6266 = vmatpush2.msra.mxu0 0.0
        %6267 = vmatprep.subr.mxu0 0.0
        %6268 = vmatpush2.msra.mxu0 0.0
        %6269 = vmatprep.subr.mxu0 0.0
        %6270 = vmatpush2.msra.mxu0 0.0
        %6271 = vmatprep.subr.mxu0 0.0
        %6272 = vmatpush2.msra.mxu0 0.0
        %6273 = vmatprep.subr.mxu0 0.0
        %6274 = vmatpush2.msra.mxu0 0.0
        %6275 = vmatprep.mubr.f32.mxu0 0.0
        %6276 = vmatmul.mubr.f32.gmra.mxu0 %v6209
        %v6277 = vpop.f32.mrf.mxu0
        %v6278 = vadd.f32 0.0, %v6277
        %v6279 = vpop.f32.mrf.mxu0
        %6280 = vdwg.mxu0
        %6281 = vrot.lane.b32.xlu0 %v4472, 112
        %v6282 = vpop.permute.xlu0 %6281
        %v6285 = vsel %vm1237, %v6200, 0
        %6287 = vmatprep.subr.mxu0 0.0
        %6288 = vmatpush1.msra.mxu0 0.0
        %6289 = vmatprep.subr.mxu0 0.0
        %6290 = vmatpush1.msra.mxu0 0.0
        %6291 = vmatprep.subr.mxu0 0.0
        %6292 = vmatpush1.msra.mxu0 0.0
        %6293 = vmatprep.subr.mxu0 0.0
        %6294 = vmatpush1.msra.mxu0 0.0
        %6295 = vmatprep.subr.mxu0 0.0
        %6296 = vmatpush1.msra.mxu0 0.0
        %6297 = vmatprep.subr.mxu0 0.0
        %6298 = vmatpush1.msra.mxu0 0.0
        %6299 = vmatprep.subr.mxu0 0.0
        %6300 = vmatpush1.msra.mxu0 0.0
        %6301 = vmatprep.subr.mxu0 0.0
        %6302 = vmatpush1.msra.mxu0 0.0
        %6303 = vmatprep.subr.mxu0 0.0
        %6304 = vmatpush1.msra.mxu0 0.0
        %6305 = vmatprep.subr.mxu0 0.0
        %6306 = vmatpush1.msra.mxu0 0.0
        %6307 = vmatprep.subr.mxu0 0.0
        %6308 = vmatpush1.msra.mxu0 0.0
        %6309 = vmatprep.subr.mxu0 0.0
        %6310 = vmatpush1.msra.mxu0 0.0
        %6311 = vmatprep.subr.mxu0 0.0
        %6312 = vmatpush1.msra.mxu0 0.0
        %6313 = vmatprep.subr.mxu0 0.0
        %6314 = vmatpush1.msra.mxu0 0.0
        %6315 = vmatprep.subr.mxu0 0.0
        %6316 = vmatpush1.msra.mxu0 0.0
        %6317 = vmatprep.subr.mxu0 0.0
        %6318 = vmatpush1.msra.mxu0 %v6282
        %6319 = vmatprep.subr.mxu0 0.0
        %6320 = vmatpush2.msra.mxu0 0.0
        %6321 = vmatprep.subr.mxu0 0.0
        %6322 = vmatpush2.msra.mxu0 0.0
        %6323 = vmatprep.subr.mxu0 0.0
        %6324 = vmatpush2.msra.mxu0 0.0
        %6325 = vmatprep.subr.mxu0 0.0
        %6326 = vmatpush2.msra.mxu0 0.0
        %6327 = vmatprep.subr.mxu0 0.0
        %6328 = vmatpush2.msra.mxu0 0.0
        %6329 = vmatprep.subr.mxu0 0.0
        %6330 = vmatpush2.msra.mxu0 0.0
        %6331 = vmatprep.subr.mxu0 0.0
        %6332 = vmatpush2.msra.mxu0 0.0
        %6333 = vmatprep.subr.mxu0 0.0
        %6334 = vmatpush2.msra.mxu0 0.0
        %6335 = vmatprep.subr.mxu0 0.0
        %6336 = vmatpush2.msra.mxu0 0.0
        %6337 = vmatprep.subr.mxu0 0.0
        %6338 = vmatpush2.msra.mxu0 0.0
        %6339 = vmatprep.subr.mxu0 0.0
        %6340 = vmatpush2.msra.mxu0 0.0
        %6341 = vmatprep.subr.mxu0 0.0
        %6342 = vmatpush2.msra.mxu0 0.0
        %6343 = vmatprep.subr.mxu0 0.0
        %6344 = vmatpush2.msra.mxu0 0.0
        %6345 = vmatprep.subr.mxu0 0.0
        %6346 = vmatpush2.msra.mxu0 0.0
        %6347 = vmatprep.subr.mxu0 0.0
        %6348 = vmatpush2.msra.mxu0 0.0
        %6349 = vmatprep.subr.mxu0 0.0
        %6350 = vmatpush2.msra.mxu0 0.0
        %6351 = vmatprep.mubr.f32.mxu0 0.0
        %6352 = vmatmul.mubr.f32.gmra.mxu0 %v6285
        %v6353 = vpop.f32.mrf.mxu0
        %v6354 = vadd.f32 0.0, %v6353
        %v6355 = vpop.f32.mrf.mxu0
        %6356 = vdwg.mxu0
        %6357 = vrot.lane.b32.xlu0 %v4477, 112
        %v6358 = vpop.permute.xlu0 %6357
        %v6361 = vsel %vm1237, %v6202, 0
        %6363 = vmatprep.subr.mxu0 0.0
        %6364 = vmatpush1.msra.mxu0 0.0
        %6365 = vmatprep.subr.mxu0 0.0
        %6366 = vmatpush1.msra.mxu0 0.0
        %6367 = vmatprep.subr.mxu0 0.0
        %6368 = vmatpush1.msra.mxu0 0.0
        %6369 = vmatprep.subr.mxu0 0.0
        %6370 = vmatpush1.msra.mxu0 0.0
        %6371 = vmatprep.subr.mxu0 0.0
        %6372 = vmatpush1.msra.mxu0 0.0
        %6373 = vmatprep.subr.mxu0 0.0
        %6374 = vmatpush1.msra.mxu0 0.0
        %6375 = vmatprep.subr.mxu0 0.0
        %6376 = vmatpush1.msra.mxu0 0.0
        %6377 = vmatprep.subr.mxu0 0.0
        %6378 = vmatpush1.msra.mxu0 0.0
        %6379 = vmatprep.subr.mxu0 0.0
        %6380 = vmatpush1.msra.mxu0 0.0
        %6381 = vmatprep.subr.mxu0 0.0
        %6382 = vmatpush1.msra.mxu0 0.0
        %6383 = vmatprep.subr.mxu0 0.0
        %6384 = vmatpush1.msra.mxu0 0.0
        %6385 = vmatprep.subr.mxu0 0.0
        %6386 = vmatpush1.msra.mxu0 0.0
        %6387 = vmatprep.subr.mxu0 0.0
        %6388 = vmatpush1.msra.mxu0 0.0
        %6389 = vmatprep.subr.mxu0 0.0
        %6390 = vmatpush1.msra.mxu0 0.0
        %6391 = vmatprep.subr.mxu0 0.0
        %6392 = vmatpush1.msra.mxu0 0.0
        %6393 = vmatprep.subr.mxu0 0.0
        %6394 = vmatpush1.msra.mxu0 %v6358
        %6395 = vmatprep.subr.mxu0 0.0
        %6396 = vmatpush2.msra.mxu0 0.0
        %6397 = vmatprep.subr.mxu0 0.0
        %6398 = vmatpush2.msra.mxu0 0.0
        %6399 = vmatprep.subr.mxu0 0.0
        %6400 = vmatpush2.msra.mxu0 0.0
        %6401 = vmatprep.subr.mxu0 0.0
        %6402 = vmatpush2.msra.mxu0 0.0
        %6403 = vmatprep.subr.mxu0 0.0
        %6404 = vmatpush2.msra.mxu0 0.0
        %6405 = vmatprep.subr.mxu0 0.0
        %6406 = vmatpush2.msra.mxu0 0.0
        %6407 = vmatprep.subr.mxu0 0.0
        %6408 = vmatpush2.msra.mxu0 0.0
        %6409 = vmatprep.subr.mxu0 0.0
        %6410 = vmatpush2.msra.mxu0 0.0
        %6411 = vmatprep.subr.mxu0 0.0
        %6412 = vmatpush2.msra.mxu0 0.0
        %6413 = vmatprep.subr.mxu0 0.0
        %6414 = vmatpush2.msra.mxu0 0.0
        %6415 = vmatprep.subr.mxu0 0.0
        %6416 = vmatpush2.msra.mxu0 0.0
        %6417 = vmatprep.subr.mxu0 0.0
        %6418 = vmatpush2.msra.mxu0 0.0
        %6419 = vmatprep.subr.mxu0 0.0
        %6420 = vmatpush2.msra.mxu0 0.0
        %6421 = vmatprep.subr.mxu0 0.0
        %6422 = vmatpush2.msra.mxu0 0.0
        %6423 = vmatprep.subr.mxu0 0.0
        %6424 = vmatpush2.msra.mxu0 0.0
        %6425 = vmatprep.subr.mxu0 0.0
        %6426 = vmatpush2.msra.mxu0 0.0
        %6427 = vmatprep.mubr.f32.mxu0 0.0
        %6428 = vmatmul.mubr.f32.gmra.mxu0 %v6361
        %v6429 = vpop.f32.mrf.mxu0
        %v6430 = vadd.f32 0.0, %v6429
        %v6431 = vpop.f32.mrf.mxu0
        %6432 = vdwg.mxu0
        %6433 = vrot.lane.b32.xlu0 %v4480, 112
        %v6434 = vpop.permute.xlu0 %6433
        %v6437 = vsel %vm1237, %v6204, 0
        %6439 = vmatprep.subr.mxu0 0.0
        %6440 = vmatpush1.msra.mxu0 0.0
        %6441 = vmatprep.subr.mxu0 0.0
        %6442 = vmatpush1.msra.mxu0 0.0
        %6443 = vmatprep.subr.mxu0 0.0
        %6444 = vmatpush1.msra.mxu0 0.0
        %6445 = vmatprep.subr.mxu0 0.0
        %6446 = vmatpush1.msra.mxu0 0.0
        %6447 = vmatprep.subr.mxu0 0.0
        %6448 = vmatpush1.msra.mxu0 0.0
        %6449 = vmatprep.subr.mxu0 0.0
        %6450 = vmatpush1.msra.mxu0 0.0
        %6451 = vmatprep.subr.mxu0 0.0
        %6452 = vmatpush1.msra.mxu0 0.0
        %6453 = vmatprep.subr.mxu0 0.0
        %6454 = vmatpush1.msra.mxu0 0.0
        %6455 = vmatprep.subr.mxu0 0.0
        %6456 = vmatpush1.msra.mxu0 0.0
        %6457 = vmatprep.subr.mxu0 0.0
        %6458 = vmatpush1.msra.mxu0 0.0
        %6459 = vmatprep.subr.mxu0 0.0
        %6460 = vmatpush1.msra.mxu0 0.0
        %6461 = vmatprep.subr.mxu0 0.0
        %6462 = vmatpush1.msra.mxu0 0.0
        %6463 = vmatprep.subr.mxu0 0.0
        %6464 = vmatpush1.msra.mxu0 0.0
        %6465 = vmatprep.subr.mxu0 0.0
        %6466 = vmatpush1.msra.mxu0 0.0
        %6467 = vmatprep.subr.mxu0 0.0
        %6468 = vmatpush1.msra.mxu0 0.0
        %6469 = vmatprep.subr.mxu0 0.0
        %6470 = vmatpush1.msra.mxu0 %v6434
        %6471 = vmatprep.subr.mxu0 0.0
        %6472 = vmatpush2.msra.mxu0 0.0
        %6473 = vmatprep.subr.mxu0 0.0
        %6474 = vmatpush2.msra.mxu0 0.0
        %6475 = vmatprep.subr.mxu0 0.0
        %6476 = vmatpush2.msra.mxu0 0.0
        %6477 = vmatprep.subr.mxu0 0.0
        %6478 = vmatpush2.msra.mxu0 0.0
        %6479 = vmatprep.subr.mxu0 0.0
        %6480 = vmatpush2.msra.mxu0 0.0
        %6481 = vmatprep.subr.mxu0 0.0
        %6482 = vmatpush2.msra.mxu0 0.0
        %6483 = vmatprep.subr.mxu0 0.0
        %6484 = vmatpush2.msra.mxu0 0.0
        %6485 = vmatprep.subr.mxu0 0.0
        %6486 = vmatpush2.msra.mxu0 0.0
        %6487 = vmatprep.subr.mxu0 0.0
        %6488 = vmatpush2.msra.mxu0 0.0
        %6489 = vmatprep.subr.mxu0 0.0
        %6490 = vmatpush2.msra.mxu0 0.0
        %6491 = vmatprep.subr.mxu0 0.0
        %6492 = vmatpush2.msra.mxu0 0.0
        %6493 = vmatprep.subr.mxu0 0.0
        %6494 = vmatpush2.msra.mxu0 0.0
        %6495 = vmatprep.subr.mxu0 0.0
        %6496 = vmatpush2.msra.mxu0 0.0
        %6497 = vmatprep.subr.mxu0 0.0
        %6498 = vmatpush2.msra.mxu0 0.0
        %6499 = vmatprep.subr.mxu0 0.0
        %6500 = vmatpush2.msra.mxu0 0.0
        %6501 = vmatprep.subr.mxu0 0.0
        %6502 = vmatpush2.msra.mxu0 0.0
        %6503 = vmatprep.mubr.f32.mxu0 0.0
        %6504 = vmatmul.mubr.f32.gmra.mxu0 %v6437
        %v6505 = vpop.f32.mrf.mxu0
        %v6506 = vadd.f32 0.0, %v6505
        %v6507 = vpop.f32.mrf.mxu0
        %6508 = vdwg.mxu0
        %6509 = vrot.lane.b32.xlu0 %v5156, 104
        %v6510 = vpop.permute.xlu0 %6509
        %6511 = vrot.lane.b32.xlu0 %v4395, 104
        %v6512 = vpop.permute.xlu0 %6511
        %v6513 = vsel %vm1237, %v6510, 0
        %v6515 = vsel %vm1237, %v6512, 0
        %6517 = vmatprep.subr.mxu0 0.0
        %6518 = vmatpush1.xpose.msra.mxu0 0.0
        %6519 = vmatprep.subr.mxu0 0.0
        %6520 = vmatpush1.xpose.msra.mxu0 0.0
        %6521 = vmatprep.subr.mxu0 0.0
        %6522 = vmatpush1.xpose.msra.mxu0 0.0
        %6523 = vmatprep.subr.mxu0 0.0
        %6524 = vmatpush1.xpose.msra.mxu0 0.0
        %6525 = vmatprep.subr.mxu0 0.0
        %6526 = vmatpush1.xpose.msra.mxu0 0.0
        %6527 = vmatprep.subr.mxu0 0.0
        %6528 = vmatpush1.xpose.msra.mxu0 0.0
        %6529 = vmatprep.subr.mxu0 0.0
        %6530 = vmatpush1.xpose.msra.mxu0 0.0
        %6531 = vmatprep.subr.mxu0 0.0
        %6532 = vmatpush1.xpose.msra.mxu0 0.0
        %6533 = vmatprep.subr.mxu0 0.0
        %6534 = vmatpush1.xpose.msra.mxu0 0.0
        %6535 = vmatprep.subr.mxu0 0.0
        %6536 = vmatpush1.xpose.msra.mxu0 0.0
        %6537 = vmatprep.subr.mxu0 0.0
        %6538 = vmatpush1.xpose.msra.mxu0 0.0
        %6539 = vmatprep.subr.mxu0 0.0
        %6540 = vmatpush1.xpose.msra.mxu0 0.0
        %6541 = vmatprep.subr.mxu0 0.0
        %6542 = vmatpush1.xpose.msra.mxu0 0.0
        %6543 = vmatprep.subr.mxu0 0.0
        %6544 = vmatpush1.xpose.msra.mxu0 0.0
        %6545 = vmatprep.subr.mxu0 0.0
        %6546 = vmatpush1.xpose.msra.mxu0 0.0
        %6547 = vmatprep.subr.mxu0 0.0
        %6548 = vmatpush1.xpose.msra.mxu0 %v6515
        %6549 = vmatprep.subr.mxu0 0.0
        %6550 = vmatpush2.xpose.msra.mxu0 0.0
        %6551 = vmatprep.subr.mxu0 0.0
        %6552 = vmatpush2.xpose.msra.mxu0 0.0
        %6553 = vmatprep.subr.mxu0 0.0
        %6554 = vmatpush2.xpose.msra.mxu0 0.0
        %6555 = vmatprep.subr.mxu0 0.0
        %6556 = vmatpush2.xpose.msra.mxu0 0.0
        %6557 = vmatprep.subr.mxu0 0.0
        %6558 = vmatpush2.xpose.msra.mxu0 0.0
        %6559 = vmatprep.subr.mxu0 0.0
        %6560 = vmatpush2.xpose.msra.mxu0 0.0
        %6561 = vmatprep.subr.mxu0 0.0
        %6562 = vmatpush2.xpose.msra.mxu0 0.0
        %6563 = vmatprep.subr.mxu0 0.0
        %6564 = vmatpush2.xpose.msra.mxu0 0.0
        %6565 = vmatprep.subr.mxu0 0.0
        %6566 = vmatpush2.xpose.msra.mxu0 0.0
        %6567 = vmatprep.subr.mxu0 0.0
        %6568 = vmatpush2.xpose.msra.mxu0 0.0
        %6569 = vmatprep.subr.mxu0 0.0
        %6570 = vmatpush2.xpose.msra.mxu0 0.0
        %6571 = vmatprep.subr.mxu0 0.0
        %6572 = vmatpush2.xpose.msra.mxu0 0.0
        %6573 = vmatprep.subr.mxu0 0.0
        %6574 = vmatpush2.xpose.msra.mxu0 0.0
        %6575 = vmatprep.subr.mxu0 0.0
        %6576 = vmatpush2.xpose.msra.mxu0 0.0
        %6577 = vmatprep.subr.mxu0 0.0
        %6578 = vmatpush2.xpose.msra.mxu0 0.0
        %6579 = vmatprep.subr.mxu0 0.0
        %6580 = vmatpush2.xpose.msra.mxu0 0.0
        %6581 = vmatprep.mubr.f32.mxu0 0.0
        %6582 = vmatmul.mubr.f32.gmra.mxu0 %v6513
        %v6583 = vpop.f32.mrf.mxu0
        %v6584 = vadd.f32 0.0, %v6583
        %v6585 = vpop.f32.mrf.mxu0
        %6586 = vdwg.mxu0
        %6587 = vrot.lane.b32.xlu0 %v5238, 104
        %v6588 = vpop.permute.xlu0 %6587
        %6589 = vrot.lane.b32.xlu0 %v4398, 104
        %v6590 = vpop.permute.xlu0 %6589
        %v6591 = vsel %vm1237, %v6588, 0
        %v6593 = vsel %vm1237, %v6590, 0
        %6595 = vmatprep.subr.mxu0 0.0
        %6596 = vmatpush1.xpose.msra.mxu0 0.0
        %6597 = vmatprep.subr.mxu0 0.0
        %6598 = vmatpush1.xpose.msra.mxu0 0.0
        %6599 = vmatprep.subr.mxu0 0.0
        %6600 = vmatpush1.xpose.msra.mxu0 0.0
        %6601 = vmatprep.subr.mxu0 0.0
        %6602 = vmatpush1.xpose.msra.mxu0 0.0
        %6603 = vmatprep.subr.mxu0 0.0
        %6604 = vmatpush1.xpose.msra.mxu0 0.0
        %6605 = vmatprep.subr.mxu0 0.0
        %6606 = vmatpush1.xpose.msra.mxu0 0.0
        %6607 = vmatprep.subr.mxu0 0.0
        %6608 = vmatpush1.xpose.msra.mxu0 0.0
        %6609 = vmatprep.subr.mxu0 0.0
        %6610 = vmatpush1.xpose.msra.mxu0 0.0
        %6611 = vmatprep.subr.mxu0 0.0
        %6612 = vmatpush1.xpose.msra.mxu0 0.0
        %6613 = vmatprep.subr.mxu0 0.0
        %6614 = vmatpush1.xpose.msra.mxu0 0.0
        %6615 = vmatprep.subr.mxu0 0.0
        %6616 = vmatpush1.xpose.msra.mxu0 0.0
        %6617 = vmatprep.subr.mxu0 0.0
        %6618 = vmatpush1.xpose.msra.mxu0 0.0
        %6619 = vmatprep.subr.mxu0 0.0
        %6620 = vmatpush1.xpose.msra.mxu0 0.0
        %6621 = vmatprep.subr.mxu0 0.0
        %6622 = vmatpush1.xpose.msra.mxu0 0.0
        %6623 = vmatprep.subr.mxu0 0.0
        %6624 = vmatpush1.xpose.msra.mxu0 0.0
        %6625 = vmatprep.subr.mxu0 0.0
        %6626 = vmatpush1.xpose.msra.mxu0 %v6593
        %6627 = vmatprep.subr.mxu0 0.0
        %6628 = vmatpush2.xpose.msra.mxu0 0.0
        %6629 = vmatprep.subr.mxu0 0.0
        %6630 = vmatpush2.xpose.msra.mxu0 0.0
        %6631 = vmatprep.subr.mxu0 0.0
        %6632 = vmatpush2.xpose.msra.mxu0 0.0
        %6633 = vmatprep.subr.mxu0 0.0
        %6634 = vmatpush2.xpose.msra.mxu0 0.0
        %6635 = vmatprep.subr.mxu0 0.0
        %6636 = vmatpush2.xpose.msra.mxu0 0.0
        %6637 = vmatprep.subr.mxu0 0.0
        %6638 = vmatpush2.xpose.msra.mxu0 0.0
        %6639 = vmatprep.subr.mxu0 0.0
        %6640 = vmatpush2.xpose.msra.mxu0 0.0
        %6641 = vmatprep.subr.mxu0 0.0
        %6642 = vmatpush2.xpose.msra.mxu0 0.0
        %6643 = vmatprep.subr.mxu0 0.0
        %6644 = vmatpush2.xpose.msra.mxu0 0.0
        %6645 = vmatprep.subr.mxu0 0.0
        %6646 = vmatpush2.xpose.msra.mxu0 0.0
        %6647 = vmatprep.subr.mxu0 0.0
        %6648 = vmatpush2.xpose.msra.mxu0 0.0
        %6649 = vmatprep.subr.mxu0 0.0
        %6650 = vmatpush2.xpose.msra.mxu0 0.0
        %6651 = vmatprep.subr.mxu0 0.0
        %6652 = vmatpush2.xpose.msra.mxu0 0.0
        %6653 = vmatprep.subr.mxu0 0.0
        %6654 = vmatpush2.xpose.msra.mxu0 0.0
        %6655 = vmatprep.subr.mxu0 0.0
        %6656 = vmatpush2.xpose.msra.mxu0 0.0
        %6657 = vmatprep.subr.mxu0 0.0
        %6658 = vmatpush2.xpose.msra.mxu0 0.0
        %6659 = vmatprep.mubr.f32.mxu0 0.0
        %6660 = vmatmul.mubr.f32.gmra.mxu0 %v6591
        %v6661 = vpop.f32.mrf.mxu0
        %v6662 = vadd.f32 0.0, %v6661
        %v6663 = vpop.f32.mrf.mxu0
        %6664 = vdwg.mxu0
        %6665 = vrot.lane.b32.xlu0 %v5320, 104
        %v6666 = vpop.permute.xlu0 %6665
        %6667 = vrot.lane.b32.xlu0 %v4403, 104
        %v6668 = vpop.permute.xlu0 %6667
        %v6669 = vsel %vm1237, %v6666, 0
        %v6671 = vsel %vm1237, %v6668, 0
        %6673 = vmatprep.subr.mxu0 0.0
        %6674 = vmatpush1.xpose.msra.mxu0 0.0
        %6675 = vmatprep.subr.mxu0 0.0
        %6676 = vmatpush1.xpose.msra.mxu0 0.0
        %6677 = vmatprep.subr.mxu0 0.0
        %6678 = vmatpush1.xpose.msra.mxu0 0.0
        %6679 = vmatprep.subr.mxu0 0.0
        %6680 = vmatpush1.xpose.msra.mxu0 0.0
        %6681 = vmatprep.subr.mxu0 0.0
        %6682 = vmatpush1.xpose.msra.mxu0 0.0
        %6683 = vmatprep.subr.mxu0 0.0
        %6684 = vmatpush1.xpose.msra.mxu0 0.0
        %6685 = vmatprep.subr.mxu0 0.0
        %6686 = vmatpush1.xpose.msra.mxu0 0.0
        %6687 = vmatprep.subr.mxu0 0.0
        %6688 = vmatpush1.xpose.msra.mxu0 0.0
        %6689 = vmatprep.subr.mxu0 0.0
        %6690 = vmatpush1.xpose.msra.mxu0 0.0
        %6691 = vmatprep.subr.mxu0 0.0
        %6692 = vmatpush1.xpose.msra.mxu0 0.0
        %6693 = vmatprep.subr.mxu0 0.0
        %6694 = vmatpush1.xpose.msra.mxu0 0.0
        %6695 = vmatprep.subr.mxu0 0.0
        %6696 = vmatpush1.xpose.msra.mxu0 0.0
        %6697 = vmatprep.subr.mxu0 0.0
        %6698 = vmatpush1.xpose.msra.mxu0 0.0
        %6699 = vmatprep.subr.mxu0 0.0
        %6700 = vmatpush1.xpose.msra.mxu0 0.0
        %6701 = vmatprep.subr.mxu0 0.0
        %6702 = vmatpush1.xpose.msra.mxu0 0.0
        %6703 = vmatprep.subr.mxu0 0.0
        %6704 = vmatpush1.xpose.msra.mxu0 %v6671
        %6705 = vmatprep.subr.mxu0 0.0
        %6706 = vmatpush2.xpose.msra.mxu0 0.0
        %6707 = vmatprep.subr.mxu0 0.0
        %6708 = vmatpush2.xpose.msra.mxu0 0.0
        %6709 = vmatprep.subr.mxu0 0.0
        %6710 = vmatpush2.xpose.msra.mxu0 0.0
        %6711 = vmatprep.subr.mxu0 0.0
        %6712 = vmatpush2.xpose.msra.mxu0 0.0
        %6713 = vmatprep.subr.mxu0 0.0
        %6714 = vmatpush2.xpose.msra.mxu0 0.0
        %6715 = vmatprep.subr.mxu0 0.0
        %6716 = vmatpush2.xpose.msra.mxu0 0.0
        %6717 = vmatprep.subr.mxu0 0.0
        %6718 = vmatpush2.xpose.msra.mxu0 0.0
        %6719 = vmatprep.subr.mxu0 0.0
        %6720 = vmatpush2.xpose.msra.mxu0 0.0
        %6721 = vmatprep.subr.mxu0 0.0
        %6722 = vmatpush2.xpose.msra.mxu0 0.0
        %6723 = vmatprep.subr.mxu0 0.0
        %6724 = vmatpush2.xpose.msra.mxu0 0.0
        %6725 = vmatprep.subr.mxu0 0.0
        %6726 = vmatpush2.xpose.msra.mxu0 0.0
        %6727 = vmatprep.subr.mxu0 0.0
        %6728 = vmatpush2.xpose.msra.mxu0 0.0
        %6729 = vmatprep.subr.mxu0 0.0
        %6730 = vmatpush2.xpose.msra.mxu0 0.0
        %6731 = vmatprep.subr.mxu0 0.0
        %6732 = vmatpush2.xpose.msra.mxu0 0.0
        %6733 = vmatprep.subr.mxu0 0.0
        %6734 = vmatpush2.xpose.msra.mxu0 0.0
        %6735 = vmatprep.subr.mxu0 0.0
        %6736 = vmatpush2.xpose.msra.mxu0 0.0
        %6737 = vmatprep.mubr.f32.mxu0 0.0
        %6738 = vmatmul.mubr.f32.gmra.mxu0 %v6669
        %v6739 = vpop.f32.mrf.mxu0
        %v6740 = vadd.f32 0.0, %v6739
        %v6741 = vpop.f32.mrf.mxu0
        %6742 = vdwg.mxu0
        %6743 = vrot.lane.b32.xlu0 %v5402, 104
        %v6744 = vpop.permute.xlu0 %6743
        %6745 = vrot.lane.b32.xlu0 %v4406, 104
        %v6746 = vpop.permute.xlu0 %6745
        %v6747 = vsel %vm1237, %v6744, 0
        %v6749 = vsel %vm1237, %v6746, 0
        %6751 = vmatprep.subr.mxu0 0.0
        %6752 = vmatpush1.xpose.msra.mxu0 0.0
        %6753 = vmatprep.subr.mxu0 0.0
        %6754 = vmatpush1.xpose.msra.mxu0 0.0
        %6755 = vmatprep.subr.mxu0 0.0
        %6756 = vmatpush1.xpose.msra.mxu0 0.0
        %6757 = vmatprep.subr.mxu0 0.0
        %6758 = vmatpush1.xpose.msra.mxu0 0.0
        %6759 = vmatprep.subr.mxu0 0.0
        %6760 = vmatpush1.xpose.msra.mxu0 0.0
        %6761 = vmatprep.subr.mxu0 0.0
        %6762 = vmatpush1.xpose.msra.mxu0 0.0
        %6763 = vmatprep.subr.mxu0 0.0
        %6764 = vmatpush1.xpose.msra.mxu0 0.0
        %6765 = vmatprep.subr.mxu0 0.0
        %6766 = vmatpush1.xpose.msra.mxu0 0.0
        %6767 = vmatprep.subr.mxu0 0.0
        %6768 = vmatpush1.xpose.msra.mxu0 0.0
        %6769 = vmatprep.subr.mxu0 0.0
        %6770 = vmatpush1.xpose.msra.mxu0 0.0
        %6771 = vmatprep.subr.mxu0 0.0
        %6772 = vmatpush1.xpose.msra.mxu0 0.0
        %6773 = vmatprep.subr.mxu0 0.0
        %6774 = vmatpush1.xpose.msra.mxu0 0.0
        %6775 = vmatprep.subr.mxu0 0.0
        %6776 = vmatpush1.xpose.msra.mxu0 0.0
        %6777 = vmatprep.subr.mxu0 0.0
        %6778 = vmatpush1.xpose.msra.mxu0 0.0
        %6779 = vmatprep.subr.mxu0 0.0
        %6780 = vmatpush1.xpose.msra.mxu0 0.0
        %6781 = vmatprep.subr.mxu0 0.0
        %6782 = vmatpush1.xpose.msra.mxu0 %v6749
        %6783 = vmatprep.subr.mxu0 0.0
        %6784 = vmatpush2.xpose.msra.mxu0 0.0
        %6785 = vmatprep.subr.mxu0 0.0
        %6786 = vmatpush2.xpose.msra.mxu0 0.0
        %6787 = vmatprep.subr.mxu0 0.0
        %6788 = vmatpush2.xpose.msra.mxu0 0.0
        %6789 = vmatprep.subr.mxu0 0.0
        %6790 = vmatpush2.xpose.msra.mxu0 0.0
        %6791 = vmatprep.subr.mxu0 0.0
        %6792 = vmatpush2.xpose.msra.mxu0 0.0
        %6793 = vmatprep.subr.mxu0 0.0
        %6794 = vmatpush2.xpose.msra.mxu0 0.0
        %6795 = vmatprep.subr.mxu0 0.0
        %6796 = vmatpush2.xpose.msra.mxu0 0.0
        %6797 = vmatprep.subr.mxu0 0.0
        %6798 = vmatpush2.xpose.msra.mxu0 0.0
        %6799 = vmatprep.subr.mxu0 0.0
        %6800 = vmatpush2.xpose.msra.mxu0 0.0
        %6801 = vmatprep.subr.mxu0 0.0
        %6802 = vmatpush2.xpose.msra.mxu0 0.0
        %6803 = vmatprep.subr.mxu0 0.0
        %6804 = vmatpush2.xpose.msra.mxu0 0.0
        %6805 = vmatprep.subr.mxu0 0.0
        %6806 = vmatpush2.xpose.msra.mxu0 0.0
        %6807 = vmatprep.subr.mxu0 0.0
        %6808 = vmatpush2.xpose.msra.mxu0 0.0
        %6809 = vmatprep.subr.mxu0 0.0
        %6810 = vmatpush2.xpose.msra.mxu0 0.0
        %6811 = vmatprep.subr.mxu0 0.0
        %6812 = vmatpush2.xpose.msra.mxu0 0.0
        %6813 = vmatprep.subr.mxu0 0.0
        %6814 = vmatpush2.xpose.msra.mxu0 0.0
        %6815 = vmatprep.mubr.f32.mxu0 0.0
        %6816 = vmatmul.mubr.f32.gmra.mxu0 %v6747
        %v6817 = vpop.f32.mrf.mxu0
        %v6818 = vadd.f32 0.0, %v6817
        %v6819 = vpop.f32.mrf.mxu0
        %6820 = vdwg.mxu0
        %v6821 = vmul.f32 %v6584, 0.35355338
        %v6822 = vmul.f32 %v6662, 0.35355338
        %v6823 = vmul.f32 %v6740, 0.35355338
        %v6824 = vmul.f32 %v6818, 0.35355338
        %v6825 = vadd.f32 %v6821, %v4256
        %v6826 = vadd.f32 %v6822, %v4257
        %v6827 = vadd.f32 %v6823, %v4258
        %v6828 = vadd.f32 %v6824, %v4259
        %v6829 = vsel %vm4816, %v6825, -inf
        %6830 = vmax.xlane.f32.xlu0 %v6829
        %v6831 = vpop.xlane.xlu0 %6830
        %v6832 = vsel %vm4816, %v6826, -inf
        %6833 = vmax.xlane.f32.xlu0 %v6832
        %v6834 = vpop.xlane.xlu0 %6833
        %v6835 = vsel %vm4816, %v6827, -inf
        %6836 = vmax.xlane.f32.xlu0 %v6835
        %v6837 = vpop.xlane.xlu0 %6836
        %v6838 = vsel %vm4816, %v6828, -inf
        %6839 = vmax.xlane.f32.xlu0 %v6838
        %v6840 = vpop.xlane.xlu0 %6839
        %v6841 = vsub.f32 %v6825, %v6831
        %v6842 = vsub.f32 %v6826, %v6834
        %v6843 = vsub.f32 %v6827, %v6837
        %v6844 = vsub.f32 %v6828, %v6840
        %v6845 = vmul.f32 %v6841, 1.442695
        %v6846 = vpow.pop %v6845
        %v6847 = vmul.f32 %v6842, 1.442695
        %v6848 = vpow.pop %v6847
        %v6849 = vmul.f32 %v6843, 1.442695
        %v6850 = vpow.pop %v6849
        %v6851 = vmul.f32 %v6844, 1.442695
        %v6852 = vpow.pop %v6851
        %v6853 = vsel %vm4816, %v6846, 0.0
        %6854 = vadd.xlane.f32.xlu0 %v6853
        %v6855 = vpop.xlane.xlu0 %6854
        %v6856 = vsel %vm4816, %v6848, 0.0
        %6857 = vadd.xlane.f32.xlu0 %v6856
        %v6858 = vpop.xlane.xlu0 %6857
        %v6859 = vsel %vm4816, %v6850, 0.0
        %6860 = vadd.xlane.f32.xlu0 %v6859
        %v6861 = vpop.xlane.xlu0 %6860
        %v6862 = vsel %vm4816, %v6852, 0.0
        %6863 = vadd.xlane.f32.xlu0 %v6862
        %v6864 = vpop.xlane.xlu0 %6863
        %v6865 = vrcp.pop %v6855
        %v6866 = vmul.f32 %v6846, %v6865
        %v6867 = vrcp.pop %v6858
        %v6868 = vmul.f32 %v6848, %v6867
        %v6869 = vrcp.pop %v6861
        %v6870 = vmul.f32 %v6850, %v6869
        %v6871 = vrcp.pop %v6864
        %v6872 = vmul.f32 %v6852, %v6871
        %6873 = vrot.lane.b32.xlu0 %v4469, 104
        %v6874 = vpop.permute.xlu0 %6873
        %v6877 = vsel %vm1237, %v6866, 0
        %6879 = vmatprep.subr.mxu0 0.0
        %6880 = vmatpush1.msra.mxu0 0.0
        %6881 = vmatprep.subr.mxu0 0.0
        %6882 = vmatpush1.msra.mxu0 0.0
        %6883 = vmatprep.subr.mxu0 0.0
        %6884 = vmatpush1.msra.mxu0 0.0
        %6885 = vmatprep.subr.mxu0 0.0
        %6886 = vmatpush1.msra.mxu0 0.0
        %6887 = vmatprep.subr.mxu0 0.0
        %6888 = vmatpush1.msra.mxu0 0.0
        %6889 = vmatprep.subr.mxu0 0.0
        %6890 = vmatpush1.msra.mxu0 0.0
        %6891 = vmatprep.subr.mxu0 0.0
        %6892 = vmatpush1.msra.mxu0 0.0
        %6893 = vmatprep.subr.mxu0 0.0
        %6894 = vmatpush1.msra.mxu0 0.0
        %6895 = vmatprep.subr.mxu0 0.0
        %6896 = vmatpush1.msra.mxu0 0.0
        %6897 = vmatprep.subr.mxu0 0.0
        %6898 = vmatpush1.msra.mxu0 0.0
        %6899 = vmatprep.subr.mxu0 0.0
        %6900 = vmatpush1.msra.mxu0 0.0
        %6901 = vmatprep.subr.mxu0 0.0
        %6902 = vmatpush1.msra.mxu0 0.0
        %6903 = vmatprep.subr.mxu0 0.0
        %6904 = vmatpush1.msra.mxu0 0.0
        %6905 = vmatprep.subr.mxu0 0.0
        %6906 = vmatpush1.msra.mxu0 0.0
        %6907 = vmatprep.subr.mxu0 0.0
        %6908 = vmatpush1.msra.mxu0 0.0
        %6909 = vmatprep.subr.mxu0 0.0
        %6910 = vmatpush1.msra.mxu0 %v6874
        %6911 = vmatprep.subr.mxu0 0.0
        %6912 = vmatpush2.msra.mxu0 0.0
        %6913 = vmatprep.subr.mxu0 0.0
        %6914 = vmatpush2.msra.mxu0 0.0
        %6915 = vmatprep.subr.mxu0 0.0
        %6916 = vmatpush2.msra.mxu0 0.0
        %6917 = vmatprep.subr.mxu0 0.0
        %6918 = vmatpush2.msra.mxu0 0.0
        %6919 = vmatprep.subr.mxu0 0.0
        %6920 = vmatpush2.msra.mxu0 0.0
        %6921 = vmatprep.subr.mxu0 0.0
        %6922 = vmatpush2.msra.mxu0 0.0
        %6923 = vmatprep.subr.mxu0 0.0
        %6924 = vmatpush2.msra.mxu0 0.0
        %6925 = vmatprep.subr.mxu0 0.0
        %6926 = vmatpush2.msra.mxu0 0.0
        %6927 = vmatprep.subr.mxu0 0.0
        %6928 = vmatpush2.msra.mxu0 0.0
        %6929 = vmatprep.subr.mxu0 0.0
        %6930 = vmatpush2.msra.mxu0 0.0
        %6931 = vmatprep.subr.mxu0 0.0
        %6932 = vmatpush2.msra.mxu0 0.0
        %6933 = vmatprep.subr.mxu0 0.0
        %6934 = vmatpush2.msra.mxu0 0.0
        %6935 = vmatprep.subr.mxu0 0.0
        %6936 = vmatpush2.msra.mxu0 0.0
        %6937 = vmatprep.subr.mxu0 0.0
        %6938 = vmatpush2.msra.mxu0 0.0
        %6939 = vmatprep.subr.mxu0 0.0
        %6940 = vmatpush2.msra.mxu0 0.0
        %6941 = vmatprep.subr.mxu0 0.0
        %6942 = vmatpush2.msra.mxu0 0.0
        %6943 = vmatprep.mubr.f32.mxu0 0.0
        %6944 = vmatmul.mubr.f32.gmra.mxu0 %v6877
        %v6945 = vpop.f32.mrf.mxu0
        %v6946 = vadd.f32 0.0, %v6945
        %v6947 = vpop.f32.mrf.mxu0
        %6948 = vdwg.mxu0
        %6949 = vrot.lane.b32.xlu0 %v4472, 104
        %v6950 = vpop.permute.xlu0 %6949
        %v6953 = vsel %vm1237, %v6868, 0
        %6955 = vmatprep.subr.mxu0 0.0
        %6956 = vmatpush1.msra.mxu0 0.0
        %6957 = vmatprep.subr.mxu0 0.0
        %6958 = vmatpush1.msra.mxu0 0.0
        %6959 = vmatprep.subr.mxu0 0.0
        %6960 = vmatpush1.msra.mxu0 0.0
        %6961 = vmatprep.subr.mxu0 0.0
        %6962 = vmatpush1.msra.mxu0 0.0
        %6963 = vmatprep.subr.mxu0 0.0
        %6964 = vmatpush1.msra.mxu0 0.0
        %6965 = vmatprep.subr.mxu0 0.0
        %6966 = vmatpush1.msra.mxu0 0.0
        %6967 = vmatprep.subr.mxu0 0.0
        %6968 = vmatpush1.msra.mxu0 0.0
        %6969 = vmatprep.subr.mxu0 0.0
        %6970 = vmatpush1.msra.mxu0 0.0
        %6971 = vmatprep.subr.mxu0 0.0
        %6972 = vmatpush1.msra.mxu0 0.0
        %6973 = vmatprep.subr.mxu0 0.0
        %6974 = vmatpush1.msra.mxu0 0.0
        %6975 = vmatprep.subr.mxu0 0.0
        %6976 = vmatpush1.msra.mxu0 0.0
        %6977 = vmatprep.subr.mxu0 0.0
        %6978 = vmatpush1.msra.mxu0 0.0
        %6979 = vmatprep.subr.mxu0 0.0
        %6980 = vmatpush1.msra.mxu0 0.0
        %6981 = vmatprep.subr.mxu0 0.0
        %6982 = vmatpush1.msra.mxu0 0.0
        %6983 = vmatprep.subr.mxu0 0.0
        %6984 = vmatpush1.msra.mxu0 0.0
        %6985 = vmatprep.subr.mxu0 0.0
        %6986 = vmatpush1.msra.mxu0 %v6950
        %6987 = vmatprep.subr.mxu0 0.0
        %6988 = vmatpush2.msra.mxu0 0.0
        %6989 = vmatprep.subr.mxu0 0.0
        %6990 = vmatpush2.msra.mxu0 0.0
        %6991 = vmatprep.subr.mxu0 0.0
        %6992 = vmatpush2.msra.mxu0 0.0
        %6993 = vmatprep.subr.mxu0 0.0
        %6994 = vmatpush2.msra.mxu0 0.0
        %6995 = vmatprep.subr.mxu0 0.0
        %6996 = vmatpush2.msra.mxu0 0.0
        %6997 = vmatprep.subr.mxu0 0.0
        %6998 = vmatpush2.msra.mxu0 0.0
        %6999 = vmatprep.subr.mxu0 0.0
        %7000 = vmatpush2.msra.mxu0 0.0
        %7001 = vmatprep.subr.mxu0 0.0
        %7002 = vmatpush2.msra.mxu0 0.0
        %7003 = vmatprep.subr.mxu0 0.0
        %7004 = vmatpush2.msra.mxu0 0.0
        %7005 = vmatprep.subr.mxu0 0.0
        %7006 = vmatpush2.msra.mxu0 0.0
        %7007 = vmatprep.subr.mxu0 0.0
        %7008 = vmatpush2.msra.mxu0 0.0
        %7009 = vmatprep.subr.mxu0 0.0
        %7010 = vmatpush2.msra.mxu0 0.0
        %7011 = vmatprep.subr.mxu0 0.0
        %7012 = vmatpush2.msra.mxu0 0.0
        %7013 = vmatprep.subr.mxu0 0.0
        %7014 = vmatpush2.msra.mxu0 0.0
        %7015 = vmatprep.subr.mxu0 0.0
        %7016 = vmatpush2.msra.mxu0 0.0
        %7017 = vmatprep.subr.mxu0 0.0
        %7018 = vmatpush2.msra.mxu0 0.0
        %7019 = vmatprep.mubr.f32.mxu0 0.0
        %7020 = vmatmul.mubr.f32.gmra.mxu0 %v6953
        %v7021 = vpop.f32.mrf.mxu0
        %v7022 = vadd.f32 0.0, %v7021
        %v7023 = vpop.f32.mrf.mxu0
        %7024 = vdwg.mxu0
        %7025 = vrot.lane.b32.xlu0 %v4477, 104
        %v7026 = vpop.permute.xlu0 %7025
        %v7029 = vsel %vm1237, %v6870, 0
        %7031 = vmatprep.subr.mxu0 0.0
        %7032 = vmatpush1.msra.mxu0 0.0
        %7033 = vmatprep.subr.mxu0 0.0
        %7034 = vmatpush1.msra.mxu0 0.0
        %7035 = vmatprep.subr.mxu0 0.0
        %7036 = vmatpush1.msra.mxu0 0.0
        %7037 = vmatprep.subr.mxu0 0.0
        %7038 = vmatpush1.msra.mxu0 0.0
        %7039 = vmatprep.subr.mxu0 0.0
        %7040 = vmatpush1.msra.mxu0 0.0
        %7041 = vmatprep.subr.mxu0 0.0
        %7042 = vmatpush1.msra.mxu0 0.0
        %7043 = vmatprep.subr.mxu0 0.0
        %7044 = vmatpush1.msra.mxu0 0.0
        %7045 = vmatprep.subr.mxu0 0.0
        %7046 = vmatpush1.msra.mxu0 0.0
        %7047 = vmatprep.subr.mxu0 0.0
        %7048 = vmatpush1.msra.mxu0 0.0
        %7049 = vmatprep.subr.mxu0 0.0
        %7050 = vmatpush1.msra.mxu0 0.0
        %7051 = vmatprep.subr.mxu0 0.0
        %7052 = vmatpush1.msra.mxu0 0.0
        %7053 = vmatprep.subr.mxu0 0.0
        %7054 = vmatpush1.msra.mxu0 0.0
        %7055 = vmatprep.subr.mxu0 0.0
        %7056 = vmatpush1.msra.mxu0 0.0
        %7057 = vmatprep.subr.mxu0 0.0
        %7058 = vmatpush1.msra.mxu0 0.0
        %7059 = vmatprep.subr.mxu0 0.0
        %7060 = vmatpush1.msra.mxu0 0.0
        %7061 = vmatprep.subr.mxu0 0.0
        %7062 = vmatpush1.msra.mxu0 %v7026
        %7063 = vmatprep.subr.mxu0 0.0
        %7064 = vmatpush2.msra.mxu0 0.0
        %7065 = vmatprep.subr.mxu0 0.0
        %7066 = vmatpush2.msra.mxu0 0.0
        %7067 = vmatprep.subr.mxu0 0.0
        %7068 = vmatpush2.msra.mxu0 0.0
        %7069 = vmatprep.subr.mxu0 0.0
        %7070 = vmatpush2.msra.mxu0 0.0
        %7071 = vmatprep.subr.mxu0 0.0
        %7072 = vmatpush2.msra.mxu0 0.0
        %7073 = vmatprep.subr.mxu0 0.0
        %7074 = vmatpush2.msra.mxu0 0.0
        %7075 = vmatprep.subr.mxu0 0.0
        %7076 = vmatpush2.msra.mxu0 0.0
        %7077 = vmatprep.subr.mxu0 0.0
        %7078 = vmatpush2.msra.mxu0 0.0
        %7079 = vmatprep.subr.mxu0 0.0
        %7080 = vmatpush2.msra.mxu0 0.0
        %7081 = vmatprep.subr.mxu0 0.0
        %7082 = vmatpush2.msra.mxu0 0.0
        %7083 = vmatprep.subr.mxu0 0.0
        %7084 = vmatpush2.msra.mxu0 0.0
        %7085 = vmatprep.subr.mxu0 0.0
        %7086 = vmatpush2.msra.mxu0 0.0
        %7087 = vmatprep.subr.mxu0 0.0
        %7088 = vmatpush2.msra.mxu0 0.0
        %7089 = vmatprep.subr.mxu0 0.0
        %7090 = vmatpush2.msra.mxu0 0.0
        %7091 = vmatprep.subr.mxu0 0.0
        %7092 = vmatpush2.msra.mxu0 0.0
        %7093 = vmatprep.subr.mxu0 0.0
        %7094 = vmatpush2.msra.mxu0 0.0
        %7095 = vmatprep.mubr.f32.mxu0 0.0
        %7096 = vmatmul.mubr.f32.gmra.mxu0 %v7029
        %v7097 = vpop.f32.mrf.mxu0
        %v7098 = vadd.f32 0.0, %v7097
        %v7099 = vpop.f32.mrf.mxu0
        %7100 = vdwg.mxu0
        %7101 = vrot.lane.b32.xlu0 %v4480, 104
        %v7102 = vpop.permute.xlu0 %7101
        %v7105 = vsel %vm1237, %v6872, 0
        %7107 = vmatprep.subr.mxu0 0.0
        %7108 = vmatpush1.msra.mxu0 0.0
        %7109 = vmatprep.subr.mxu0 0.0
        %7110 = vmatpush1.msra.mxu0 0.0
        %7111 = vmatprep.subr.mxu0 0.0
        %7112 = vmatpush1.msra.mxu0 0.0
        %7113 = vmatprep.subr.mxu0 0.0
        %7114 = vmatpush1.msra.mxu0 0.0
        %7115 = vmatprep.subr.mxu0 0.0
        %7116 = vmatpush1.msra.mxu0 0.0
        %7117 = vmatprep.subr.mxu0 0.0
        %7118 = vmatpush1.msra.mxu0 0.0
        %7119 = vmatprep.subr.mxu0 0.0
        %7120 = vmatpush1.msra.mxu0 0.0
        %7121 = vmatprep.subr.mxu0 0.0
        %7122 = vmatpush1.msra.mxu0 0.0
        %7123 = vmatprep.subr.mxu0 0.0
        %7124 = vmatpush1.msra.mxu0 0.0
        %7125 = vmatprep.subr.mxu0 0.0
        %7126 = vmatpush1.msra.mxu0 0.0
        %7127 = vmatprep.subr.mxu0 0.0
        %7128 = vmatpush1.msra.mxu0 0.0
        %7129 = vmatprep.subr.mxu0 0.0
        %7130 = vmatpush1.msra.mxu0 0.0
        %7131 = vmatprep.subr.mxu0 0.0
        %7132 = vmatpush1.msra.mxu0 0.0
        %7133 = vmatprep.subr.mxu0 0.0
        %7134 = vmatpush1.msra.mxu0 0.0
        %7135 = vmatprep.subr.mxu0 0.0
        %7136 = vmatpush1.msra.mxu0 0.0
        %7137 = vmatprep.subr.mxu0 0.0
        %7138 = vmatpush1.msra.mxu0 %v7102
        %7139 = vmatprep.subr.mxu0 0.0
        %7140 = vmatpush2.msra.mxu0 0.0
        %7141 = vmatprep.subr.mxu0 0.0
        %7142 = vmatpush2.msra.mxu0 0.0
        %7143 = vmatprep.subr.mxu0 0.0
        %7144 = vmatpush2.msra.mxu0 0.0
        %7145 = vmatprep.subr.mxu0 0.0
        %7146 = vmatpush2.msra.mxu0 0.0
        %7147 = vmatprep.subr.mxu0 0.0
        %7148 = vmatpush2.msra.mxu0 0.0
        %7149 = vmatprep.subr.mxu0 0.0
        %7150 = vmatpush2.msra.mxu0 0.0
        %7151 = vmatprep.subr.mxu0 0.0
        %7152 = vmatpush2.msra.mxu0 0.0
        %7153 = vmatprep.subr.mxu0 0.0
        %7154 = vmatpush2.msra.mxu0 0.0
        %7155 = vmatprep.subr.mxu0 0.0
        %7156 = vmatpush2.msra.mxu0 0.0
        %7157 = vmatprep.subr.mxu0 0.0
        %7158 = vmatpush2.msra.mxu0 0.0
        %7159 = vmatprep.subr.mxu0 0.0
        %7160 = vmatpush2.msra.mxu0 0.0
        %7161 = vmatprep.subr.mxu0 0.0
        %7162 = vmatpush2.msra.mxu0 0.0
        %7163 = vmatprep.subr.mxu0 0.0
        %7164 = vmatpush2.msra.mxu0 0.0
        %7165 = vmatprep.subr.mxu0 0.0
        %7166 = vmatpush2.msra.mxu0 0.0
        %7167 = vmatprep.subr.mxu0 0.0
        %7168 = vmatpush2.msra.mxu0 0.0
        %7169 = vmatprep.subr.mxu0 0.0
        %7170 = vmatpush2.msra.mxu0 0.0
        %7171 = vmatprep.mubr.f32.mxu0 0.0
        %7172 = vmatmul.mubr.f32.gmra.mxu0 %v7105
        %v7173 = vpop.f32.mrf.mxu0
        %v7174 = vadd.f32 0.0, %v7173
        %v7175 = vpop.f32.mrf.mxu0
        %7176 = vdwg.mxu0
        %v7181 = vrot.slane %v5004, 7
        %v7182 = vsel %vm956, %v7181, %v4931
        %v7183 = vrot.slane %v5077, 6
        %v7184 = vsel %vm959, %v7183, %v7182
        %v7185 = vrot.slane %v5150, 5
        %v7186 = vsel %vm962, %v7185, %v7184
        %v7192 = vrot.slane %v5684, 7
        %v7193 = vsel %vm956, %v7192, %v5607
        %v7194 = vrot.slane %v5761, 6
        %v7195 = vsel %vm959, %v7194, %v7193
        %v7196 = vrot.slane %v5838, 5
        %v7197 = vsel %vm962, %v7196, %v7195
        %7198 = vrot.lane.b32.xlu0 %v7197, 8
        %v7199 = vpop.permute.xlu0 %7198
        %v7205 = vrot.slane %v6354, 7
        %v7206 = vsel %vm956, %v7205, %v6278
        %v7207 = vrot.slane %v6430, 6
        %v7208 = vsel %vm959, %v7207, %v7206
        %v7209 = vrot.slane %v6506, 5
        %v7210 = vsel %vm962, %v7209, %v7208
        %7211 = vrot.lane.b32.xlu0 %v7210, 16
        %v7212 = vpop.permute.xlu0 %7211
        %v7218 = vrot.slane %v7022, 7
        %v7219 = vsel %vm956, %v7218, %v6946
        %v7220 = vrot.slane %v7098, 6
        %v7221 = vsel %vm959, %v7220, %v7219
        %v7222 = vrot.slane %v7174, 5
        %v7223 = vsel %vm962, %v7222, %v7221
        %7224 = vrot.lane.b32.xlu0 %v7223, 24
        %v7225 = vpop.permute.xlu0 %7224
        %v7227 = vsel %vm1237, %v7186, %v7199
        %v7228 = vsel %vm1603, %v7227, %v7212
        %v7229 = vsel %vm4060, %v7228, %v7225
        %v7230 = vpack.c.bf16 %v7229, %v7229
        %v7231 = vld [vmem:[%s15] sm:$0xf]
        %v7232 = vld [vmem:[%s15 + $0x4] sm:$0xf]
        %v7233 = vld [vmem:[%s15 + $0x8] sm:$0xf]
        %v7234 = vld [vmem:[%s15 + $0xc] sm:$0xf]
        %v7235 = vld [vmem:[%s16] sm:$0x1]
        %v7237 = vlaneseq
        %v7238 = vshrl.u32 %v7237, 7
        %v7239 = vsub.s32 0, %v7238
        %v7240 = vrot.slane %v7235, %v7239
        %v7246 = vunpack.c.l.b16 %v7231
        %v7247 = vunpack.c.l.b16 %v7232
        %v7248 = vunpack.c.l.b16 %v7233
        %v7249 = vunpack.c.l.b16 %v7234
        %v7250 = vpack.c.b16 %v7247, %v7246
        %v7251 = vpack.c.b16 %v7249, %v7248
        %v7255 = vsel %vm801, %v7230, 0
        %7257 = vmatprep.subr.bf16.mxu0 0
        %7258 = vmatpush1.bf16.msra.mxu0 0
        %7259 = vmatprep.subr.bf16.mxu0 0
        %7260 = vmatpush1.bf16.msra.mxu0 0
        %7261 = vmatprep.subr.bf16.mxu0 0
        %7262 = vmatpush1.bf16.msra.mxu0 0
        %7263 = vmatprep.subr.bf16.mxu0 0
        %7264 = vmatpush1.bf16.msra.mxu0 0
        %7265 = vmatprep.subr.bf16.mxu0 0
        %7266 = vmatpush1.bf16.msra.mxu0 0
        %7267 = vmatprep.subr.bf16.mxu0 0
        %7268 = vmatpush1.bf16.msra.mxu0 0
        %7269 = vmatprep.subr.bf16.mxu0 0
        %7270 = vmatpush1.bf16.msra.mxu0 %v7251
        %7271 = vmatprep.subr.bf16.mxu0 0
        %7272 = vmatpush1.bf16.msra.mxu0 %v7250
        %7273 = vmatprep.subr.bf16.mxu0 0
        %7274 = vmatpush2.bf16.msra.mxu0 0
        %7275 = vmatprep.subr.bf16.mxu0 0
        %7276 = vmatpush2.bf16.msra.mxu0 0
        %7277 = vmatprep.subr.bf16.mxu0 0
        %7278 = vmatpush2.bf16.msra.mxu0 0
        %7279 = vmatprep.subr.bf16.mxu0 0
        %7280 = vmatpush2.bf16.msra.mxu0 0
        %7281 = vmatprep.subr.bf16.mxu0 0
        %7282 = vmatpush2.bf16.msra.mxu0 0
        %7283 = vmatprep.subr.bf16.mxu0 0
        %7284 = vmatpush2.bf16.msra.mxu0 0
        %7285 = vmatprep.subr.bf16.mxu0 0
        %7286 = vmatpush2.bf16.msra.mxu0 0
        %7287 = vmatprep.subr.bf16.mxu0 0
        %7288 = vmatpush2.bf16.msra.mxu0 0
        %7289 = vmatprep.mubr.bf16.mxu0 0
        %7290 = vmatmul.mubr.bf16.gmra.mxu0 %v7255
        %v7291 = vpop.f32.mrf.mxu0
        %v7292 = vadd.f32 %v7240, %v7291
        %v7293 = vpop.f32.mrf.mxu0
        %v7294 = vpop.f32.mrf.mxu0
        %v7295 = vpop.f32.mrf.mxu0
        %7296 = vdwg.mxu0
        %v7298 = vrot.slane %v7292, 1
        %v7299 = vrot.slane %v7292, 2
        %v7300 = vrot.slane %v7292, 3
        %v7301 = vrot.slane %v7292, 4
        %v7306 = vadd.f32 %v4138, %v7298
        %v7307 = vadd.f32 %v4139, %v7299
        %v7308 = vadd.f32 %v4140, %v7300
        %v7309 = vadd.f32 %v4141, %v7301
        %v7310 = vld [vmem:[%s17] sm:$0x1]
        %v7311 = vld [vmem:[%s18] sm:$0x1]
        %v7316 = vrot.slane %v7307, 7
        %v7317 = vrot.slane %v7308, 6
        %v7318 = vsel %vm956, %v7317, %v7316
        %v7319 = vrot.slane %v7309, 5
        %v7320 = vsel %vm959, %v7319, %v7318
        %v7323 = vsel %vm4155, %v7306, 0.0
        %7324 = vadd.xlane.f32.xlu0 %v7323
        %v7325 = vpop.xlane.xlu0 %7324
        %v7326 = vsel %vm4159, %v7320, 0.0
        %7327 = vadd.xlane.f32.xlu0 %v7326
        %v7328 = vpop.xlane.xlu0 %7327
        %v7329 = vmul.f32 %v7325, %v814
        %v7330 = vmul.f32 %v7328, %v814
        %v7333 = vrot.slane %v7330, 1
        %v7334 = vrot.slane %v7330, 2
        %v7335 = vrot.slane %v7330, 3
        %v7340 = vsub.f32 %v7306, %v7329
        %v7341 = vsub.f32 %v7307, %v7333
        %v7342 = vsub.f32 %v7308, %v7334
        %v7343 = vsub.f32 %v7309, %v7335
        %v7344 = vmul.f32 %v7340, %v7340
        %v7345 = vmul.f32 %v7341, %v7341
        %v7346 = vmul.f32 %v7342, %v7342
        %v7347 = vmul.f32 %v7343, %v7343
        %v7352 = vrot.slane %v7345, 7
        %v7353 = vrot.slane %v7346, 6
        %v7354 = vsel %vm956, %v7353, %v7352
        %v7355 = vrot.slane %v7347, 5
        %v7356 = vsel %vm959, %v7355, %v7354
        %v7359 = vsel %vm4155, %v7344, 0.0
        %7360 = vadd.xlane.f32.xlu0 %v7359
        %v7361 = vpop.xlane.xlu0 %7360
        %v7362 = vsel %vm4159, %v7356, 0.0
        %7363 = vadd.xlane.f32.xlu0 %v7362
        %v7364 = vpop.xlane.xlu0 %7363
        %v7365 = vmul.f32 %v7361, 0.032258064
        %v7366 = vmul.f32 %v7364, 0.032258064
        %v7368 = vlaneseq
        %v7369 = vshrl.u32 %v7368, 7
        %v7370 = vsub.s32 0, %v7369
        %v7371 = vrot.slane %v7310, %v7370
        %v7377 = vrot.slane %v7340, 7
        %v7378 = vrot.slane %v7341, 6
        %v7379 = vsel %vm956, %v7378, %v7377
        %v7380 = vrot.slane %v7342, 5
        %v7381 = vsel %vm959, %v7380, %v7379
        %v7382 = vrot.slane %v7343, 4
        %v7383 = vsel %vm962, %v7382, %v7381
        %v7385 = vmul.f32 %v7371, %v7383
        %v7386 = vrsqrt.pop %v7365
        %v7387 = vmul.f32 %v7365, %v7386
        %vm7388 = vcmp.eq.f32.partialorder %v7365, inf
        %v7389 = vsel %vm7388, %v7365, %v7387
        %vm7390 = vcmp.eq.f32.partialorder %v7365, 0.0
        %v7391 = vand.u32 %v7365, 2147483648
        %v7392 = vsel %vm7390, %v7391, %v7389
        %v7393 = vrsqrt.pop %v7366
        %v7394 = vmul.f32 %v7366, %v7393
        %vm7395 = vcmp.eq.f32.partialorder %v7366, inf
        %v7396 = vsel %vm7395, %v7366, %v7394
        %vm7397 = vcmp.eq.f32.partialorder %v7366, 0.0
        %v7398 = vand.u32 %v7366, 2147483648
        %v7399 = vsel %vm7397, %v7398, %v7396
        %v7400 = vadd.f32 %v7392, 1e-06
        %v7401 = vadd.f32 %v7399, 1e-06
        %v7404 = vrot.slane %v7400, 7
        %v7405 = vrot.slane %v7401, 7
        %v7406 = vsel %vm4238, %v7404, %v7405
        %v7408 = vrcp.pop %v7406
        %v7409 = vmul.f32 %v7385, %v7408
        %v7411 = vlaneseq
        %v7412 = vshrl.u32 %v7411, 7
        %v7413 = vsub.s32 0, %v7412
        %v7414 = vrot.slane %v7311, %v7413
        %v7416 = vadd.f32 %v7409, %v7414
        %v7417 = vpack.c.bf16 %v7416, %v7416
        %v7418 = vld [vmem:[%s19] sm:$0xf]
        %v7419 = vld [vmem:[%s19 + $0x4] sm:$0xf]
        %v7420 = vld [vmem:[%s19 + $0x8] sm:$0xf]
        %v7421 = vld [vmem:[%s19 + $0xc] sm:$0xf]
        %v7422 = vld [vmem:[%s20] sm:$0x1]
        %v7424 = vlaneseq
        %v7425 = vshrl.u32 %v7424, 7
        %v7426 = vsub.s32 0, %v7425
        %v7427 = vrot.slane %v7422, %v7426
        %v7433 = vunpack.c.l.b16 %v7418
        %v7434 = vunpack.c.l.b16 %v7419
        %v7435 = vunpack.c.l.b16 %v7420
        %v7436 = vunpack.c.l.b16 %v7421
        %v7437 = vpack.c.b16 %v7434, %v7433
        %v7438 = vpack.c.b16 %v7436, %v7435
        %v7442 = vsel %vm801, %v7417, 0
        %7444 = vmatprep.subr.bf16.mxu0 0
        %7445 = vmatpush1.bf16.msra.mxu0 0
        %7446 = vmatprep.subr.bf16.mxu0 0
        %7447 = vmatpush1.bf16.msra.mxu0 0
        %7448 = vmatprep.subr.bf16.mxu0 0
        %7449 = vmatpush1.bf16.msra.mxu0 0
        %7450 = vmatprep.subr.bf16.mxu0 0
        %7451 = vmatpush1.bf16.msra.mxu0 0
        %7452 = vmatprep.subr.bf16.mxu0 0
        %7453 = vmatpush1.bf16.msra.mxu0 0
        %7454 = vmatprep.subr.bf16.mxu0 0
        %7455 = vmatpush1.bf16.msra.mxu0 0
        %7456 = vmatprep.subr.bf16.mxu0 0
        %7457 = vmatpush1.bf16.msra.mxu0 %v7438
        %7458 = vmatprep.subr.bf16.mxu0 0
        %7459 = vmatpush1.bf16.msra.mxu0 %v7437
        %7460 = vmatprep.subr.bf16.mxu0 0
        %7461 = vmatpush2.bf16.msra.mxu0 0
        %7462 = vmatprep.subr.bf16.mxu0 0
        %7463 = vmatpush2.bf16.msra.mxu0 0
        %7464 = vmatprep.subr.bf16.mxu0 0
        %7465 = vmatpush2.bf16.msra.mxu0 0
        %7466 = vmatprep.subr.bf16.mxu0 0
        %7467 = vmatpush2.bf16.msra.mxu0 0
        %7468 = vmatprep.subr.bf16.mxu0 0
        %7469 = vmatpush2.bf16.msra.mxu0 0
        %7470 = vmatprep.subr.bf16.mxu0 0
        %7471 = vmatpush2.bf16.msra.mxu0 0
        %7472 = vmatprep.subr.bf16.mxu0 0
        %7473 = vmatpush2.bf16.msra.mxu0 0
        %7474 = vmatprep.subr.bf16.mxu0 0
        %7475 = vmatpush2.bf16.msra.mxu0 0
        %7476 = vmatprep.mubr.bf16.mxu0 0
        %7477 = vmatmul.mubr.bf16.gmra.mxu0 %v7442
        %v7478 = vpop.f32.mrf.mxu0
        %v7479 = vadd.f32 %v7427, %v7478
        %v7480 = vpop.f32.mrf.mxu0
        %v7481 = vpop.f32.mrf.mxu0
        %v7482 = vpop.f32.mrf.mxu0
        %7483 = vdwg.mxu0
        %v7484 = vmax.f32 %v7479, 0.0
        %v7485 = vpack.c.bf16 %v7484, %v7484
        %v7486 = vld [vmem:[%s21] sm:$0xf]
        %v7487 = vld [vmem:[%s21 + $0x4] sm:$0xf]
        %v7488 = vld [vmem:[%s21 + $0x8] sm:$0xf]
        %v7489 = vld [vmem:[%s21 + $0xc] sm:$0xf]
        %v7490 = vld [vmem:[%s21 + $0x10] sm:$0xf]
        %v7491 = vld [vmem:[%s21 + $0x14] sm:$0xf]
        %v7492 = vld [vmem:[%s21 + $0x18] sm:$0xf]
        %v7493 = vld [vmem:[%s21 + $0x1c] sm:$0xf]
        %v7494 = vld [vmem:[%s22] sm:$0x1]
        %v7496 = vlaneseq
        %v7497 = vshrl.u32 %v7496, 7
        %v7498 = vsub.s32 0, %v7497
        %v7499 = vrot.slane %v7494, %v7498
        %v7509 = vunpack.c.l.b16 %v7486
        %v7510 = vunpack.c.l.b16 %v7487
        %v7511 = vunpack.c.l.b16 %v7488
        %v7512 = vunpack.c.l.b16 %v7489
        %v7513 = vunpack.c.l.b16 %v7490
        %v7514 = vunpack.c.l.b16 %v7491
        %v7515 = vunpack.c.l.b16 %v7492
        %v7516 = vunpack.c.l.b16 %v7493
        %v7517 = vpack.c.b16 %v7510, %v7509
        %v7518 = vpack.c.b16 %v7512, %v7511
        %v7519 = vpack.c.b16 %v7514, %v7513
        %v7520 = vpack.c.b16 %v7516, %v7515
        %vm7525 = vcmask 523264
        %v7527 = vsel %vm7525, %v7485, 0
        %7529 = vmatprep.subr.bf16.mxu0 0
        %7530 = vmatpush1.bf16.msra.mxu0 0
        %7531 = vmatprep.subr.bf16.mxu0 0
        %7532 = vmatpush1.bf16.msra.mxu0 0
        %7533 = vmatprep.subr.bf16.mxu0 0
        %7534 = vmatpush1.bf16.msra.mxu0 0
        %7535 = vmatprep.subr.bf16.mxu0 0
        %7536 = vmatpush1.bf16.msra.mxu0 0
        %7537 = vmatprep.subr.bf16.mxu0 0
        %7538 = vmatpush1.bf16.msra.mxu0 %v7520
        %7539 = vmatprep.subr.bf16.mxu0 0
        %7540 = vmatpush1.bf16.msra.mxu0 %v7519
        %7541 = vmatprep.subr.bf16.mxu0 0
        %7542 = vmatpush1.bf16.msra.mxu0 %v7518
        %7543 = vmatprep.subr.bf16.mxu0 0
        %7544 = vmatpush1.bf16.msra.mxu0 %v7517
        %7545 = vmatprep.subr.bf16.mxu0 0
        %7546 = vmatpush2.bf16.msra.mxu0 0
        %7547 = vmatprep.subr.bf16.mxu0 0
        %7548 = vmatpush2.bf16.msra.mxu0 0
        %7549 = vmatprep.subr.bf16.mxu0 0
        %7550 = vmatpush2.bf16.msra.mxu0 0
        %7551 = vmatprep.subr.bf16.mxu0 0
        %7552 = vmatpush2.bf16.msra.mxu0 0
        %7553 = vmatprep.subr.bf16.mxu0 0
        %7554 = vmatpush2.bf16.msra.mxu0 0
        %7555 = vmatprep.subr.bf16.mxu0 0
        %7556 = vmatpush2.bf16.msra.mxu0 0
        %7557 = vmatprep.subr.bf16.mxu0 0
        %7558 = vmatpush2.bf16.msra.mxu0 0
        %7559 = vmatprep.subr.bf16.mxu0 0
        %7560 = vmatpush2.bf16.msra.mxu0 0
        %7561 = vmatprep.mubr.bf16.mxu0 0
        %7562 = vmatmul.mubr.bf16.gmra.mxu0 %v7527
        %v7563 = vpop.f32.mrf.mxu0
        %v7564 = vadd.f32 %v7499, %v7563
        %v7565 = vpop.f32.mrf.mxu0
        %v7566 = vpop.f32.mrf.mxu0
        %v7567 = vpop.f32.mrf.mxu0
        %7568 = vdwg.mxu0
        %v7570 = vrot.slane %v7564, 1
        %v7571 = vrot.slane %v7564, 2
        %v7572 = vrot.slane %v7564, 3
        %v7573 = vrot.slane %v7564, 4
        %v7578 = vadd.f32 %v7306, %v7570
        %v7579 = vadd.f32 %v7307, %v7571
        %v7580 = vadd.f32 %v7308, %v7572
        %v7581 = vadd.f32 %v7309, %v7573
        %7582 = vst.msk [vmem:[%s764 - $0x7] sm:$0x80] %vm4155, %v7578
        %7583 = vst.msk [vmem:[%s764 - $0x6] sm:$0x80] %vm4155, %v7579
        %7584 = vst.msk [vmem:[%s764 - $0x5] sm:$0x80] %vm4155, %v7580
        %7585 = vst.msk [vmem:[%s764 - $0x4] sm:$0x80] %vm4155, %v7581
        %s7586 = sand.u32 %s553, 1
        %s7587 = scalar_lea.sflag [#allocation4], %s7586
        %s7588 = sand.u32 %s553, 1
        %s7589 = smul.addr %s7588, 4
        %s7590 = scalar_lea.vmem [#allocation3], %s7589
        // Predicated region
        $region113: #{decoder_layer.1} parent=111 // pred_check
          %p7591 = pneg %p563
        $region114: #{decoder_layer.1} parent=111 // pred_check_branch
          %7593 = sbr.rel (%p7591) target = $region116
        $region115: #{decoder_layer.1} parent=111 // pred_region
          %s7594 = smul.u32 4, %s37
          %s7596 = ssub.s32 64, 64
          %7597 = vsyncadd %s7587, %s7596
          %s7598 = smul.addr %s7594, 16
          %s7599 = scalar_lea.hbm %s23, %s7598
          %s7600 = sshll.u32 %s7590, 4
          %s7601 = int_to_ptr.vmem [resolvable:$true] %s7600
          %7606 = dma.vmem_to_hbm [thread:$0]  %s7601, 64, %s7599, %s7587, 16, 16, 1
        $region116: #{decoder_layer.1} parent=111 // pred_fallthru
          _
      $region112: #{decoder_layer.1} parent=5 // pred_fallthru
        _
      %p7607 = scmp.le.s32.totalorder 2, %s32
      // Predicated region
      $region117: #{decoder_layer.1} parent=5 // pred_check
        %p7608 = pneg %p7607
      $region118: #{decoder_layer.1} parent=5 // pred_check_branch
        %7610 = sbr.rel (%p7608) target = $region120
      $region119: #{decoder_layer.1} parent=5 // pred_region
        %s7611 = ssub.s32 %s32, 2
        // Predicated region
        $region121: #{decoder_layer.1} parent=119 // pred_check
          %p7612 = pneg %p569
        $region122: #{decoder_layer.1} parent=119 // pred_check_branch
          %7614 = sbr.rel (%p7612) target = $region124
        $region123: #{decoder_layer.1} parent=119 // pred_region
          %s7615 = sand.u32 %s554, 1
          %s7616 = scalar_lea.sflag [#allocation4], %s7615
          %s7617 = sand.u32 %s554, 1
          %s7618 = smul.addr %s7617, 4
          %s7619 = scalar_lea.vmem [#allocation3], %s7618
          %7620 = dma.done %s7616, 64
        $region124: #{decoder_layer.1} parent=119 // pred_fallthru
          _
      $region120: #{decoder_layer.1} parent=5 // pred_fallthru
        _
    $region6: #{decoder_layer.1} parent=1 // loop_footer
      %s36 = sadd.s32 1, %s32
    $region7: #{decoder_layer.1} parent=1 // loop_footer_branch
      %31 = sbr.rel target = $region3
    $region8: #{decoder_layer.1} parent=1 // loop_exit
      _
    %7621 = vsyncpa [#allocation4], 1
    %s7622 = scalar_lea.sflag [#allocation4], 1
    %7623 = vsyncpa %s7622, 1

</llo_original>
